<compile_context>
chip_gen: v7x
topology: tpu7x:2x2x1
jax: 0.10.0
libtpu: 0.0.40
codegen_flags: <defaults>
</compile_context>

<pallas_src>
import functools
import math

import jax
import jax.numpy as jnp
from jax.experimental import pallas as pl
from jax.experimental.pallas import tpu as pltpu


def _linear_bias_dropout_kernel(x_ref, w_ref, b_ref, m_ref, o_ref):
    """Grid: (S // TM, K // TK); K (reduction) is the trailing axis.

    x_ref: (TM, TK)  bf16 activation tile
    w_ref: (TK, N)   bf16 weight tile (weight stored transposed: K x N)
    b_ref: (1,  N)   f32 bias (resident)
    m_ref: (TM, N)   f32 dropout keep/scale mask (resident per row tile)
    o_ref: (TM, N)   f32 output tile, resident across K -> doubles as the
                     accumulator (no extra VMEM scratch).
    """
    k = pl.program_id(1)

    @pl.when(k == 0)
    def _():
        o_ref[...] = jnp.zeros_like(o_ref)

    # bf16 x bf16 -> f32 on the MXU, accumulated straight into the output tile.
    o_ref[...] += jnp.dot(x_ref[...], w_ref[...],
                          preferred_element_type=jnp.float32)

    @pl.when(k == pl.num_programs(1) - 1)
    def _():
        o_ref[...] = (o_ref[...] + b_ref[...]) * m_ref[...]


def linear_bias_dropout(x2d, w, b, mask, *, tm=128, tk=1536):
    """x2d: (S, K) bf16, w: (K, N) bf16, b: (1, N) f32, mask: (S, N) f32."""
    S, K = x2d.shape
    Kw, N = w.shape
    assert K == Kw
    assert S % tm == 0 and K % tk == 0 and N % 128 == 0

    grid = (S // tm, K // tk)

    return pl.pallas_call(
        _linear_bias_dropout_kernel,
        out_shape=jax.ShapeDtypeStruct((S, N), jnp.float32),
        grid_spec=pltpu.PrefetchScalarGridSpec(
            num_scalar_prefetch=0,
            grid=grid,
            in_specs=[
                pl.BlockSpec((tm, tk), lambda i, k: (i, k)),   # activations
                pl.BlockSpec((tk, N), lambda i, k: (k, 0)),    # weight (K, N)
                pl.BlockSpec((1, N), lambda i, k: (0, 0)),     # bias
                pl.BlockSpec((tm, N), lambda i, k: (i, 0)),    # dropout mask
            ],
            out_specs=pl.BlockSpec((tm, N), lambda i, k: (i, 0)),
        ),
        compiler_params=pltpu.CompilerParams(
            # Row axis shards across TensorCores on v7x; K is the reduction.
            dimension_semantics=("parallel", "arbitrary"),
        ),
    )(x2d, w, b, mask)


@functools.partial(jax.jit, static_argnames=("p", "training"))
def model_forward(x, w, b, key, *, p=0.1, training=True):
    """x: (B, S, 3072) f32 -> (B, S, 768) f32, matching M.forward."""
    B, S, K = x.shape
    N = w.shape[1]

    x2d = x.reshape(B * S, K).astype(jnp.bfloat16)
    w_bf16 = w.astype(jnp.bfloat16)      # no-op if w already stored as bf16

    if training and p > 0.0:
        keep = jax.random.bernoulli(key, 1.0 - p, (B * S, N))
        mask = jnp.where(keep, jnp.float32(1.0 / (1.0 - p)), jnp.float32(0.0))
    else:
        mask = jnp.ones((B * S, N), jnp.float32)

    y2d = linear_bias_dropout(x2d, w_bf16, b, mask)
    return y2d.reshape(B, S, N)


if __name__ == "__main__":
    IN_FEATURES = 3072
    OUT_FEATURES = 768
    SEQ = 384           # matches the original module's (1, 384, 3072) input
    P_DROP = 0.1

    root = jax.random.PRNGKey(0)
    kx, kw, kb, kd = jax.random.split(root, 4)

    # PyTorch Linear default init: U(-1/sqrt(in), 1/sqrt(in))
    bound = 1.0 / math.sqrt(IN_FEATURES)
    x = jax.random.normal(kx, (1, SEQ, IN_FEATURES), dtype=jnp.float32)
    # weight stored transposed: (in_features, out_features)
    w = jax.random.uniform(kw, (IN_FEATURES, OUT_FEATURES),
                           dtype=jnp.float32, minval=-bound, maxval=bound)
    b = jax.random.uniform(kb, (1, OUT_FEATURES),
                           dtype=jnp.float32, minval=-bound, maxval=bound)

    # Store the weight in HBM as bf16 (halves the weight DMA traffic).
    w_bf16 = w.astype(jnp.bfloat16)

    out = model_forward(x, w_bf16, b, kd, p=P_DROP, training=True)
    jax.block_until_ready(out)

    assert out.shape == (1, SEQ, OUT_FEATURES)
    assert out.dtype == jnp.float32

    # Light correctness check against a pure-JAX reference using the same
    # bf16 inputs and the identical dropout mask.
    x2d_bf16 = x.reshape(SEQ, IN_FEATURES).astype(jnp.bfloat16)
    keep = jax.random.bernoulli(kd, 1.0 - P_DROP, (SEQ, OUT_FEATURES))
    ref_mask = jnp.where(keep, jnp.float32(1.0 / (1.0 - P_DROP)),
                         jnp.float32(0.0))
    ref = (jnp.dot(x2d_bf16, w_bf16, preferred_element_type=jnp.float32) + b)
    ref = (ref * ref_mask).reshape(1, SEQ, OUT_FEATURES)
    assert jnp.allclose(out, ref, atol=2e-2, rtol=2e-2)

    print("KERNEL_OK")
</pallas_src>

<mosaic_0001>
module attributes {stable_mosaic.version = 11 : i64} {
  func.func @_linear_bias_dropout_kernel(%arg0: i32, %arg1: i32, %arg2: memref<128x1536xbf16, #tpu.memory_space<vmem>>, %arg3: memref<1536x768xbf16, #tpu.memory_space<vmem>>, %arg4: memref<1x768xf32, #tpu.memory_space<vmem>>, %arg5: memref<128x768xf32, #tpu.memory_space<vmem>>, %arg6: memref<128x768xf32, #tpu.memory_space<vmem>>) attributes {dimension_semantics = [#tpu.dimension_semantics<parallel>, #tpu.dimension_semantics<arbitrary>], iteration_bounds = array<i64: 3, 2>, scalar_prefetch = 0 : i64, scratch_operands = 0 : i64, tpu.core_type = #tpu.core_type<tc>, window_params = [{transform_indices = @transform_0, window_bounds = array<i64: 128, 1536>}, {transform_indices = @transform_1, window_bounds = array<i64: 1536, 768>}, {pipeline_mode = #tpu.pipeline_mode<synchronous>, transform_indices = @transform_2, window_bounds = array<i64: 1, 768>}, {transform_indices = @transform_3, window_bounds = array<i64: 128, 768>}, {transform_indices = @transform_4, window_bounds = array<i64: 128, 768>}]} {
    %c0_i32 = arith.constant 0 : i32
    %0 = arith.cmpi eq, %arg1, %c0_i32 : i32
    %1 = arith.extui %0 : i1 to i32
    %c0_i32_0 = arith.constant 0 : i32
    %2 = arith.cmpi ne, %1, %c0_i32_0 : i32
    scf.if %2 {
      %cst_9 = arith.constant 0.000000e+00 : f32
      %12 = vector.broadcast %cst_9 : f32 to vector<128x768xf32>
      %c0_10 = arith.constant 0 : index
      %c0_11 = arith.constant 0 : index
      %13 = vector.load %arg6[%c0_10, %c0_11] : memref<128x768xf32, #tpu.memory_space<vmem>>, vector<128x768xf32>
      tpu.vector_store %arg6[%c0_10, %c0_11], %12 {strides = array<i32>} : memref<128x768xf32, #tpu.memory_space<vmem>>, vector<128x768xf32>,
    } else {
    }
    %c0 = arith.constant 0 : index
    %c0_1 = arith.constant 0 : index
    %3 = vector.load %arg6[%c0, %c0_1] : memref<128x768xf32, #tpu.memory_space<vmem>>, vector<128x768xf32>
    %c0_2 = arith.constant 0 : index
    %c0_3 = arith.constant 0 : index
    %4 = vector.load %arg2[%c0_2, %c0_3] : memref<128x1536xbf16, #tpu.memory_space<vmem>>, vector<128x1536xbf16>
    %c0_4 = arith.constant 0 : index
    %c0_5 = arith.constant 0 : index
    %5 = vector.load %arg3[%c0_4, %c0_5] : memref<1536x768xbf16, #tpu.memory_space<vmem>>, vector<1536x768xbf16>
    %cst = arith.constant dense<0.000000e+00> : vector<128x768xf32>
    %6 = tpu.matmul %4, %5, %cst {dimension_numbers = #tpu.dot_dimension_numbers<[1], [0], [0], [1], [0, 0, 1, 1], [], []>} : vector<128x1536xbf16>, vector<1536x768xbf16>, vector<128x768xf32> -> vector<128x768xf32>
    %7 = arith.addf %3, %6 : vector<128x768xf32>
    %c0_6 = arith.constant 0 : index
    %c0_7 = arith.constant 0 : index
    %8 = vector.load %arg6[%c0_6, %c0_7] : memref<128x768xf32, #tpu.memory_space<vmem>>, vector<128x768xf32>
    tpu.vector_store %arg6[%c0_6, %c0_7], %7 {strides = array<i32>} : memref<128x768xf32, #tpu.memory_space<vmem>>, vector<128x768xf32>,
    %c1_i32 = arith.constant 1 : i32
    %9 = arith.cmpi eq, %arg1, %c1_i32 : i32
    %10 = arith.extui %9 : i1 to i32
    %c0_i32_8 = arith.constant 0 : i32
    %11 = arith.cmpi ne, %10, %c0_i32_8 : i32
    scf.if %11 {
      %c0_9 = arith.constant 0 : index
      %c0_10 = arith.constant 0 : index
      %12 = vector.load %arg6[%c0_9, %c0_10] : memref<128x768xf32, #tpu.memory_space<vmem>>, vector<128x768xf32>
      %c0_11 = arith.constant 0 : index
      %c0_12 = arith.constant 0 : index
      %13 = vector.load %arg4[%c0_11, %c0_12] : memref<1x768xf32, #tpu.memory_space<vmem>>, vector<1x768xf32>
      %14 = vector.broadcast %13 : vector<1x768xf32> to vector<128x768xf32>
      %15 = arith.addf %12, %14 : vector<128x768xf32>
      %c0_13 = arith.constant 0 : index
      %c0_14 = arith.constant 0 : index
      %16 = vector.load %arg5[%c0_13, %c0_14] : memref<128x768xf32, #tpu.memory_space<vmem>>, vector<128x768xf32>
      %17 = arith.mulf %15, %16 : vector<128x768xf32>
      %c0_15 = arith.constant 0 : index
      %c0_16 = arith.constant 0 : index
      %18 = vector.load %arg6[%c0_15, %c0_16] : memref<128x768xf32, #tpu.memory_space<vmem>>, vector<128x768xf32>
      tpu.vector_store %arg6[%c0_15, %c0_16], %17 {strides = array<i32>} : memref<128x768xf32, #tpu.memory_space<vmem>>, vector<128x768xf32>,
    } else {
    }
    return
  }
  func.func @transform_0(%arg0: i32, %arg1: i32) -> (i32, i32) {
    %c0_i32 = arith.constant 0 : i32
    return %arg0, %arg1 : i32, i32
  }
  func.func @transform_1(%arg0: i32, %arg1: i32) -> (i32, i32) {
    %c0_i32 = arith.constant 0 : i32
    %c0_i32_0 = arith.constant 0 : i32
    return %arg1, %c0_i32 : i32, i32
  }
  func.func @transform_2(%arg0: i32, %arg1: i32) -> (i32, i32) {
    %c0_i32 = arith.constant 0 : i32
    %c0_i32_0 = arith.constant 0 : i32
    %c0_i32_1 = arith.constant 0 : i32
    return %c0_i32, %c0_i32_0 : i32, i32
  }
  func.func @transform_3(%arg0: i32, %arg1: i32) -> (i32, i32) {
    %c0_i32 = arith.constant 0 : i32
    %c0_i32_0 = arith.constant 0 : i32
    return %arg0, %c0_i32 : i32, i32
  }
  func.func @transform_4(%arg0: i32, %arg1: i32) -> (i32, i32) {
    %c0_i32 = arith.constant 0 : i32
    %c0_i32_0 = arith.constant 0 : i32
    return %arg0, %c0_i32 : i32, i32
  }
}

</mosaic_0001>

<llo_original>
// kernel: model_forward.1
$region0: #{model_forward.1}
  #allocation0 [shape = 'u32[]', space=smem, size = 0x4, offset = 0x4, fixed_abs, tag = 'smem constant byte address 0x4 - core index']
  #allocation1 [shape = 'u32[144,128]{1,0:T(1,128)}', space=vmem, size = 0x12000, scoped, tag = 'internal scratch']
  %s0 = inlined_call_operand.vmem [shape: bf16[384,3072], index: 0, kind: input, shape index: {}]
  %s1 = inlined_call_operand.vmem [shape: bf16[3072,768], index: 1, kind: input, shape index: {}]
  %s2 = inlined_call_operand.vmem [shape: f32[1,768], index: 2, kind: input, shape index: {}]
  %s3 = inlined_call_operand.vmem [shape: f32[384,768], index: 3, kind: input, shape index: {}]
  %s4 = inlined_call_operand.hbm [shape: f32[384,768], index: 4, kind: output, shape index: {}]
  %s5 = sld [smem:[#allocation0]]
  $region80: #{model_forward.1} parent=0
    _
  %s7 = ssub.s32 1, %s5
  %s8 = scalar_select 0, %s7, %s5
  $region1: #{model_forward.1} parent=0
    #allocation2 [shape = 'u8[786432]{0}', space=vmem, size = 0xc0000, scoped, tag = 'input window, operand 0']
    #allocation3 [shape = 'u8[786432]{0}', space=vmem, size = 0xc0000, scoped, tag = 'output window, operand 0']
    #allocation4 [shape = 's32[2]{0}', space=sflag, size = 0x8, scoped, tag = 'scoped memory for model_forward.1']
    %9 = vsyncpa [#allocation4], 0
    %s10 = scalar_lea.sflag [#allocation4], 1
    %11 = vsyncpa %s10, 0
    loop: start=0, step=1, limit=8
    $region2: #{model_forward.1} parent=1 // loop_pre_header
      _
    $region3: #{model_forward.1} parent=1 // loop_header
      %s13 = sphi 0, %s17
      %p14 = scmp.ge.s32.totalorder %s13, 8
      %s20 = sphi 0, %s32
      %s21 = sphi 0, %s28
      %s22 = sphi 0, %s20
      %s23 = sphi 0, %s21
      %s24 = sphi 0, %s22
      %s25 = sphi 0, %s23
      %s37 = sphi 0, %s39
      %s40 = sphi 0, %s37
      %s41 = sphi 0, %s40
      %s57 = sphi 0, %s41
      %s63 = sphi 0, %s65
      %s66 = sphi 0, %s63
      %s67 = sphi 0, %s66
      %s83 = sphi 0, %s67
      %s87 = sphi 0, %s87
      %s89 = sphi 0, %s87
      %s90 = sphi 0, %s89
      %s104 = sphi 0, %s90
      %s110 = sphi 0, %s112
      %s113 = sphi 0, %s110
      %s114 = sphi 0, %s113
      %s130 = sphi 0, %s114
      %s136 = sphi 0, %s138
      %s139 = sphi 0, %s136
      %s140 = sphi 0, %s139
      %s156 = sphi 0, %s140
    $region4: #{model_forward.1} parent=1 // loop_header_branch
      %16 = sbr.rel (%p14) target = $region8
    $region5: #{model_forward.1} parent=1 // loop_body
      %s18 = ssub.s32 %s13, 1
      %s19 = ssub.s32 %s13, 2
      %s26 = sadd.s32 1, %s21
      %p27 = scmp.ge.s32.totalorder %s26, 2
      %s28 = scalar_select %p27, 0, %s26
      %s29 = sadd.s32 1, %s20
      %s30 = scalar_select %p27, %s29, %s20
      %p31 = scmp.ge.s32.totalorder %s30, 3
      %s32 = scalar_select %p31, 0, %s30
      %s33 = ssub.s32 %s20, %s32
      %s34 = ssub.s32 %s21, %s28
      %s35 = sor.u32 %s33, %s34
      %p36 = scmp.eq.s32.totalorder %s35, 0
      %s38 = sadd.s32 %s37, 1
      %s39 = scalar_select %p36, %s37, %s38
      %p42 = pneg %p36
      %p43 = scmp.eq.s32.totalorder %s13, 5
      %p44 = por %p42, %p43
      %p45 = scmp.ne.s32.totalorder %s37, %s40
      %p46 = scmp.eq.s32.totalorder %s13, 0
      %p47 = por %p45, %p46
      %p48 = scmp.ne.s32.totalorder %s37, %s40
      %p49 = scmp.eq.s32.totalorder %s18, 5
      %p50 = por %p48, %p49
      %p51 = scmp.ne.s32.totalorder %s40, %s41
      %p52 = scmp.eq.s32.totalorder %s18, 0
      %p53 = por %p51, %p52
      %p54 = scmp.ne.s32.totalorder %s40, %s41
      %p55 = scmp.eq.s32.totalorder %s19, 5
      %p56 = por %p54, %p55
      %p58 = scmp.ne.s32.totalorder %s41, %s57
      %p59 = scmp.eq.s32.totalorder %s19, 0
      %p60 = por %p58, %p59
      %s61 = ssub.s32 %s21, %s28
      %p62 = scmp.eq.s32.totalorder %s61, 0
      %s64 = sadd.s32 %s63, 1
      %s65 = scalar_select %p62, %s63, %s64
      %p68 = pneg %p62
      %p69 = scmp.eq.s32.totalorder %s13, 5
      %p70 = por %p68, %p69
      %p71 = scmp.ne.s32.totalorder %s63, %s66
      %p72 = scmp.eq.s32.totalorder %s13, 0
      %p73 = por %p71, %p72
      %p74 = scmp.ne.s32.totalorder %s63, %s66
      %p75 = scmp.eq.s32.totalorder %s18, 5
      %p76 = por %p74, %p75
      %p77 = scmp.ne.s32.totalorder %s66, %s67
      %p78 = scmp.eq.s32.totalorder %s18, 0
      %p79 = por %p77, %p78
      %p80 = scmp.ne.s32.totalorder %s66, %s67
      %p81 = scmp.eq.s32.totalorder %s19, 5
      %p82 = por %p80, %p81
      %p84 = scmp.ne.s32.totalorder %s67, %s83
      %p85 = scmp.eq.s32.totalorder %s19, 0
      %p86 = por %p84, %p85
      %s88 = sadd.s32 %s87, 1
      %p91 = scmp.eq.s32.totalorder %s13, 5
      %p92 = scmp.ne.s32.totalorder %s87, %s89
      %p93 = scmp.eq.s32.totalorder %s13, 0
      %p94 = por %p92, %p93
      %p95 = scmp.ne.s32.totalorder %s87, %s89
      %p96 = scmp.eq.s32.totalorder %s18, 5
      %p97 = por %p95, %p96
      %p98 = scmp.ne.s32.totalorder %s89, %s90
      %p99 = scmp.eq.s32.totalorder %s18, 0
      %p100 = por %p98, %p99
      %p101 = scmp.ne.s32.totalorder %s89, %s90
      %p102 = scmp.eq.s32.totalorder %s19, 5
      %p103 = por %p101, %p102
      %p105 = scmp.ne.s32.totalorder %s90, %s104
      %p106 = scmp.eq.s32.totalorder %s19, 0
      %p107 = por %p105, %p106
      %s108 = ssub.s32 %s20, %s32
      %p109 = scmp.eq.s32.totalorder %s108, 0
      %s111 = sadd.s32 %s110, 1
      %s112 = scalar_select %p109, %s110, %s111
      %p115 = pneg %p109
      %p116 = scmp.eq.s32.totalorder %s13, 5
      %p117 = por %p115, %p116
      %p118 = scmp.ne.s32.totalorder %s110, %s113
      %p119 = scmp.eq.s32.totalorder %s13, 0
      %p120 = por %p118, %p119
      %p121 = scmp.ne.s32.totalorder %s110, %s113
      %p122 = scmp.eq.s32.totalorder %s18, 5
      %p123 = por %p121, %p122
      %p124 = scmp.ne.s32.totalorder %s113, %s114
      %p125 = scmp.eq.s32.totalorder %s18, 0
      %p126 = por %p124, %p125
      %p127 = scmp.ne.s32.totalorder %s113, %s114
      %p128 = scmp.eq.s32.totalorder %s19, 5
      %p129 = por %p127, %p128
      %p131 = scmp.ne.s32.totalorder %s114, %s130
      %p132 = scmp.eq.s32.totalorder %s19, 0
      %p133 = por %p131, %p132
      %s134 = ssub.s32 %s20, %s32
      %p135 = scmp.eq.s32.totalorder %s134, 0
      %s137 = sadd.s32 %s136, 1
      %s138 = scalar_select %p135, %s136, %s137
      %p141 = pneg %p135
      %p142 = scmp.eq.s32.totalorder %s13, 5
      %p143 = por %p141, %p142
      %p144 = scmp.ne.s32.totalorder %s136, %s139
      %p145 = scmp.eq.s32.totalorder %s13, 0
      %p146 = por %p144, %p145
      %p147 = scmp.ne.s32.totalorder %s136, %s139
      %p148 = scmp.eq.s32.totalorder %s18, 5
      %p149 = por %p147, %p148
      %p150 = scmp.ne.s32.totalorder %s139, %s140
      %p151 = scmp.eq.s32.totalorder %s18, 0
      %p152 = por %p150, %p151
      %p153 = scmp.ne.s32.totalorder %s139, %s140
      %p154 = scmp.eq.s32.totalorder %s19, 5
      %p155 = por %p153, %p154
      %p157 = scmp.ne.s32.totalorder %s140, %s156
      %p158 = scmp.eq.s32.totalorder %s19, 0
      %p159 = por %p157, %p158
      %p160 = scmp.le.s32.totalorder 1, %s13
      %p161 = scmp.lt.s32.totalorder %s13, 7
      %p162 = pnand %p160, %p161
      %p163 = pneg %p162
      // Predicated region
      $region9: #{model_forward.1} parent=5 // pred_check
        _
      $region10: #{model_forward.1} parent=5 // pred_check_branch
        %165 = sbr.rel (%p162) target = $region12
      $region11: #{model_forward.1} parent=5 // pred_region
        %s166 = ssub.s32 %s13, 1
        // Predicated region
        $region13: #{model_forward.1} parent=11 // pred_check
          %p167 = pneg %p100
        $region14: #{model_forward.1} parent=11 // pred_check_branch
          %169 = sbr.rel (%p167) target = $region16
        $region15: #{model_forward.1} parent=11 // pred_region
          _
        $region16: #{model_forward.1} parent=11 // pred_fallthru
          _
      $region12: #{model_forward.1} parent=5 // pred_fallthru
        _
      %p170 = scmp.lt.s32.totalorder %s13, 6
      // Predicated region
      $region17: #{model_forward.1} parent=5 // pred_check
        %p171 = pneg %p170
      $region18: #{model_forward.1} parent=5 // pred_check_branch
        %173 = sbr.rel (%p171) target = $region20
      $region19: #{model_forward.1} parent=5 // pred_region
        // Predicated region
        $region21: #{model_forward.1} parent=19 // pred_check
          %p174 = pneg %p47
        $region22: #{model_forward.1} parent=19 // pred_check_branch
          %176 = sbr.rel (%p174) target = $region24
        $region23: #{model_forward.1} parent=19 // pred_region
          %s177 = sand.u32 %s37, 1
          %s178 = sand.u32 %s37, 1
          %s179 = smul.addr %s178, 768
          %s180 = scalar_lea.vmem [#allocation2], %s179
          %s181 = smul.u32 16, %s20
          %s182 = smul.u32 12, %s21
          %s183 = smul.addr %s181, 24
          %s184 = sadd.s32 %s182, %s183
          %s185 = smul.addr %s184, 4
          %s186 = scalar_lea.vmem %s0, %s185
          // Predicated region
          $region25: #{model_forward.1} parent=23 // pred_check
            _
          $region26: #{model_forward.1} parent=23 // pred_check_branch
            %188 = sbr.rel (0) target = $region28
          $region27: #{model_forward.1} parent=23 // pred_region
            // Predicated region
            $region29: #{model_forward.1} parent=27 // pred_check
              _
            $region30: #{model_forward.1} parent=27 // pred_check_branch
              %190 = sbr.rel (0) target = $region32
            $region31: #{model_forward.1} parent=27 // pred_region
              loop: start=0, step=1, limit=1
              $region33: #{model_forward.1} parent=31 // loop_pre_header
                _
              $region34: #{model_forward.1} parent=31 // loop_header
                %s192 = sphi 0, %s196
                %p193 = scmp.ge.s32.totalorder %s192, 1
                %s197 = sphi %s186, %s186
                %s198 = sphi %s180, %s180
              $region35: #{model_forward.1} parent=31 // loop_header_branch
                %195 = sbr.rel (%p193) target = $region39
              $region36: #{model_forward.1} parent=31 // loop_body
                %v199 = vld [vmem:[%s197] sm:$0xff]
                %200 = vst [vmem:[%s198] sm:$0xff] %v199
                %v201 = vld [vmem:[%s197 + $0x8] sm:$0xff]
                %202 = vst [vmem:[%s198 + $0x8] sm:$0xff] %v201
                %v203 = vld [vmem:[%s197 + $0x10] sm:$0xff]
                %204 = vst [vmem:[%s198 + $0x10] sm:$0xff] %v203
                %v205 = vld [vmem:[%s197 + $0x18] sm:$0xff]
                %206 = vst [vmem:[%s198 + $0x18] sm:$0xff] %v205
                %v207 = vld [vmem:[%s197 + $0x20] sm:$0xff]
                %208 = vst [vmem:[%s198 + $0x20] sm:$0xff] %v207
                %v209 = vld [vmem:[%s197 + $0x28] sm:$0xff]
                %210 = vst [vmem:[%s198 + $0x28] sm:$0xff] %v209
                %v211 = vld [vmem:[%s197 + $0x60] sm:$0xff]
                %212 = vst [vmem:[%s198 + $0x30] sm:$0xff] %v211
                %v213 = vld [vmem:[%s197 + $0x68] sm:$0xff]
                %214 = vst [vmem:[%s198 + $0x38] sm:$0xff] %v213
                %v215 = vld [vmem:[%s197 + $0x70] sm:$0xff]
                %216 = vst [vmem:[%s198 + $0x40] sm:$0xff] %v215
                %v217 = vld [vmem:[%s197 + $0x78] sm:$0xff]
                %218 = vst [vmem:[%s198 + $0x48] sm:$0xff] %v217
                %v219 = vld [vmem:[%s197 + $0x80] sm:$0xff]
                %220 = vst [vmem:[%s198 + $0x50] sm:$0xff] %v219
                %v221 = vld [vmem:[%s197 + $0x88] sm:$0xff]
                %222 = vst [vmem:[%s198 + $0x58] sm:$0xff] %v221
                %v223 = vld [vmem:[%s197 + $0xc0] sm:$0xff]
                %224 = vst [vmem:[%s198 + $0x60] sm:$0xff] %v223
                %v225 = vld [vmem:[%s197 + $0xc8] sm:$0xff]
                %226 = vst [vmem:[%s198 + $0x68] sm:$0xff] %v225
                %v227 = vld [vmem:[%s197 + $0xd0] sm:$0xff]
                %228 = vst [vmem:[%s198 + $0x70] sm:$0xff] %v227
                %v229 = vld [vmem:[%s197 + $0xd8] sm:$0xff]
                %230 = vst [vmem:[%s198 + $0x78] sm:$0xff] %v229
                %v231 = vld [vmem:[%s197 + $0xe0] sm:$0xff]
                %232 = vst [vmem:[%s198 + $0x80] sm:$0xff] %v231
                %v233 = vld [vmem:[%s197 + $0xe8] sm:$0xff]
                %234 = vst [vmem:[%s198 + $0x88] sm:$0xff] %v233
                %v235 = vld [vmem:[%s197 + $0x120] sm:$0xff]
                %236 = vst [vmem:[%s198 + $0x90] sm:$0xff] %v235
                %v237 = vld [vmem:[%s197 + $0x128] sm:$0xff]
                %238 = vst [vmem:[%s198 + $0x98] sm:$0xff] %v237
                %v239 = vld [vmem:[%s197 + $0x130] sm:$0xff]
                %240 = vst [vmem:[%s198 + $0xa0] sm:$0xff] %v239
                %v241 = vld [vmem:[%s197 + $0x138] sm:$0xff]
                %242 = vst [vmem:[%s198 + $0xa8] sm:$0xff] %v241
                %v243 = vld [vmem:[%s197 + $0x140] sm:$0xff]
                %244 = vst [vmem:[%s198 + $0xb0] sm:$0xff] %v243
                %v245 = vld [vmem:[%s197 + $0x148] sm:$0xff]
                %246 = vst [vmem:[%s198 + $0xb8] sm:$0xff] %v245
                %v247 = vld [vmem:[%s197 + $0x180] sm:$0xff]
                %248 = vst [vmem:[%s198 + $0xc0] sm:$0xff] %v247
                %v249 = vld [vmem:[%s197 + $0x188] sm:$0xff]
                %250 = vst [vmem:[%s198 + $0xc8] sm:$0xff] %v249
                %v251 = vld [vmem:[%s197 + $0x190] sm:$0xff]
                %252 = vst [vmem:[%s198 + $0xd0] sm:$0xff] %v251
                %v253 = vld [vmem:[%s197 + $0x198] sm:$0xff]
                %254 = vst [vmem:[%s198 + $0xd8] sm:$0xff] %v253
                %v255 = vld [vmem:[%s197 + $0x1a0] sm:$0xff]
                %256 = vst [vmem:[%s198 + $0xe0] sm:$0xff] %v255
                %v257 = vld [vmem:[%s197 + $0x1a8] sm:$0xff]
                %258 = vst [vmem:[%s198 + $0xe8] sm:$0xff] %v257
                %v259 = vld [vmem:[%s197 + $0x1e0] sm:$0xff]
                %260 = vst [vmem:[%s198 + $0xf0] sm:$0xff] %v259
                %v261 = vld [vmem:[%s197 + $0x1e8] sm:$0xff]
                %262 = vst [vmem:[%s198 + $0xf8] sm:$0xff] %v261
                %v263 = vld [vmem:[%s197 + $0x1f0] sm:$0xff]
                %264 = vst [vmem:[%s198 + $0x100] sm:$0xff] %v263
                %v265 = vld [vmem:[%s197 + $0x1f8] sm:$0xff]
                %266 = vst [vmem:[%s198 + $0x108] sm:$0xff] %v265
                %v267 = vld [vmem:[%s197 + $0x200] sm:$0xff]
                %268 = vst [vmem:[%s198 + $0x110] sm:$0xff] %v267
                %v269 = vld [vmem:[%s197 + $0x208] sm:$0xff]
                %270 = vst [vmem:[%s198 + $0x118] sm:$0xff] %v269
                %v271 = vld [vmem:[%s197 + $0x240] sm:$0xff]
                %272 = vst [vmem:[%s198 + $0x120] sm:$0xff] %v271
                %v273 = vld [vmem:[%s197 + $0x248] sm:$0xff]
                %274 = vst [vmem:[%s198 + $0x128] sm:$0xff] %v273
                %v275 = vld [vmem:[%s197 + $0x250] sm:$0xff]
                %276 = vst [vmem:[%s198 + $0x130] sm:$0xff] %v275
                %v277 = vld [vmem:[%s197 + $0x258] sm:$0xff]
                %278 = vst [vmem:[%s198 + $0x138] sm:$0xff] %v277
                %v279 = vld [vmem:[%s197 + $0x260] sm:$0xff]
                %280 = vst [vmem:[%s198 + $0x140] sm:$0xff] %v279
                %v281 = vld [vmem:[%s197 + $0x268] sm:$0xff]
                %282 = vst [vmem:[%s198 + $0x148] sm:$0xff] %v281
                %v283 = vld [vmem:[%s197 + $0x2a0] sm:$0xff]
                %284 = vst [vmem:[%s198 + $0x150] sm:$0xff] %v283
                %v285 = vld [vmem:[%s197 + $0x2a8] sm:$0xff]
                %286 = vst [vmem:[%s198 + $0x158] sm:$0xff] %v285
                %v287 = vld [vmem:[%s197 + $0x2b0] sm:$0xff]
                %288 = vst [vmem:[%s198 + $0x160] sm:$0xff] %v287
                %v289 = vld [vmem:[%s197 + $0x2b8] sm:$0xff]
                %290 = vst [vmem:[%s198 + $0x168] sm:$0xff] %v289
                %v291 = vld [vmem:[%s197 + $0x2c0] sm:$0xff]
                %292 = vst [vmem:[%s198 + $0x170] sm:$0xff] %v291
                %v293 = vld [vmem:[%s197 + $0x2c8] sm:$0xff]
                %294 = vst [vmem:[%s198 + $0x178] sm:$0xff] %v293
                %v295 = vld [vmem:[%s197 + $0x300] sm:$0xff]
                %296 = vst [vmem:[%s198 + $0x180] sm:$0xff] %v295
                %v297 = vld [vmem:[%s197 + $0x308] sm:$0xff]
                %298 = vst [vmem:[%s198 + $0x188] sm:$0xff] %v297
                %v299 = vld [vmem:[%s197 + $0x310] sm:$0xff]
                %300 = vst [vmem:[%s198 + $0x190] sm:$0xff] %v299
                %v301 = vld [vmem:[%s197 + $0x318] sm:$0xff]
                %302 = vst [vmem:[%s198 + $0x198] sm:$0xff] %v301
                %v303 = vld [vmem:[%s197 + $0x320] sm:$0xff]
                %304 = vst [vmem:[%s198 + $0x1a0] sm:$0xff] %v303
                %v305 = vld [vmem:[%s197 + $0x328] sm:$0xff]
                %306 = vst [vmem:[%s198 + $0x1a8] sm:$0xff] %v305
                %v307 = vld [vmem:[%s197 + $0x360] sm:$0xff]
                %308 = vst [vmem:[%s198 + $0x1b0] sm:$0xff] %v307
                %v309 = vld [vmem:[%s197 + $0x368] sm:$0xff]
                %310 = vst [vmem:[%s198 + $0x1b8] sm:$0xff] %v309
                %v311 = vld [vmem:[%s197 + $0x370] sm:$0xff]
                %312 = vst [vmem:[%s198 + $0x1c0] sm:$0xff] %v311
                %v313 = vld [vmem:[%s197 + $0x378] sm:$0xff]
                %314 = vst [vmem:[%s198 + $0x1c8] sm:$0xff] %v313
                %v315 = vld [vmem:[%s197 + $0x380] sm:$0xff]
                %316 = vst [vmem:[%s198 + $0x1d0] sm:$0xff] %v315
                %v317 = vld [vmem:[%s197 + $0x388] sm:$0xff]
                %318 = vst [vmem:[%s198 + $0x1d8] sm:$0xff] %v317
                %v319 = vld [vmem:[%s197 + $0x3c0] sm:$0xff]
                %320 = vst [vmem:[%s198 + $0x1e0] sm:$0xff] %v319
                %v321 = vld [vmem:[%s197 + $0x3c8] sm:$0xff]
                %322 = vst [vmem:[%s198 + $0x1e8] sm:$0xff] %v321
                %v323 = vld [vmem:[%s197 + $0x3d0] sm:$0xff]
                %324 = vst [vmem:[%s198 + $0x1f0] sm:$0xff] %v323
                %v325 = vld [vmem:[%s197 + $0x3d8] sm:$0xff]
                %326 = vst [vmem:[%s198 + $0x1f8] sm:$0xff] %v325
                %v327 = vld [vmem:[%s197 + $0x3e0] sm:$0xff]
                %328 = vst [vmem:[%s198 + $0x200] sm:$0xff] %v327
                %v329 = vld [vmem:[%s197 + $0x3e8] sm:$0xff]
                %330 = vst [vmem:[%s198 + $0x208] sm:$0xff] %v329
                %v331 = vld [vmem:[%s197 + $0x420] sm:$0xff]
                %332 = vst [vmem:[%s198 + $0x210] sm:$0xff] %v331
                %v333 = vld [vmem:[%s197 + $0x428] sm:$0xff]
                %334 = vst [vmem:[%s198 + $0x218] sm:$0xff] %v333
                %v335 = vld [vmem:[%s197 + $0x430] sm:$0xff]
                %336 = vst [vmem:[%s198 + $0x220] sm:$0xff] %v335
                %v337 = vld [vmem:[%s197 + $0x438] sm:$0xff]
                %338 = vst [vmem:[%s198 + $0x228] sm:$0xff] %v337
                %v339 = vld [vmem:[%s197 + $0x440] sm:$0xff]
                %340 = vst [vmem:[%s198 + $0x230] sm:$0xff] %v339
                %v341 = vld [vmem:[%s197 + $0x448] sm:$0xff]
                %342 = vst [vmem:[%s198 + $0x238] sm:$0xff] %v341
                %v343 = vld [vmem:[%s197 + $0x480] sm:$0xff]
                %344 = vst [vmem:[%s198 + $0x240] sm:$0xff] %v343
                %v345 = vld [vmem:[%s197 + $0x488] sm:$0xff]
                %346 = vst [vmem:[%s198 + $0x248] sm:$0xff] %v345
                %v347 = vld [vmem:[%s197 + $0x490] sm:$0xff]
                %348 = vst [vmem:[%s198 + $0x250] sm:$0xff] %v347
                %v349 = vld [vmem:[%s197 + $0x498] sm:$0xff]
                %350 = vst [vmem:[%s198 + $0x258] sm:$0xff] %v349
                %v351 = vld [vmem:[%s197 + $0x4a0] sm:$0xff]
                %352 = vst [vmem:[%s198 + $0x260] sm:$0xff] %v351
                %v353 = vld [vmem:[%s197 + $0x4a8] sm:$0xff]
                %354 = vst [vmem:[%s198 + $0x268] sm:$0xff] %v353
                %v355 = vld [vmem:[%s197 + $0x4e0] sm:$0xff]
                %356 = vst [vmem:[%s198 + $0x270] sm:$0xff] %v355
                %v357 = vld [vmem:[%s197 + $0x4e8] sm:$0xff]
                %358 = vst [vmem:[%s198 + $0x278] sm:$0xff] %v357
                %v359 = vld [vmem:[%s197 + $0x4f0] sm:$0xff]
                %360 = vst [vmem:[%s198 + $0x280] sm:$0xff] %v359
                %v361 = vld [vmem:[%s197 + $0x4f8] sm:$0xff]
                %362 = vst [vmem:[%s198 + $0x288] sm:$0xff] %v361
                %v363 = vld [vmem:[%s197 + $0x500] sm:$0xff]
                %364 = vst [vmem:[%s198 + $0x290] sm:$0xff] %v363
                %v365 = vld [vmem:[%s197 + $0x508] sm:$0xff]
                %366 = vst [vmem:[%s198 + $0x298] sm:$0xff] %v365
                %v367 = vld [vmem:[%s197 + $0x540] sm:$0xff]
                %368 = vst [vmem:[%s198 + $0x2a0] sm:$0xff] %v367
                %v369 = vld [vmem:[%s197 + $0x548] sm:$0xff]
                %370 = vst [vmem:[%s198 + $0x2a8] sm:$0xff] %v369
                %v371 = vld [vmem:[%s197 + $0x550] sm:$0xff]
                %372 = vst [vmem:[%s198 + $0x2b0] sm:$0xff] %v371
                %v373 = vld [vmem:[%s197 + $0x558] sm:$0xff]
                %374 = vst [vmem:[%s198 + $0x2b8] sm:$0xff] %v373
                %v375 = vld [vmem:[%s197 + $0x560] sm:$0xff]
                %376 = vst [vmem:[%s198 + $0x2c0] sm:$0xff] %v375
                %v377 = vld [vmem:[%s197 + $0x568] sm:$0xff]
                %378 = vst [vmem:[%s198 + $0x2c8] sm:$0xff] %v377
                %v379 = vld [vmem:[%s197 + $0x5a0] sm:$0xff]
                %380 = vst [vmem:[%s198 + $0x2d0] sm:$0xff] %v379
                %v381 = vld [vmem:[%s197 + $0x5a8] sm:$0xff]
                %382 = vst [vmem:[%s198 + $0x2d8] sm:$0xff] %v381
                %v383 = vld [vmem:[%s197 + $0x5b0] sm:$0xff]
                %384 = vst [vmem:[%s198 + $0x2e0] sm:$0xff] %v383
                %v385 = vld [vmem:[%s197 + $0x5b8] sm:$0xff]
                %386 = vst [vmem:[%s198 + $0x2e8] sm:$0xff] %v385
                %v387 = vld [vmem:[%s197 + $0x5c0] sm:$0xff]
                %388 = vst [vmem:[%s198 + $0x2f0] sm:$0xff] %v387
                %v389 = vld [vmem:[%s197 + $0x5c8] sm:$0xff]
                %390 = vst [vmem:[%s198 + $0x2f8] sm:$0xff] %v389
              $region37: #{model_forward.1} parent=31 // loop_footer
                %s196 = sadd.s32 1, %s192
              $region38: #{model_forward.1} parent=31 // loop_footer_branch
                %191 = sbr.rel target = $region34
              $region39: #{model_forward.1} parent=31 // loop_exit
                _
            $region32: #{model_forward.1} parent=27 // pred_fallthru
              _
            // Predicated region
            $region40: #{model_forward.1} parent=27 // pred_check
              _
            $region41: #{model_forward.1} parent=27 // pred_check_branch
              %392 = sbr.rel target = $region43
            $region42: #{model_forward.1} parent=27 // pred_region
              _
            $region43: #{model_forward.1} parent=27 // pred_fallthru
              _
          $region28: #{model_forward.1} parent=23 // pred_fallthru
            _
          %393 = vnop
        $region24: #{model_forward.1} parent=19 // pred_fallthru
          _
        // Predicated region
        $region44: #{model_forward.1} parent=19 // pred_check
          %p394 = pneg %p73
        $region45: #{model_forward.1} parent=19 // pred_check_branch
          %396 = sbr.rel (%p394) target = $region47
        $region46: #{model_forward.1} parent=19 // pred_region
          %s397 = smul.u32 192, %s21
          %p398 = scmp.lt.s32.totalorder %s397, 383
          %s399 = scalar_select %p398, %s397, 383
          %s400 = smul.addr %s399, 6
          %s401 = smul.addr %s400, 4
          %s402 = scalar_lea.vmem %s1, %s401
          %s403 = smul.u32 192, %s21
        $region47: #{model_forward.1} parent=19 // pred_fallthru
          _
        // Predicated region
        $region48: #{model_forward.1} parent=19 // pred_check
          %p404 = pneg %p120
        $region49: #{model_forward.1} parent=19 // pred_check_branch
          %406 = sbr.rel (%p404) target = $region51
        $region50: #{model_forward.1} parent=19 // pred_region
          %s407 = smul.u32 16, %s20
          %p408 = scmp.lt.s32.totalorder %s407, 47
          %s409 = scalar_select %p408, %s407, 47
          %s410 = smul.addr %s409, 6
          %s411 = smul.addr %s410, 8
          %s412 = scalar_lea.vmem %s3, %s411
          %s413 = smul.u32 16, %s20
        $region51: #{model_forward.1} parent=19 // pred_fallthru
          _
      $region20: #{model_forward.1} parent=5 // pred_fallthru
        _
      %p414 = scmp.le.s32.totalorder 1, %s13
      %p415 = scmp.lt.s32.totalorder %s13, 7
      %p416 = pnand %p414, %p415
      %p417 = pneg %p416
      // Predicated region
      $region52: #{model_forward.1} parent=5 // pred_check
        _
      $region53: #{model_forward.1} parent=5 // pred_check_branch
        %419 = sbr.rel (%p416) target = $region55
      $region54: #{model_forward.1} parent=5 // pred_region
        %s420 = ssub.s32 %s13, 1
        %s421 = sand.u32 %s40, 1
        %s422 = sand.u32 %s40, 1
        %s423 = smul.addr %s422, 768
        %s424 = scalar_lea.vmem [#allocation2], %s423
        // Predicated region
        $region56: #{model_forward.1} parent=54 // pred_check
          %p425 = pneg %p53
        $region57: #{model_forward.1} parent=54 // pred_check_branch
          %427 = sbr.rel (%p425) target = $region59
        $region58: #{model_forward.1} parent=54 // pred_region
          _
        $region59: #{model_forward.1} parent=54 // pred_fallthru
          _
        %s428 = sand.u32 %s40, 1
        %s429 = sand.u32 %s40, 1
        %s430 = smul.addr %s429, 768
        %s431 = scalar_lea.vmem [#allocation2], %s430
        %p432 = pneg %p53
        %p433 = pneg %p50
        %s434 = smul.u32 192, %s23
        %p435 = scmp.lt.s32.totalorder %s434, 383
        %s436 = scalar_select %p435, %s434, 383
        %s437 = smul.addr %s436, 6
        %s438 = smul.addr %s437, 4
        %s439 = scalar_lea.vmem %s1, %s438
        %p440 = pneg %p79
        %p441 = pneg %p76
        %p442 = pneg %p100
        %p443 = pneg %p97
        %s444 = smul.u32 16, %s22
        %p445 = scmp.lt.s32.totalorder %s444, 47
        %s446 = scalar_select %p445, %s444, 47
        %s447 = smul.addr %s446, 6
        %s448 = smul.addr %s447, 8
        %s449 = scalar_lea.vmem %s3, %s448
        %p450 = pneg %p126
        %p451 = pneg %p123
        %p452 = pneg %p152
        %p453 = pneg %p149
        %s454 = sand.u32 %s139, 1
        %s455 = scalar_lea.sflag [#allocation4], %s454
        %s456 = sand.u32 %s139, 1
        %s457 = smul.addr %s456, 768
        %s458 = scalar_lea.vmem [#allocation3], %s457
        %s459 = smul.u32 16, %s22
        %s460 = smul.u32 12, %s23
        %s461 = smul.u32 192, %s23
        %p462 = scmp.lt.s32.totalorder %s461, 383
        %s463 = scalar_select %p462, %s461, 383
        %s464 = smul.addr %s463, 6
        %s465 = smul.addr %s464, 4
        %s466 = scalar_lea.vmem %s1, %s465
        %s467 = smul.u32 192, %s23
        %s468 = smul.u32 16, %s22
        %p469 = scmp.lt.s32.totalorder %s468, 47
        %s470 = scalar_select %p469, %s468, 47
        %s471 = smul.addr %s470, 6
        %s472 = smul.addr %s471, 8
        %s473 = scalar_lea.vmem %s3, %s472
        %s474 = smul.u32 16, %s22
        %s475 = smul.u32 16, %s22
        %p476 = scmp.eq.s32.totalorder %s23, 0
        // Predicated region
        $region60: #{model_forward.1} parent=54 // pred_check
          %p477 = pneg %p476
        $region61: #{model_forward.1} parent=54 // pred_check_branch
          %479 = sbr.rel (%p477) target = $region63
        $region62: #{model_forward.1} parent=54 // pred_region
          %480 = vst [vmem:[%s458] sm:$0xff] 0.0
          %481 = vst [vmem:[%s458 + $0x8] sm:$0xff] 0.0
          %482 = vst [vmem:[%s458 + $0x10] sm:$0xff] 0.0
          %483 = vst [vmem:[%s458 + $0x18] sm:$0xff] 0.0
          %484 = vst [vmem:[%s458 + $0x20] sm:$0xff] 0.0
          %485 = vst [vmem:[%s458 + $0x28] sm:$0xff] 0.0
          %486 = vst [vmem:[%s458 + $0x30] sm:$0xff] 0.0
          %487 = vst [vmem:[%s458 + $0x38] sm:$0xff] 0.0
          %488 = vst [vmem:[%s458 + $0x40] sm:$0xff] 0.0
          %489 = vst [vmem:[%s458 + $0x48] sm:$0xff] 0.0
          %490 = vst [vmem:[%s458 + $0x50] sm:$0xff] 0.0
          %491 = vst [vmem:[%s458 + $0x58] sm:$0xff] 0.0
          %492 = vst [vmem:[%s458 + $0x60] sm:$0xff] 0.0
          %493 = vst [vmem:[%s458 + $0x68] sm:$0xff] 0.0
          %494 = vst [vmem:[%s458 + $0x70] sm:$0xff] 0.0
          %495 = vst [vmem:[%s458 + $0x78] sm:$0xff] 0.0
          %496 = vst [vmem:[%s458 + $0x80] sm:$0xff] 0.0
          %497 = vst [vmem:[%s458 + $0x88] sm:$0xff] 0.0
          %498 = vst [vmem:[%s458 + $0x90] sm:$0xff] 0.0
          %499 = vst [vmem:[%s458 + $0x98] sm:$0xff] 0.0
          %500 = vst [vmem:[%s458 + $0xa0] sm:$0xff] 0.0
          %501 = vst [vmem:[%s458 + $0xa8] sm:$0xff] 0.0
          %502 = vst [vmem:[%s458 + $0xb0] sm:$0xff] 0.0
          %503 = vst [vmem:[%s458 + $0xb8] sm:$0xff] 0.0
          %504 = vst [vmem:[%s458 + $0xc0] sm:$0xff] 0.0
          %505 = vst [vmem:[%s458 + $0xc8] sm:$0xff] 0.0
          %506 = vst [vmem:[%s458 + $0xd0] sm:$0xff] 0.0
          %507 = vst [vmem:[%s458 + $0xd8] sm:$0xff] 0.0
          %508 = vst [vmem:[%s458 + $0xe0] sm:$0xff] 0.0
          %509 = vst [vmem:[%s458 + $0xe8] sm:$0xff] 0.0
          %510 = vst [vmem:[%s458 + $0xf0] sm:$0xff] 0.0
          %511 = vst [vmem:[%s458 + $0xf8] sm:$0xff] 0.0
          %512 = vst [vmem:[%s458 + $0x100] sm:$0xff] 0.0
          %513 = vst [vmem:[%s458 + $0x108] sm:$0xff] 0.0
          %514 = vst [vmem:[%s458 + $0x110] sm:$0xff] 0.0
          %515 = vst [vmem:[%s458 + $0x118] sm:$0xff] 0.0
          %516 = vst [vmem:[%s458 + $0x120] sm:$0xff] 0.0
          %517 = vst [vmem:[%s458 + $0x128] sm:$0xff] 0.0
          %518 = vst [vmem:[%s458 + $0x130] sm:$0xff] 0.0
          %519 = vst [vmem:[%s458 + $0x138] sm:$0xff] 0.0
          %520 = vst [vmem:[%s458 + $0x140] sm:$0xff] 0.0
          %521 = vst [vmem:[%s458 + $0x148] sm:$0xff] 0.0
          %522 = vst [vmem:[%s458 + $0x150] sm:$0xff] 0.0
          %523 = vst [vmem:[%s458 + $0x158] sm:$0xff] 0.0
          %524 = vst [vmem:[%s458 + $0x160] sm:$0xff] 0.0
          %525 = vst [vmem:[%s458 + $0x168] sm:$0xff] 0.0
          %526 = vst [vmem:[%s458 + $0x170] sm:$0xff] 0.0
          %527 = vst [vmem:[%s458 + $0x178] sm:$0xff] 0.0
          %528 = vst [vmem:[%s458 + $0x180] sm:$0xff] 0.0
          %529 = vst [vmem:[%s458 + $0x188] sm:$0xff] 0.0
          %530 = vst [vmem:[%s458 + $0x190] sm:$0xff] 0.0
          %531 = vst [vmem:[%s458 + $0x198] sm:$0xff] 0.0
          %532 = vst [vmem:[%s458 + $0x1a0] sm:$0xff] 0.0
          %533 = vst [vmem:[%s458 + $0x1a8] sm:$0xff] 0.0
          %534 = vst [vmem:[%s458 + $0x1b0] sm:$0xff] 0.0
          %535 = vst [vmem:[%s458 + $0x1b8] sm:$0xff] 0.0
          %536 = vst [vmem:[%s458 + $0x1c0] sm:$0xff] 0.0
          %537 = vst [vmem:[%s458 + $0x1c8] sm:$0xff] 0.0
          %538 = vst [vmem:[%s458 + $0x1d0] sm:$0xff] 0.0
          %539 = vst [vmem:[%s458 + $0x1d8] sm:$0xff] 0.0
          %540 = vst [vmem:[%s458 + $0x1e0] sm:$0xff] 0.0
          %541 = vst [vmem:[%s458 + $0x1e8] sm:$0xff] 0.0
          %542 = vst [vmem:[%s458 + $0x1f0] sm:$0xff] 0.0
          %543 = vst [vmem:[%s458 + $0x1f8] sm:$0xff] 0.0
          %544 = vst [vmem:[%s458 + $0x200] sm:$0xff] 0.0
          %545 = vst [vmem:[%s458 + $0x208] sm:$0xff] 0.0
          %546 = vst [vmem:[%s458 + $0x210] sm:$0xff] 0.0
          %547 = vst [vmem:[%s458 + $0x218] sm:$0xff] 0.0
          %548 = vst [vmem:[%s458 + $0x220] sm:$0xff] 0.0
          %549 = vst [vmem:[%s458 + $0x228] sm:$0xff] 0.0
          %550 = vst [vmem:[%s458 + $0x230] sm:$0xff] 0.0
          %551 = vst [vmem:[%s458 + $0x238] sm:$0xff] 0.0
          %552 = vst [vmem:[%s458 + $0x240] sm:$0xff] 0.0
          %553 = vst [vmem:[%s458 + $0x248] sm:$0xff] 0.0
          %554 = vst [vmem:[%s458 + $0x250] sm:$0xff] 0.0
          %555 = vst [vmem:[%s458 + $0x258] sm:$0xff] 0.0
          %556 = vst [vmem:[%s458 + $0x260] sm:$0xff] 0.0
          %557 = vst [vmem:[%s458 + $0x268] sm:$0xff] 0.0
          %558 = vst [vmem:[%s458 + $0x270] sm:$0xff] 0.0
          %559 = vst [vmem:[%s458 + $0x278] sm:$0xff] 0.0
          %560 = vst [vmem:[%s458 + $0x280] sm:$0xff] 0.0
          %561 = vst [vmem:[%s458 + $0x288] sm:$0xff] 0.0
          %562 = vst [vmem:[%s458 + $0x290] sm:$0xff] 0.0
          %563 = vst [vmem:[%s458 + $0x298] sm:$0xff] 0.0
          %564 = vst [vmem:[%s458 + $0x2a0] sm:$0xff] 0.0
          %565 = vst [vmem:[%s458 + $0x2a8] sm:$0xff] 0.0
          %566 = vst [vmem:[%s458 + $0x2b0] sm:$0xff] 0.0
          %567 = vst [vmem:[%s458 + $0x2b8] sm:$0xff] 0.0
          %568 = vst [vmem:[%s458 + $0x2c0] sm:$0xff] 0.0
          %569 = vst [vmem:[%s458 + $0x2c8] sm:$0xff] 0.0
          %570 = vst [vmem:[%s458 + $0x2d0] sm:$0xff] 0.0
          %571 = vst [vmem:[%s458 + $0x2d8] sm:$0xff] 0.0
          %572 = vst [vmem:[%s458 + $0x2e0] sm:$0xff] 0.0
          %573 = vst [vmem:[%s458 + $0x2e8] sm:$0xff] 0.0
          %574 = vst [vmem:[%s458 + $0x2f0] sm:$0xff] 0.0
          %575 = vst [vmem:[%s458 + $0x2f8] sm:$0xff] 0.0
        $region63: #{model_forward.1} parent=54 // pred_fallthru
          _
        %v576 = vld [vmem:[%s458] sm:$0xff]
        %v577 = vld [vmem:[%s458 + $0x8] sm:$0xff]
        %v578 = vld [vmem:[%s458 + $0x10] sm:$0xff]
        %v579 = vld [vmem:[%s458 + $0x18] sm:$0xff]
        %v580 = vld [vmem:[%s458 + $0x20] sm:$0xff]
        %v581 = vld [vmem:[%s458 + $0x28] sm:$0xff]
        %v582 = vld [vmem:[%s458 + $0x30] sm:$0xff]
        %v583 = vld [vmem:[%s458 + $0x38] sm:$0xff]
        %v584 = vld [vmem:[%s458 + $0x40] sm:$0xff]
        %v585 = vld [vmem:[%s458 + $0x48] sm:$0xff]
        %v586 = vld [vmem:[%s458 + $0x50] sm:$0xff]
        %v587 = vld [vmem:[%s458 + $0x58] sm:$0xff]
        %v588 = vld [vmem:[%s458 + $0x60] sm:$0xff]
        %v589 = vld [vmem:[%s458 + $0x68] sm:$0xff]
        %v590 = vld [vmem:[%s458 + $0x70] sm:$0xff]
        %v591 = vld [vmem:[%s458 + $0x78] sm:$0xff]
        %v592 = vld [vmem:[%s458 + $0x80] sm:$0xff]
        %v593 = vld [vmem:[%s458 + $0x88] sm:$0xff]
        %v594 = vld [vmem:[%s458 + $0x90] sm:$0xff]
        %v595 = vld [vmem:[%s458 + $0x98] sm:$0xff]
        %v596 = vld [vmem:[%s458 + $0xa0] sm:$0xff]
        %v597 = vld [vmem:[%s458 + $0xa8] sm:$0xff]
        %v598 = vld [vmem:[%s458 + $0xb0] sm:$0xff]
        %v599 = vld [vmem:[%s458 + $0xb8] sm:$0xff]
        %v600 = vld [vmem:[%s458 + $0xc0] sm:$0xff]
        %v601 = vld [vmem:[%s458 + $0xc8] sm:$0xff]
        %v602 = vld [vmem:[%s458 + $0xd0] sm:$0xff]
        %v603 = vld [vmem:[%s458 + $0xd8] sm:$0xff]
        %v604 = vld [vmem:[%s458 + $0xe0] sm:$0xff]
        %v605 = vld [vmem:[%s458 + $0xe8] sm:$0xff]
        %v606 = vld [vmem:[%s458 + $0xf0] sm:$0xff]
        %v607 = vld [vmem:[%s458 + $0xf8] sm:$0xff]
        %v608 = vld [vmem:[%s458 + $0x100] sm:$0xff]
        %v609 = vld [vmem:[%s458 + $0x108] sm:$0xff]
        %v610 = vld [vmem:[%s458 + $0x110] sm:$0xff]
        %v611 = vld [vmem:[%s458 + $0x118] sm:$0xff]
        %v612 = vld [vmem:[%s458 + $0x120] sm:$0xff]
        %v613 = vld [vmem:[%s458 + $0x128] sm:$0xff]
        %v614 = vld [vmem:[%s458 + $0x130] sm:$0xff]
        %v615 = vld [vmem:[%s458 + $0x138] sm:$0xff]
        %v616 = vld [vmem:[%s458 + $0x140] sm:$0xff]
        %v617 = vld [vmem:[%s458 + $0x148] sm:$0xff]
        %v618 = vld [vmem:[%s458 + $0x150] sm:$0xff]
        %v619 = vld [vmem:[%s458 + $0x158] sm:$0xff]
        %v620 = vld [vmem:[%s458 + $0x160] sm:$0xff]
        %v621 = vld [vmem:[%s458 + $0x168] sm:$0xff]
        %v622 = vld [vmem:[%s458 + $0x170] sm:$0xff]
        %v623 = vld [vmem:[%s458 + $0x178] sm:$0xff]
        %v624 = vld [vmem:[%s458 + $0x180] sm:$0xff]
        %v625 = vld [vmem:[%s458 + $0x188] sm:$0xff]
        %v626 = vld [vmem:[%s458 + $0x190] sm:$0xff]
        %v627 = vld [vmem:[%s458 + $0x198] sm:$0xff]
        %v628 = vld [vmem:[%s458 + $0x1a0] sm:$0xff]
        %v629 = vld [vmem:[%s458 + $0x1a8] sm:$0xff]
        %v630 = vld [vmem:[%s458 + $0x1b0] sm:$0xff]
        %v631 = vld [vmem:[%s458 + $0x1b8] sm:$0xff]
        %v632 = vld [vmem:[%s458 + $0x1c0] sm:$0xff]
        %v633 = vld [vmem:[%s458 + $0x1c8] sm:$0xff]
        %v634 = vld [vmem:[%s458 + $0x1d0] sm:$0xff]
        %v635 = vld [vmem:[%s458 + $0x1d8] sm:$0xff]
        %v636 = vld [vmem:[%s458 + $0x1e0] sm:$0xff]
        %v637 = vld [vmem:[%s458 + $0x1e8] sm:$0xff]
        %v638 = vld [vmem:[%s458 + $0x1f0] sm:$0xff]
        %v639 = vld [vmem:[%s458 + $0x1f8] sm:$0xff]
        %v640 = vld [vmem:[%s458 + $0x200] sm:$0xff]
        %v641 = vld [vmem:[%s458 + $0x208] sm:$0xff]
        %v642 = vld [vmem:[%s458 + $0x210] sm:$0xff]
        %v643 = vld [vmem:[%s458 + $0x218] sm:$0xff]
        %v644 = vld [vmem:[%s458 + $0x220] sm:$0xff]
        %v645 = vld [vmem:[%s458 + $0x228] sm:$0xff]
        %v646 = vld [vmem:[%s458 + $0x230] sm:$0xff]
        %v647 = vld [vmem:[%s458 + $0x238] sm:$0xff]
        %v648 = vld [vmem:[%s458 + $0x240] sm:$0xff]
        %v649 = vld [vmem:[%s458 + $0x248] sm:$0xff]
        %v650 = vld [vmem:[%s458 + $0x250] sm:$0xff]
        %v651 = vld [vmem:[%s458 + $0x258] sm:$0xff]
        %v652 = vld [vmem:[%s458 + $0x260] sm:$0xff]
        %v653 = vld [vmem:[%s458 + $0x268] sm:$0xff]
        %v654 = vld [vmem:[%s458 + $0x270] sm:$0xff]
        %v655 = vld [vmem:[%s458 + $0x278] sm:$0xff]
        %v656 = vld [vmem:[%s458 + $0x280] sm:$0xff]
        %v657 = vld [vmem:[%s458 + $0x288] sm:$0xff]
        %v658 = vld [vmem:[%s458 + $0x290] sm:$0xff]
        %v659 = vld [vmem:[%s458 + $0x298] sm:$0xff]
        %v660 = vld [vmem:[%s458 + $0x2a0] sm:$0xff]
        %v661 = vld [vmem:[%s458 + $0x2a8] sm:$0xff]
        %v662 = vld [vmem:[%s458 + $0x2b0] sm:$0xff]
        %v663 = vld [vmem:[%s458 + $0x2b8] sm:$0xff]
        %v664 = vld [vmem:[%s458 + $0x2c0] sm:$0xff]
        %v665 = vld [vmem:[%s458 + $0x2c8] sm:$0xff]
        %v666 = vld [vmem:[%s458 + $0x2d0] sm:$0xff]
        %v667 = vld [vmem:[%s458 + $0x2d8] sm:$0xff]
        %v668 = vld [vmem:[%s458 + $0x2e0] sm:$0xff]
        %v669 = vld [vmem:[%s458 + $0x2e8] sm:$0xff]
        %v670 = vld [vmem:[%s458 + $0x2f0] sm:$0xff]
        %v671 = vld [vmem:[%s458 + $0x2f8] sm:$0xff]
        %v672 = vld [vmem:[%s424] sm:$0xff]
        %v673 = vld [vmem:[%s424 + $0x8] sm:$0xff]
        %v674 = vld [vmem:[%s424 + $0x10] sm:$0xff]
        %v675 = vld [vmem:[%s424 + $0x18] sm:$0xff]
        %v676 = vld [vmem:[%s424 + $0x20] sm:$0xff]
        %v677 = vld [vmem:[%s424 + $0x28] sm:$0xff]
        %v678 = vld [vmem:[%s424 + $0x30] sm:$0xff]
        %v679 = vld [vmem:[%s424 + $0x38] sm:$0xff]
        %v680 = vld [vmem:[%s424 + $0x40] sm:$0xff]
        %v681 = vld [vmem:[%s424 + $0x48] sm:$0xff]
        %v682 = vld [vmem:[%s424 + $0x50] sm:$0xff]
        %v683 = vld [vmem:[%s424 + $0x58] sm:$0xff]
        %v684 = vld [vmem:[%s424 + $0x60] sm:$0xff]
        %v685 = vld [vmem:[%s424 + $0x68] sm:$0xff]
        %v686 = vld [vmem:[%s424 + $0x70] sm:$0xff]
        %v687 = vld [vmem:[%s424 + $0x78] sm:$0xff]
        %v688 = vld [vmem:[%s424 + $0x80] sm:$0xff]
        %v689 = vld [vmem:[%s424 + $0x88] sm:$0xff]
        %v690 = vld [vmem:[%s424 + $0x90] sm:$0xff]
        %v691 = vld [vmem:[%s424 + $0x98] sm:$0xff]
        %v692 = vld [vmem:[%s424 + $0xa0] sm:$0xff]
        %v693 = vld [vmem:[%s424 + $0xa8] sm:$0xff]
        %v694 = vld [vmem:[%s424 + $0xb0] sm:$0xff]
        %v695 = vld [vmem:[%s424 + $0xb8] sm:$0xff]
        %v696 = vld [vmem:[%s424 + $0xc0] sm:$0xff]
        %v697 = vld [vmem:[%s424 + $0xc8] sm:$0xff]
        %v698 = vld [vmem:[%s424 + $0xd0] sm:$0xff]
        %v699 = vld [vmem:[%s424 + $0xd8] sm:$0xff]
        %v700 = vld [vmem:[%s424 + $0xe0] sm:$0xff]
        %v701 = vld [vmem:[%s424 + $0xe8] sm:$0xff]
        %v702 = vld [vmem:[%s424 + $0xf0] sm:$0xff]
        %v703 = vld [vmem:[%s424 + $0xf8] sm:$0xff]
        %v704 = vld [vmem:[%s424 + $0x100] sm:$0xff]
        %v705 = vld [vmem:[%s424 + $0x108] sm:$0xff]
        %v706 = vld [vmem:[%s424 + $0x110] sm:$0xff]
        %v707 = vld [vmem:[%s424 + $0x118] sm:$0xff]
        %v708 = vld [vmem:[%s424 + $0x120] sm:$0xff]
        %v709 = vld [vmem:[%s424 + $0x128] sm:$0xff]
        %v710 = vld [vmem:[%s424 + $0x130] sm:$0xff]
        %v711 = vld [vmem:[%s424 + $0x138] sm:$0xff]
        %v712 = vld [vmem:[%s424 + $0x140] sm:$0xff]
        %v713 = vld [vmem:[%s424 + $0x148] sm:$0xff]
        %v714 = vld [vmem:[%s424 + $0x150] sm:$0xff]
        %v715 = vld [vmem:[%s424 + $0x158] sm:$0xff]
        %v716 = vld [vmem:[%s424 + $0x160] sm:$0xff]
        %v717 = vld [vmem:[%s424 + $0x168] sm:$0xff]
        %v718 = vld [vmem:[%s424 + $0x170] sm:$0xff]
        %v719 = vld [vmem:[%s424 + $0x178] sm:$0xff]
        %v720 = vld [vmem:[%s424 + $0x180] sm:$0xff]
        %v721 = vld [vmem:[%s424 + $0x188] sm:$0xff]
        %v722 = vld [vmem:[%s424 + $0x190] sm:$0xff]
        %v723 = vld [vmem:[%s424 + $0x198] sm:$0xff]
        %v724 = vld [vmem:[%s424 + $0x1a0] sm:$0xff]
        %v725 = vld [vmem:[%s424 + $0x1a8] sm:$0xff]
        %v726 = vld [vmem:[%s424 + $0x1b0] sm:$0xff]
        %v727 = vld [vmem:[%s424 + $0x1b8] sm:$0xff]
        %v728 = vld [vmem:[%s424 + $0x1c0] sm:$0xff]
        %v729 = vld [vmem:[%s424 + $0x1c8] sm:$0xff]
        %v730 = vld [vmem:[%s424 + $0x1d0] sm:$0xff]
        %v731 = vld [vmem:[%s424 + $0x1d8] sm:$0xff]
        %v732 = vld [vmem:[%s424 + $0x1e0] sm:$0xff]
        %v733 = vld [vmem:[%s424 + $0x1e8] sm:$0xff]
        %v734 = vld [vmem:[%s424 + $0x1f0] sm:$0xff]
        %v735 = vld [vmem:[%s424 + $0x1f8] sm:$0xff]
        %v736 = vld [vmem:[%s424 + $0x200] sm:$0xff]
        %v737 = vld [vmem:[%s424 + $0x208] sm:$0xff]
        %v738 = vld [vmem:[%s424 + $0x210] sm:$0xff]
        %v739 = vld [vmem:[%s424 + $0x218] sm:$0xff]
        %v740 = vld [vmem:[%s424 + $0x220] sm:$0xff]
        %v741 = vld [vmem:[%s424 + $0x228] sm:$0xff]
        %v742 = vld [vmem:[%s424 + $0x230] sm:$0xff]
        %v743 = vld [vmem:[%s424 + $0x238] sm:$0xff]
        %v744 = vld [vmem:[%s424 + $0x240] sm:$0xff]
        %v745 = vld [vmem:[%s424 + $0x248] sm:$0xff]
        %v746 = vld [vmem:[%s424 + $0x250] sm:$0xff]
        %v747 = vld [vmem:[%s424 + $0x258] sm:$0xff]
        %v748 = vld [vmem:[%s424 + $0x260] sm:$0xff]
        %v749 = vld [vmem:[%s424 + $0x268] sm:$0xff]
        %v750 = vld [vmem:[%s424 + $0x270] sm:$0xff]
        %v751 = vld [vmem:[%s424 + $0x278] sm:$0xff]
        %v752 = vld [vmem:[%s424 + $0x280] sm:$0xff]
        %v753 = vld [vmem:[%s424 + $0x288] sm:$0xff]
        %v754 = vld [vmem:[%s424 + $0x290] sm:$0xff]
        %v755 = vld [vmem:[%s424 + $0x298] sm:$0xff]
        %v756 = vld [vmem:[%s424 + $0x2a0] sm:$0xff]
        %v757 = vld [vmem:[%s424 + $0x2a8] sm:$0xff]
        %v758 = vld [vmem:[%s424 + $0x2b0] sm:$0xff]
        %v759 = vld [vmem:[%s424 + $0x2b8] sm:$0xff]
        %v760 = vld [vmem:[%s424 + $0x2c0] sm:$0xff]
        %v761 = vld [vmem:[%s424 + $0x2c8] sm:$0xff]
        %v762 = vld [vmem:[%s424 + $0x2d0] sm:$0xff]
        %v763 = vld [vmem:[%s424 + $0x2d8] sm:$0xff]
        %v764 = vld [vmem:[%s424 + $0x2e0] sm:$0xff]
        %v765 = vld [vmem:[%s424 + $0x2e8] sm:$0xff]
        %v766 = vld [vmem:[%s424 + $0x2f0] sm:$0xff]
        %v767 = vld [vmem:[%s424 + $0x2f8] sm:$0xff]
        %v768 = vld [vmem:[%s466] sm:$0xff]
        %v769 = vld [vmem:[%s466 + $0x8] sm:$0xff]
        %v770 = vld [vmem:[%s466 + $0x10] sm:$0xff]
        %v771 = vld [vmem:[%s466 + $0x18] sm:$0xff]
        %v772 = vld [vmem:[%s466 + $0x20] sm:$0xff]
        %v773 = vld [vmem:[%s466 + $0x28] sm:$0xff]
        %v774 = vld [vmem:[%s466 + $0x30] sm:$0xff]
        %v775 = vld [vmem:[%s466 + $0x38] sm:$0xff]
        %v776 = vld [vmem:[%s466 + $0x40] sm:$0xff]
        %v777 = vld [vmem:[%s466 + $0x48] sm:$0xff]
        %v778 = vld [vmem:[%s466 + $0x50] sm:$0xff]
        %v779 = vld [vmem:[%s466 + $0x58] sm:$0xff]
        %v780 = vld [vmem:[%s466 + $0x60] sm:$0xff]
        %v781 = vld [vmem:[%s466 + $0x68] sm:$0xff]
        %v782 = vld [vmem:[%s466 + $0x70] sm:$0xff]
        %v783 = vld [vmem:[%s466 + $0x78] sm:$0xff]
        %v784 = vld [vmem:[%s466 + $0x80] sm:$0xff]
        %v785 = vld [vmem:[%s466 + $0x88] sm:$0xff]
        %v786 = vld [vmem:[%s466 + $0x90] sm:$0xff]
        %v787 = vld [vmem:[%s466 + $0x98] sm:$0xff]
        %v788 = vld [vmem:[%s466 + $0xa0] sm:$0xff]
        %v789 = vld [vmem:[%s466 + $0xa8] sm:$0xff]
        %v790 = vld [vmem:[%s466 + $0xb0] sm:$0xff]
        %v791 = vld [vmem:[%s466 + $0xb8] sm:$0xff]
        %v792 = vld [vmem:[%s466 + $0xc0] sm:$0xff]
        %v793 = vld [vmem:[%s466 + $0xc8] sm:$0xff]
        %v794 = vld [vmem:[%s466 + $0xd0] sm:$0xff]
        %v795 = vld [vmem:[%s466 + $0xd8] sm:$0xff]
        %v796 = vld [vmem:[%s466 + $0xe0] sm:$0xff]
        %v797 = vld [vmem:[%s466 + $0xe8] sm:$0xff]
        %v798 = vld [vmem:[%s466 + $0xf0] sm:$0xff]
        %v799 = vld [vmem:[%s466 + $0xf8] sm:$0xff]
        %v800 = vld [vmem:[%s466 + $0x100] sm:$0xff]
        %v801 = vld [vmem:[%s466 + $0x108] sm:$0xff]
        %v802 = vld [vmem:[%s466 + $0x110] sm:$0xff]
        %v803 = vld [vmem:[%s466 + $0x118] sm:$0xff]
        %v804 = vld [vmem:[%s466 + $0x120] sm:$0xff]
        %v805 = vld [vmem:[%s466 + $0x128] sm:$0xff]
        %v806 = vld [vmem:[%s466 + $0x130] sm:$0xff]
        %v807 = vld [vmem:[%s466 + $0x138] sm:$0xff]
        %v808 = vld [vmem:[%s466 + $0x140] sm:$0xff]
        %v809 = vld [vmem:[%s466 + $0x148] sm:$0xff]
        %v810 = vld [vmem:[%s466 + $0x150] sm:$0xff]
        %v811 = vld [vmem:[%s466 + $0x158] sm:$0xff]
        %v812 = vld [vmem:[%s466 + $0x160] sm:$0xff]
        %v813 = vld [vmem:[%s466 + $0x168] sm:$0xff]
        %v814 = vld [vmem:[%s466 + $0x170] sm:$0xff]
        %v815 = vld [vmem:[%s466 + $0x178] sm:$0xff]
        %v816 = vld [vmem:[%s466 + $0x180] sm:$0xff]
        %v817 = vld [vmem:[%s466 + $0x188] sm:$0xff]
        %v818 = vld [vmem:[%s466 + $0x190] sm:$0xff]
        %v819 = vld [vmem:[%s466 + $0x198] sm:$0xff]
        %v820 = vld [vmem:[%s466 + $0x1a0] sm:$0xff]
        %v821 = vld [vmem:[%s466 + $0x1a8] sm:$0xff]
        %v822 = vld [vmem:[%s466 + $0x1b0] sm:$0xff]
        %v823 = vld [vmem:[%s466 + $0x1b8] sm:$0xff]
        %v824 = vld [vmem:[%s466 + $0x1c0] sm:$0xff]
        %v825 = vld [vmem:[%s466 + $0x1c8] sm:$0xff]
        %v826 = vld [vmem:[%s466 + $0x1d0] sm:$0xff]
        %v827 = vld [vmem:[%s466 + $0x1d8] sm:$0xff]
        %v828 = vld [vmem:[%s466 + $0x1e0] sm:$0xff]
        %v829 = vld [vmem:[%s466 + $0x1e8] sm:$0xff]
        %v830 = vld [vmem:[%s466 + $0x1f0] sm:$0xff]
        %v831 = vld [vmem:[%s466 + $0x1f8] sm:$0xff]
        %v832 = vld [vmem:[%s466 + $0x200] sm:$0xff]
        %v833 = vld [vmem:[%s466 + $0x208] sm:$0xff]
        %v834 = vld [vmem:[%s466 + $0x210] sm:$0xff]
        %v835 = vld [vmem:[%s466 + $0x218] sm:$0xff]
        %v836 = vld [vmem:[%s466 + $0x220] sm:$0xff]
        %v837 = vld [vmem:[%s466 + $0x228] sm:$0xff]
        %v838 = vld [vmem:[%s466 + $0x230] sm:$0xff]
        %v839 = vld [vmem:[%s466 + $0x238] sm:$0xff]
        %v840 = vld [vmem:[%s466 + $0x240] sm:$0xff]
        %v841 = vld [vmem:[%s466 + $0x248] sm:$0xff]
        %v842 = vld [vmem:[%s466 + $0x250] sm:$0xff]
        %v843 = vld [vmem:[%s466 + $0x258] sm:$0xff]
        %v844 = vld [vmem:[%s466 + $0x260] sm:$0xff]
        %v845 = vld [vmem:[%s466 + $0x268] sm:$0xff]
        %v846 = vld [vmem:[%s466 + $0x270] sm:$0xff]
        %v847 = vld [vmem:[%s466 + $0x278] sm:$0xff]
        %v848 = vld [vmem:[%s466 + $0x280] sm:$0xff]
        %v849 = vld [vmem:[%s466 + $0x288] sm:$0xff]
        %v850 = vld [vmem:[%s466 + $0x290] sm:$0xff]
        %v851 = vld [vmem:[%s466 + $0x298] sm:$0xff]
        %v852 = vld [vmem:[%s466 + $0x2a0] sm:$0xff]
        %v853 = vld [vmem:[%s466 + $0x2a8] sm:$0xff]
        %v854 = vld [vmem:[%s466 + $0x2b0] sm:$0xff]
        %v855 = vld [vmem:[%s466 + $0x2b8] sm:$0xff]
        %v856 = vld [vmem:[%s466 + $0x2c0] sm:$0xff]
        %v857 = vld [vmem:[%s466 + $0x2c8] sm:$0xff]
        %v858 = vld [vmem:[%s466 + $0x2d0] sm:$0xff]
        %v859 = vld [vmem:[%s466 + $0x2d8] sm:$0xff]
        %v860 = vld [vmem:[%s466 + $0x2e0] sm:$0xff]
        %v861 = vld [vmem:[%s466 + $0x2e8] sm:$0xff]
        %v862 = vld [vmem:[%s466 + $0x2f0] sm:$0xff]
        %v863 = vld [vmem:[%s466 + $0x2f8] sm:$0xff]
        %v864 = vld [vmem:[%s466 + $0x300] sm:$0xff]
        %v865 = vld [vmem:[%s466 + $0x308] sm:$0xff]
        %v866 = vld [vmem:[%s466 + $0x310] sm:$0xff]
        %v867 = vld [vmem:[%s466 + $0x318] sm:$0xff]
        %v868 = vld [vmem:[%s466 + $0x320] sm:$0xff]
        %v869 = vld [vmem:[%s466 + $0x328] sm:$0xff]
        %v870 = vld [vmem:[%s466 + $0x330] sm:$0xff]
        %v871 = vld [vmem:[%s466 + $0x338] sm:$0xff]
        %v872 = vld [vmem:[%s466 + $0x340] sm:$0xff]
        %v873 = vld [vmem:[%s466 + $0x348] sm:$0xff]
        %v874 = vld [vmem:[%s466 + $0x350] sm:$0xff]
        %v875 = vld [vmem:[%s466 + $0x358] sm:$0xff]
        %v876 = vld [vmem:[%s466 + $0x360] sm:$0xff]
        %v877 = vld [vmem:[%s466 + $0x368] sm:$0xff]
        %v878 = vld [vmem:[%s466 + $0x370] sm:$0xff]
        %v879 = vld [vmem:[%s466 + $0x378] sm:$0xff]
        %v880 = vld [vmem:[%s466 + $0x380] sm:$0xff]
        %v881 = vld [vmem:[%s466 + $0x388] sm:$0xff]
        %v882 = vld [vmem:[%s466 + $0x390] sm:$0xff]
        %v883 = vld [vmem:[%s466 + $0x398] sm:$0xff]
        %v884 = vld [vmem:[%s466 + $0x3a0] sm:$0xff]
        %v885 = vld [vmem:[%s466 + $0x3a8] sm:$0xff]
        %v886 = vld [vmem:[%s466 + $0x3b0] sm:$0xff]
        %v887 = vld [vmem:[%s466 + $0x3b8] sm:$0xff]
        %v888 = vld [vmem:[%s466 + $0x3c0] sm:$0xff]
        %v889 = vld [vmem:[%s466 + $0x3c8] sm:$0xff]
        %v890 = vld [vmem:[%s466 + $0x3d0] sm:$0xff]
        %v891 = vld [vmem:[%s466 + $0x3d8] sm:$0xff]
        %v892 = vld [vmem:[%s466 + $0x3e0] sm:$0xff]
        %v893 = vld [vmem:[%s466 + $0x3e8] sm:$0xff]
        %v894 = vld [vmem:[%s466 + $0x3f0] sm:$0xff]
        %v895 = vld [vmem:[%s466 + $0x3f8] sm:$0xff]
        %v896 = vld [vmem:[%s466 + $0x400] sm:$0xff]
        %v897 = vld [vmem:[%s466 + $0x408] sm:$0xff]
        %v898 = vld [vmem:[%s466 + $0x410] sm:$0xff]
        %v899 = vld [vmem:[%s466 + $0x418] sm:$0xff]
        %v900 = vld [vmem:[%s466 + $0x420] sm:$0xff]
        %v901 = vld [vmem:[%s466 + $0x428] sm:$0xff]
        %v902 = vld [vmem:[%s466 + $0x430] sm:$0xff]
        %v903 = vld [vmem:[%s466 + $0x438] sm:$0xff]
        %v904 = vld [vmem:[%s466 + $0x440] sm:$0xff]
        %v905 = vld [vmem:[%s466 + $0x448] sm:$0xff]
        %v906 = vld [vmem:[%s466 + $0x450] sm:$0xff]
        %v907 = vld [vmem:[%s466 + $0x458] sm:$0xff]
        %v908 = vld [vmem:[%s466 + $0x460] sm:$0xff]
        %v909 = vld [vmem:[%s466 + $0x468] sm:$0xff]
        %v910 = vld [vmem:[%s466 + $0x470] sm:$0xff]
        %v911 = vld [vmem:[%s466 + $0x478] sm:$0xff]
        %v912 = vld [vmem:[%s466 + $0x480] sm:$0xff]
        %v913 = vld [vmem:[%s466 + $0x488] sm:$0xff]
        %v914 = vld [vmem:[%s466 + $0x490] sm:$0xff]
        %v915 = vld [vmem:[%s466 + $0x498] sm:$0xff]
        %v916 = vld [vmem:[%s466 + $0x4a0] sm:$0xff]
        %v917 = vld [vmem:[%s466 + $0x4a8] sm:$0xff]
        %v918 = vld [vmem:[%s466 + $0x4b0] sm:$0xff]
        %v919 = vld [vmem:[%s466 + $0x4b8] sm:$0xff]
        %v920 = vld [vmem:[%s466 + $0x4c0] sm:$0xff]
        %v921 = vld [vmem:[%s466 + $0x4c8] sm:$0xff]
        %v922 = vld [vmem:[%s466 + $0x4d0] sm:$0xff]
        %v923 = vld [vmem:[%s466 + $0x4d8] sm:$0xff]
        %v924 = vld [vmem:[%s466 + $0x4e0] sm:$0xff]
        %v925 = vld [vmem:[%s466 + $0x4e8] sm:$0xff]
        %v926 = vld [vmem:[%s466 + $0x4f0] sm:$0xff]
        %v927 = vld [vmem:[%s466 + $0x4f8] sm:$0xff]
        %v928 = vld [vmem:[%s466 + $0x500] sm:$0xff]
        %v929 = vld [vmem:[%s466 + $0x508] sm:$0xff]
        %v930 = vld [vmem:[%s466 + $0x510] sm:$0xff]
        %v931 = vld [vmem:[%s466 + $0x518] sm:$0xff]
        %v932 = vld [vmem:[%s466 + $0x520] sm:$0xff]
        %v933 = vld [vmem:[%s466 + $0x528] sm:$0xff]
        %v934 = vld [vmem:[%s466 + $0x530] sm:$0xff]
        %v935 = vld [vmem:[%s466 + $0x538] sm:$0xff]
        %v936 = vld [vmem:[%s466 + $0x540] sm:$0xff]
        %v937 = vld [vmem:[%s466 + $0x548] sm:$0xff]
        %v938 = vld [vmem:[%s466 + $0x550] sm:$0xff]
        %v939 = vld [vmem:[%s466 + $0x558] sm:$0xff]
        %v940 = vld [vmem:[%s466 + $0x560] sm:$0xff]
        %v941 = vld [vmem:[%s466 + $0x568] sm:$0xff]
        %v942 = vld [vmem:[%s466 + $0x570] sm:$0xff]
        %v943 = vld [vmem:[%s466 + $0x578] sm:$0xff]
        %v944 = vld [vmem:[%s466 + $0x580] sm:$0xff]
        %v945 = vld [vmem:[%s466 + $0x588] sm:$0xff]
        %v946 = vld [vmem:[%s466 + $0x590] sm:$0xff]
        %v947 = vld [vmem:[%s466 + $0x598] sm:$0xff]
        %v948 = vld [vmem:[%s466 + $0x5a0] sm:$0xff]
        %v949 = vld [vmem:[%s466 + $0x5a8] sm:$0xff]
        %v950 = vld [vmem:[%s466 + $0x5b0] sm:$0xff]
        %v951 = vld [vmem:[%s466 + $0x5b8] sm:$0xff]
        %v952 = vld [vmem:[%s466 + $0x5c0] sm:$0xff]
        %v953 = vld [vmem:[%s466 + $0x5c8] sm:$0xff]
        %v954 = vld [vmem:[%s466 + $0x5d0] sm:$0xff]
        %v955 = vld [vmem:[%s466 + $0x5d8] sm:$0xff]
        %v956 = vld [vmem:[%s466 + $0x5e0] sm:$0xff]
        %v957 = vld [vmem:[%s466 + $0x5e8] sm:$0xff]
        %v958 = vld [vmem:[%s466 + $0x5f0] sm:$0xff]
        %v959 = vld [vmem:[%s466 + $0x5f8] sm:$0xff]
        %v960 = vld [vmem:[%s466 + $0x600] sm:$0xff]
        %v961 = vld [vmem:[%s466 + $0x608] sm:$0xff]
        %v962 = vld [vmem:[%s466 + $0x610] sm:$0xff]
        %v963 = vld [vmem:[%s466 + $0x618] sm:$0xff]
        %v964 = vld [vmem:[%s466 + $0x620] sm:$0xff]
        %v965 = vld [vmem:[%s466 + $0x628] sm:$0xff]
        %v966 = vld [vmem:[%s466 + $0x630] sm:$0xff]
        %v967 = vld [vmem:[%s466 + $0x638] sm:$0xff]
        %v968 = vld [vmem:[%s466 + $0x640] sm:$0xff]
        %v969 = vld [vmem:[%s466 + $0x648] sm:$0xff]
        %v970 = vld [vmem:[%s466 + $0x650] sm:$0xff]
        %v971 = vld [vmem:[%s466 + $0x658] sm:$0xff]
        %v972 = vld [vmem:[%s466 + $0x660] sm:$0xff]
        %v973 = vld [vmem:[%s466 + $0x668] sm:$0xff]
        %v974 = vld [vmem:[%s466 + $0x670] sm:$0xff]
        %v975 = vld [vmem:[%s466 + $0x678] sm:$0xff]
        %v976 = vld [vmem:[%s466 + $0x680] sm:$0xff]
        %v977 = vld [vmem:[%s466 + $0x688] sm:$0xff]
        %v978 = vld [vmem:[%s466 + $0x690] sm:$0xff]
        %v979 = vld [vmem:[%s466 + $0x698] sm:$0xff]
        %v980 = vld [vmem:[%s466 + $0x6a0] sm:$0xff]
        %v981 = vld [vmem:[%s466 + $0x6a8] sm:$0xff]
        %v982 = vld [vmem:[%s466 + $0x6b0] sm:$0xff]
        %v983 = vld [vmem:[%s466 + $0x6b8] sm:$0xff]
        %v984 = vld [vmem:[%s466 + $0x6c0] sm:$0xff]
        %v985 = vld [vmem:[%s466 + $0x6c8] sm:$0xff]
        %v986 = vld [vmem:[%s466 + $0x6d0] sm:$0xff]
        %v987 = vld [vmem:[%s466 + $0x6d8] sm:$0xff]
        %v988 = vld [vmem:[%s466 + $0x6e0] sm:$0xff]
        %v989 = vld [vmem:[%s466 + $0x6e8] sm:$0xff]
        %v990 = vld [vmem:[%s466 + $0x6f0] sm:$0xff]
        %v991 = vld [vmem:[%s466 + $0x6f8] sm:$0xff]
        %v992 = vld [vmem:[%s466 + $0x700] sm:$0xff]
        %v993 = vld [vmem:[%s466 + $0x708] sm:$0xff]
        %v994 = vld [vmem:[%s466 + $0x710] sm:$0xff]
        %v995 = vld [vmem:[%s466 + $0x718] sm:$0xff]
        %v996 = vld [vmem:[%s466 + $0x720] sm:$0xff]
        %v997 = vld [vmem:[%s466 + $0x728] sm:$0xff]
        %v998 = vld [vmem:[%s466 + $0x730] sm:$0xff]
        %v999 = vld [vmem:[%s466 + $0x738] sm:$0xff]
        %v1000 = vld [vmem:[%s466 + $0x740] sm:$0xff]
        %v1001 = vld [vmem:[%s466 + $0x748] sm:$0xff]
        %v1002 = vld [vmem:[%s466 + $0x750] sm:$0xff]
        %v1003 = vld [vmem:[%s466 + $0x758] sm:$0xff]
        %v1004 = vld [vmem:[%s466 + $0x760] sm:$0xff]
        %v1005 = vld [vmem:[%s466 + $0x768] sm:$0xff]
        %v1006 = vld [vmem:[%s466 + $0x770] sm:$0xff]
        %v1007 = vld [vmem:[%s466 + $0x778] sm:$0xff]
        %v1008 = vld [vmem:[%s466 + $0x780] sm:$0xff]
        %v1009 = vld [vmem:[%s466 + $0x788] sm:$0xff]
        %v1010 = vld [vmem:[%s466 + $0x790] sm:$0xff]
        %v1011 = vld [vmem:[%s466 + $0x798] sm:$0xff]
        %v1012 = vld [vmem:[%s466 + $0x7a0] sm:$0xff]
        %v1013 = vld [vmem:[%s466 + $0x7a8] sm:$0xff]
        %v1014 = vld [vmem:[%s466 + $0x7b0] sm:$0xff]
        %v1015 = vld [vmem:[%s466 + $0x7b8] sm:$0xff]
        %v1016 = vld [vmem:[%s466 + $0x7c0] sm:$0xff]
        %v1017 = vld [vmem:[%s466 + $0x7c8] sm:$0xff]
        %v1018 = vld [vmem:[%s466 + $0x7d0] sm:$0xff]
        %v1019 = vld [vmem:[%s466 + $0x7d8] sm:$0xff]
        %v1020 = vld [vmem:[%s466 + $0x7e0] sm:$0xff]
        %v1021 = vld [vmem:[%s466 + $0x7e8] sm:$0xff]
        %v1022 = vld [vmem:[%s466 + $0x7f0] sm:$0xff]
        %v1023 = vld [vmem:[%s466 + $0x7f8] sm:$0xff]
        %v1024 = vld [vmem:[%s466 + $0x800] sm:$0xff]
        %v1025 = vld [vmem:[%s466 + $0x808] sm:$0xff]
        %v1026 = vld [vmem:[%s466 + $0x810] sm:$0xff]
        %v1027 = vld [vmem:[%s466 + $0x818] sm:$0xff]
        %v1028 = vld [vmem:[%s466 + $0x820] sm:$0xff]
        %v1029 = vld [vmem:[%s466 + $0x828] sm:$0xff]
        %v1030 = vld [vmem:[%s466 + $0x830] sm:$0xff]
        %v1031 = vld [vmem:[%s466 + $0x838] sm:$0xff]
        %v1032 = vld [vmem:[%s466 + $0x840] sm:$0xff]
        %v1033 = vld [vmem:[%s466 + $0x848] sm:$0xff]
        %v1034 = vld [vmem:[%s466 + $0x850] sm:$0xff]
        %v1035 = vld [vmem:[%s466 + $0x858] sm:$0xff]
        %v1036 = vld [vmem:[%s466 + $0x860] sm:$0xff]
        %v1037 = vld [vmem:[%s466 + $0x868] sm:$0xff]
        %v1038 = vld [vmem:[%s466 + $0x870] sm:$0xff]
        %v1039 = vld [vmem:[%s466 + $0x878] sm:$0xff]
        %v1040 = vld [vmem:[%s466 + $0x880] sm:$0xff]
        %v1041 = vld [vmem:[%s466 + $0x888] sm:$0xff]
        %v1042 = vld [vmem:[%s466 + $0x890] sm:$0xff]
        %v1043 = vld [vmem:[%s466 + $0x898] sm:$0xff]
        %v1044 = vld [vmem:[%s466 + $0x8a0] sm:$0xff]
        %v1045 = vld [vmem:[%s466 + $0x8a8] sm:$0xff]
        %v1046 = vld [vmem:[%s466 + $0x8b0] sm:$0xff]
        %v1047 = vld [vmem:[%s466 + $0x8b8] sm:$0xff]
        %v1048 = vld [vmem:[%s466 + $0x8c0] sm:$0xff]
        %v1049 = vld [vmem:[%s466 + $0x8c8] sm:$0xff]
        %v1050 = vld [vmem:[%s466 + $0x8d0] sm:$0xff]
        %v1051 = vld [vmem:[%s466 + $0x8d8] sm:$0xff]
        %v1052 = vld [vmem:[%s466 + $0x8e0] sm:$0xff]
        %v1053 = vld [vmem:[%s466 + $0x8e8] sm:$0xff]
        %v1054 = vld [vmem:[%s466 + $0x8f0] sm:$0xff]
        %v1055 = vld [vmem:[%s466 + $0x8f8] sm:$0xff]
        %v1056 = vld [vmem:[%s466 + $0x900] sm:$0xff]
        %v1057 = vld [vmem:[%s466 + $0x908] sm:$0xff]
        %v1058 = vld [vmem:[%s466 + $0x910] sm:$0xff]
        %v1059 = vld [vmem:[%s466 + $0x918] sm:$0xff]
        %v1060 = vld [vmem:[%s466 + $0x920] sm:$0xff]
        %v1061 = vld [vmem:[%s466 + $0x928] sm:$0xff]
        %v1062 = vld [vmem:[%s466 + $0x930] sm:$0xff]
        %v1063 = vld [vmem:[%s466 + $0x938] sm:$0xff]
        %v1064 = vld [vmem:[%s466 + $0x940] sm:$0xff]
        %v1065 = vld [vmem:[%s466 + $0x948] sm:$0xff]
        %v1066 = vld [vmem:[%s466 + $0x950] sm:$0xff]
        %v1067 = vld [vmem:[%s466 + $0x958] sm:$0xff]
        %v1068 = vld [vmem:[%s466 + $0x960] sm:$0xff]
        %v1069 = vld [vmem:[%s466 + $0x968] sm:$0xff]
        %v1070 = vld [vmem:[%s466 + $0x970] sm:$0xff]
        %v1071 = vld [vmem:[%s466 + $0x978] sm:$0xff]
        %v1072 = vld [vmem:[%s466 + $0x980] sm:$0xff]
        %v1073 = vld [vmem:[%s466 + $0x988] sm:$0xff]
        %v1074 = vld [vmem:[%s466 + $0x990] sm:$0xff]
        %v1075 = vld [vmem:[%s466 + $0x998] sm:$0xff]
        %v1076 = vld [vmem:[%s466 + $0x9a0] sm:$0xff]
        %v1077 = vld [vmem:[%s466 + $0x9a8] sm:$0xff]
        %v1078 = vld [vmem:[%s466 + $0x9b0] sm:$0xff]
        %v1079 = vld [vmem:[%s466 + $0x9b8] sm:$0xff]
        %v1080 = vld [vmem:[%s466 + $0x9c0] sm:$0xff]
        %v1081 = vld [vmem:[%s466 + $0x9c8] sm:$0xff]
        %v1082 = vld [vmem:[%s466 + $0x9d0] sm:$0xff]
        %v1083 = vld [vmem:[%s466 + $0x9d8] sm:$0xff]
        %v1084 = vld [vmem:[%s466 + $0x9e0] sm:$0xff]
        %v1085 = vld [vmem:[%s466 + $0x9e8] sm:$0xff]
        %v1086 = vld [vmem:[%s466 + $0x9f0] sm:$0xff]
        %v1087 = vld [vmem:[%s466 + $0x9f8] sm:$0xff]
        %v1088 = vld [vmem:[%s466 + $0xa00] sm:$0xff]
        %v1089 = vld [vmem:[%s466 + $0xa08] sm:$0xff]
        %v1090 = vld [vmem:[%s466 + $0xa10] sm:$0xff]
        %v1091 = vld [vmem:[%s466 + $0xa18] sm:$0xff]
        %v1092 = vld [vmem:[%s466 + $0xa20] sm:$0xff]
        %v1093 = vld [vmem:[%s466 + $0xa28] sm:$0xff]
        %v1094 = vld [vmem:[%s466 + $0xa30] sm:$0xff]
        %v1095 = vld [vmem:[%s466 + $0xa38] sm:$0xff]
        %v1096 = vld [vmem:[%s466 + $0xa40] sm:$0xff]
        %v1097 = vld [vmem:[%s466 + $0xa48] sm:$0xff]
        %v1098 = vld [vmem:[%s466 + $0xa50] sm:$0xff]
        %v1099 = vld [vmem:[%s466 + $0xa58] sm:$0xff]
        %v1100 = vld [vmem:[%s466 + $0xa60] sm:$0xff]
        %v1101 = vld [vmem:[%s466 + $0xa68] sm:$0xff]
        %v1102 = vld [vmem:[%s466 + $0xa70] sm:$0xff]
        %v1103 = vld [vmem:[%s466 + $0xa78] sm:$0xff]
        %v1104 = vld [vmem:[%s466 + $0xa80] sm:$0xff]
        %v1105 = vld [vmem:[%s466 + $0xa88] sm:$0xff]
        %v1106 = vld [vmem:[%s466 + $0xa90] sm:$0xff]
        %v1107 = vld [vmem:[%s466 + $0xa98] sm:$0xff]
        %v1108 = vld [vmem:[%s466 + $0xaa0] sm:$0xff]
        %v1109 = vld [vmem:[%s466 + $0xaa8] sm:$0xff]
        %v1110 = vld [vmem:[%s466 + $0xab0] sm:$0xff]
        %v1111 = vld [vmem:[%s466 + $0xab8] sm:$0xff]
        %v1112 = vld [vmem:[%s466 + $0xac0] sm:$0xff]
        %v1113 = vld [vmem:[%s466 + $0xac8] sm:$0xff]
        %v1114 = vld [vmem:[%s466 + $0xad0] sm:$0xff]
        %v1115 = vld [vmem:[%s466 + $0xad8] sm:$0xff]
        %v1116 = vld [vmem:[%s466 + $0xae0] sm:$0xff]
        %v1117 = vld [vmem:[%s466 + $0xae8] sm:$0xff]
        %v1118 = vld [vmem:[%s466 + $0xaf0] sm:$0xff]
        %v1119 = vld [vmem:[%s466 + $0xaf8] sm:$0xff]
        %v1120 = vld [vmem:[%s466 + $0xb00] sm:$0xff]
        %v1121 = vld [vmem:[%s466 + $0xb08] sm:$0xff]
        %v1122 = vld [vmem:[%s466 + $0xb10] sm:$0xff]
        %v1123 = vld [vmem:[%s466 + $0xb18] sm:$0xff]
        %v1124 = vld [vmem:[%s466 + $0xb20] sm:$0xff]
        %v1125 = vld [vmem:[%s466 + $0xb28] sm:$0xff]
        %v1126 = vld [vmem:[%s466 + $0xb30] sm:$0xff]
        %v1127 = vld [vmem:[%s466 + $0xb38] sm:$0xff]
        %v1128 = vld [vmem:[%s466 + $0xb40] sm:$0xff]
        %v1129 = vld [vmem:[%s466 + $0xb48] sm:$0xff]
        %v1130 = vld [vmem:[%s466 + $0xb50] sm:$0xff]
        %v1131 = vld [vmem:[%s466 + $0xb58] sm:$0xff]
        %v1132 = vld [vmem:[%s466 + $0xb60] sm:$0xff]
        %v1133 = vld [vmem:[%s466 + $0xb68] sm:$0xff]
        %v1134 = vld [vmem:[%s466 + $0xb70] sm:$0xff]
        %v1135 = vld [vmem:[%s466 + $0xb78] sm:$0xff]
        %v1136 = vld [vmem:[%s466 + $0xb80] sm:$0xff]
        %v1137 = vld [vmem:[%s466 + $0xb88] sm:$0xff]
        %v1138 = vld [vmem:[%s466 + $0xb90] sm:$0xff]
        %v1139 = vld [vmem:[%s466 + $0xb98] sm:$0xff]
        %v1140 = vld [vmem:[%s466 + $0xba0] sm:$0xff]
        %v1141 = vld [vmem:[%s466 + $0xba8] sm:$0xff]
        %v1142 = vld [vmem:[%s466 + $0xbb0] sm:$0xff]
        %v1143 = vld [vmem:[%s466 + $0xbb8] sm:$0xff]
        %v1144 = vld [vmem:[%s466 + $0xbc0] sm:$0xff]
        %v1145 = vld [vmem:[%s466 + $0xbc8] sm:$0xff]
        %v1146 = vld [vmem:[%s466 + $0xbd0] sm:$0xff]
        %v1147 = vld [vmem:[%s466 + $0xbd8] sm:$0xff]
        %v1148 = vld [vmem:[%s466 + $0xbe0] sm:$0xff]
        %v1149 = vld [vmem:[%s466 + $0xbe8] sm:$0xff]
        %v1150 = vld [vmem:[%s466 + $0xbf0] sm:$0xff]
        %v1151 = vld [vmem:[%s466 + $0xbf8] sm:$0xff]
        %v1152 = vld [vmem:[%s466 + $0xc00] sm:$0xff]
        %v1153 = vld [vmem:[%s466 + $0xc08] sm:$0xff]
        %v1154 = vld [vmem:[%s466 + $0xc10] sm:$0xff]
        %v1155 = vld [vmem:[%s466 + $0xc18] sm:$0xff]
        %v1156 = vld [vmem:[%s466 + $0xc20] sm:$0xff]
        %v1157 = vld [vmem:[%s466 + $0xc28] sm:$0xff]
        %v1158 = vld [vmem:[%s466 + $0xc30] sm:$0xff]
        %v1159 = vld [vmem:[%s466 + $0xc38] sm:$0xff]
        %v1160 = vld [vmem:[%s466 + $0xc40] sm:$0xff]
        %v1161 = vld [vmem:[%s466 + $0xc48] sm:$0xff]
        %v1162 = vld [vmem:[%s466 + $0xc50] sm:$0xff]
        %v1163 = vld [vmem:[%s466 + $0xc58] sm:$0xff]
        %v1164 = vld [vmem:[%s466 + $0xc60] sm:$0xff]
        %v1165 = vld [vmem:[%s466 + $0xc68] sm:$0xff]
        %v1166 = vld [vmem:[%s466 + $0xc70] sm:$0xff]
        %v1167 = vld [vmem:[%s466 + $0xc78] sm:$0xff]
        %v1168 = vld [vmem:[%s466 + $0xc80] sm:$0xff]
        %v1169 = vld [vmem:[%s466 + $0xc88] sm:$0xff]
        %v1170 = vld [vmem:[%s466 + $0xc90] sm:$0xff]
        %v1171 = vld [vmem:[%s466 + $0xc98] sm:$0xff]
        %v1172 = vld [vmem:[%s466 + $0xca0] sm:$0xff]
        %v1173 = vld [vmem:[%s466 + $0xca8] sm:$0xff]
        %v1174 = vld [vmem:[%s466 + $0xcb0] sm:$0xff]
        %v1175 = vld [vmem:[%s466 + $0xcb8] sm:$0xff]
        %v1176 = vld [vmem:[%s466 + $0xcc0] sm:$0xff]
        %v1177 = vld [vmem:[%s466 + $0xcc8] sm:$0xff]
        %v1178 = vld [vmem:[%s466 + $0xcd0] sm:$0xff]
        %v1179 = vld [vmem:[%s466 + $0xcd8] sm:$0xff]
        %v1180 = vld [vmem:[%s466 + $0xce0] sm:$0xff]
        %v1181 = vld [vmem:[%s466 + $0xce8] sm:$0xff]
        %v1182 = vld [vmem:[%s466 + $0xcf0] sm:$0xff]
        %v1183 = vld [vmem:[%s466 + $0xcf8] sm:$0xff]
        %v1184 = vld [vmem:[%s466 + $0xd00] sm:$0xff]
        %v1185 = vld [vmem:[%s466 + $0xd08] sm:$0xff]
        %v1186 = vld [vmem:[%s466 + $0xd10] sm:$0xff]
        %v1187 = vld [vmem:[%s466 + $0xd18] sm:$0xff]
        %v1188 = vld [vmem:[%s466 + $0xd20] sm:$0xff]
        %v1189 = vld [vmem:[%s466 + $0xd28] sm:$0xff]
        %v1190 = vld [vmem:[%s466 + $0xd30] sm:$0xff]
        %v1191 = vld [vmem:[%s466 + $0xd38] sm:$0xff]
        %v1192 = vld [vmem:[%s466 + $0xd40] sm:$0xff]
        %v1193 = vld [vmem:[%s466 + $0xd48] sm:$0xff]
        %v1194 = vld [vmem:[%s466 + $0xd50] sm:$0xff]
        %v1195 = vld [vmem:[%s466 + $0xd58] sm:$0xff]
        %v1196 = vld [vmem:[%s466 + $0xd60] sm:$0xff]
        %v1197 = vld [vmem:[%s466 + $0xd68] sm:$0xff]
        %v1198 = vld [vmem:[%s466 + $0xd70] sm:$0xff]
        %v1199 = vld [vmem:[%s466 + $0xd78] sm:$0xff]
        %v1200 = vld [vmem:[%s466 + $0xd80] sm:$0xff]
        %v1201 = vld [vmem:[%s466 + $0xd88] sm:$0xff]
        %v1202 = vld [vmem:[%s466 + $0xd90] sm:$0xff]
        %v1203 = vld [vmem:[%s466 + $0xd98] sm:$0xff]
        %v1204 = vld [vmem:[%s466 + $0xda0] sm:$0xff]
        %v1205 = vld [vmem:[%s466 + $0xda8] sm:$0xff]
        %v1206 = vld [vmem:[%s466 + $0xdb0] sm:$0xff]
        %v1207 = vld [vmem:[%s466 + $0xdb8] sm:$0xff]
        %v1208 = vld [vmem:[%s466 + $0xdc0] sm:$0xff]
        %v1209 = vld [vmem:[%s466 + $0xdc8] sm:$0xff]
        %v1210 = vld [vmem:[%s466 + $0xdd0] sm:$0xff]
        %v1211 = vld [vmem:[%s466 + $0xdd8] sm:$0xff]
        %v1212 = vld [vmem:[%s466 + $0xde0] sm:$0xff]
        %v1213 = vld [vmem:[%s466 + $0xde8] sm:$0xff]
        %v1214 = vld [vmem:[%s466 + $0xdf0] sm:$0xff]
        %v1215 = vld [vmem:[%s466 + $0xdf8] sm:$0xff]
        %v1216 = vld [vmem:[%s466 + $0xe00] sm:$0xff]
        %v1217 = vld [vmem:[%s466 + $0xe08] sm:$0xff]
        %v1218 = vld [vmem:[%s466 + $0xe10] sm:$0xff]
        %v1219 = vld [vmem:[%s466 + $0xe18] sm:$0xff]
        %v1220 = vld [vmem:[%s466 + $0xe20] sm:$0xff]
        %v1221 = vld [vmem:[%s466 + $0xe28] sm:$0xff]
        %v1222 = vld [vmem:[%s466 + $0xe30] sm:$0xff]
        %v1223 = vld [vmem:[%s466 + $0xe38] sm:$0xff]
        %v1224 = vld [vmem:[%s466 + $0xe40] sm:$0xff]
        %v1225 = vld [vmem:[%s466 + $0xe48] sm:$0xff]
        %v1226 = vld [vmem:[%s466 + $0xe50] sm:$0xff]
        %v1227 = vld [vmem:[%s466 + $0xe58] sm:$0xff]
        %v1228 = vld [vmem:[%s466 + $0xe60] sm:$0xff]
        %v1229 = vld [vmem:[%s466 + $0xe68] sm:$0xff]
        %v1230 = vld [vmem:[%s466 + $0xe70] sm:$0xff]
        %v1231 = vld [vmem:[%s466 + $0xe78] sm:$0xff]
        %v1232 = vld [vmem:[%s466 + $0xe80] sm:$0xff]
        %v1233 = vld [vmem:[%s466 + $0xe88] sm:$0xff]
        %v1234 = vld [vmem:[%s466 + $0xe90] sm:$0xff]
        %v1235 = vld [vmem:[%s466 + $0xe98] sm:$0xff]
        %v1236 = vld [vmem:[%s466 + $0xea0] sm:$0xff]
        %v1237 = vld [vmem:[%s466 + $0xea8] sm:$0xff]
        %v1238 = vld [vmem:[%s466 + $0xeb0] sm:$0xff]
        %v1239 = vld [vmem:[%s466 + $0xeb8] sm:$0xff]
        %v1240 = vld [vmem:[%s466 + $0xec0] sm:$0xff]
        %v1241 = vld [vmem:[%s466 + $0xec8] sm:$0xff]
        %v1242 = vld [vmem:[%s466 + $0xed0] sm:$0xff]
        %v1243 = vld [vmem:[%s466 + $0xed8] sm:$0xff]
        %v1244 = vld [vmem:[%s466 + $0xee0] sm:$0xff]
        %v1245 = vld [vmem:[%s466 + $0xee8] sm:$0xff]
        %v1246 = vld [vmem:[%s466 + $0xef0] sm:$0xff]
        %v1247 = vld [vmem:[%s466 + $0xef8] sm:$0xff]
        %v1248 = vld [vmem:[%s466 + $0xf00] sm:$0xff]
        %v1249 = vld [vmem:[%s466 + $0xf08] sm:$0xff]
        %v1250 = vld [vmem:[%s466 + $0xf10] sm:$0xff]
        %v1251 = vld [vmem:[%s466 + $0xf18] sm:$0xff]
        %v1252 = vld [vmem:[%s466 + $0xf20] sm:$0xff]
        %v1253 = vld [vmem:[%s466 + $0xf28] sm:$0xff]
        %v1254 = vld [vmem:[%s466 + $0xf30] sm:$0xff]
        %v1255 = vld [vmem:[%s466 + $0xf38] sm:$0xff]
        %v1256 = vld [vmem:[%s466 + $0xf40] sm:$0xff]
        %v1257 = vld [vmem:[%s466 + $0xf48] sm:$0xff]
        %v1258 = vld [vmem:[%s466 + $0xf50] sm:$0xff]
        %v1259 = vld [vmem:[%s466 + $0xf58] sm:$0xff]
        %v1260 = vld [vmem:[%s466 + $0xf60] sm:$0xff]
        %v1261 = vld [vmem:[%s466 + $0xf68] sm:$0xff]
        %v1262 = vld [vmem:[%s466 + $0xf70] sm:$0xff]
        %v1263 = vld [vmem:[%s466 + $0xf78] sm:$0xff]
        %v1264 = vld [vmem:[%s466 + $0xf80] sm:$0xff]
        %v1265 = vld [vmem:[%s466 + $0xf88] sm:$0xff]
        %v1266 = vld [vmem:[%s466 + $0xf90] sm:$0xff]
        %v1267 = vld [vmem:[%s466 + $0xf98] sm:$0xff]
        %v1268 = vld [vmem:[%s466 + $0xfa0] sm:$0xff]
        %v1269 = vld [vmem:[%s466 + $0xfa8] sm:$0xff]
        %v1270 = vld [vmem:[%s466 + $0xfb0] sm:$0xff]
        %v1271 = vld [vmem:[%s466 + $0xfb8] sm:$0xff]
        %v1272 = vld [vmem:[%s466 + $0xfc0] sm:$0xff]
        %v1273 = vld [vmem:[%s466 + $0xfc8] sm:$0xff]
        %v1274 = vld [vmem:[%s466 + $0xfd0] sm:$0xff]
        %v1275 = vld [vmem:[%s466 + $0xfd8] sm:$0xff]
        %v1276 = vld [vmem:[%s466 + $0xfe0] sm:$0xff]
        %v1277 = vld [vmem:[%s466 + $0xfe8] sm:$0xff]
        %v1278 = vld [vmem:[%s466 + $0xff0] sm:$0xff]
        %v1279 = vld [vmem:[%s466 + $0xff8] sm:$0xff]
        %v1280 = vld [vmem:[%s466 + $0x1000] sm:$0xff]
        %v1281 = vld [vmem:[%s466 + $0x1008] sm:$0xff]
        %v1282 = vld [vmem:[%s466 + $0x1010] sm:$0xff]
        %v1283 = vld [vmem:[%s466 + $0x1018] sm:$0xff]
        %v1284 = vld [vmem:[%s466 + $0x1020] sm:$0xff]
        %v1285 = vld [vmem:[%s466 + $0x1028] sm:$0xff]
        %v1286 = vld [vmem:[%s466 + $0x1030] sm:$0xff]
        %v1287 = vld [vmem:[%s466 + $0x1038] sm:$0xff]
        %v1288 = vld [vmem:[%s466 + $0x1040] sm:$0xff]
        %v1289 = vld [vmem:[%s466 + $0x1048] sm:$0xff]
        %v1290 = vld [vmem:[%s466 + $0x1050] sm:$0xff]
        %v1291 = vld [vmem:[%s466 + $0x1058] sm:$0xff]
        %v1292 = vld [vmem:[%s466 + $0x1060] sm:$0xff]
        %v1293 = vld [vmem:[%s466 + $0x1068] sm:$0xff]
        %v1294 = vld [vmem:[%s466 + $0x1070] sm:$0xff]
        %v1295 = vld [vmem:[%s466 + $0x1078] sm:$0xff]
        %v1296 = vld [vmem:[%s466 + $0x1080] sm:$0xff]
        %v1297 = vld [vmem:[%s466 + $0x1088] sm:$0xff]
        %v1298 = vld [vmem:[%s466 + $0x1090] sm:$0xff]
        %v1299 = vld [vmem:[%s466 + $0x1098] sm:$0xff]
        %v1300 = vld [vmem:[%s466 + $0x10a0] sm:$0xff]
        %v1301 = vld [vmem:[%s466 + $0x10a8] sm:$0xff]
        %v1302 = vld [vmem:[%s466 + $0x10b0] sm:$0xff]
        %v1303 = vld [vmem:[%s466 + $0x10b8] sm:$0xff]
        %v1304 = vld [vmem:[%s466 + $0x10c0] sm:$0xff]
        %v1305 = vld [vmem:[%s466 + $0x10c8] sm:$0xff]
        %v1306 = vld [vmem:[%s466 + $0x10d0] sm:$0xff]
        %v1307 = vld [vmem:[%s466 + $0x10d8] sm:$0xff]
        %v1308 = vld [vmem:[%s466 + $0x10e0] sm:$0xff]
        %v1309 = vld [vmem:[%s466 + $0x10e8] sm:$0xff]
        %v1310 = vld [vmem:[%s466 + $0x10f0] sm:$0xff]
        %v1311 = vld [vmem:[%s466 + $0x10f8] sm:$0xff]
        %v1312 = vld [vmem:[%s466 + $0x1100] sm:$0xff]
        %v1313 = vld [vmem:[%s466 + $0x1108] sm:$0xff]
        %v1314 = vld [vmem:[%s466 + $0x1110] sm:$0xff]
        %v1315 = vld [vmem:[%s466 + $0x1118] sm:$0xff]
        %v1316 = vld [vmem:[%s466 + $0x1120] sm:$0xff]
        %v1317 = vld [vmem:[%s466 + $0x1128] sm:$0xff]
        %v1318 = vld [vmem:[%s466 + $0x1130] sm:$0xff]
        %v1319 = vld [vmem:[%s466 + $0x1138] sm:$0xff]
        %v1320 = vld [vmem:[%s466 + $0x1140] sm:$0xff]
        %v1321 = vld [vmem:[%s466 + $0x1148] sm:$0xff]
        %v1322 = vld [vmem:[%s466 + $0x1150] sm:$0xff]
        %v1323 = vld [vmem:[%s466 + $0x1158] sm:$0xff]
        %v1324 = vld [vmem:[%s466 + $0x1160] sm:$0xff]
        %v1325 = vld [vmem:[%s466 + $0x1168] sm:$0xff]
        %v1326 = vld [vmem:[%s466 + $0x1170] sm:$0xff]
        %v1327 = vld [vmem:[%s466 + $0x1178] sm:$0xff]
        %v1328 = vld [vmem:[%s466 + $0x1180] sm:$0xff]
        %v1329 = vld [vmem:[%s466 + $0x1188] sm:$0xff]
        %v1330 = vld [vmem:[%s466 + $0x1190] sm:$0xff]
        %v1331 = vld [vmem:[%s466 + $0x1198] sm:$0xff]
        %v1332 = vld [vmem:[%s466 + $0x11a0] sm:$0xff]
        %v1333 = vld [vmem:[%s466 + $0x11a8] sm:$0xff]
        %v1334 = vld [vmem:[%s466 + $0x11b0] sm:$0xff]
        %v1335 = vld [vmem:[%s466 + $0x11b8] sm:$0xff]
        %v1336 = vld [vmem:[%s466 + $0x11c0] sm:$0xff]
        %v1337 = vld [vmem:[%s466 + $0x11c8] sm:$0xff]
        %v1338 = vld [vmem:[%s466 + $0x11d0] sm:$0xff]
        %v1339 = vld [vmem:[%s466 + $0x11d8] sm:$0xff]
        %v1340 = vld [vmem:[%s466 + $0x11e0] sm:$0xff]
        %v1341 = vld [vmem:[%s466 + $0x11e8] sm:$0xff]
        %v1342 = vld [vmem:[%s466 + $0x11f0] sm:$0xff]
        %v1343 = vld [vmem:[%s466 + $0x11f8] sm:$0xff]
        %v1440 = vunpack.c.l.b16 %v672
        %v1441 = vunpack.c.h.b16 %v672
        %v1442 = vunpack.c.l.b16 %v673
        %v1443 = vunpack.c.h.b16 %v673
        %v1444 = vunpack.c.l.b16 %v674
        %v1445 = vunpack.c.h.b16 %v674
        %v1446 = vunpack.c.l.b16 %v675
        %v1447 = vunpack.c.h.b16 %v675
        %v1448 = vunpack.c.l.b16 %v676
        %v1449 = vunpack.c.h.b16 %v676
        %v1450 = vunpack.c.l.b16 %v677
        %v1451 = vunpack.c.h.b16 %v677
        %v1452 = vunpack.c.l.b16 %v678
        %v1453 = vunpack.c.h.b16 %v678
        %v1454 = vunpack.c.l.b16 %v679
        %v1455 = vunpack.c.h.b16 %v679
        %v1456 = vunpack.c.l.b16 %v680
        %v1457 = vunpack.c.h.b16 %v680
        %v1458 = vunpack.c.l.b16 %v681
        %v1459 = vunpack.c.h.b16 %v681
        %v1460 = vunpack.c.l.b16 %v682
        %v1461 = vunpack.c.h.b16 %v682
        %v1462 = vunpack.c.l.b16 %v683
        %v1463 = vunpack.c.h.b16 %v683
        %v1464 = vunpack.c.l.b16 %v684
        %v1465 = vunpack.c.h.b16 %v684
        %v1466 = vunpack.c.l.b16 %v685
        %v1467 = vunpack.c.h.b16 %v685
        %v1468 = vunpack.c.l.b16 %v686
        %v1469 = vunpack.c.h.b16 %v686
        %v1470 = vunpack.c.l.b16 %v687
        %v1471 = vunpack.c.h.b16 %v687
        %v1472 = vunpack.c.l.b16 %v688
        %v1473 = vunpack.c.h.b16 %v688
        %v1474 = vunpack.c.l.b16 %v689
        %v1475 = vunpack.c.h.b16 %v689
        %v1476 = vunpack.c.l.b16 %v690
        %v1477 = vunpack.c.h.b16 %v690
        %v1478 = vunpack.c.l.b16 %v691
        %v1479 = vunpack.c.h.b16 %v691
        %v1480 = vunpack.c.l.b16 %v692
        %v1481 = vunpack.c.h.b16 %v692
        %v1482 = vunpack.c.l.b16 %v693
        %v1483 = vunpack.c.h.b16 %v693
        %v1484 = vunpack.c.l.b16 %v694
        %v1485 = vunpack.c.h.b16 %v694
        %v1486 = vunpack.c.l.b16 %v695
        %v1487 = vunpack.c.h.b16 %v695
        %v1488 = vunpack.c.l.b16 %v696
        %v1489 = vunpack.c.h.b16 %v696
        %v1490 = vunpack.c.l.b16 %v697
        %v1491 = vunpack.c.h.b16 %v697
        %v1492 = vunpack.c.l.b16 %v698
        %v1493 = vunpack.c.h.b16 %v698
        %v1494 = vunpack.c.l.b16 %v699
        %v1495 = vunpack.c.h.b16 %v699
        %v1496 = vunpack.c.l.b16 %v700
        %v1497 = vunpack.c.h.b16 %v700
        %v1498 = vunpack.c.l.b16 %v701
        %v1499 = vunpack.c.h.b16 %v701
        %v1500 = vunpack.c.l.b16 %v702
        %v1501 = vunpack.c.h.b16 %v702
        %v1502 = vunpack.c.l.b16 %v703
        %v1503 = vunpack.c.h.b16 %v703
        %v1504 = vunpack.c.l.b16 %v704
        %v1505 = vunpack.c.h.b16 %v704
        %v1506 = vunpack.c.l.b16 %v705
        %v1507 = vunpack.c.h.b16 %v705
        %v1508 = vunpack.c.l.b16 %v706
        %v1509 = vunpack.c.h.b16 %v706
        %v1510 = vunpack.c.l.b16 %v707
        %v1511 = vunpack.c.h.b16 %v707
        %v1512 = vunpack.c.l.b16 %v708
        %v1513 = vunpack.c.h.b16 %v708
        %v1514 = vunpack.c.l.b16 %v709
        %v1515 = vunpack.c.h.b16 %v709
        %v1516 = vunpack.c.l.b16 %v710
        %v1517 = vunpack.c.h.b16 %v710
        %v1518 = vunpack.c.l.b16 %v711
        %v1519 = vunpack.c.h.b16 %v711
        %v1520 = vunpack.c.l.b16 %v712
        %v1521 = vunpack.c.h.b16 %v712
        %v1522 = vunpack.c.l.b16 %v713
        %v1523 = vunpack.c.h.b16 %v713
        %v1524 = vunpack.c.l.b16 %v714
        %v1525 = vunpack.c.h.b16 %v714
        %v1526 = vunpack.c.l.b16 %v715
        %v1527 = vunpack.c.h.b16 %v715
        %v1528 = vunpack.c.l.b16 %v716
        %v1529 = vunpack.c.h.b16 %v716
        %v1530 = vunpack.c.l.b16 %v717
        %v1531 = vunpack.c.h.b16 %v717
        %v1532 = vunpack.c.l.b16 %v718
        %v1533 = vunpack.c.h.b16 %v718
        %v1534 = vunpack.c.l.b16 %v719
        %v1535 = vunpack.c.h.b16 %v719
        %v1536 = vunpack.c.l.b16 %v720
        %v1537 = vunpack.c.h.b16 %v720
        %v1538 = vunpack.c.l.b16 %v721
        %v1539 = vunpack.c.h.b16 %v721
        %v1540 = vunpack.c.l.b16 %v722
        %v1541 = vunpack.c.h.b16 %v722
        %v1542 = vunpack.c.l.b16 %v723
        %v1543 = vunpack.c.h.b16 %v723
        %v1544 = vunpack.c.l.b16 %v724
        %v1545 = vunpack.c.h.b16 %v724
        %v1546 = vunpack.c.l.b16 %v725
        %v1547 = vunpack.c.h.b16 %v725
        %v1548 = vunpack.c.l.b16 %v726
        %v1549 = vunpack.c.h.b16 %v726
        %v1550 = vunpack.c.l.b16 %v727
        %v1551 = vunpack.c.h.b16 %v727
        %v1552 = vunpack.c.l.b16 %v728
        %v1553 = vunpack.c.h.b16 %v728
        %v1554 = vunpack.c.l.b16 %v729
        %v1555 = vunpack.c.h.b16 %v729
        %v1556 = vunpack.c.l.b16 %v730
        %v1557 = vunpack.c.h.b16 %v730
        %v1558 = vunpack.c.l.b16 %v731
        %v1559 = vunpack.c.h.b16 %v731
        %v1560 = vunpack.c.l.b16 %v732
        %v1561 = vunpack.c.h.b16 %v732
        %v1562 = vunpack.c.l.b16 %v733
        %v1563 = vunpack.c.h.b16 %v733
        %v1564 = vunpack.c.l.b16 %v734
        %v1565 = vunpack.c.h.b16 %v734
        %v1566 = vunpack.c.l.b16 %v735
        %v1567 = vunpack.c.h.b16 %v735
        %v1568 = vunpack.c.l.b16 %v736
        %v1569 = vunpack.c.h.b16 %v736
        %v1570 = vunpack.c.l.b16 %v737
        %v1571 = vunpack.c.h.b16 %v737
        %v1572 = vunpack.c.l.b16 %v738
        %v1573 = vunpack.c.h.b16 %v738
        %v1574 = vunpack.c.l.b16 %v739
        %v1575 = vunpack.c.h.b16 %v739
        %v1576 = vunpack.c.l.b16 %v740
        %v1577 = vunpack.c.h.b16 %v740
        %v1578 = vunpack.c.l.b16 %v741
        %v1579 = vunpack.c.h.b16 %v741
        %v1580 = vunpack.c.l.b16 %v742
        %v1581 = vunpack.c.h.b16 %v742
        %v1582 = vunpack.c.l.b16 %v743
        %v1583 = vunpack.c.h.b16 %v743
        %v1584 = vunpack.c.l.b16 %v744
        %v1585 = vunpack.c.h.b16 %v744
        %v1586 = vunpack.c.l.b16 %v745
        %v1587 = vunpack.c.h.b16 %v745
        %v1588 = vunpack.c.l.b16 %v746
        %v1589 = vunpack.c.h.b16 %v746
        %v1590 = vunpack.c.l.b16 %v747
        %v1591 = vunpack.c.h.b16 %v747
        %v1592 = vunpack.c.l.b16 %v748
        %v1593 = vunpack.c.h.b16 %v748
        %v1594 = vunpack.c.l.b16 %v749
        %v1595 = vunpack.c.h.b16 %v749
        %v1596 = vunpack.c.l.b16 %v750
        %v1597 = vunpack.c.h.b16 %v750
        %v1598 = vunpack.c.l.b16 %v751
        %v1599 = vunpack.c.h.b16 %v751
        %v1600 = vunpack.c.l.b16 %v752
        %v1601 = vunpack.c.h.b16 %v752
        %v1602 = vunpack.c.l.b16 %v753
        %v1603 = vunpack.c.h.b16 %v753
        %v1604 = vunpack.c.l.b16 %v754
        %v1605 = vunpack.c.h.b16 %v754
        %v1606 = vunpack.c.l.b16 %v755
        %v1607 = vunpack.c.h.b16 %v755
        %v1608 = vunpack.c.l.b16 %v756
        %v1609 = vunpack.c.h.b16 %v756
        %v1610 = vunpack.c.l.b16 %v757
        %v1611 = vunpack.c.h.b16 %v757
        %v1612 = vunpack.c.l.b16 %v758
        %v1613 = vunpack.c.h.b16 %v758
        %v1614 = vunpack.c.l.b16 %v759
        %v1615 = vunpack.c.h.b16 %v759
        %v1616 = vunpack.c.l.b16 %v760
        %v1617 = vunpack.c.h.b16 %v760
        %v1618 = vunpack.c.l.b16 %v761
        %v1619 = vunpack.c.h.b16 %v761
        %v1620 = vunpack.c.l.b16 %v762
        %v1621 = vunpack.c.h.b16 %v762
        %v1622 = vunpack.c.l.b16 %v763
        %v1623 = vunpack.c.h.b16 %v763
        %v1624 = vunpack.c.l.b16 %v764
        %v1625 = vunpack.c.h.b16 %v764
        %v1626 = vunpack.c.l.b16 %v765
        %v1627 = vunpack.c.h.b16 %v765
        %v1628 = vunpack.c.l.b16 %v766
        %v1629 = vunpack.c.h.b16 %v766
        %v1630 = vunpack.c.l.b16 %v767
        %v1631 = vunpack.c.h.b16 %v767
        %v1632 = vpack.c.b16 %v1452, %v1440
        %v1633 = vpack.c.b16 %v1453, %v1441
        %v1634 = vpack.c.b16 %v1454, %v1442
        %v1635 = vpack.c.b16 %v1455, %v1443
        %v1636 = vpack.c.b16 %v1456, %v1444
        %v1637 = vpack.c.b16 %v1457, %v1445
        %v1638 = vpack.c.b16 %v1458, %v1446
        %v1639 = vpack.c.b16 %v1459, %v1447
        %v1640 = vpack.c.b16 %v1460, %v1448
        %v1641 = vpack.c.b16 %v1461, %v1449
        %v1642 = vpack.c.b16 %v1462, %v1450
        %v1643 = vpack.c.b16 %v1463, %v1451
        %v1644 = vpack.c.b16 %v1476, %v1464
        %v1645 = vpack.c.b16 %v1477, %v1465
        %v1646 = vpack.c.b16 %v1478, %v1466
        %v1647 = vpack.c.b16 %v1479, %v1467
        %v1648 = vpack.c.b16 %v1480, %v1468
        %v1649 = vpack.c.b16 %v1481, %v1469
        %v1650 = vpack.c.b16 %v1482, %v1470
        %v1651 = vpack.c.b16 %v1483, %v1471
        %v1652 = vpack.c.b16 %v1484, %v1472
        %v1653 = vpack.c.b16 %v1485, %v1473
        %v1654 = vpack.c.b16 %v1486, %v1474
        %v1655 = vpack.c.b16 %v1487, %v1475
        %v1656 = vpack.c.b16 %v1500, %v1488
        %v1657 = vpack.c.b16 %v1501, %v1489
        %v1658 = vpack.c.b16 %v1502, %v1490
        %v1659 = vpack.c.b16 %v1503, %v1491
        %v1660 = vpack.c.b16 %v1504, %v1492
        %v1661 = vpack.c.b16 %v1505, %v1493
        %v1662 = vpack.c.b16 %v1506, %v1494
        %v1663 = vpack.c.b16 %v1507, %v1495
        %v1664 = vpack.c.b16 %v1508, %v1496
        %v1665 = vpack.c.b16 %v1509, %v1497
        %v1666 = vpack.c.b16 %v1510, %v1498
        %v1667 = vpack.c.b16 %v1511, %v1499
        %v1668 = vpack.c.b16 %v1524, %v1512
        %v1669 = vpack.c.b16 %v1525, %v1513
        %v1670 = vpack.c.b16 %v1526, %v1514
        %v1671 = vpack.c.b16 %v1527, %v1515
        %v1672 = vpack.c.b16 %v1528, %v1516
        %v1673 = vpack.c.b16 %v1529, %v1517
        %v1674 = vpack.c.b16 %v1530, %v1518
        %v1675 = vpack.c.b16 %v1531, %v1519
        %v1676 = vpack.c.b16 %v1532, %v1520
        %v1677 = vpack.c.b16 %v1533, %v1521
        %v1678 = vpack.c.b16 %v1534, %v1522
        %v1679 = vpack.c.b16 %v1535, %v1523
        %v1680 = vpack.c.b16 %v1548, %v1536
        %v1681 = vpack.c.b16 %v1549, %v1537
        %v1682 = vpack.c.b16 %v1550, %v1538
        %v1683 = vpack.c.b16 %v1551, %v1539
        %v1684 = vpack.c.b16 %v1552, %v1540
        %v1685 = vpack.c.b16 %v1553, %v1541
        %v1686 = vpack.c.b16 %v1554, %v1542
        %v1687 = vpack.c.b16 %v1555, %v1543
        %v1688 = vpack.c.b16 %v1556, %v1544
        %v1689 = vpack.c.b16 %v1557, %v1545
        %v1690 = vpack.c.b16 %v1558, %v1546
        %v1691 = vpack.c.b16 %v1559, %v1547
        %v1692 = vpack.c.b16 %v1572, %v1560
        %v1693 = vpack.c.b16 %v1573, %v1561
        %v1694 = vpack.c.b16 %v1574, %v1562
        %v1695 = vpack.c.b16 %v1575, %v1563
        %v1696 = vpack.c.b16 %v1576, %v1564
        %v1697 = vpack.c.b16 %v1577, %v1565
        %v1698 = vpack.c.b16 %v1578, %v1566
        %v1699 = vpack.c.b16 %v1579, %v1567
        %v1700 = vpack.c.b16 %v1580, %v1568
        %v1701 = vpack.c.b16 %v1581, %v1569
        %v1702 = vpack.c.b16 %v1582, %v1570
        %v1703 = vpack.c.b16 %v1583, %v1571
        %v1704 = vpack.c.b16 %v1596, %v1584
        %v1705 = vpack.c.b16 %v1597, %v1585
        %v1706 = vpack.c.b16 %v1598, %v1586
        %v1707 = vpack.c.b16 %v1599, %v1587
        %v1708 = vpack.c.b16 %v1600, %v1588
        %v1709 = vpack.c.b16 %v1601, %v1589
        %v1710 = vpack.c.b16 %v1602, %v1590
        %v1711 = vpack.c.b16 %v1603, %v1591
        %v1712 = vpack.c.b16 %v1604, %v1592
        %v1713 = vpack.c.b16 %v1605, %v1593
        %v1714 = vpack.c.b16 %v1606, %v1594
        %v1715 = vpack.c.b16 %v1607, %v1595
        %v1716 = vpack.c.b16 %v1620, %v1608
        %v1717 = vpack.c.b16 %v1621, %v1609
        %v1718 = vpack.c.b16 %v1622, %v1610
        %v1719 = vpack.c.b16 %v1623, %v1611
        %v1720 = vpack.c.b16 %v1624, %v1612
        %v1721 = vpack.c.b16 %v1625, %v1613
        %v1722 = vpack.c.b16 %v1626, %v1614
        %v1723 = vpack.c.b16 %v1627, %v1615
        %v1724 = vpack.c.b16 %v1628, %v1616
        %v1725 = vpack.c.b16 %v1629, %v1617
        %v1726 = vpack.c.b16 %v1630, %v1618
        %v1727 = vpack.c.b16 %v1631, %v1619
        %v2400 = vunpack.c.l.b16 %v768
        %v2401 = vunpack.c.h.b16 %v768
        %v2402 = vunpack.c.l.b16 %v769
        %v2403 = vunpack.c.h.b16 %v769
        %v2404 = vunpack.c.l.b16 %v770
        %v2405 = vunpack.c.h.b16 %v770
        %v2406 = vunpack.c.l.b16 %v771
        %v2407 = vunpack.c.h.b16 %v771
        %v2408 = vunpack.c.l.b16 %v772
        %v2409 = vunpack.c.h.b16 %v772
        %v2410 = vunpack.c.l.b16 %v773
        %v2411 = vunpack.c.h.b16 %v773
        %v2412 = vunpack.c.l.b16 %v774
        %v2413 = vunpack.c.h.b16 %v774
        %v2414 = vunpack.c.l.b16 %v775
        %v2415 = vunpack.c.h.b16 %v775
        %v2416 = vunpack.c.l.b16 %v776
        %v2417 = vunpack.c.h.b16 %v776
        %v2418 = vunpack.c.l.b16 %v777
        %v2419 = vunpack.c.h.b16 %v777
        %v2420 = vunpack.c.l.b16 %v778
        %v2421 = vunpack.c.h.b16 %v778
        %v2422 = vunpack.c.l.b16 %v779
        %v2423 = vunpack.c.h.b16 %v779
        %v2424 = vunpack.c.l.b16 %v780
        %v2425 = vunpack.c.h.b16 %v780
        %v2426 = vunpack.c.l.b16 %v781
        %v2427 = vunpack.c.h.b16 %v781
        %v2428 = vunpack.c.l.b16 %v782
        %v2429 = vunpack.c.h.b16 %v782
        %v2430 = vunpack.c.l.b16 %v783
        %v2431 = vunpack.c.h.b16 %v783
        %v2432 = vunpack.c.l.b16 %v784
        %v2433 = vunpack.c.h.b16 %v784
        %v2434 = vunpack.c.l.b16 %v785
        %v2435 = vunpack.c.h.b16 %v785
        %v2436 = vunpack.c.l.b16 %v786
        %v2437 = vunpack.c.h.b16 %v786
        %v2438 = vunpack.c.l.b16 %v787
        %v2439 = vunpack.c.h.b16 %v787
        %v2440 = vunpack.c.l.b16 %v788
        %v2441 = vunpack.c.h.b16 %v788
        %v2442 = vunpack.c.l.b16 %v789
        %v2443 = vunpack.c.h.b16 %v789
        %v2444 = vunpack.c.l.b16 %v790
        %v2445 = vunpack.c.h.b16 %v790
        %v2446 = vunpack.c.l.b16 %v791
        %v2447 = vunpack.c.h.b16 %v791
        %v2448 = vunpack.c.l.b16 %v792
        %v2449 = vunpack.c.h.b16 %v792
        %v2450 = vunpack.c.l.b16 %v793
        %v2451 = vunpack.c.h.b16 %v793
        %v2452 = vunpack.c.l.b16 %v794
        %v2453 = vunpack.c.h.b16 %v794
        %v2454 = vunpack.c.l.b16 %v795
        %v2455 = vunpack.c.h.b16 %v795
        %v2456 = vunpack.c.l.b16 %v796
        %v2457 = vunpack.c.h.b16 %v796
        %v2458 = vunpack.c.l.b16 %v797
        %v2459 = vunpack.c.h.b16 %v797
        %v2460 = vunpack.c.l.b16 %v798
        %v2461 = vunpack.c.h.b16 %v798
        %v2462 = vunpack.c.l.b16 %v799
        %v2463 = vunpack.c.h.b16 %v799
        %v2464 = vunpack.c.l.b16 %v800
        %v2465 = vunpack.c.h.b16 %v800
        %v2466 = vunpack.c.l.b16 %v801
        %v2467 = vunpack.c.h.b16 %v801
        %v2468 = vunpack.c.l.b16 %v802
        %v2469 = vunpack.c.h.b16 %v802
        %v2470 = vunpack.c.l.b16 %v803
        %v2471 = vunpack.c.h.b16 %v803
        %v2472 = vunpack.c.l.b16 %v804
        %v2473 = vunpack.c.h.b16 %v804
        %v2474 = vunpack.c.l.b16 %v805
        %v2475 = vunpack.c.h.b16 %v805
        %v2476 = vunpack.c.l.b16 %v806
        %v2477 = vunpack.c.h.b16 %v806
        %v2478 = vunpack.c.l.b16 %v807
        %v2479 = vunpack.c.h.b16 %v807
        %v2480 = vunpack.c.l.b16 %v808
        %v2481 = vunpack.c.h.b16 %v808
        %v2482 = vunpack.c.l.b16 %v809
        %v2483 = vunpack.c.h.b16 %v809
        %v2484 = vunpack.c.l.b16 %v810
        %v2485 = vunpack.c.h.b16 %v810
        %v2486 = vunpack.c.l.b16 %v811
        %v2487 = vunpack.c.h.b16 %v811
        %v2488 = vunpack.c.l.b16 %v812
        %v2489 = vunpack.c.h.b16 %v812
        %v2490 = vunpack.c.l.b16 %v813
        %v2491 = vunpack.c.h.b16 %v813
        %v2492 = vunpack.c.l.b16 %v814
        %v2493 = vunpack.c.h.b16 %v814
        %v2494 = vunpack.c.l.b16 %v815
        %v2495 = vunpack.c.h.b16 %v815
        %v2496 = vunpack.c.l.b16 %v816
        %v2497 = vunpack.c.h.b16 %v816
        %v2498 = vunpack.c.l.b16 %v817
        %v2499 = vunpack.c.h.b16 %v817
        %v2500 = vunpack.c.l.b16 %v818
        %v2501 = vunpack.c.h.b16 %v818
        %v2502 = vunpack.c.l.b16 %v819
        %v2503 = vunpack.c.h.b16 %v819
        %v2504 = vunpack.c.l.b16 %v820
        %v2505 = vunpack.c.h.b16 %v820
        %v2506 = vunpack.c.l.b16 %v821
        %v2507 = vunpack.c.h.b16 %v821
        %v2508 = vunpack.c.l.b16 %v822
        %v2509 = vunpack.c.h.b16 %v822
        %v2510 = vunpack.c.l.b16 %v823
        %v2511 = vunpack.c.h.b16 %v823
        %v2512 = vunpack.c.l.b16 %v824
        %v2513 = vunpack.c.h.b16 %v824
        %v2514 = vunpack.c.l.b16 %v825
        %v2515 = vunpack.c.h.b16 %v825
        %v2516 = vunpack.c.l.b16 %v826
        %v2517 = vunpack.c.h.b16 %v826
        %v2518 = vunpack.c.l.b16 %v827
        %v2519 = vunpack.c.h.b16 %v827
        %v2520 = vunpack.c.l.b16 %v828
        %v2521 = vunpack.c.h.b16 %v828
        %v2522 = vunpack.c.l.b16 %v829
        %v2523 = vunpack.c.h.b16 %v829
        %v2524 = vunpack.c.l.b16 %v830
        %v2525 = vunpack.c.h.b16 %v830
        %v2526 = vunpack.c.l.b16 %v831
        %v2527 = vunpack.c.h.b16 %v831
        %v2528 = vunpack.c.l.b16 %v832
        %v2529 = vunpack.c.h.b16 %v832
        %v2530 = vunpack.c.l.b16 %v833
        %v2531 = vunpack.c.h.b16 %v833
        %v2532 = vunpack.c.l.b16 %v834
        %v2533 = vunpack.c.h.b16 %v834
        %v2534 = vunpack.c.l.b16 %v835
        %v2535 = vunpack.c.h.b16 %v835
        %v2536 = vunpack.c.l.b16 %v836
        %v2537 = vunpack.c.h.b16 %v836
        %v2538 = vunpack.c.l.b16 %v837
        %v2539 = vunpack.c.h.b16 %v837
        %v2540 = vunpack.c.l.b16 %v838
        %v2541 = vunpack.c.h.b16 %v838
        %v2542 = vunpack.c.l.b16 %v839
        %v2543 = vunpack.c.h.b16 %v839
        %v2544 = vunpack.c.l.b16 %v840
        %v2545 = vunpack.c.h.b16 %v840
        %v2546 = vunpack.c.l.b16 %v841
        %v2547 = vunpack.c.h.b16 %v841
        %v2548 = vunpack.c.l.b16 %v842
        %v2549 = vunpack.c.h.b16 %v842
        %v2550 = vunpack.c.l.b16 %v843
        %v2551 = vunpack.c.h.b16 %v843
        %v2552 = vunpack.c.l.b16 %v844
        %v2553 = vunpack.c.h.b16 %v844
        %v2554 = vunpack.c.l.b16 %v845
        %v2555 = vunpack.c.h.b16 %v845
        %v2556 = vunpack.c.l.b16 %v846
        %v2557 = vunpack.c.h.b16 %v846
        %v2558 = vunpack.c.l.b16 %v847
        %v2559 = vunpack.c.h.b16 %v847
        %v2560 = vunpack.c.l.b16 %v848
        %v2561 = vunpack.c.h.b16 %v848
        %v2562 = vunpack.c.l.b16 %v849
        %v2563 = vunpack.c.h.b16 %v849
        %v2564 = vunpack.c.l.b16 %v850
        %v2565 = vunpack.c.h.b16 %v850
        %v2566 = vunpack.c.l.b16 %v851
        %v2567 = vunpack.c.h.b16 %v851
        %v2568 = vunpack.c.l.b16 %v852
        %v2569 = vunpack.c.h.b16 %v852
        %v2570 = vunpack.c.l.b16 %v853
        %v2571 = vunpack.c.h.b16 %v853
        %v2572 = vunpack.c.l.b16 %v854
        %v2573 = vunpack.c.h.b16 %v854
        %v2574 = vunpack.c.l.b16 %v855
        %v2575 = vunpack.c.h.b16 %v855
        %v2576 = vunpack.c.l.b16 %v856
        %v2577 = vunpack.c.h.b16 %v856
        %v2578 = vunpack.c.l.b16 %v857
        %v2579 = vunpack.c.h.b16 %v857
        %v2580 = vunpack.c.l.b16 %v858
        %v2581 = vunpack.c.h.b16 %v858
        %v2582 = vunpack.c.l.b16 %v859
        %v2583 = vunpack.c.h.b16 %v859
        %v2584 = vunpack.c.l.b16 %v860
        %v2585 = vunpack.c.h.b16 %v860
        %v2586 = vunpack.c.l.b16 %v861
        %v2587 = vunpack.c.h.b16 %v861
        %v2588 = vunpack.c.l.b16 %v862
        %v2589 = vunpack.c.h.b16 %v862
        %v2590 = vunpack.c.l.b16 %v863
        %v2591 = vunpack.c.h.b16 %v863
        %v2592 = vunpack.c.l.b16 %v864
        %v2593 = vunpack.c.h.b16 %v864
        %v2594 = vunpack.c.l.b16 %v865
        %v2595 = vunpack.c.h.b16 %v865
        %v2596 = vunpack.c.l.b16 %v866
        %v2597 = vunpack.c.h.b16 %v866
        %v2598 = vunpack.c.l.b16 %v867
        %v2599 = vunpack.c.h.b16 %v867
        %v2600 = vunpack.c.l.b16 %v868
        %v2601 = vunpack.c.h.b16 %v868
        %v2602 = vunpack.c.l.b16 %v869
        %v2603 = vunpack.c.h.b16 %v869
        %v2604 = vunpack.c.l.b16 %v870
        %v2605 = vunpack.c.h.b16 %v870
        %v2606 = vunpack.c.l.b16 %v871
        %v2607 = vunpack.c.h.b16 %v871
        %v2608 = vunpack.c.l.b16 %v872
        %v2609 = vunpack.c.h.b16 %v872
        %v2610 = vunpack.c.l.b16 %v873
        %v2611 = vunpack.c.h.b16 %v873
        %v2612 = vunpack.c.l.b16 %v874
        %v2613 = vunpack.c.h.b16 %v874
        %v2614 = vunpack.c.l.b16 %v875
        %v2615 = vunpack.c.h.b16 %v875
        %v2616 = vunpack.c.l.b16 %v876
        %v2617 = vunpack.c.h.b16 %v876
        %v2618 = vunpack.c.l.b16 %v877
        %v2619 = vunpack.c.h.b16 %v877
        %v2620 = vunpack.c.l.b16 %v878
        %v2621 = vunpack.c.h.b16 %v878
        %v2622 = vunpack.c.l.b16 %v879
        %v2623 = vunpack.c.h.b16 %v879
        %v2624 = vunpack.c.l.b16 %v880
        %v2625 = vunpack.c.h.b16 %v880
        %v2626 = vunpack.c.l.b16 %v881
        %v2627 = vunpack.c.h.b16 %v881
        %v2628 = vunpack.c.l.b16 %v882
        %v2629 = vunpack.c.h.b16 %v882
        %v2630 = vunpack.c.l.b16 %v883
        %v2631 = vunpack.c.h.b16 %v883
        %v2632 = vunpack.c.l.b16 %v884
        %v2633 = vunpack.c.h.b16 %v884
        %v2634 = vunpack.c.l.b16 %v885
        %v2635 = vunpack.c.h.b16 %v885
        %v2636 = vunpack.c.l.b16 %v886
        %v2637 = vunpack.c.h.b16 %v886
        %v2638 = vunpack.c.l.b16 %v887
        %v2639 = vunpack.c.h.b16 %v887
        %v2640 = vunpack.c.l.b16 %v888
        %v2641 = vunpack.c.h.b16 %v888
        %v2642 = vunpack.c.l.b16 %v889
        %v2643 = vunpack.c.h.b16 %v889
        %v2644 = vunpack.c.l.b16 %v890
        %v2645 = vunpack.c.h.b16 %v890
        %v2646 = vunpack.c.l.b16 %v891
        %v2647 = vunpack.c.h.b16 %v891
        %v2648 = vunpack.c.l.b16 %v892
        %v2649 = vunpack.c.h.b16 %v892
        %v2650 = vunpack.c.l.b16 %v893
        %v2651 = vunpack.c.h.b16 %v893
        %v2652 = vunpack.c.l.b16 %v894
        %v2653 = vunpack.c.h.b16 %v894
        %v2654 = vunpack.c.l.b16 %v895
        %v2655 = vunpack.c.h.b16 %v895
        %v2656 = vunpack.c.l.b16 %v896
        %v2657 = vunpack.c.h.b16 %v896
        %v2658 = vunpack.c.l.b16 %v897
        %v2659 = vunpack.c.h.b16 %v897
        %v2660 = vunpack.c.l.b16 %v898
        %v2661 = vunpack.c.h.b16 %v898
        %v2662 = vunpack.c.l.b16 %v899
        %v2663 = vunpack.c.h.b16 %v899
        %v2664 = vunpack.c.l.b16 %v900
        %v2665 = vunpack.c.h.b16 %v900
        %v2666 = vunpack.c.l.b16 %v901
        %v2667 = vunpack.c.h.b16 %v901
        %v2668 = vunpack.c.l.b16 %v902
        %v2669 = vunpack.c.h.b16 %v902
        %v2670 = vunpack.c.l.b16 %v903
        %v2671 = vunpack.c.h.b16 %v903
        %v2672 = vunpack.c.l.b16 %v904
        %v2673 = vunpack.c.h.b16 %v904
        %v2674 = vunpack.c.l.b16 %v905
        %v2675 = vunpack.c.h.b16 %v905
        %v2676 = vunpack.c.l.b16 %v906
        %v2677 = vunpack.c.h.b16 %v906
        %v2678 = vunpack.c.l.b16 %v907
        %v2679 = vunpack.c.h.b16 %v907
        %v2680 = vunpack.c.l.b16 %v908
        %v2681 = vunpack.c.h.b16 %v908
        %v2682 = vunpack.c.l.b16 %v909
        %v2683 = vunpack.c.h.b16 %v909
        %v2684 = vunpack.c.l.b16 %v910
        %v2685 = vunpack.c.h.b16 %v910
        %v2686 = vunpack.c.l.b16 %v911
        %v2687 = vunpack.c.h.b16 %v911
        %v2688 = vunpack.c.l.b16 %v912
        %v2689 = vunpack.c.h.b16 %v912
        %v2690 = vunpack.c.l.b16 %v913
        %v2691 = vunpack.c.h.b16 %v913
        %v2692 = vunpack.c.l.b16 %v914
        %v2693 = vunpack.c.h.b16 %v914
        %v2694 = vunpack.c.l.b16 %v915
        %v2695 = vunpack.c.h.b16 %v915
        %v2696 = vunpack.c.l.b16 %v916
        %v2697 = vunpack.c.h.b16 %v916
        %v2698 = vunpack.c.l.b16 %v917
        %v2699 = vunpack.c.h.b16 %v917
        %v2700 = vunpack.c.l.b16 %v918
        %v2701 = vunpack.c.h.b16 %v918
        %v2702 = vunpack.c.l.b16 %v919
        %v2703 = vunpack.c.h.b16 %v919
        %v2704 = vunpack.c.l.b16 %v920
        %v2705 = vunpack.c.h.b16 %v920
        %v2706 = vunpack.c.l.b16 %v921
        %v2707 = vunpack.c.h.b16 %v921
        %v2708 = vunpack.c.l.b16 %v922
        %v2709 = vunpack.c.h.b16 %v922
        %v2710 = vunpack.c.l.b16 %v923
        %v2711 = vunpack.c.h.b16 %v923
        %v2712 = vunpack.c.l.b16 %v924
        %v2713 = vunpack.c.h.b16 %v924
        %v2714 = vunpack.c.l.b16 %v925
        %v2715 = vunpack.c.h.b16 %v925
        %v2716 = vunpack.c.l.b16 %v926
        %v2717 = vunpack.c.h.b16 %v926
        %v2718 = vunpack.c.l.b16 %v927
        %v2719 = vunpack.c.h.b16 %v927
        %v2720 = vunpack.c.l.b16 %v928
        %v2721 = vunpack.c.h.b16 %v928
        %v2722 = vunpack.c.l.b16 %v929
        %v2723 = vunpack.c.h.b16 %v929
        %v2724 = vunpack.c.l.b16 %v930
        %v2725 = vunpack.c.h.b16 %v930
        %v2726 = vunpack.c.l.b16 %v931
        %v2727 = vunpack.c.h.b16 %v931
        %v2728 = vunpack.c.l.b16 %v932
        %v2729 = vunpack.c.h.b16 %v932
        %v2730 = vunpack.c.l.b16 %v933
        %v2731 = vunpack.c.h.b16 %v933
        %v2732 = vunpack.c.l.b16 %v934
        %v2733 = vunpack.c.h.b16 %v934
        %v2734 = vunpack.c.l.b16 %v935
        %v2735 = vunpack.c.h.b16 %v935
        %v2736 = vunpack.c.l.b16 %v936
        %v2737 = vunpack.c.h.b16 %v936
        %v2738 = vunpack.c.l.b16 %v937
        %v2739 = vunpack.c.h.b16 %v937
        %v2740 = vunpack.c.l.b16 %v938
        %v2741 = vunpack.c.h.b16 %v938
        %v2742 = vunpack.c.l.b16 %v939
        %v2743 = vunpack.c.h.b16 %v939
        %v2744 = vunpack.c.l.b16 %v940
        %v2745 = vunpack.c.h.b16 %v940
        %v2746 = vunpack.c.l.b16 %v941
        %v2747 = vunpack.c.h.b16 %v941
        %v2748 = vunpack.c.l.b16 %v942
        %v2749 = vunpack.c.h.b16 %v942
        %v2750 = vunpack.c.l.b16 %v943
        %v2751 = vunpack.c.h.b16 %v943
        %v2752 = vunpack.c.l.b16 %v944
        %v2753 = vunpack.c.h.b16 %v944
        %v2754 = vunpack.c.l.b16 %v945
        %v2755 = vunpack.c.h.b16 %v945
        %v2756 = vunpack.c.l.b16 %v946
        %v2757 = vunpack.c.h.b16 %v946
        %v2758 = vunpack.c.l.b16 %v947
        %v2759 = vunpack.c.h.b16 %v947
        %v2760 = vunpack.c.l.b16 %v948
        %v2761 = vunpack.c.h.b16 %v948
        %v2762 = vunpack.c.l.b16 %v949
        %v2763 = vunpack.c.h.b16 %v949
        %v2764 = vunpack.c.l.b16 %v950
        %v2765 = vunpack.c.h.b16 %v950
        %v2766 = vunpack.c.l.b16 %v951
        %v2767 = vunpack.c.h.b16 %v951
        %v2768 = vunpack.c.l.b16 %v952
        %v2769 = vunpack.c.h.b16 %v952
        %v2770 = vunpack.c.l.b16 %v953
        %v2771 = vunpack.c.h.b16 %v953
        %v2772 = vunpack.c.l.b16 %v954
        %v2773 = vunpack.c.h.b16 %v954
        %v2774 = vunpack.c.l.b16 %v955
        %v2775 = vunpack.c.h.b16 %v955
        %v2776 = vunpack.c.l.b16 %v956
        %v2777 = vunpack.c.h.b16 %v956
        %v2778 = vunpack.c.l.b16 %v957
        %v2779 = vunpack.c.h.b16 %v957
        %v2780 = vunpack.c.l.b16 %v958
        %v2781 = vunpack.c.h.b16 %v958
        %v2782 = vunpack.c.l.b16 %v959
        %v2783 = vunpack.c.h.b16 %v959
        %v2784 = vunpack.c.l.b16 %v960
        %v2785 = vunpack.c.h.b16 %v960
        %v2786 = vunpack.c.l.b16 %v961
        %v2787 = vunpack.c.h.b16 %v961
        %v2788 = vunpack.c.l.b16 %v962
        %v2789 = vunpack.c.h.b16 %v962
        %v2790 = vunpack.c.l.b16 %v963
        %v2791 = vunpack.c.h.b16 %v963
        %v2792 = vunpack.c.l.b16 %v964
        %v2793 = vunpack.c.h.b16 %v964
        %v2794 = vunpack.c.l.b16 %v965
        %v2795 = vunpack.c.h.b16 %v965
        %v2796 = vunpack.c.l.b16 %v966
        %v2797 = vunpack.c.h.b16 %v966
        %v2798 = vunpack.c.l.b16 %v967
        %v2799 = vunpack.c.h.b16 %v967
        %v2800 = vunpack.c.l.b16 %v968
        %v2801 = vunpack.c.h.b16 %v968
        %v2802 = vunpack.c.l.b16 %v969
        %v2803 = vunpack.c.h.b16 %v969
        %v2804 = vunpack.c.l.b16 %v970
        %v2805 = vunpack.c.h.b16 %v970
        %v2806 = vunpack.c.l.b16 %v971
        %v2807 = vunpack.c.h.b16 %v971
        %v2808 = vunpack.c.l.b16 %v972
        %v2809 = vunpack.c.h.b16 %v972
        %v2810 = vunpack.c.l.b16 %v973
        %v2811 = vunpack.c.h.b16 %v973
        %v2812 = vunpack.c.l.b16 %v974
        %v2813 = vunpack.c.h.b16 %v974
        %v2814 = vunpack.c.l.b16 %v975
        %v2815 = vunpack.c.h.b16 %v975
        %v2816 = vunpack.c.l.b16 %v976
        %v2817 = vunpack.c.h.b16 %v976
        %v2818 = vunpack.c.l.b16 %v977
        %v2819 = vunpack.c.h.b16 %v977
        %v2820 = vunpack.c.l.b16 %v978
        %v2821 = vunpack.c.h.b16 %v978
        %v2822 = vunpack.c.l.b16 %v979
        %v2823 = vunpack.c.h.b16 %v979
        %v2824 = vunpack.c.l.b16 %v980
        %v2825 = vunpack.c.h.b16 %v980
        %v2826 = vunpack.c.l.b16 %v981
        %v2827 = vunpack.c.h.b16 %v981
        %v2828 = vunpack.c.l.b16 %v982
        %v2829 = vunpack.c.h.b16 %v982
        %v2830 = vunpack.c.l.b16 %v983
        %v2831 = vunpack.c.h.b16 %v983
        %v2832 = vunpack.c.l.b16 %v984
        %v2833 = vunpack.c.h.b16 %v984
        %v2834 = vunpack.c.l.b16 %v985
        %v2835 = vunpack.c.h.b16 %v985
        %v2836 = vunpack.c.l.b16 %v986
        %v2837 = vunpack.c.h.b16 %v986
        %v2838 = vunpack.c.l.b16 %v987
        %v2839 = vunpack.c.h.b16 %v987
        %v2840 = vunpack.c.l.b16 %v988
        %v2841 = vunpack.c.h.b16 %v988
        %v2842 = vunpack.c.l.b16 %v989
        %v2843 = vunpack.c.h.b16 %v989
        %v2844 = vunpack.c.l.b16 %v990
        %v2845 = vunpack.c.h.b16 %v990
        %v2846 = vunpack.c.l.b16 %v991
        %v2847 = vunpack.c.h.b16 %v991
        %v2848 = vunpack.c.l.b16 %v992
        %v2849 = vunpack.c.h.b16 %v992
        %v2850 = vunpack.c.l.b16 %v993
        %v2851 = vunpack.c.h.b16 %v993
        %v2852 = vunpack.c.l.b16 %v994
        %v2853 = vunpack.c.h.b16 %v994
        %v2854 = vunpack.c.l.b16 %v995
        %v2855 = vunpack.c.h.b16 %v995
        %v2856 = vunpack.c.l.b16 %v996
        %v2857 = vunpack.c.h.b16 %v996
        %v2858 = vunpack.c.l.b16 %v997
        %v2859 = vunpack.c.h.b16 %v997
        %v2860 = vunpack.c.l.b16 %v998
        %v2861 = vunpack.c.h.b16 %v998
        %v2862 = vunpack.c.l.b16 %v999
        %v2863 = vunpack.c.h.b16 %v999
        %v2864 = vunpack.c.l.b16 %v1000
        %v2865 = vunpack.c.h.b16 %v1000
        %v2866 = vunpack.c.l.b16 %v1001
        %v2867 = vunpack.c.h.b16 %v1001
        %v2868 = vunpack.c.l.b16 %v1002
        %v2869 = vunpack.c.h.b16 %v1002
        %v2870 = vunpack.c.l.b16 %v1003
        %v2871 = vunpack.c.h.b16 %v1003
        %v2872 = vunpack.c.l.b16 %v1004
        %v2873 = vunpack.c.h.b16 %v1004
        %v2874 = vunpack.c.l.b16 %v1005
        %v2875 = vunpack.c.h.b16 %v1005
        %v2876 = vunpack.c.l.b16 %v1006
        %v2877 = vunpack.c.h.b16 %v1006
        %v2878 = vunpack.c.l.b16 %v1007
        %v2879 = vunpack.c.h.b16 %v1007
        %v2880 = vunpack.c.l.b16 %v1008
        %v2881 = vunpack.c.h.b16 %v1008
        %v2882 = vunpack.c.l.b16 %v1009
        %v2883 = vunpack.c.h.b16 %v1009
        %v2884 = vunpack.c.l.b16 %v1010
        %v2885 = vunpack.c.h.b16 %v1010
        %v2886 = vunpack.c.l.b16 %v1011
        %v2887 = vunpack.c.h.b16 %v1011
        %v2888 = vunpack.c.l.b16 %v1012
        %v2889 = vunpack.c.h.b16 %v1012
        %v2890 = vunpack.c.l.b16 %v1013
        %v2891 = vunpack.c.h.b16 %v1013
        %v2892 = vunpack.c.l.b16 %v1014
        %v2893 = vunpack.c.h.b16 %v1014
        %v2894 = vunpack.c.l.b16 %v1015
        %v2895 = vunpack.c.h.b16 %v1015
        %v2896 = vunpack.c.l.b16 %v1016
        %v2897 = vunpack.c.h.b16 %v1016
        %v2898 = vunpack.c.l.b16 %v1017
        %v2899 = vunpack.c.h.b16 %v1017
        %v2900 = vunpack.c.l.b16 %v1018
        %v2901 = vunpack.c.h.b16 %v1018
        %v2902 = vunpack.c.l.b16 %v1019
        %v2903 = vunpack.c.h.b16 %v1019
        %v2904 = vunpack.c.l.b16 %v1020
        %v2905 = vunpack.c.h.b16 %v1020
        %v2906 = vunpack.c.l.b16 %v1021
        %v2907 = vunpack.c.h.b16 %v1021
        %v2908 = vunpack.c.l.b16 %v1022
        %v2909 = vunpack.c.h.b16 %v1022
        %v2910 = vunpack.c.l.b16 %v1023
        %v2911 = vunpack.c.h.b16 %v1023
        %v2912 = vunpack.c.l.b16 %v1024
        %v2913 = vunpack.c.h.b16 %v1024
        %v2914 = vunpack.c.l.b16 %v1025
        %v2915 = vunpack.c.h.b16 %v1025
        %v2916 = vunpack.c.l.b16 %v1026
        %v2917 = vunpack.c.h.b16 %v1026
        %v2918 = vunpack.c.l.b16 %v1027
        %v2919 = vunpack.c.h.b16 %v1027
        %v2920 = vunpack.c.l.b16 %v1028
        %v2921 = vunpack.c.h.b16 %v1028
        %v2922 = vunpack.c.l.b16 %v1029
        %v2923 = vunpack.c.h.b16 %v1029
        %v2924 = vunpack.c.l.b16 %v1030
        %v2925 = vunpack.c.h.b16 %v1030
        %v2926 = vunpack.c.l.b16 %v1031
        %v2927 = vunpack.c.h.b16 %v1031
        %v2928 = vunpack.c.l.b16 %v1032
        %v2929 = vunpack.c.h.b16 %v1032
        %v2930 = vunpack.c.l.b16 %v1033
        %v2931 = vunpack.c.h.b16 %v1033
        %v2932 = vunpack.c.l.b16 %v1034
        %v2933 = vunpack.c.h.b16 %v1034
        %v2934 = vunpack.c.l.b16 %v1035
        %v2935 = vunpack.c.h.b16 %v1035
        %v2936 = vunpack.c.l.b16 %v1036
        %v2937 = vunpack.c.h.b16 %v1036
        %v2938 = vunpack.c.l.b16 %v1037
        %v2939 = vunpack.c.h.b16 %v1037
        %v2940 = vunpack.c.l.b16 %v1038
        %v2941 = vunpack.c.h.b16 %v1038
        %v2942 = vunpack.c.l.b16 %v1039
        %v2943 = vunpack.c.h.b16 %v1039
        %v2944 = vunpack.c.l.b16 %v1040
        %v2945 = vunpack.c.h.b16 %v1040
        %v2946 = vunpack.c.l.b16 %v1041
        %v2947 = vunpack.c.h.b16 %v1041
        %v2948 = vunpack.c.l.b16 %v1042
        %v2949 = vunpack.c.h.b16 %v1042
        %v2950 = vunpack.c.l.b16 %v1043
        %v2951 = vunpack.c.h.b16 %v1043
        %v2952 = vunpack.c.l.b16 %v1044
        %v2953 = vunpack.c.h.b16 %v1044
        %v2954 = vunpack.c.l.b16 %v1045
        %v2955 = vunpack.c.h.b16 %v1045
        %v2956 = vunpack.c.l.b16 %v1046
        %v2957 = vunpack.c.h.b16 %v1046
        %v2958 = vunpack.c.l.b16 %v1047
        %v2959 = vunpack.c.h.b16 %v1047
        %v2960 = vunpack.c.l.b16 %v1048
        %v2961 = vunpack.c.h.b16 %v1048
        %v2962 = vunpack.c.l.b16 %v1049
        %v2963 = vunpack.c.h.b16 %v1049
        %v2964 = vunpack.c.l.b16 %v1050
        %v2965 = vunpack.c.h.b16 %v1050
        %v2966 = vunpack.c.l.b16 %v1051
        %v2967 = vunpack.c.h.b16 %v1051
        %v2968 = vunpack.c.l.b16 %v1052
        %v2969 = vunpack.c.h.b16 %v1052
        %v2970 = vunpack.c.l.b16 %v1053
        %v2971 = vunpack.c.h.b16 %v1053
        %v2972 = vunpack.c.l.b16 %v1054
        %v2973 = vunpack.c.h.b16 %v1054
        %v2974 = vunpack.c.l.b16 %v1055
        %v2975 = vunpack.c.h.b16 %v1055
        %v2976 = vunpack.c.l.b16 %v1056
        %v2977 = vunpack.c.h.b16 %v1056
        %v2978 = vunpack.c.l.b16 %v1057
        %v2979 = vunpack.c.h.b16 %v1057
        %v2980 = vunpack.c.l.b16 %v1058
        %v2981 = vunpack.c.h.b16 %v1058
        %v2982 = vunpack.c.l.b16 %v1059
        %v2983 = vunpack.c.h.b16 %v1059
        %v2984 = vunpack.c.l.b16 %v1060
        %v2985 = vunpack.c.h.b16 %v1060
        %v2986 = vunpack.c.l.b16 %v1061
        %v2987 = vunpack.c.h.b16 %v1061
        %v2988 = vunpack.c.l.b16 %v1062
        %v2989 = vunpack.c.h.b16 %v1062
        %v2990 = vunpack.c.l.b16 %v1063
        %v2991 = vunpack.c.h.b16 %v1063
        %v2992 = vunpack.c.l.b16 %v1064
        %v2993 = vunpack.c.h.b16 %v1064
        %v2994 = vunpack.c.l.b16 %v1065
        %v2995 = vunpack.c.h.b16 %v1065
        %v2996 = vunpack.c.l.b16 %v1066
        %v2997 = vunpack.c.h.b16 %v1066
        %v2998 = vunpack.c.l.b16 %v1067
        %v2999 = vunpack.c.h.b16 %v1067
        %v3000 = vunpack.c.l.b16 %v1068
        %v3001 = vunpack.c.h.b16 %v1068
        %v3002 = vunpack.c.l.b16 %v1069
        %v3003 = vunpack.c.h.b16 %v1069
        %v3004 = vunpack.c.l.b16 %v1070
        %v3005 = vunpack.c.h.b16 %v1070
        %v3006 = vunpack.c.l.b16 %v1071
        %v3007 = vunpack.c.h.b16 %v1071
        %v3008 = vunpack.c.l.b16 %v1072
        %v3009 = vunpack.c.h.b16 %v1072
        %v3010 = vunpack.c.l.b16 %v1073
        %v3011 = vunpack.c.h.b16 %v1073
        %v3012 = vunpack.c.l.b16 %v1074
        %v3013 = vunpack.c.h.b16 %v1074
        %v3014 = vunpack.c.l.b16 %v1075
        %v3015 = vunpack.c.h.b16 %v1075
        %v3016 = vunpack.c.l.b16 %v1076
        %v3017 = vunpack.c.h.b16 %v1076
        %v3018 = vunpack.c.l.b16 %v1077
        %v3019 = vunpack.c.h.b16 %v1077
        %v3020 = vunpack.c.l.b16 %v1078
        %v3021 = vunpack.c.h.b16 %v1078
        %v3022 = vunpack.c.l.b16 %v1079
        %v3023 = vunpack.c.h.b16 %v1079
        %v3024 = vunpack.c.l.b16 %v1080
        %v3025 = vunpack.c.h.b16 %v1080
        %v3026 = vunpack.c.l.b16 %v1081
        %v3027 = vunpack.c.h.b16 %v1081
        %v3028 = vunpack.c.l.b16 %v1082
        %v3029 = vunpack.c.h.b16 %v1082
        %v3030 = vunpack.c.l.b16 %v1083
        %v3031 = vunpack.c.h.b16 %v1083
        %v3032 = vunpack.c.l.b16 %v1084
        %v3033 = vunpack.c.h.b16 %v1084
        %v3034 = vunpack.c.l.b16 %v1085
        %v3035 = vunpack.c.h.b16 %v1085
        %v3036 = vunpack.c.l.b16 %v1086
        %v3037 = vunpack.c.h.b16 %v1086
        %v3038 = vunpack.c.l.b16 %v1087
        %v3039 = vunpack.c.h.b16 %v1087
        %v3040 = vunpack.c.l.b16 %v1088
        %v3041 = vunpack.c.h.b16 %v1088
        %v3042 = vunpack.c.l.b16 %v1089
        %v3043 = vunpack.c.h.b16 %v1089
        %v3044 = vunpack.c.l.b16 %v1090
        %v3045 = vunpack.c.h.b16 %v1090
        %v3046 = vunpack.c.l.b16 %v1091
        %v3047 = vunpack.c.h.b16 %v1091
        %v3048 = vunpack.c.l.b16 %v1092
        %v3049 = vunpack.c.h.b16 %v1092
        %v3050 = vunpack.c.l.b16 %v1093
        %v3051 = vunpack.c.h.b16 %v1093
        %v3052 = vunpack.c.l.b16 %v1094
        %v3053 = vunpack.c.h.b16 %v1094
        %v3054 = vunpack.c.l.b16 %v1095
        %v3055 = vunpack.c.h.b16 %v1095
        %v3056 = vunpack.c.l.b16 %v1096
        %v3057 = vunpack.c.h.b16 %v1096
        %v3058 = vunpack.c.l.b16 %v1097
        %v3059 = vunpack.c.h.b16 %v1097
        %v3060 = vunpack.c.l.b16 %v1098
        %v3061 = vunpack.c.h.b16 %v1098
        %v3062 = vunpack.c.l.b16 %v1099
        %v3063 = vunpack.c.h.b16 %v1099
        %v3064 = vunpack.c.l.b16 %v1100
        %v3065 = vunpack.c.h.b16 %v1100
        %v3066 = vunpack.c.l.b16 %v1101
        %v3067 = vunpack.c.h.b16 %v1101
        %v3068 = vunpack.c.l.b16 %v1102
        %v3069 = vunpack.c.h.b16 %v1102
        %v3070 = vunpack.c.l.b16 %v1103
        %v3071 = vunpack.c.h.b16 %v1103
        %v3072 = vunpack.c.l.b16 %v1104
        %v3073 = vunpack.c.h.b16 %v1104
        %v3074 = vunpack.c.l.b16 %v1105
        %v3075 = vunpack.c.h.b16 %v1105
        %v3076 = vunpack.c.l.b16 %v1106
        %v3077 = vunpack.c.h.b16 %v1106
        %v3078 = vunpack.c.l.b16 %v1107
        %v3079 = vunpack.c.h.b16 %v1107
        %v3080 = vunpack.c.l.b16 %v1108
        %v3081 = vunpack.c.h.b16 %v1108
        %v3082 = vunpack.c.l.b16 %v1109
        %v3083 = vunpack.c.h.b16 %v1109
        %v3084 = vunpack.c.l.b16 %v1110
        %v3085 = vunpack.c.h.b16 %v1110
        %v3086 = vunpack.c.l.b16 %v1111
        %v3087 = vunpack.c.h.b16 %v1111
        %v3088 = vunpack.c.l.b16 %v1112
        %v3089 = vunpack.c.h.b16 %v1112
        %v3090 = vunpack.c.l.b16 %v1113
        %v3091 = vunpack.c.h.b16 %v1113
        %v3092 = vunpack.c.l.b16 %v1114
        %v3093 = vunpack.c.h.b16 %v1114
        %v3094 = vunpack.c.l.b16 %v1115
        %v3095 = vunpack.c.h.b16 %v1115
        %v3096 = vunpack.c.l.b16 %v1116
        %v3097 = vunpack.c.h.b16 %v1116
        %v3098 = vunpack.c.l.b16 %v1117
        %v3099 = vunpack.c.h.b16 %v1117
        %v3100 = vunpack.c.l.b16 %v1118
        %v3101 = vunpack.c.h.b16 %v1118
        %v3102 = vunpack.c.l.b16 %v1119
        %v3103 = vunpack.c.h.b16 %v1119
        %v3104 = vunpack.c.l.b16 %v1120
        %v3105 = vunpack.c.h.b16 %v1120
        %v3106 = vunpack.c.l.b16 %v1121
        %v3107 = vunpack.c.h.b16 %v1121
        %v3108 = vunpack.c.l.b16 %v1122
        %v3109 = vunpack.c.h.b16 %v1122
        %v3110 = vunpack.c.l.b16 %v1123
        %v3111 = vunpack.c.h.b16 %v1123
        %v3112 = vunpack.c.l.b16 %v1124
        %v3113 = vunpack.c.h.b16 %v1124
        %v3114 = vunpack.c.l.b16 %v1125
        %v3115 = vunpack.c.h.b16 %v1125
        %v3116 = vunpack.c.l.b16 %v1126
        %v3117 = vunpack.c.h.b16 %v1126
        %v3118 = vunpack.c.l.b16 %v1127
        %v3119 = vunpack.c.h.b16 %v1127
        %v3120 = vunpack.c.l.b16 %v1128
        %v3121 = vunpack.c.h.b16 %v1128
        %v3122 = vunpack.c.l.b16 %v1129
        %v3123 = vunpack.c.h.b16 %v1129
        %v3124 = vunpack.c.l.b16 %v1130
        %v3125 = vunpack.c.h.b16 %v1130
        %v3126 = vunpack.c.l.b16 %v1131
        %v3127 = vunpack.c.h.b16 %v1131
        %v3128 = vunpack.c.l.b16 %v1132
        %v3129 = vunpack.c.h.b16 %v1132
        %v3130 = vunpack.c.l.b16 %v1133
        %v3131 = vunpack.c.h.b16 %v1133
        %v3132 = vunpack.c.l.b16 %v1134
        %v3133 = vunpack.c.h.b16 %v1134
        %v3134 = vunpack.c.l.b16 %v1135
        %v3135 = vunpack.c.h.b16 %v1135
        %v3136 = vunpack.c.l.b16 %v1136
        %v3137 = vunpack.c.h.b16 %v1136
        %v3138 = vunpack.c.l.b16 %v1137
        %v3139 = vunpack.c.h.b16 %v1137
        %v3140 = vunpack.c.l.b16 %v1138
        %v3141 = vunpack.c.h.b16 %v1138
        %v3142 = vunpack.c.l.b16 %v1139
        %v3143 = vunpack.c.h.b16 %v1139
        %v3144 = vunpack.c.l.b16 %v1140
        %v3145 = vunpack.c.h.b16 %v1140
        %v3146 = vunpack.c.l.b16 %v1141
        %v3147 = vunpack.c.h.b16 %v1141
        %v3148 = vunpack.c.l.b16 %v1142
        %v3149 = vunpack.c.h.b16 %v1142
        %v3150 = vunpack.c.l.b16 %v1143
        %v3151 = vunpack.c.h.b16 %v1143
        %v3152 = vunpack.c.l.b16 %v1144
        %v3153 = vunpack.c.h.b16 %v1144
        %v3154 = vunpack.c.l.b16 %v1145
        %v3155 = vunpack.c.h.b16 %v1145
        %v3156 = vunpack.c.l.b16 %v1146
        %v3157 = vunpack.c.h.b16 %v1146
        %v3158 = vunpack.c.l.b16 %v1147
        %v3159 = vunpack.c.h.b16 %v1147
        %v3160 = vunpack.c.l.b16 %v1148
        %v3161 = vunpack.c.h.b16 %v1148
        %v3162 = vunpack.c.l.b16 %v1149
        %v3163 = vunpack.c.h.b16 %v1149
        %v3164 = vunpack.c.l.b16 %v1150
        %v3165 = vunpack.c.h.b16 %v1150
        %v3166 = vunpack.c.l.b16 %v1151
        %v3167 = vunpack.c.h.b16 %v1151
        %v3168 = vunpack.c.l.b16 %v1152
        %v3169 = vunpack.c.h.b16 %v1152
        %v3170 = vunpack.c.l.b16 %v1153
        %v3171 = vunpack.c.h.b16 %v1153
        %v3172 = vunpack.c.l.b16 %v1154
        %v3173 = vunpack.c.h.b16 %v1154
        %v3174 = vunpack.c.l.b16 %v1155
        %v3175 = vunpack.c.h.b16 %v1155
        %v3176 = vunpack.c.l.b16 %v1156
        %v3177 = vunpack.c.h.b16 %v1156
        %v3178 = vunpack.c.l.b16 %v1157
        %v3179 = vunpack.c.h.b16 %v1157
        %v3180 = vunpack.c.l.b16 %v1158
        %v3181 = vunpack.c.h.b16 %v1158
        %v3182 = vunpack.c.l.b16 %v1159
        %v3183 = vunpack.c.h.b16 %v1159
        %v3184 = vunpack.c.l.b16 %v1160
        %v3185 = vunpack.c.h.b16 %v1160
        %v3186 = vunpack.c.l.b16 %v1161
        %v3187 = vunpack.c.h.b16 %v1161
        %v3188 = vunpack.c.l.b16 %v1162
        %v3189 = vunpack.c.h.b16 %v1162
        %v3190 = vunpack.c.l.b16 %v1163
        %v3191 = vunpack.c.h.b16 %v1163
        %v3192 = vunpack.c.l.b16 %v1164
        %v3193 = vunpack.c.h.b16 %v1164
        %v3194 = vunpack.c.l.b16 %v1165
        %v3195 = vunpack.c.h.b16 %v1165
        %v3196 = vunpack.c.l.b16 %v1166
        %v3197 = vunpack.c.h.b16 %v1166
        %v3198 = vunpack.c.l.b16 %v1167
        %v3199 = vunpack.c.h.b16 %v1167
        %v3200 = vunpack.c.l.b16 %v1168
        %v3201 = vunpack.c.h.b16 %v1168
        %v3202 = vunpack.c.l.b16 %v1169
        %v3203 = vunpack.c.h.b16 %v1169
        %v3204 = vunpack.c.l.b16 %v1170
        %v3205 = vunpack.c.h.b16 %v1170
        %v3206 = vunpack.c.l.b16 %v1171
        %v3207 = vunpack.c.h.b16 %v1171
        %v3208 = vunpack.c.l.b16 %v1172
        %v3209 = vunpack.c.h.b16 %v1172
        %v3210 = vunpack.c.l.b16 %v1173
        %v3211 = vunpack.c.h.b16 %v1173
        %v3212 = vunpack.c.l.b16 %v1174
        %v3213 = vunpack.c.h.b16 %v1174
        %v3214 = vunpack.c.l.b16 %v1175
        %v3215 = vunpack.c.h.b16 %v1175
        %v3216 = vunpack.c.l.b16 %v1176
        %v3217 = vunpack.c.h.b16 %v1176
        %v3218 = vunpack.c.l.b16 %v1177
        %v3219 = vunpack.c.h.b16 %v1177
        %v3220 = vunpack.c.l.b16 %v1178
        %v3221 = vunpack.c.h.b16 %v1178
        %v3222 = vunpack.c.l.b16 %v1179
        %v3223 = vunpack.c.h.b16 %v1179
        %v3224 = vunpack.c.l.b16 %v1180
        %v3225 = vunpack.c.h.b16 %v1180
        %v3226 = vunpack.c.l.b16 %v1181
        %v3227 = vunpack.c.h.b16 %v1181
        %v3228 = vunpack.c.l.b16 %v1182
        %v3229 = vunpack.c.h.b16 %v1182
        %v3230 = vunpack.c.l.b16 %v1183
        %v3231 = vunpack.c.h.b16 %v1183
        %v3232 = vunpack.c.l.b16 %v1184
        %v3233 = vunpack.c.h.b16 %v1184
        %v3234 = vunpack.c.l.b16 %v1185
        %v3235 = vunpack.c.h.b16 %v1185
        %v3236 = vunpack.c.l.b16 %v1186
        %v3237 = vunpack.c.h.b16 %v1186
        %v3238 = vunpack.c.l.b16 %v1187
        %v3239 = vunpack.c.h.b16 %v1187
        %v3240 = vunpack.c.l.b16 %v1188
        %v3241 = vunpack.c.h.b16 %v1188
        %v3242 = vunpack.c.l.b16 %v1189
        %v3243 = vunpack.c.h.b16 %v1189
        %v3244 = vunpack.c.l.b16 %v1190
        %v3245 = vunpack.c.h.b16 %v1190
        %v3246 = vunpack.c.l.b16 %v1191
        %v3247 = vunpack.c.h.b16 %v1191
        %v3248 = vunpack.c.l.b16 %v1192
        %v3249 = vunpack.c.h.b16 %v1192
        %v3250 = vunpack.c.l.b16 %v1193
        %v3251 = vunpack.c.h.b16 %v1193
        %v3252 = vunpack.c.l.b16 %v1194
        %v3253 = vunpack.c.h.b16 %v1194
        %v3254 = vunpack.c.l.b16 %v1195
        %v3255 = vunpack.c.h.b16 %v1195
        %v3256 = vunpack.c.l.b16 %v1196
        %v3257 = vunpack.c.h.b16 %v1196
        %v3258 = vunpack.c.l.b16 %v1197
        %v3259 = vunpack.c.h.b16 %v1197
        %v3260 = vunpack.c.l.b16 %v1198
        %v3261 = vunpack.c.h.b16 %v1198
        %v3262 = vunpack.c.l.b16 %v1199
        %v3263 = vunpack.c.h.b16 %v1199
        %v3264 = vunpack.c.l.b16 %v1200
        %v3265 = vunpack.c.h.b16 %v1200
        %v3266 = vunpack.c.l.b16 %v1201
        %v3267 = vunpack.c.h.b16 %v1201
        %v3268 = vunpack.c.l.b16 %v1202
        %v3269 = vunpack.c.h.b16 %v1202
        %v3270 = vunpack.c.l.b16 %v1203
        %v3271 = vunpack.c.h.b16 %v1203
        %v3272 = vunpack.c.l.b16 %v1204
        %v3273 = vunpack.c.h.b16 %v1204
        %v3274 = vunpack.c.l.b16 %v1205
        %v3275 = vunpack.c.h.b16 %v1205
        %v3276 = vunpack.c.l.b16 %v1206
        %v3277 = vunpack.c.h.b16 %v1206
        %v3278 = vunpack.c.l.b16 %v1207
        %v3279 = vunpack.c.h.b16 %v1207
        %v3280 = vunpack.c.l.b16 %v1208
        %v3281 = vunpack.c.h.b16 %v1208
        %v3282 = vunpack.c.l.b16 %v1209
        %v3283 = vunpack.c.h.b16 %v1209
        %v3284 = vunpack.c.l.b16 %v1210
        %v3285 = vunpack.c.h.b16 %v1210
        %v3286 = vunpack.c.l.b16 %v1211
        %v3287 = vunpack.c.h.b16 %v1211
        %v3288 = vunpack.c.l.b16 %v1212
        %v3289 = vunpack.c.h.b16 %v1212
        %v3290 = vunpack.c.l.b16 %v1213
        %v3291 = vunpack.c.h.b16 %v1213
        %v3292 = vunpack.c.l.b16 %v1214
        %v3293 = vunpack.c.h.b16 %v1214
        %v3294 = vunpack.c.l.b16 %v1215
        %v3295 = vunpack.c.h.b16 %v1215
        %v3296 = vunpack.c.l.b16 %v1216
        %v3297 = vunpack.c.h.b16 %v1216
        %v3298 = vunpack.c.l.b16 %v1217
        %v3299 = vunpack.c.h.b16 %v1217
        %v3300 = vunpack.c.l.b16 %v1218
        %v3301 = vunpack.c.h.b16 %v1218
        %v3302 = vunpack.c.l.b16 %v1219
        %v3303 = vunpack.c.h.b16 %v1219
        %v3304 = vunpack.c.l.b16 %v1220
        %v3305 = vunpack.c.h.b16 %v1220
        %v3306 = vunpack.c.l.b16 %v1221
        %v3307 = vunpack.c.h.b16 %v1221
        %v3308 = vunpack.c.l.b16 %v1222
        %v3309 = vunpack.c.h.b16 %v1222
        %v3310 = vunpack.c.l.b16 %v1223
        %v3311 = vunpack.c.h.b16 %v1223
        %v3312 = vunpack.c.l.b16 %v1224
        %v3313 = vunpack.c.h.b16 %v1224
        %v3314 = vunpack.c.l.b16 %v1225
        %v3315 = vunpack.c.h.b16 %v1225
        %v3316 = vunpack.c.l.b16 %v1226
        %v3317 = vunpack.c.h.b16 %v1226
        %v3318 = vunpack.c.l.b16 %v1227
        %v3319 = vunpack.c.h.b16 %v1227
        %v3320 = vunpack.c.l.b16 %v1228
        %v3321 = vunpack.c.h.b16 %v1228
        %v3322 = vunpack.c.l.b16 %v1229
        %v3323 = vunpack.c.h.b16 %v1229
        %v3324 = vunpack.c.l.b16 %v1230
        %v3325 = vunpack.c.h.b16 %v1230
        %v3326 = vunpack.c.l.b16 %v1231
        %v3327 = vunpack.c.h.b16 %v1231
        %v3328 = vunpack.c.l.b16 %v1232
        %v3329 = vunpack.c.h.b16 %v1232
        %v3330 = vunpack.c.l.b16 %v1233
        %v3331 = vunpack.c.h.b16 %v1233
        %v3332 = vunpack.c.l.b16 %v1234
        %v3333 = vunpack.c.h.b16 %v1234
        %v3334 = vunpack.c.l.b16 %v1235
        %v3335 = vunpack.c.h.b16 %v1235
        %v3336 = vunpack.c.l.b16 %v1236
        %v3337 = vunpack.c.h.b16 %v1236
        %v3338 = vunpack.c.l.b16 %v1237
        %v3339 = vunpack.c.h.b16 %v1237
        %v3340 = vunpack.c.l.b16 %v1238
        %v3341 = vunpack.c.h.b16 %v1238
        %v3342 = vunpack.c.l.b16 %v1239
        %v3343 = vunpack.c.h.b16 %v1239
        %v3344 = vunpack.c.l.b16 %v1240
        %v3345 = vunpack.c.h.b16 %v1240
        %v3346 = vunpack.c.l.b16 %v1241
        %v3347 = vunpack.c.h.b16 %v1241
        %v3348 = vunpack.c.l.b16 %v1242
        %v3349 = vunpack.c.h.b16 %v1242
        %v3350 = vunpack.c.l.b16 %v1243
        %v3351 = vunpack.c.h.b16 %v1243
        %v3352 = vunpack.c.l.b16 %v1244
        %v3353 = vunpack.c.h.b16 %v1244
        %v3354 = vunpack.c.l.b16 %v1245
        %v3355 = vunpack.c.h.b16 %v1245
        %v3356 = vunpack.c.l.b16 %v1246
        %v3357 = vunpack.c.h.b16 %v1246
        %v3358 = vunpack.c.l.b16 %v1247
        %v3359 = vunpack.c.h.b16 %v1247
        %v3360 = vunpack.c.l.b16 %v1248
        %v3361 = vunpack.c.h.b16 %v1248
        %v3362 = vunpack.c.l.b16 %v1249
        %v3363 = vunpack.c.h.b16 %v1249
        %v3364 = vunpack.c.l.b16 %v1250
        %v3365 = vunpack.c.h.b16 %v1250
        %v3366 = vunpack.c.l.b16 %v1251
        %v3367 = vunpack.c.h.b16 %v1251
        %v3368 = vunpack.c.l.b16 %v1252
        %v3369 = vunpack.c.h.b16 %v1252
        %v3370 = vunpack.c.l.b16 %v1253
        %v3371 = vunpack.c.h.b16 %v1253
        %v3372 = vunpack.c.l.b16 %v1254
        %v3373 = vunpack.c.h.b16 %v1254
        %v3374 = vunpack.c.l.b16 %v1255
        %v3375 = vunpack.c.h.b16 %v1255
        %v3376 = vunpack.c.l.b16 %v1256
        %v3377 = vunpack.c.h.b16 %v1256
        %v3378 = vunpack.c.l.b16 %v1257
        %v3379 = vunpack.c.h.b16 %v1257
        %v3380 = vunpack.c.l.b16 %v1258
        %v3381 = vunpack.c.h.b16 %v1258
        %v3382 = vunpack.c.l.b16 %v1259
        %v3383 = vunpack.c.h.b16 %v1259
        %v3384 = vunpack.c.l.b16 %v1260
        %v3385 = vunpack.c.h.b16 %v1260
        %v3386 = vunpack.c.l.b16 %v1261
        %v3387 = vunpack.c.h.b16 %v1261
        %v3388 = vunpack.c.l.b16 %v1262
        %v3389 = vunpack.c.h.b16 %v1262
        %v3390 = vunpack.c.l.b16 %v1263
        %v3391 = vunpack.c.h.b16 %v1263
        %v3392 = vunpack.c.l.b16 %v1264
        %v3393 = vunpack.c.h.b16 %v1264
        %v3394 = vunpack.c.l.b16 %v1265
        %v3395 = vunpack.c.h.b16 %v1265
        %v3396 = vunpack.c.l.b16 %v1266
        %v3397 = vunpack.c.h.b16 %v1266
        %v3398 = vunpack.c.l.b16 %v1267
        %v3399 = vunpack.c.h.b16 %v1267
        %v3400 = vunpack.c.l.b16 %v1268
        %v3401 = vunpack.c.h.b16 %v1268
        %v3402 = vunpack.c.l.b16 %v1269
        %v3403 = vunpack.c.h.b16 %v1269
        %v3404 = vunpack.c.l.b16 %v1270
        %v3405 = vunpack.c.h.b16 %v1270
        %v3406 = vunpack.c.l.b16 %v1271
        %v3407 = vunpack.c.h.b16 %v1271
        %v3408 = vunpack.c.l.b16 %v1272
        %v3409 = vunpack.c.h.b16 %v1272
        %v3410 = vunpack.c.l.b16 %v1273
        %v3411 = vunpack.c.h.b16 %v1273
        %v3412 = vunpack.c.l.b16 %v1274
        %v3413 = vunpack.c.h.b16 %v1274
        %v3414 = vunpack.c.l.b16 %v1275
        %v3415 = vunpack.c.h.b16 %v1275
        %v3416 = vunpack.c.l.b16 %v1276
        %v3417 = vunpack.c.h.b16 %v1276
        %v3418 = vunpack.c.l.b16 %v1277
        %v3419 = vunpack.c.h.b16 %v1277
        %v3420 = vunpack.c.l.b16 %v1278
        %v3421 = vunpack.c.h.b16 %v1278
        %v3422 = vunpack.c.l.b16 %v1279
        %v3423 = vunpack.c.h.b16 %v1279
        %v3424 = vunpack.c.l.b16 %v1280
        %v3425 = vunpack.c.h.b16 %v1280
        %v3426 = vunpack.c.l.b16 %v1281
        %v3427 = vunpack.c.h.b16 %v1281
        %v3428 = vunpack.c.l.b16 %v1282
        %v3429 = vunpack.c.h.b16 %v1282
        %v3430 = vunpack.c.l.b16 %v1283
        %v3431 = vunpack.c.h.b16 %v1283
        %v3432 = vunpack.c.l.b16 %v1284
        %v3433 = vunpack.c.h.b16 %v1284
        %v3434 = vunpack.c.l.b16 %v1285
        %v3435 = vunpack.c.h.b16 %v1285
        %v3436 = vunpack.c.l.b16 %v1286
        %v3437 = vunpack.c.h.b16 %v1286
        %v3438 = vunpack.c.l.b16 %v1287
        %v3439 = vunpack.c.h.b16 %v1287
        %v3440 = vunpack.c.l.b16 %v1288
        %v3441 = vunpack.c.h.b16 %v1288
        %v3442 = vunpack.c.l.b16 %v1289
        %v3443 = vunpack.c.h.b16 %v1289
        %v3444 = vunpack.c.l.b16 %v1290
        %v3445 = vunpack.c.h.b16 %v1290
        %v3446 = vunpack.c.l.b16 %v1291
        %v3447 = vunpack.c.h.b16 %v1291
        %v3448 = vunpack.c.l.b16 %v1292
        %v3449 = vunpack.c.h.b16 %v1292
        %v3450 = vunpack.c.l.b16 %v1293
        %v3451 = vunpack.c.h.b16 %v1293
        %v3452 = vunpack.c.l.b16 %v1294
        %v3453 = vunpack.c.h.b16 %v1294
        %v3454 = vunpack.c.l.b16 %v1295
        %v3455 = vunpack.c.h.b16 %v1295
        %v3456 = vunpack.c.l.b16 %v1296
        %v3457 = vunpack.c.h.b16 %v1296
        %v3458 = vunpack.c.l.b16 %v1297
        %v3459 = vunpack.c.h.b16 %v1297
        %v3460 = vunpack.c.l.b16 %v1298
        %v3461 = vunpack.c.h.b16 %v1298
        %v3462 = vunpack.c.l.b16 %v1299
        %v3463 = vunpack.c.h.b16 %v1299
        %v3464 = vunpack.c.l.b16 %v1300
        %v3465 = vunpack.c.h.b16 %v1300
        %v3466 = vunpack.c.l.b16 %v1301
        %v3467 = vunpack.c.h.b16 %v1301
        %v3468 = vunpack.c.l.b16 %v1302
        %v3469 = vunpack.c.h.b16 %v1302
        %v3470 = vunpack.c.l.b16 %v1303
        %v3471 = vunpack.c.h.b16 %v1303
        %v3472 = vunpack.c.l.b16 %v1304
        %v3473 = vunpack.c.h.b16 %v1304
        %v3474 = vunpack.c.l.b16 %v1305
        %v3475 = vunpack.c.h.b16 %v1305
        %v3476 = vunpack.c.l.b16 %v1306
        %v3477 = vunpack.c.h.b16 %v1306
        %v3478 = vunpack.c.l.b16 %v1307
        %v3479 = vunpack.c.h.b16 %v1307
        %v3480 = vunpack.c.l.b16 %v1308
        %v3481 = vunpack.c.h.b16 %v1308
        %v3482 = vunpack.c.l.b16 %v1309
        %v3483 = vunpack.c.h.b16 %v1309
        %v3484 = vunpack.c.l.b16 %v1310
        %v3485 = vunpack.c.h.b16 %v1310
        %v3486 = vunpack.c.l.b16 %v1311
        %v3487 = vunpack.c.h.b16 %v1311
        %v3488 = vunpack.c.l.b16 %v1312
        %v3489 = vunpack.c.h.b16 %v1312
        %v3490 = vunpack.c.l.b16 %v1313
        %v3491 = vunpack.c.h.b16 %v1313
        %v3492 = vunpack.c.l.b16 %v1314
        %v3493 = vunpack.c.h.b16 %v1314
        %v3494 = vunpack.c.l.b16 %v1315
        %v3495 = vunpack.c.h.b16 %v1315
        %v3496 = vunpack.c.l.b16 %v1316
        %v3497 = vunpack.c.h.b16 %v1316
        %v3498 = vunpack.c.l.b16 %v1317
        %v3499 = vunpack.c.h.b16 %v1317
        %v3500 = vunpack.c.l.b16 %v1318
        %v3501 = vunpack.c.h.b16 %v1318
        %v3502 = vunpack.c.l.b16 %v1319
        %v3503 = vunpack.c.h.b16 %v1319
        %v3504 = vunpack.c.l.b16 %v1320
        %v3505 = vunpack.c.h.b16 %v1320
        %v3506 = vunpack.c.l.b16 %v1321
        %v3507 = vunpack.c.h.b16 %v1321
        %v3508 = vunpack.c.l.b16 %v1322
        %v3509 = vunpack.c.h.b16 %v1322
        %v3510 = vunpack.c.l.b16 %v1323
        %v3511 = vunpack.c.h.b16 %v1323
        %v3512 = vunpack.c.l.b16 %v1324
        %v3513 = vunpack.c.h.b16 %v1324
        %v3514 = vunpack.c.l.b16 %v1325
        %v3515 = vunpack.c.h.b16 %v1325
        %v3516 = vunpack.c.l.b16 %v1326
        %v3517 = vunpack.c.h.b16 %v1326
        %v3518 = vunpack.c.l.b16 %v1327
        %v3519 = vunpack.c.h.b16 %v1327
        %v3520 = vunpack.c.l.b16 %v1328
        %v3521 = vunpack.c.h.b16 %v1328
        %v3522 = vunpack.c.l.b16 %v1329
        %v3523 = vunpack.c.h.b16 %v1329
        %v3524 = vunpack.c.l.b16 %v1330
        %v3525 = vunpack.c.h.b16 %v1330
        %v3526 = vunpack.c.l.b16 %v1331
        %v3527 = vunpack.c.h.b16 %v1331
        %v3528 = vunpack.c.l.b16 %v1332
        %v3529 = vunpack.c.h.b16 %v1332
        %v3530 = vunpack.c.l.b16 %v1333
        %v3531 = vunpack.c.h.b16 %v1333
        %v3532 = vunpack.c.l.b16 %v1334
        %v3533 = vunpack.c.h.b16 %v1334
        %v3534 = vunpack.c.l.b16 %v1335
        %v3535 = vunpack.c.h.b16 %v1335
        %v3536 = vunpack.c.l.b16 %v1336
        %v3537 = vunpack.c.h.b16 %v1336
        %v3538 = vunpack.c.l.b16 %v1337
        %v3539 = vunpack.c.h.b16 %v1337
        %v3540 = vunpack.c.l.b16 %v1338
        %v3541 = vunpack.c.h.b16 %v1338
        %v3542 = vunpack.c.l.b16 %v1339
        %v3543 = vunpack.c.h.b16 %v1339
        %v3544 = vunpack.c.l.b16 %v1340
        %v3545 = vunpack.c.h.b16 %v1340
        %v3546 = vunpack.c.l.b16 %v1341
        %v3547 = vunpack.c.h.b16 %v1341
        %v3548 = vunpack.c.l.b16 %v1342
        %v3549 = vunpack.c.h.b16 %v1342
        %v3550 = vunpack.c.l.b16 %v1343
        %v3551 = vunpack.c.h.b16 %v1343
        %v3552 = vpack.c.b16 %v2406, %v2400
        %v3553 = vpack.c.b16 %v2407, %v2401
        %v3554 = vpack.c.b16 %v2408, %v2402
        %v3555 = vpack.c.b16 %v2409, %v2403
        %v3556 = vpack.c.b16 %v2410, %v2404
        %v3557 = vpack.c.b16 %v2411, %v2405
        %v3558 = vpack.c.b16 %v2418, %v2412
        %v3559 = vpack.c.b16 %v2419, %v2413
        %v3560 = vpack.c.b16 %v2420, %v2414
        %v3561 = vpack.c.b16 %v2421, %v2415
        %v3562 = vpack.c.b16 %v2422, %v2416
        %v3563 = vpack.c.b16 %v2423, %v2417
        %v3564 = vpack.c.b16 %v2430, %v2424
        %v3565 = vpack.c.b16 %v2431, %v2425
        %v3566 = vpack.c.b16 %v2432, %v2426
        %v3567 = vpack.c.b16 %v2433, %v2427
        %v3568 = vpack.c.b16 %v2434, %v2428
        %v3569 = vpack.c.b16 %v2435, %v2429
        %v3570 = vpack.c.b16 %v2442, %v2436
        %v3571 = vpack.c.b16 %v2443, %v2437
        %v3572 = vpack.c.b16 %v2444, %v2438
        %v3573 = vpack.c.b16 %v2445, %v2439
        %v3574 = vpack.c.b16 %v2446, %v2440
        %v3575 = vpack.c.b16 %v2447, %v2441
        %v3576 = vpack.c.b16 %v2454, %v2448
        %v3577 = vpack.c.b16 %v2455, %v2449
        %v3578 = vpack.c.b16 %v2456, %v2450
        %v3579 = vpack.c.b16 %v2457, %v2451
        %v3580 = vpack.c.b16 %v2458, %v2452
        %v3581 = vpack.c.b16 %v2459, %v2453
        %v3582 = vpack.c.b16 %v2466, %v2460
        %v3583 = vpack.c.b16 %v2467, %v2461
        %v3584 = vpack.c.b16 %v2468, %v2462
        %v3585 = vpack.c.b16 %v2469, %v2463
        %v3586 = vpack.c.b16 %v2470, %v2464
        %v3587 = vpack.c.b16 %v2471, %v2465
        %v3588 = vpack.c.b16 %v2478, %v2472
        %v3589 = vpack.c.b16 %v2479, %v2473
        %v3590 = vpack.c.b16 %v2480, %v2474
        %v3591 = vpack.c.b16 %v2481, %v2475
        %v3592 = vpack.c.b16 %v2482, %v2476
        %v3593 = vpack.c.b16 %v2483, %v2477
        %v3594 = vpack.c.b16 %v2490, %v2484
        %v3595 = vpack.c.b16 %v2491, %v2485
        %v3596 = vpack.c.b16 %v2492, %v2486
        %v3597 = vpack.c.b16 %v2493, %v2487
        %v3598 = vpack.c.b16 %v2494, %v2488
        %v3599 = vpack.c.b16 %v2495, %v2489
        %v3600 = vpack.c.b16 %v2502, %v2496
        %v3601 = vpack.c.b16 %v2503, %v2497
        %v3602 = vpack.c.b16 %v2504, %v2498
        %v3603 = vpack.c.b16 %v2505, %v2499
        %v3604 = vpack.c.b16 %v2506, %v2500
        %v3605 = vpack.c.b16 %v2507, %v2501
        %v3606 = vpack.c.b16 %v2514, %v2508
        %v3607 = vpack.c.b16 %v2515, %v2509
        %v3608 = vpack.c.b16 %v2516, %v2510
        %v3609 = vpack.c.b16 %v2517, %v2511
        %v3610 = vpack.c.b16 %v2518, %v2512
        %v3611 = vpack.c.b16 %v2519, %v2513
        %v3612 = vpack.c.b16 %v2526, %v2520
        %v3613 = vpack.c.b16 %v2527, %v2521
        %v3614 = vpack.c.b16 %v2528, %v2522
        %v3615 = vpack.c.b16 %v2529, %v2523
        %v3616 = vpack.c.b16 %v2530, %v2524
        %v3617 = vpack.c.b16 %v2531, %v2525
        %v3618 = vpack.c.b16 %v2538, %v2532
        %v3619 = vpack.c.b16 %v2539, %v2533
        %v3620 = vpack.c.b16 %v2540, %v2534
        %v3621 = vpack.c.b16 %v2541, %v2535
        %v3622 = vpack.c.b16 %v2542, %v2536
        %v3623 = vpack.c.b16 %v2543, %v2537
        %v3624 = vpack.c.b16 %v2550, %v2544
        %v3625 = vpack.c.b16 %v2551, %v2545
        %v3626 = vpack.c.b16 %v2552, %v2546
        %v3627 = vpack.c.b16 %v2553, %v2547
        %v3628 = vpack.c.b16 %v2554, %v2548
        %v3629 = vpack.c.b16 %v2555, %v2549
        %v3630 = vpack.c.b16 %v2562, %v2556
        %v3631 = vpack.c.b16 %v2563, %v2557
        %v3632 = vpack.c.b16 %v2564, %v2558
        %v3633 = vpack.c.b16 %v2565, %v2559
        %v3634 = vpack.c.b16 %v2566, %v2560
        %v3635 = vpack.c.b16 %v2567, %v2561
        %v3636 = vpack.c.b16 %v2574, %v2568
        %v3637 = vpack.c.b16 %v2575, %v2569
        %v3638 = vpack.c.b16 %v2576, %v2570
        %v3639 = vpack.c.b16 %v2577, %v2571
        %v3640 = vpack.c.b16 %v2578, %v2572
        %v3641 = vpack.c.b16 %v2579, %v2573
        %v3642 = vpack.c.b16 %v2586, %v2580
        %v3643 = vpack.c.b16 %v2587, %v2581
        %v3644 = vpack.c.b16 %v2588, %v2582
        %v3645 = vpack.c.b16 %v2589, %v2583
        %v3646 = vpack.c.b16 %v2590, %v2584
        %v3647 = vpack.c.b16 %v2591, %v2585
        %v3648 = vpack.c.b16 %v2598, %v2592
        %v3649 = vpack.c.b16 %v2599, %v2593
        %v3650 = vpack.c.b16 %v2600, %v2594
        %v3651 = vpack.c.b16 %v2601, %v2595
        %v3652 = vpack.c.b16 %v2602, %v2596
        %v3653 = vpack.c.b16 %v2603, %v2597
        %v3654 = vpack.c.b16 %v2610, %v2604
        %v3655 = vpack.c.b16 %v2611, %v2605
        %v3656 = vpack.c.b16 %v2612, %v2606
        %v3657 = vpack.c.b16 %v2613, %v2607
        %v3658 = vpack.c.b16 %v2614, %v2608
        %v3659 = vpack.c.b16 %v2615, %v2609
        %v3660 = vpack.c.b16 %v2622, %v2616
        %v3661 = vpack.c.b16 %v2623, %v2617
        %v3662 = vpack.c.b16 %v2624, %v2618
        %v3663 = vpack.c.b16 %v2625, %v2619
        %v3664 = vpack.c.b16 %v2626, %v2620
        %v3665 = vpack.c.b16 %v2627, %v2621
        %v3666 = vpack.c.b16 %v2634, %v2628
        %v3667 = vpack.c.b16 %v2635, %v2629
        %v3668 = vpack.c.b16 %v2636, %v2630
        %v3669 = vpack.c.b16 %v2637, %v2631
        %v3670 = vpack.c.b16 %v2638, %v2632
        %v3671 = vpack.c.b16 %v2639, %v2633
        %v3672 = vpack.c.b16 %v2646, %v2640
        %v3673 = vpack.c.b16 %v2647, %v2641
        %v3674 = vpack.c.b16 %v2648, %v2642
        %v3675 = vpack.c.b16 %v2649, %v2643
        %v3676 = vpack.c.b16 %v2650, %v2644
        %v3677 = vpack.c.b16 %v2651, %v2645
        %v3678 = vpack.c.b16 %v2658, %v2652
        %v3679 = vpack.c.b16 %v2659, %v2653
        %v3680 = vpack.c.b16 %v2660, %v2654
        %v3681 = vpack.c.b16 %v2661, %v2655
        %v3682 = vpack.c.b16 %v2662, %v2656
        %v3683 = vpack.c.b16 %v2663, %v2657
        %v3684 = vpack.c.b16 %v2670, %v2664
        %v3685 = vpack.c.b16 %v2671, %v2665
        %v3686 = vpack.c.b16 %v2672, %v2666
        %v3687 = vpack.c.b16 %v2673, %v2667
        %v3688 = vpack.c.b16 %v2674, %v2668
        %v3689 = vpack.c.b16 %v2675, %v2669
        %v3690 = vpack.c.b16 %v2682, %v2676
        %v3691 = vpack.c.b16 %v2683, %v2677
        %v3692 = vpack.c.b16 %v2684, %v2678
        %v3693 = vpack.c.b16 %v2685, %v2679
        %v3694 = vpack.c.b16 %v2686, %v2680
        %v3695 = vpack.c.b16 %v2687, %v2681
        %v3696 = vpack.c.b16 %v2694, %v2688
        %v3697 = vpack.c.b16 %v2695, %v2689
        %v3698 = vpack.c.b16 %v2696, %v2690
        %v3699 = vpack.c.b16 %v2697, %v2691
        %v3700 = vpack.c.b16 %v2698, %v2692
        %v3701 = vpack.c.b16 %v2699, %v2693
        %v3702 = vpack.c.b16 %v2706, %v2700
        %v3703 = vpack.c.b16 %v2707, %v2701
        %v3704 = vpack.c.b16 %v2708, %v2702
        %v3705 = vpack.c.b16 %v2709, %v2703
        %v3706 = vpack.c.b16 %v2710, %v2704
        %v3707 = vpack.c.b16 %v2711, %v2705
        %v3708 = vpack.c.b16 %v2718, %v2712
        %v3709 = vpack.c.b16 %v2719, %v2713
        %v3710 = vpack.c.b16 %v2720, %v2714
        %v3711 = vpack.c.b16 %v2721, %v2715
        %v3712 = vpack.c.b16 %v2722, %v2716
        %v3713 = vpack.c.b16 %v2723, %v2717
        %v3714 = vpack.c.b16 %v2730, %v2724
        %v3715 = vpack.c.b16 %v2731, %v2725
        %v3716 = vpack.c.b16 %v2732, %v2726
        %v3717 = vpack.c.b16 %v2733, %v2727
        %v3718 = vpack.c.b16 %v2734, %v2728
        %v3719 = vpack.c.b16 %v2735, %v2729
        %v3720 = vpack.c.b16 %v2742, %v2736
        %v3721 = vpack.c.b16 %v2743, %v2737
        %v3722 = vpack.c.b16 %v2744, %v2738
        %v3723 = vpack.c.b16 %v2745, %v2739
        %v3724 = vpack.c.b16 %v2746, %v2740
        %v3725 = vpack.c.b16 %v2747, %v2741
        %v3726 = vpack.c.b16 %v2754, %v2748
        %v3727 = vpack.c.b16 %v2755, %v2749
        %v3728 = vpack.c.b16 %v2756, %v2750
        %v3729 = vpack.c.b16 %v2757, %v2751
        %v3730 = vpack.c.b16 %v2758, %v2752
        %v3731 = vpack.c.b16 %v2759, %v2753
        %v3732 = vpack.c.b16 %v2766, %v2760
        %v3733 = vpack.c.b16 %v2767, %v2761
        %v3734 = vpack.c.b16 %v2768, %v2762
        %v3735 = vpack.c.b16 %v2769, %v2763
        %v3736 = vpack.c.b16 %v2770, %v2764
        %v3737 = vpack.c.b16 %v2771, %v2765
        %v3738 = vpack.c.b16 %v2778, %v2772
        %v3739 = vpack.c.b16 %v2779, %v2773
        %v3740 = vpack.c.b16 %v2780, %v2774
        %v3741 = vpack.c.b16 %v2781, %v2775
        %v3742 = vpack.c.b16 %v2782, %v2776
        %v3743 = vpack.c.b16 %v2783, %v2777
        %v3744 = vpack.c.b16 %v2790, %v2784
        %v3745 = vpack.c.b16 %v2791, %v2785
        %v3746 = vpack.c.b16 %v2792, %v2786
        %v3747 = vpack.c.b16 %v2793, %v2787
        %v3748 = vpack.c.b16 %v2794, %v2788
        %v3749 = vpack.c.b16 %v2795, %v2789
        %v3750 = vpack.c.b16 %v2802, %v2796
        %v3751 = vpack.c.b16 %v2803, %v2797
        %v3752 = vpack.c.b16 %v2804, %v2798
        %v3753 = vpack.c.b16 %v2805, %v2799
        %v3754 = vpack.c.b16 %v2806, %v2800
        %v3755 = vpack.c.b16 %v2807, %v2801
        %v3756 = vpack.c.b16 %v2814, %v2808
        %v3757 = vpack.c.b16 %v2815, %v2809
        %v3758 = vpack.c.b16 %v2816, %v2810
        %v3759 = vpack.c.b16 %v2817, %v2811
        %v3760 = vpack.c.b16 %v2818, %v2812
        %v3761 = vpack.c.b16 %v2819, %v2813
        %v3762 = vpack.c.b16 %v2826, %v2820
        %v3763 = vpack.c.b16 %v2827, %v2821
        %v3764 = vpack.c.b16 %v2828, %v2822
        %v3765 = vpack.c.b16 %v2829, %v2823
        %v3766 = vpack.c.b16 %v2830, %v2824
        %v3767 = vpack.c.b16 %v2831, %v2825
        %v3768 = vpack.c.b16 %v2838, %v2832
        %v3769 = vpack.c.b16 %v2839, %v2833
        %v3770 = vpack.c.b16 %v2840, %v2834
        %v3771 = vpack.c.b16 %v2841, %v2835
        %v3772 = vpack.c.b16 %v2842, %v2836
        %v3773 = vpack.c.b16 %v2843, %v2837
        %v3774 = vpack.c.b16 %v2850, %v2844
        %v3775 = vpack.c.b16 %v2851, %v2845
        %v3776 = vpack.c.b16 %v2852, %v2846
        %v3777 = vpack.c.b16 %v2853, %v2847
        %v3778 = vpack.c.b16 %v2854, %v2848
        %v3779 = vpack.c.b16 %v2855, %v2849
        %v3780 = vpack.c.b16 %v2862, %v2856
        %v3781 = vpack.c.b16 %v2863, %v2857
        %v3782 = vpack.c.b16 %v2864, %v2858
        %v3783 = vpack.c.b16 %v2865, %v2859
        %v3784 = vpack.c.b16 %v2866, %v2860
        %v3785 = vpack.c.b16 %v2867, %v2861
        %v3786 = vpack.c.b16 %v2874, %v2868
        %v3787 = vpack.c.b16 %v2875, %v2869
        %v3788 = vpack.c.b16 %v2876, %v2870
        %v3789 = vpack.c.b16 %v2877, %v2871
        %v3790 = vpack.c.b16 %v2878, %v2872
        %v3791 = vpack.c.b16 %v2879, %v2873
        %v3792 = vpack.c.b16 %v2886, %v2880
        %v3793 = vpack.c.b16 %v2887, %v2881
        %v3794 = vpack.c.b16 %v2888, %v2882
        %v3795 = vpack.c.b16 %v2889, %v2883
        %v3796 = vpack.c.b16 %v2890, %v2884
        %v3797 = vpack.c.b16 %v2891, %v2885
        %v3798 = vpack.c.b16 %v2898, %v2892
        %v3799 = vpack.c.b16 %v2899, %v2893
        %v3800 = vpack.c.b16 %v2900, %v2894
        %v3801 = vpack.c.b16 %v2901, %v2895
        %v3802 = vpack.c.b16 %v2902, %v2896
        %v3803 = vpack.c.b16 %v2903, %v2897
        %v3804 = vpack.c.b16 %v2910, %v2904
        %v3805 = vpack.c.b16 %v2911, %v2905
        %v3806 = vpack.c.b16 %v2912, %v2906
        %v3807 = vpack.c.b16 %v2913, %v2907
        %v3808 = vpack.c.b16 %v2914, %v2908
        %v3809 = vpack.c.b16 %v2915, %v2909
        %v3810 = vpack.c.b16 %v2922, %v2916
        %v3811 = vpack.c.b16 %v2923, %v2917
        %v3812 = vpack.c.b16 %v2924, %v2918
        %v3813 = vpack.c.b16 %v2925, %v2919
        %v3814 = vpack.c.b16 %v2926, %v2920
        %v3815 = vpack.c.b16 %v2927, %v2921
        %v3816 = vpack.c.b16 %v2934, %v2928
        %v3817 = vpack.c.b16 %v2935, %v2929
        %v3818 = vpack.c.b16 %v2936, %v2930
        %v3819 = vpack.c.b16 %v2937, %v2931
        %v3820 = vpack.c.b16 %v2938, %v2932
        %v3821 = vpack.c.b16 %v2939, %v2933
        %v3822 = vpack.c.b16 %v2946, %v2940
        %v3823 = vpack.c.b16 %v2947, %v2941
        %v3824 = vpack.c.b16 %v2948, %v2942
        %v3825 = vpack.c.b16 %v2949, %v2943
        %v3826 = vpack.c.b16 %v2950, %v2944
        %v3827 = vpack.c.b16 %v2951, %v2945
        %v3828 = vpack.c.b16 %v2958, %v2952
        %v3829 = vpack.c.b16 %v2959, %v2953
        %v3830 = vpack.c.b16 %v2960, %v2954
        %v3831 = vpack.c.b16 %v2961, %v2955
        %v3832 = vpack.c.b16 %v2962, %v2956
        %v3833 = vpack.c.b16 %v2963, %v2957
        %v3834 = vpack.c.b16 %v2970, %v2964
        %v3835 = vpack.c.b16 %v2971, %v2965
        %v3836 = vpack.c.b16 %v2972, %v2966
        %v3837 = vpack.c.b16 %v2973, %v2967
        %v3838 = vpack.c.b16 %v2974, %v2968
        %v3839 = vpack.c.b16 %v2975, %v2969
        %v3840 = vpack.c.b16 %v2982, %v2976
        %v3841 = vpack.c.b16 %v2983, %v2977
        %v3842 = vpack.c.b16 %v2984, %v2978
        %v3843 = vpack.c.b16 %v2985, %v2979
        %v3844 = vpack.c.b16 %v2986, %v2980
        %v3845 = vpack.c.b16 %v2987, %v2981
        %v3846 = vpack.c.b16 %v2994, %v2988
        %v3847 = vpack.c.b16 %v2995, %v2989
        %v3848 = vpack.c.b16 %v2996, %v2990
        %v3849 = vpack.c.b16 %v2997, %v2991
        %v3850 = vpack.c.b16 %v2998, %v2992
        %v3851 = vpack.c.b16 %v2999, %v2993
        %v3852 = vpack.c.b16 %v3006, %v3000
        %v3853 = vpack.c.b16 %v3007, %v3001
        %v3854 = vpack.c.b16 %v3008, %v3002
        %v3855 = vpack.c.b16 %v3009, %v3003
        %v3856 = vpack.c.b16 %v3010, %v3004
        %v3857 = vpack.c.b16 %v3011, %v3005
        %v3858 = vpack.c.b16 %v3018, %v3012
        %v3859 = vpack.c.b16 %v3019, %v3013
        %v3860 = vpack.c.b16 %v3020, %v3014
        %v3861 = vpack.c.b16 %v3021, %v3015
        %v3862 = vpack.c.b16 %v3022, %v3016
        %v3863 = vpack.c.b16 %v3023, %v3017
        %v3864 = vpack.c.b16 %v3030, %v3024
        %v3865 = vpack.c.b16 %v3031, %v3025
        %v3866 = vpack.c.b16 %v3032, %v3026
        %v3867 = vpack.c.b16 %v3033, %v3027
        %v3868 = vpack.c.b16 %v3034, %v3028
        %v3869 = vpack.c.b16 %v3035, %v3029
        %v3870 = vpack.c.b16 %v3042, %v3036
        %v3871 = vpack.c.b16 %v3043, %v3037
        %v3872 = vpack.c.b16 %v3044, %v3038
        %v3873 = vpack.c.b16 %v3045, %v3039
        %v3874 = vpack.c.b16 %v3046, %v3040
        %v3875 = vpack.c.b16 %v3047, %v3041
        %v3876 = vpack.c.b16 %v3054, %v3048
        %v3877 = vpack.c.b16 %v3055, %v3049
        %v3878 = vpack.c.b16 %v3056, %v3050
        %v3879 = vpack.c.b16 %v3057, %v3051
        %v3880 = vpack.c.b16 %v3058, %v3052
        %v3881 = vpack.c.b16 %v3059, %v3053
        %v3882 = vpack.c.b16 %v3066, %v3060
        %v3883 = vpack.c.b16 %v3067, %v3061
        %v3884 = vpack.c.b16 %v3068, %v3062
        %v3885 = vpack.c.b16 %v3069, %v3063
        %v3886 = vpack.c.b16 %v3070, %v3064
        %v3887 = vpack.c.b16 %v3071, %v3065
        %v3888 = vpack.c.b16 %v3078, %v3072
        %v3889 = vpack.c.b16 %v3079, %v3073
        %v3890 = vpack.c.b16 %v3080, %v3074
        %v3891 = vpack.c.b16 %v3081, %v3075
        %v3892 = vpack.c.b16 %v3082, %v3076
        %v3893 = vpack.c.b16 %v3083, %v3077
        %v3894 = vpack.c.b16 %v3090, %v3084
        %v3895 = vpack.c.b16 %v3091, %v3085
        %v3896 = vpack.c.b16 %v3092, %v3086
        %v3897 = vpack.c.b16 %v3093, %v3087
        %v3898 = vpack.c.b16 %v3094, %v3088
        %v3899 = vpack.c.b16 %v3095, %v3089
        %v3900 = vpack.c.b16 %v3102, %v3096
        %v3901 = vpack.c.b16 %v3103, %v3097
        %v3902 = vpack.c.b16 %v3104, %v3098
        %v3903 = vpack.c.b16 %v3105, %v3099
        %v3904 = vpack.c.b16 %v3106, %v3100
        %v3905 = vpack.c.b16 %v3107, %v3101
        %v3906 = vpack.c.b16 %v3114, %v3108
        %v3907 = vpack.c.b16 %v3115, %v3109
        %v3908 = vpack.c.b16 %v3116, %v3110
        %v3909 = vpack.c.b16 %v3117, %v3111
        %v3910 = vpack.c.b16 %v3118, %v3112
        %v3911 = vpack.c.b16 %v3119, %v3113
        %v3912 = vpack.c.b16 %v3126, %v3120
        %v3913 = vpack.c.b16 %v3127, %v3121
        %v3914 = vpack.c.b16 %v3128, %v3122
        %v3915 = vpack.c.b16 %v3129, %v3123
        %v3916 = vpack.c.b16 %v3130, %v3124
        %v3917 = vpack.c.b16 %v3131, %v3125
        %v3918 = vpack.c.b16 %v3138, %v3132
        %v3919 = vpack.c.b16 %v3139, %v3133
        %v3920 = vpack.c.b16 %v3140, %v3134
        %v3921 = vpack.c.b16 %v3141, %v3135
        %v3922 = vpack.c.b16 %v3142, %v3136
        %v3923 = vpack.c.b16 %v3143, %v3137
        %v3924 = vpack.c.b16 %v3150, %v3144
        %v3925 = vpack.c.b16 %v3151, %v3145
        %v3926 = vpack.c.b16 %v3152, %v3146
        %v3927 = vpack.c.b16 %v3153, %v3147
        %v3928 = vpack.c.b16 %v3154, %v3148
        %v3929 = vpack.c.b16 %v3155, %v3149
        %v3930 = vpack.c.b16 %v3162, %v3156
        %v3931 = vpack.c.b16 %v3163, %v3157
        %v3932 = vpack.c.b16 %v3164, %v3158
        %v3933 = vpack.c.b16 %v3165, %v3159
        %v3934 = vpack.c.b16 %v3166, %v3160
        %v3935 = vpack.c.b16 %v3167, %v3161
        %v3936 = vpack.c.b16 %v3174, %v3168
        %v3937 = vpack.c.b16 %v3175, %v3169
        %v3938 = vpack.c.b16 %v3176, %v3170
        %v3939 = vpack.c.b16 %v3177, %v3171
        %v3940 = vpack.c.b16 %v3178, %v3172
        %v3941 = vpack.c.b16 %v3179, %v3173
        %v3942 = vpack.c.b16 %v3186, %v3180
        %v3943 = vpack.c.b16 %v3187, %v3181
        %v3944 = vpack.c.b16 %v3188, %v3182
        %v3945 = vpack.c.b16 %v3189, %v3183
        %v3946 = vpack.c.b16 %v3190, %v3184
        %v3947 = vpack.c.b16 %v3191, %v3185
        %v3948 = vpack.c.b16 %v3198, %v3192
        %v3949 = vpack.c.b16 %v3199, %v3193
        %v3950 = vpack.c.b16 %v3200, %v3194
        %v3951 = vpack.c.b16 %v3201, %v3195
        %v3952 = vpack.c.b16 %v3202, %v3196
        %v3953 = vpack.c.b16 %v3203, %v3197
        %v3954 = vpack.c.b16 %v3210, %v3204
        %v3955 = vpack.c.b16 %v3211, %v3205
        %v3956 = vpack.c.b16 %v3212, %v3206
        %v3957 = vpack.c.b16 %v3213, %v3207
        %v3958 = vpack.c.b16 %v3214, %v3208
        %v3959 = vpack.c.b16 %v3215, %v3209
        %v3960 = vpack.c.b16 %v3222, %v3216
        %v3961 = vpack.c.b16 %v3223, %v3217
        %v3962 = vpack.c.b16 %v3224, %v3218
        %v3963 = vpack.c.b16 %v3225, %v3219
        %v3964 = vpack.c.b16 %v3226, %v3220
        %v3965 = vpack.c.b16 %v3227, %v3221
        %v3966 = vpack.c.b16 %v3234, %v3228
        %v3967 = vpack.c.b16 %v3235, %v3229
        %v3968 = vpack.c.b16 %v3236, %v3230
        %v3969 = vpack.c.b16 %v3237, %v3231
        %v3970 = vpack.c.b16 %v3238, %v3232
        %v3971 = vpack.c.b16 %v3239, %v3233
        %v3972 = vpack.c.b16 %v3246, %v3240
        %v3973 = vpack.c.b16 %v3247, %v3241
        %v3974 = vpack.c.b16 %v3248, %v3242
        %v3975 = vpack.c.b16 %v3249, %v3243
        %v3976 = vpack.c.b16 %v3250, %v3244
        %v3977 = vpack.c.b16 %v3251, %v3245
        %v3978 = vpack.c.b16 %v3258, %v3252
        %v3979 = vpack.c.b16 %v3259, %v3253
        %v3980 = vpack.c.b16 %v3260, %v3254
        %v3981 = vpack.c.b16 %v3261, %v3255
        %v3982 = vpack.c.b16 %v3262, %v3256
        %v3983 = vpack.c.b16 %v3263, %v3257
        %v3984 = vpack.c.b16 %v3270, %v3264
        %v3985 = vpack.c.b16 %v3271, %v3265
        %v3986 = vpack.c.b16 %v3272, %v3266
        %v3987 = vpack.c.b16 %v3273, %v3267
        %v3988 = vpack.c.b16 %v3274, %v3268
        %v3989 = vpack.c.b16 %v3275, %v3269
        %v3990 = vpack.c.b16 %v3282, %v3276
        %v3991 = vpack.c.b16 %v3283, %v3277
        %v3992 = vpack.c.b16 %v3284, %v3278
        %v3993 = vpack.c.b16 %v3285, %v3279
        %v3994 = vpack.c.b16 %v3286, %v3280
        %v3995 = vpack.c.b16 %v3287, %v3281
        %v3996 = vpack.c.b16 %v3294, %v3288
        %v3997 = vpack.c.b16 %v3295, %v3289
        %v3998 = vpack.c.b16 %v3296, %v3290
        %v3999 = vpack.c.b16 %v3297, %v3291
        %v4000 = vpack.c.b16 %v3298, %v3292
        %v4001 = vpack.c.b16 %v3299, %v3293
        %v4002 = vpack.c.b16 %v3306, %v3300
        %v4003 = vpack.c.b16 %v3307, %v3301
        %v4004 = vpack.c.b16 %v3308, %v3302
        %v4005 = vpack.c.b16 %v3309, %v3303
        %v4006 = vpack.c.b16 %v3310, %v3304
        %v4007 = vpack.c.b16 %v3311, %v3305
        %v4008 = vpack.c.b16 %v3318, %v3312
        %v4009 = vpack.c.b16 %v3319, %v3313
        %v4010 = vpack.c.b16 %v3320, %v3314
        %v4011 = vpack.c.b16 %v3321, %v3315
        %v4012 = vpack.c.b16 %v3322, %v3316
        %v4013 = vpack.c.b16 %v3323, %v3317
        %v4014 = vpack.c.b16 %v3330, %v3324
        %v4015 = vpack.c.b16 %v3331, %v3325
        %v4016 = vpack.c.b16 %v3332, %v3326
        %v4017 = vpack.c.b16 %v3333, %v3327
        %v4018 = vpack.c.b16 %v3334, %v3328
        %v4019 = vpack.c.b16 %v3335, %v3329
        %v4020 = vpack.c.b16 %v3342, %v3336
        %v4021 = vpack.c.b16 %v3343, %v3337
        %v4022 = vpack.c.b16 %v3344, %v3338
        %v4023 = vpack.c.b16 %v3345, %v3339
        %v4024 = vpack.c.b16 %v3346, %v3340
        %v4025 = vpack.c.b16 %v3347, %v3341
        %v4026 = vpack.c.b16 %v3354, %v3348
        %v4027 = vpack.c.b16 %v3355, %v3349
        %v4028 = vpack.c.b16 %v3356, %v3350
        %v4029 = vpack.c.b16 %v3357, %v3351
        %v4030 = vpack.c.b16 %v3358, %v3352
        %v4031 = vpack.c.b16 %v3359, %v3353
        %v4032 = vpack.c.b16 %v3366, %v3360
        %v4033 = vpack.c.b16 %v3367, %v3361
        %v4034 = vpack.c.b16 %v3368, %v3362
        %v4035 = vpack.c.b16 %v3369, %v3363
        %v4036 = vpack.c.b16 %v3370, %v3364
        %v4037 = vpack.c.b16 %v3371, %v3365
        %v4038 = vpack.c.b16 %v3378, %v3372
        %v4039 = vpack.c.b16 %v3379, %v3373
        %v4040 = vpack.c.b16 %v3380, %v3374
        %v4041 = vpack.c.b16 %v3381, %v3375
        %v4042 = vpack.c.b16 %v3382, %v3376
        %v4043 = vpack.c.b16 %v3383, %v3377
        %v4044 = vpack.c.b16 %v3390, %v3384
        %v4045 = vpack.c.b16 %v3391, %v3385
        %v4046 = vpack.c.b16 %v3392, %v3386
        %v4047 = vpack.c.b16 %v3393, %v3387
        %v4048 = vpack.c.b16 %v3394, %v3388
        %v4049 = vpack.c.b16 %v3395, %v3389
        %v4050 = vpack.c.b16 %v3402, %v3396
        %v4051 = vpack.c.b16 %v3403, %v3397
        %v4052 = vpack.c.b16 %v3404, %v3398
        %v4053 = vpack.c.b16 %v3405, %v3399
        %v4054 = vpack.c.b16 %v3406, %v3400
        %v4055 = vpack.c.b16 %v3407, %v3401
        %v4056 = vpack.c.b16 %v3414, %v3408
        %v4057 = vpack.c.b16 %v3415, %v3409
        %v4058 = vpack.c.b16 %v3416, %v3410
        %v4059 = vpack.c.b16 %v3417, %v3411
        %v4060 = vpack.c.b16 %v3418, %v3412
        %v4061 = vpack.c.b16 %v3419, %v3413
        %v4062 = vpack.c.b16 %v3426, %v3420
        %v4063 = vpack.c.b16 %v3427, %v3421
        %v4064 = vpack.c.b16 %v3428, %v3422
        %v4065 = vpack.c.b16 %v3429, %v3423
        %v4066 = vpack.c.b16 %v3430, %v3424
        %v4067 = vpack.c.b16 %v3431, %v3425
        %v4068 = vpack.c.b16 %v3438, %v3432
        %v4069 = vpack.c.b16 %v3439, %v3433
        %v4070 = vpack.c.b16 %v3440, %v3434
        %v4071 = vpack.c.b16 %v3441, %v3435
        %v4072 = vpack.c.b16 %v3442, %v3436
        %v4073 = vpack.c.b16 %v3443, %v3437
        %v4074 = vpack.c.b16 %v3450, %v3444
        %v4075 = vpack.c.b16 %v3451, %v3445
        %v4076 = vpack.c.b16 %v3452, %v3446
        %v4077 = vpack.c.b16 %v3453, %v3447
        %v4078 = vpack.c.b16 %v3454, %v3448
        %v4079 = vpack.c.b16 %v3455, %v3449
        %v4080 = vpack.c.b16 %v3462, %v3456
        %v4081 = vpack.c.b16 %v3463, %v3457
        %v4082 = vpack.c.b16 %v3464, %v3458
        %v4083 = vpack.c.b16 %v3465, %v3459
        %v4084 = vpack.c.b16 %v3466, %v3460
        %v4085 = vpack.c.b16 %v3467, %v3461
        %v4086 = vpack.c.b16 %v3474, %v3468
        %v4087 = vpack.c.b16 %v3475, %v3469
        %v4088 = vpack.c.b16 %v3476, %v3470
        %v4089 = vpack.c.b16 %v3477, %v3471
        %v4090 = vpack.c.b16 %v3478, %v3472
        %v4091 = vpack.c.b16 %v3479, %v3473
        %v4092 = vpack.c.b16 %v3486, %v3480
        %v4093 = vpack.c.b16 %v3487, %v3481
        %v4094 = vpack.c.b16 %v3488, %v3482
        %v4095 = vpack.c.b16 %v3489, %v3483
        %v4096 = vpack.c.b16 %v3490, %v3484
        %v4097 = vpack.c.b16 %v3491, %v3485
        %v4098 = vpack.c.b16 %v3498, %v3492
        %v4099 = vpack.c.b16 %v3499, %v3493
        %v4100 = vpack.c.b16 %v3500, %v3494
        %v4101 = vpack.c.b16 %v3501, %v3495
        %v4102 = vpack.c.b16 %v3502, %v3496
        %v4103 = vpack.c.b16 %v3503, %v3497
        %v4104 = vpack.c.b16 %v3510, %v3504
        %v4105 = vpack.c.b16 %v3511, %v3505
        %v4106 = vpack.c.b16 %v3512, %v3506
        %v4107 = vpack.c.b16 %v3513, %v3507
        %v4108 = vpack.c.b16 %v3514, %v3508
        %v4109 = vpack.c.b16 %v3515, %v3509
        %v4110 = vpack.c.b16 %v3522, %v3516
        %v4111 = vpack.c.b16 %v3523, %v3517
        %v4112 = vpack.c.b16 %v3524, %v3518
        %v4113 = vpack.c.b16 %v3525, %v3519
        %v4114 = vpack.c.b16 %v3526, %v3520
        %v4115 = vpack.c.b16 %v3527, %v3521
        %v4116 = vpack.c.b16 %v3534, %v3528
        %v4117 = vpack.c.b16 %v3535, %v3529
        %v4118 = vpack.c.b16 %v3536, %v3530
        %v4119 = vpack.c.b16 %v3537, %v3531
        %v4120 = vpack.c.b16 %v3538, %v3532
        %v4121 = vpack.c.b16 %v3539, %v3533
        %v4122 = vpack.c.b16 %v3546, %v3540
        %v4123 = vpack.c.b16 %v3547, %v3541
        %v4124 = vpack.c.b16 %v3548, %v3542
        %v4125 = vpack.c.b16 %v3549, %v3543
        %v4126 = vpack.c.b16 %v3550, %v3544
        %v4127 = vpack.c.b16 %v3551, %v3545
        %4704 = vmatprep.subr.bf16.mxu0 %v3553
        %4705 = vmatpush1.bf16.msra.mxu0 %v3552
        %4706 = vmatprep.subr.bf16.mxu0 %v3559
        %4707 = vmatpush1.bf16.msra.mxu0 %v3558
        %4708 = vmatprep.subr.bf16.mxu0 %v3565
        %4709 = vmatpush1.bf16.msra.mxu0 %v3564
        %4710 = vmatprep.subr.bf16.mxu0 %v3571
        %4711 = vmatpush1.bf16.msra.mxu0 %v3570
        %4712 = vmatprep.subr.bf16.mxu0 %v3577
        %4713 = vmatpush1.bf16.msra.mxu0 %v3576
        %4714 = vmatprep.subr.bf16.mxu0 %v3583
        %4715 = vmatpush1.bf16.msra.mxu0 %v3582
        %4716 = vmatprep.subr.bf16.mxu0 %v3589
        %4717 = vmatpush1.bf16.msra.mxu0 %v3588
        %4718 = vmatprep.subr.bf16.mxu0 %v3595
        %4719 = vmatpush1.bf16.msra.mxu0 %v3594
        %4720 = vmatprep.subr.bf16.mxu0 %v3601
        %4721 = vmatpush1.bf16.msra.mxu0 %v3600
        %4722 = vmatprep.subr.bf16.mxu0 %v3607
        %4723 = vmatpush1.bf16.msra.mxu0 %v3606
        %4724 = vmatprep.subr.bf16.mxu0 %v3613
        %4725 = vmatpush1.bf16.msra.mxu0 %v3612
        %4726 = vmatprep.subr.bf16.mxu0 %v3619
        %4727 = vmatpush1.bf16.msra.mxu0 %v3618
        %4728 = vmatprep.subr.bf16.mxu0 %v3625
        %4729 = vmatpush1.bf16.msra.mxu0 %v3624
        %4730 = vmatprep.subr.bf16.mxu0 %v3631
        %4731 = vmatpush1.bf16.msra.mxu0 %v3630
        %4732 = vmatprep.subr.bf16.mxu0 %v3637
        %4733 = vmatpush1.bf16.msra.mxu0 %v3636
        %4734 = vmatprep.subr.bf16.mxu0 %v3643
        %4735 = vmatpush1.bf16.msra.mxu0 %v3642
        %4736 = vmatprep.mubr.bf16.mxu0 %v1633
        %4737 = vmatmul.mubr.bf16.gmra.mrb[0].mxu0 %v1632
        %v4738 = vpop.f32.mrb[0].mxu0
        %v4739 = vadd.f32 0.0, %v4738
        %v4740 = vpop.f32.mrb[0].mxu0
        %v4741 = vadd.f32 0.0, %v4740
        %v4742 = vpop.f32.mrb[0].mxu0
        %v4743 = vadd.f32 0.0, %v4742
        %v4744 = vpop.f32.mrb[0].mxu0
        %v4745 = vadd.f32 0.0, %v4744
        %4746 = vmatprep.mubr.bf16.mxu0 %v1645
        %4747 = vmatmul.mubr.bf16.gmra.mrb[0].mxu0 %v1644
        %v4748 = vpop.f32.mrb[0].mxu0
        %v4749 = vadd.f32 0.0, %v4748
        %v4750 = vpop.f32.mrb[0].mxu0
        %v4751 = vadd.f32 0.0, %v4750
        %v4752 = vpop.f32.mrb[0].mxu0
        %v4753 = vadd.f32 0.0, %v4752
        %v4754 = vpop.f32.mrb[0].mxu0
        %v4755 = vadd.f32 0.0, %v4754
        %4756 = vmatprep.mubr.bf16.mxu0 %v1657
        %4757 = vmatmul.mubr.bf16.gmra.mrb[0].mxu0 %v1656
        %v4758 = vpop.f32.mrb[0].mxu0
        %v4759 = vadd.f32 0.0, %v4758
        %v4760 = vpop.f32.mrb[0].mxu0
        %v4761 = vadd.f32 0.0, %v4760
        %v4762 = vpop.f32.mrb[0].mxu0
        %v4763 = vadd.f32 0.0, %v4762
        %v4764 = vpop.f32.mrb[0].mxu0
        %v4765 = vadd.f32 0.0, %v4764
        %4766 = vmatprep.mubr.bf16.mxu0 %v1669
        %4767 = vmatmul.mubr.bf16.gmra.mrb[0].mxu0 %v1668
        %v4768 = vpop.f32.mrb[0].mxu0
        %v4769 = vadd.f32 0.0, %v4768
        %v4770 = vpop.f32.mrb[0].mxu0
        %v4771 = vadd.f32 0.0, %v4770
        %v4772 = vpop.f32.mrb[0].mxu0
        %v4773 = vadd.f32 0.0, %v4772
        %v4774 = vpop.f32.mrb[0].mxu0
        %v4775 = vadd.f32 0.0, %v4774
        %4776 = vmatprep.mubr.bf16.mxu0 %v1681
        %4777 = vmatmul.mubr.bf16.gmra.mrb[0].mxu0 %v1680
        %v4778 = vpop.f32.mrb[0].mxu0
        %v4779 = vadd.f32 0.0, %v4778
        %v4780 = vpop.f32.mrb[0].mxu0
        %v4781 = vadd.f32 0.0, %v4780
        %v4782 = vpop.f32.mrb[0].mxu0
        %v4783 = vadd.f32 0.0, %v4782
        %v4784 = vpop.f32.mrb[0].mxu0
        %v4785 = vadd.f32 0.0, %v4784
        %4786 = vmatprep.mubr.bf16.mxu0 %v1693
        %4787 = vmatmul.mubr.bf16.gmra.mrb[0].mxu0 %v1692
        %v4788 = vpop.f32.mrb[0].mxu0
        %v4789 = vadd.f32 0.0, %v4788
        %v4790 = vpop.f32.mrb[0].mxu0
        %v4791 = vadd.f32 0.0, %v4790
        %v4792 = vpop.f32.mrb[0].mxu0
        %v4793 = vadd.f32 0.0, %v4792
        %v4794 = vpop.f32.mrb[0].mxu0
        %v4795 = vadd.f32 0.0, %v4794
        %4796 = vmatprep.mubr.bf16.mxu0 %v1705
        %4797 = vmatmul.mubr.bf16.gmra.mrb[0].mxu0 %v1704
        %v4798 = vpop.f32.mrb[0].mxu0
        %v4799 = vadd.f32 0.0, %v4798
        %v4800 = vpop.f32.mrb[0].mxu0
        %v4801 = vadd.f32 0.0, %v4800
        %v4802 = vpop.f32.mrb[0].mxu0
        %v4803 = vadd.f32 0.0, %v4802
        %v4804 = vpop.f32.mrb[0].mxu0
        %v4805 = vadd.f32 0.0, %v4804
        %4806 = vmatprep.mubr.bf16.mxu0 %v1717
        %4807 = vmatmul.mubr.bf16.gmra.mrb[0].mxu0 %v1716
        %v4808 = vpop.f32.mrb[0].mxu0
        %v4809 = vadd.f32 0.0, %v4808
        %v4810 = vpop.f32.mrb[0].mxu0
        %v4811 = vadd.f32 0.0, %v4810
        %v4812 = vpop.f32.mrb[0].mxu0
        %v4813 = vadd.f32 0.0, %v4812
        %v4814 = vpop.f32.mrb[0].mxu0
        %v4815 = vadd.f32 0.0, %v4814
        %4816 = vdwg.mxu0
        %4817 = vmatprep.subr.bf16.mxu0 %v3649
        %4818 = vmatpush1.bf16.msra.mxu0 %v3648
        %4819 = vmatprep.subr.bf16.mxu0 %v3655
        %4820 = vmatpush1.bf16.msra.mxu0 %v3654
        %4821 = vmatprep.subr.bf16.mxu0 %v3661
        %4822 = vmatpush1.bf16.msra.mxu0 %v3660
        %4823 = vmatprep.subr.bf16.mxu0 %v3667
        %4824 = vmatpush1.bf16.msra.mxu0 %v3666
        %4825 = vmatprep.subr.bf16.mxu0 %v3673
        %4826 = vmatpush1.bf16.msra.mxu0 %v3672
        %4827 = vmatprep.subr.bf16.mxu0 %v3679
        %4828 = vmatpush1.bf16.msra.mxu0 %v3678
        %4829 = vmatprep.subr.bf16.mxu0 %v3685
        %4830 = vmatpush1.bf16.msra.mxu0 %v3684
        %4831 = vmatprep.subr.bf16.mxu0 %v3691
        %4832 = vmatpush1.bf16.msra.mxu0 %v3690
        %4833 = vmatprep.subr.bf16.mxu0 %v3697
        %4834 = vmatpush1.bf16.msra.mxu0 %v3696
        %4835 = vmatprep.subr.bf16.mxu0 %v3703
        %4836 = vmatpush1.bf16.msra.mxu0 %v3702
        %4837 = vmatprep.subr.bf16.mxu0 %v3709
        %4838 = vmatpush1.bf16.msra.mxu0 %v3708
        %4839 = vmatprep.subr.bf16.mxu0 %v3715
        %4840 = vmatpush1.bf16.msra.mxu0 %v3714
        %4841 = vmatprep.subr.bf16.mxu0 %v3721
        %4842 = vmatpush1.bf16.msra.mxu0 %v3720
        %4843 = vmatprep.subr.bf16.mxu0 %v3727
        %4844 = vmatpush1.bf16.msra.mxu0 %v3726
        %4845 = vmatprep.subr.bf16.mxu0 %v3733
        %4846 = vmatpush1.bf16.msra.mxu0 %v3732
        %4847 = vmatprep.subr.bf16.mxu0 %v3739
        %4848 = vmatpush1.bf16.msra.mxu0 %v3738
        %4849 = vmatprep.mubr.bf16.mxu0 %v1635
        %4850 = vmatmul.mubr.bf16.gmra.mrb[0].mxu0 %v1634
        %v4851 = vpop.f32.mrb[0].mxu0
        %v4852 = vadd.f32 %v4739, %v4851
        %v4853 = vpop.f32.mrb[0].mxu0
        %v4854 = vadd.f32 %v4741, %v4853
        %v4855 = vpop.f32.mrb[0].mxu0
        %v4856 = vadd.f32 %v4743, %v4855
        %v4857 = vpop.f32.mrb[0].mxu0
        %v4858 = vadd.f32 %v4745, %v4857
        %4859 = vmatprep.mubr.bf16.mxu0 %v1647
        %4860 = vmatmul.mubr.bf16.gmra.mrb[0].mxu0 %v1646
        %v4861 = vpop.f32.mrb[0].mxu0
        %v4862 = vadd.f32 %v4749, %v4861
        %v4863 = vpop.f32.mrb[0].mxu0
        %v4864 = vadd.f32 %v4751, %v4863
        %v4865 = vpop.f32.mrb[0].mxu0
        %v4866 = vadd.f32 %v4753, %v4865
        %v4867 = vpop.f32.mrb[0].mxu0
        %v4868 = vadd.f32 %v4755, %v4867
        %4869 = vmatprep.mubr.bf16.mxu0 %v1659
        %4870 = vmatmul.mubr.bf16.gmra.mrb[0].mxu0 %v1658
        %v4871 = vpop.f32.mrb[0].mxu0
        %v4872 = vadd.f32 %v4759, %v4871
        %v4873 = vpop.f32.mrb[0].mxu0
        %v4874 = vadd.f32 %v4761, %v4873
        %v4875 = vpop.f32.mrb[0].mxu0
        %v4876 = vadd.f32 %v4763, %v4875
        %v4877 = vpop.f32.mrb[0].mxu0
        %v4878 = vadd.f32 %v4765, %v4877
        %4879 = vmatprep.mubr.bf16.mxu0 %v1671
        %4880 = vmatmul.mubr.bf16.gmra.mrb[0].mxu0 %v1670
        %v4881 = vpop.f32.mrb[0].mxu0
        %v4882 = vadd.f32 %v4769, %v4881
        %v4883 = vpop.f32.mrb[0].mxu0
        %v4884 = vadd.f32 %v4771, %v4883
        %v4885 = vpop.f32.mrb[0].mxu0
        %v4886 = vadd.f32 %v4773, %v4885
        %v4887 = vpop.f32.mrb[0].mxu0
        %v4888 = vadd.f32 %v4775, %v4887
        %4889 = vmatprep.mubr.bf16.mxu0 %v1683
        %4890 = vmatmul.mubr.bf16.gmra.mrb[0].mxu0 %v1682
        %v4891 = vpop.f32.mrb[0].mxu0
        %v4892 = vadd.f32 %v4779, %v4891
        %v4893 = vpop.f32.mrb[0].mxu0
        %v4894 = vadd.f32 %v4781, %v4893
        %v4895 = vpop.f32.mrb[0].mxu0
        %v4896 = vadd.f32 %v4783, %v4895
        %v4897 = vpop.f32.mrb[0].mxu0
        %v4898 = vadd.f32 %v4785, %v4897
        %4899 = vmatprep.mubr.bf16.mxu0 %v1695
        %4900 = vmatmul.mubr.bf16.gmra.mrb[0].mxu0 %v1694
        %v4901 = vpop.f32.mrb[0].mxu0
        %v4902 = vadd.f32 %v4789, %v4901
        %v4903 = vpop.f32.mrb[0].mxu0
        %v4904 = vadd.f32 %v4791, %v4903
        %v4905 = vpop.f32.mrb[0].mxu0
        %v4906 = vadd.f32 %v4793, %v4905
        %v4907 = vpop.f32.mrb[0].mxu0
        %v4908 = vadd.f32 %v4795, %v4907
        %4909 = vmatprep.mubr.bf16.mxu0 %v1707
        %4910 = vmatmul.mubr.bf16.gmra.mrb[0].mxu0 %v1706
        %v4911 = vpop.f32.mrb[0].mxu0
        %v4912 = vadd.f32 %v4799, %v4911
        %v4913 = vpop.f32.mrb[0].mxu0
        %v4914 = vadd.f32 %v4801, %v4913
        %v4915 = vpop.f32.mrb[0].mxu0
        %v4916 = vadd.f32 %v4803, %v4915
        %v4917 = vpop.f32.mrb[0].mxu0
        %v4918 = vadd.f32 %v4805, %v4917
        %4919 = vmatprep.mubr.bf16.mxu0 %v1719
        %4920 = vmatmul.mubr.bf16.gmra.mrb[0].mxu0 %v1718
        %v4921 = vpop.f32.mrb[0].mxu0
        %v4922 = vadd.f32 %v4809, %v4921
        %v4923 = vpop.f32.mrb[0].mxu0
        %v4924 = vadd.f32 %v4811, %v4923
        %v4925 = vpop.f32.mrb[0].mxu0
        %v4926 = vadd.f32 %v4813, %v4925
        %v4927 = vpop.f32.mrb[0].mxu0
        %v4928 = vadd.f32 %v4815, %v4927
        %4929 = vdwg.mxu0
        %4930 = vmatprep.subr.bf16.mxu0 %v3745
        %4931 = vmatpush1.bf16.msra.mxu0 %v3744
        %4932 = vmatprep.subr.bf16.mxu0 %v3751
        %4933 = vmatpush1.bf16.msra.mxu0 %v3750
        %4934 = vmatprep.subr.bf16.mxu0 %v3757
        %4935 = vmatpush1.bf16.msra.mxu0 %v3756
        %4936 = vmatprep.subr.bf16.mxu0 %v3763
        %4937 = vmatpush1.bf16.msra.mxu0 %v3762
        %4938 = vmatprep.subr.bf16.mxu0 %v3769
        %4939 = vmatpush1.bf16.msra.mxu0 %v3768
        %4940 = vmatprep.subr.bf16.mxu0 %v3775
        %4941 = vmatpush1.bf16.msra.mxu0 %v3774
        %4942 = vmatprep.subr.bf16.mxu0 %v3781
        %4943 = vmatpush1.bf16.msra.mxu0 %v3780
        %4944 = vmatprep.subr.bf16.mxu0 %v3787
        %4945 = vmatpush1.bf16.msra.mxu0 %v3786
        %4946 = vmatprep.subr.bf16.mxu0 %v3793
        %4947 = vmatpush1.bf16.msra.mxu0 %v3792
        %4948 = vmatprep.subr.bf16.mxu0 %v3799
        %4949 = vmatpush1.bf16.msra.mxu0 %v3798
        %4950 = vmatprep.subr.bf16.mxu0 %v3805
        %4951 = vmatpush1.bf16.msra.mxu0 %v3804
        %4952 = vmatprep.subr.bf16.mxu0 %v3811
        %4953 = vmatpush1.bf16.msra.mxu0 %v3810
        %4954 = vmatprep.subr.bf16.mxu0 %v3817
        %4955 = vmatpush1.bf16.msra.mxu0 %v3816
        %4956 = vmatprep.subr.bf16.mxu0 %v3823
        %4957 = vmatpush1.bf16.msra.mxu0 %v3822
        %4958 = vmatprep.subr.bf16.mxu0 %v3829
        %4959 = vmatpush1.bf16.msra.mxu0 %v3828
        %4960 = vmatprep.subr.bf16.mxu0 %v3835
        %4961 = vmatpush1.bf16.msra.mxu0 %v3834
        %4962 = vmatprep.mubr.bf16.mxu0 %v1637
        %4963 = vmatmul.mubr.bf16.gmra.mrb[0].mxu0 %v1636
        %v4964 = vpop.f32.mrb[0].mxu0
        %v4965 = vadd.f32 %v4852, %v4964
        %v4966 = vpop.f32.mrb[0].mxu0
        %v4967 = vadd.f32 %v4854, %v4966
        %v4968 = vpop.f32.mrb[0].mxu0
        %v4969 = vadd.f32 %v4856, %v4968
        %v4970 = vpop.f32.mrb[0].mxu0
        %v4971 = vadd.f32 %v4858, %v4970
        %4972 = vmatprep.mubr.bf16.mxu0 %v1649
        %4973 = vmatmul.mubr.bf16.gmra.mrb[0].mxu0 %v1648
        %v4974 = vpop.f32.mrb[0].mxu0
        %v4975 = vadd.f32 %v4862, %v4974
        %v4976 = vpop.f32.mrb[0].mxu0
        %v4977 = vadd.f32 %v4864, %v4976
        %v4978 = vpop.f32.mrb[0].mxu0
        %v4979 = vadd.f32 %v4866, %v4978
        %v4980 = vpop.f32.mrb[0].mxu0
        %v4981 = vadd.f32 %v4868, %v4980
        %4982 = vmatprep.mubr.bf16.mxu0 %v1661
        %4983 = vmatmul.mubr.bf16.gmra.mrb[0].mxu0 %v1660
        %v4984 = vpop.f32.mrb[0].mxu0
        %v4985 = vadd.f32 %v4872, %v4984
        %v4986 = vpop.f32.mrb[0].mxu0
        %v4987 = vadd.f32 %v4874, %v4986
        %v4988 = vpop.f32.mrb[0].mxu0
        %v4989 = vadd.f32 %v4876, %v4988
        %v4990 = vpop.f32.mrb[0].mxu0
        %v4991 = vadd.f32 %v4878, %v4990
        %4992 = vmatprep.mubr.bf16.mxu0 %v1673
        %4993 = vmatmul.mubr.bf16.gmra.mrb[0].mxu0 %v1672
        %v4994 = vpop.f32.mrb[0].mxu0
        %v4995 = vadd.f32 %v4882, %v4994
        %v4996 = vpop.f32.mrb[0].mxu0
        %v4997 = vadd.f32 %v4884, %v4996
        %v4998 = vpop.f32.mrb[0].mxu0
        %v4999 = vadd.f32 %v4886, %v4998
        %v5000 = vpop.f32.mrb[0].mxu0
        %v5001 = vadd.f32 %v4888, %v5000
        %5002 = vmatprep.mubr.bf16.mxu0 %v1685
        %5003 = vmatmul.mubr.bf16.gmra.mrb[0].mxu0 %v1684
        %v5004 = vpop.f32.mrb[0].mxu0
        %v5005 = vadd.f32 %v4892, %v5004
        %v5006 = vpop.f32.mrb[0].mxu0
        %v5007 = vadd.f32 %v4894, %v5006
        %v5008 = vpop.f32.mrb[0].mxu0
        %v5009 = vadd.f32 %v4896, %v5008
        %v5010 = vpop.f32.mrb[0].mxu0
        %v5011 = vadd.f32 %v4898, %v5010
        %5012 = vmatprep.mubr.bf16.mxu0 %v1697
        %5013 = vmatmul.mubr.bf16.gmra.mrb[0].mxu0 %v1696
        %v5014 = vpop.f32.mrb[0].mxu0
        %v5015 = vadd.f32 %v4902, %v5014
        %v5016 = vpop.f32.mrb[0].mxu0
        %v5017 = vadd.f32 %v4904, %v5016
        %v5018 = vpop.f32.mrb[0].mxu0
        %v5019 = vadd.f32 %v4906, %v5018
        %v5020 = vpop.f32.mrb[0].mxu0
        %v5021 = vadd.f32 %v4908, %v5020
        %5022 = vmatprep.mubr.bf16.mxu0 %v1709
        %5023 = vmatmul.mubr.bf16.gmra.mrb[0].mxu0 %v1708
        %v5024 = vpop.f32.mrb[0].mxu0
        %v5025 = vadd.f32 %v4912, %v5024
        %v5026 = vpop.f32.mrb[0].mxu0
        %v5027 = vadd.f32 %v4914, %v5026
        %v5028 = vpop.f32.mrb[0].mxu0
        %v5029 = vadd.f32 %v4916, %v5028
        %v5030 = vpop.f32.mrb[0].mxu0
        %v5031 = vadd.f32 %v4918, %v5030
        %5032 = vmatprep.mubr.bf16.mxu0 %v1721
        %5033 = vmatmul.mubr.bf16.gmra.mrb[0].mxu0 %v1720
        %v5034 = vpop.f32.mrb[0].mxu0
        %v5035 = vadd.f32 %v4922, %v5034
        %v5036 = vpop.f32.mrb[0].mxu0
        %v5037 = vadd.f32 %v4924, %v5036
        %v5038 = vpop.f32.mrb[0].mxu0
        %v5039 = vadd.f32 %v4926, %v5038
        %v5040 = vpop.f32.mrb[0].mxu0
        %v5041 = vadd.f32 %v4928, %v5040
        %5042 = vdwg.mxu0
        %5043 = vmatprep.subr.bf16.mxu0 %v3841
        %5044 = vmatpush1.bf16.msra.mxu0 %v3840
        %5045 = vmatprep.subr.bf16.mxu0 %v3847
        %5046 = vmatpush1.bf16.msra.mxu0 %v3846
        %5047 = vmatprep.subr.bf16.mxu0 %v3853
        %5048 = vmatpush1.bf16.msra.mxu0 %v3852
        %5049 = vmatprep.subr.bf16.mxu0 %v3859
        %5050 = vmatpush1.bf16.msra.mxu0 %v3858
        %5051 = vmatprep.subr.bf16.mxu0 %v3865
        %5052 = vmatpush1.bf16.msra.mxu0 %v3864
        %5053 = vmatprep.subr.bf16.mxu0 %v3871
        %5054 = vmatpush1.bf16.msra.mxu0 %v3870
        %5055 = vmatprep.subr.bf16.mxu0 %v3877
        %5056 = vmatpush1.bf16.msra.mxu0 %v3876
        %5057 = vmatprep.subr.bf16.mxu0 %v3883
        %5058 = vmatpush1.bf16.msra.mxu0 %v3882
        %5059 = vmatprep.subr.bf16.mxu0 %v3889
        %5060 = vmatpush1.bf16.msra.mxu0 %v3888
        %5061 = vmatprep.subr.bf16.mxu0 %v3895
        %5062 = vmatpush1.bf16.msra.mxu0 %v3894
        %5063 = vmatprep.subr.bf16.mxu0 %v3901
        %5064 = vmatpush1.bf16.msra.mxu0 %v3900
        %5065 = vmatprep.subr.bf16.mxu0 %v3907
        %5066 = vmatpush1.bf16.msra.mxu0 %v3906
        %5067 = vmatprep.subr.bf16.mxu0 %v3913
        %5068 = vmatpush1.bf16.msra.mxu0 %v3912
        %5069 = vmatprep.subr.bf16.mxu0 %v3919
        %5070 = vmatpush1.bf16.msra.mxu0 %v3918
        %5071 = vmatprep.subr.bf16.mxu0 %v3925
        %5072 = vmatpush1.bf16.msra.mxu0 %v3924
        %5073 = vmatprep.subr.bf16.mxu0 %v3931
        %5074 = vmatpush1.bf16.msra.mxu0 %v3930
        %5075 = vmatprep.mubr.bf16.mxu0 %v1639
        %5076 = vmatmul.mubr.bf16.gmra.mrb[0].mxu0 %v1638
        %v5077 = vpop.f32.mrb[0].mxu0
        %v5078 = vadd.f32 %v4965, %v5077
        %v5079 = vpop.f32.mrb[0].mxu0
        %v5080 = vadd.f32 %v4967, %v5079
        %v5081 = vpop.f32.mrb[0].mxu0
        %v5082 = vadd.f32 %v4969, %v5081
        %v5083 = vpop.f32.mrb[0].mxu0
        %v5084 = vadd.f32 %v4971, %v5083
        %5085 = vmatprep.mubr.bf16.mxu0 %v1651
        %5086 = vmatmul.mubr.bf16.gmra.mrb[0].mxu0 %v1650
        %v5087 = vpop.f32.mrb[0].mxu0
        %v5088 = vadd.f32 %v4975, %v5087
        %v5089 = vpop.f32.mrb[0].mxu0
        %v5090 = vadd.f32 %v4977, %v5089
        %v5091 = vpop.f32.mrb[0].mxu0
        %v5092 = vadd.f32 %v4979, %v5091
        %v5093 = vpop.f32.mrb[0].mxu0
        %v5094 = vadd.f32 %v4981, %v5093
        %5095 = vmatprep.mubr.bf16.mxu0 %v1663
        %5096 = vmatmul.mubr.bf16.gmra.mrb[0].mxu0 %v1662
        %v5097 = vpop.f32.mrb[0].mxu0
        %v5098 = vadd.f32 %v4985, %v5097
        %v5099 = vpop.f32.mrb[0].mxu0
        %v5100 = vadd.f32 %v4987, %v5099
        %v5101 = vpop.f32.mrb[0].mxu0
        %v5102 = vadd.f32 %v4989, %v5101
        %v5103 = vpop.f32.mrb[0].mxu0
        %v5104 = vadd.f32 %v4991, %v5103
        %5105 = vmatprep.mubr.bf16.mxu0 %v1675
        %5106 = vmatmul.mubr.bf16.gmra.mrb[0].mxu0 %v1674
        %v5107 = vpop.f32.mrb[0].mxu0
        %v5108 = vadd.f32 %v4995, %v5107
        %v5109 = vpop.f32.mrb[0].mxu0
        %v5110 = vadd.f32 %v4997, %v5109
        %v5111 = vpop.f32.mrb[0].mxu0
        %v5112 = vadd.f32 %v4999, %v5111
        %v5113 = vpop.f32.mrb[0].mxu0
        %v5114 = vadd.f32 %v5001, %v5113
        %5115 = vmatprep.mubr.bf16.mxu0 %v1687
        %5116 = vmatmul.mubr.bf16.gmra.mrb[0].mxu0 %v1686
        %v5117 = vpop.f32.mrb[0].mxu0
        %v5118 = vadd.f32 %v5005, %v5117
        %v5119 = vpop.f32.mrb[0].mxu0
        %v5120 = vadd.f32 %v5007, %v5119
        %v5121 = vpop.f32.mrb[0].mxu0
        %v5122 = vadd.f32 %v5009, %v5121
        %v5123 = vpop.f32.mrb[0].mxu0
        %v5124 = vadd.f32 %v5011, %v5123
        %5125 = vmatprep.mubr.bf16.mxu0 %v1699
        %5126 = vmatmul.mubr.bf16.gmra.mrb[0].mxu0 %v1698
        %v5127 = vpop.f32.mrb[0].mxu0
        %v5128 = vadd.f32 %v5015, %v5127
        %v5129 = vpop.f32.mrb[0].mxu0
        %v5130 = vadd.f32 %v5017, %v5129
        %v5131 = vpop.f32.mrb[0].mxu0
        %v5132 = vadd.f32 %v5019, %v5131
        %v5133 = vpop.f32.mrb[0].mxu0
        %v5134 = vadd.f32 %v5021, %v5133
        %5135 = vmatprep.mubr.bf16.mxu0 %v1711
        %5136 = vmatmul.mubr.bf16.gmra.mrb[0].mxu0 %v1710
        %v5137 = vpop.f32.mrb[0].mxu0
        %v5138 = vadd.f32 %v5025, %v5137
        %v5139 = vpop.f32.mrb[0].mxu0
        %v5140 = vadd.f32 %v5027, %v5139
        %v5141 = vpop.f32.mrb[0].mxu0
        %v5142 = vadd.f32 %v5029, %v5141
        %v5143 = vpop.f32.mrb[0].mxu0
        %v5144 = vadd.f32 %v5031, %v5143
        %5145 = vmatprep.mubr.bf16.mxu0 %v1723
        %5146 = vmatmul.mubr.bf16.gmra.mrb[0].mxu0 %v1722
        %v5147 = vpop.f32.mrb[0].mxu0
        %v5148 = vadd.f32 %v5035, %v5147
        %v5149 = vpop.f32.mrb[0].mxu0
        %v5150 = vadd.f32 %v5037, %v5149
        %v5151 = vpop.f32.mrb[0].mxu0
        %v5152 = vadd.f32 %v5039, %v5151
        %v5153 = vpop.f32.mrb[0].mxu0
        %v5154 = vadd.f32 %v5041, %v5153
        %5155 = vdwg.mxu0
        %5156 = vmatprep.subr.bf16.mxu0 %v3937
        %5157 = vmatpush1.bf16.msra.mxu0 %v3936
        %5158 = vmatprep.subr.bf16.mxu0 %v3943
        %5159 = vmatpush1.bf16.msra.mxu0 %v3942
        %5160 = vmatprep.subr.bf16.mxu0 %v3949
        %5161 = vmatpush1.bf16.msra.mxu0 %v3948
        %5162 = vmatprep.subr.bf16.mxu0 %v3955
        %5163 = vmatpush1.bf16.msra.mxu0 %v3954
        %5164 = vmatprep.subr.bf16.mxu0 %v3961
        %5165 = vmatpush1.bf16.msra.mxu0 %v3960
        %5166 = vmatprep.subr.bf16.mxu0 %v3967
        %5167 = vmatpush1.bf16.msra.mxu0 %v3966
        %5168 = vmatprep.subr.bf16.mxu0 %v3973
        %5169 = vmatpush1.bf16.msra.mxu0 %v3972
        %5170 = vmatprep.subr.bf16.mxu0 %v3979
        %5171 = vmatpush1.bf16.msra.mxu0 %v3978
        %5172 = vmatprep.subr.bf16.mxu0 %v3985
        %5173 = vmatpush1.bf16.msra.mxu0 %v3984
        %5174 = vmatprep.subr.bf16.mxu0 %v3991
        %5175 = vmatpush1.bf16.msra.mxu0 %v3990
        %5176 = vmatprep.subr.bf16.mxu0 %v3997
        %5177 = vmatpush1.bf16.msra.mxu0 %v3996
        %5178 = vmatprep.subr.bf16.mxu0 %v4003
        %5179 = vmatpush1.bf16.msra.mxu0 %v4002
        %5180 = vmatprep.subr.bf16.mxu0 %v4009
        %5181 = vmatpush1.bf16.msra.mxu0 %v4008
        %5182 = vmatprep.subr.bf16.mxu0 %v4015
        %5183 = vmatpush1.bf16.msra.mxu0 %v4014
        %5184 = vmatprep.subr.bf16.mxu0 %v4021
        %5185 = vmatpush1.bf16.msra.mxu0 %v4020
        %5186 = vmatprep.subr.bf16.mxu0 %v4027
        %5187 = vmatpush1.bf16.msra.mxu0 %v4026
        %5188 = vmatprep.mubr.bf16.mxu0 %v1641
        %5189 = vmatmul.mubr.bf16.gmra.mrb[0].mxu0 %v1640
        %v5190 = vpop.f32.mrb[0].mxu0
        %v5191 = vadd.f32 %v5078, %v5190
        %v5192 = vpop.f32.mrb[0].mxu0
        %v5193 = vadd.f32 %v5080, %v5192
        %v5194 = vpop.f32.mrb[0].mxu0
        %v5195 = vadd.f32 %v5082, %v5194
        %v5196 = vpop.f32.mrb[0].mxu0
        %v5197 = vadd.f32 %v5084, %v5196
        %5198 = vmatprep.mubr.bf16.mxu0 %v1653
        %5199 = vmatmul.mubr.bf16.gmra.mrb[0].mxu0 %v1652
        %v5200 = vpop.f32.mrb[0].mxu0
        %v5201 = vadd.f32 %v5088, %v5200
        %v5202 = vpop.f32.mrb[0].mxu0
        %v5203 = vadd.f32 %v5090, %v5202
        %v5204 = vpop.f32.mrb[0].mxu0
        %v5205 = vadd.f32 %v5092, %v5204
        %v5206 = vpop.f32.mrb[0].mxu0
        %v5207 = vadd.f32 %v5094, %v5206
        %5208 = vmatprep.mubr.bf16.mxu0 %v1665
        %5209 = vmatmul.mubr.bf16.gmra.mrb[0].mxu0 %v1664
        %v5210 = vpop.f32.mrb[0].mxu0
        %v5211 = vadd.f32 %v5098, %v5210
        %v5212 = vpop.f32.mrb[0].mxu0
        %v5213 = vadd.f32 %v5100, %v5212
        %v5214 = vpop.f32.mrb[0].mxu0
        %v5215 = vadd.f32 %v5102, %v5214
        %v5216 = vpop.f32.mrb[0].mxu0
        %v5217 = vadd.f32 %v5104, %v5216
        %5218 = vmatprep.mubr.bf16.mxu0 %v1677
        %5219 = vmatmul.mubr.bf16.gmra.mrb[0].mxu0 %v1676
        %v5220 = vpop.f32.mrb[0].mxu0
        %v5221 = vadd.f32 %v5108, %v5220
        %v5222 = vpop.f32.mrb[0].mxu0
        %v5223 = vadd.f32 %v5110, %v5222
        %v5224 = vpop.f32.mrb[0].mxu0
        %v5225 = vadd.f32 %v5112, %v5224
        %v5226 = vpop.f32.mrb[0].mxu0
        %v5227 = vadd.f32 %v5114, %v5226
        %5228 = vmatprep.mubr.bf16.mxu0 %v1689
        %5229 = vmatmul.mubr.bf16.gmra.mrb[0].mxu0 %v1688
        %v5230 = vpop.f32.mrb[0].mxu0
        %v5231 = vadd.f32 %v5118, %v5230
        %v5232 = vpop.f32.mrb[0].mxu0
        %v5233 = vadd.f32 %v5120, %v5232
        %v5234 = vpop.f32.mrb[0].mxu0
        %v5235 = vadd.f32 %v5122, %v5234
        %v5236 = vpop.f32.mrb[0].mxu0
        %v5237 = vadd.f32 %v5124, %v5236
        %5238 = vmatprep.mubr.bf16.mxu0 %v1701
        %5239 = vmatmul.mubr.bf16.gmra.mrb[0].mxu0 %v1700
        %v5240 = vpop.f32.mrb[0].mxu0
        %v5241 = vadd.f32 %v5128, %v5240
        %v5242 = vpop.f32.mrb[0].mxu0
        %v5243 = vadd.f32 %v5130, %v5242
        %v5244 = vpop.f32.mrb[0].mxu0
        %v5245 = vadd.f32 %v5132, %v5244
        %v5246 = vpop.f32.mrb[0].mxu0
        %v5247 = vadd.f32 %v5134, %v5246
        %5248 = vmatprep.mubr.bf16.mxu0 %v1713
        %5249 = vmatmul.mubr.bf16.gmra.mrb[0].mxu0 %v1712
        %v5250 = vpop.f32.mrb[0].mxu0
        %v5251 = vadd.f32 %v5138, %v5250
        %v5252 = vpop.f32.mrb[0].mxu0
        %v5253 = vadd.f32 %v5140, %v5252
        %v5254 = vpop.f32.mrb[0].mxu0
        %v5255 = vadd.f32 %v5142, %v5254
        %v5256 = vpop.f32.mrb[0].mxu0
        %v5257 = vadd.f32 %v5144, %v5256
        %5258 = vmatprep.mubr.bf16.mxu0 %v1725
        %5259 = vmatmul.mubr.bf16.gmra.mrb[0].mxu0 %v1724
        %v5260 = vpop.f32.mrb[0].mxu0
        %v5261 = vadd.f32 %v5148, %v5260
        %v5262 = vpop.f32.mrb[0].mxu0
        %v5263 = vadd.f32 %v5150, %v5262
        %v5264 = vpop.f32.mrb[0].mxu0
        %v5265 = vadd.f32 %v5152, %v5264
        %v5266 = vpop.f32.mrb[0].mxu0
        %v5267 = vadd.f32 %v5154, %v5266
        %5268 = vdwg.mxu0
        %5269 = vmatprep.subr.bf16.mxu0 %v4033
        %5270 = vmatpush1.bf16.msra.mxu0 %v4032
        %5271 = vmatprep.subr.bf16.mxu0 %v4039
        %5272 = vmatpush1.bf16.msra.mxu0 %v4038
        %5273 = vmatprep.subr.bf16.mxu0 %v4045
        %5274 = vmatpush1.bf16.msra.mxu0 %v4044
        %5275 = vmatprep.subr.bf16.mxu0 %v4051
        %5276 = vmatpush1.bf16.msra.mxu0 %v4050
        %5277 = vmatprep.subr.bf16.mxu0 %v4057
        %5278 = vmatpush1.bf16.msra.mxu0 %v4056
        %5279 = vmatprep.subr.bf16.mxu0 %v4063
        %5280 = vmatpush1.bf16.msra.mxu0 %v4062
        %5281 = vmatprep.subr.bf16.mxu0 %v4069
        %5282 = vmatpush1.bf16.msra.mxu0 %v4068
        %5283 = vmatprep.subr.bf16.mxu0 %v4075
        %5284 = vmatpush1.bf16.msra.mxu0 %v4074
        %5285 = vmatprep.subr.bf16.mxu0 %v4081
        %5286 = vmatpush1.bf16.msra.mxu0 %v4080
        %5287 = vmatprep.subr.bf16.mxu0 %v4087
        %5288 = vmatpush1.bf16.msra.mxu0 %v4086
        %5289 = vmatprep.subr.bf16.mxu0 %v4093
        %5290 = vmatpush1.bf16.msra.mxu0 %v4092
        %5291 = vmatprep.subr.bf16.mxu0 %v4099
        %5292 = vmatpush1.bf16.msra.mxu0 %v4098
        %5293 = vmatprep.subr.bf16.mxu0 %v4105
        %5294 = vmatpush1.bf16.msra.mxu0 %v4104
        %5295 = vmatprep.subr.bf16.mxu0 %v4111
        %5296 = vmatpush1.bf16.msra.mxu0 %v4110
        %5297 = vmatprep.subr.bf16.mxu0 %v4117
        %5298 = vmatpush1.bf16.msra.mxu0 %v4116
        %5299 = vmatprep.subr.bf16.mxu0 %v4123
        %5300 = vmatpush1.bf16.msra.mxu0 %v4122
        %5301 = vmatprep.mubr.bf16.mxu0 %v1643
        %5302 = vmatmul.mubr.bf16.gmra.mrb[0].mxu0 %v1642
        %v5303 = vpop.f32.mrb[0].mxu0
        %v5304 = vadd.f32 %v5191, %v5303
        %v5305 = vpop.f32.mrb[0].mxu0
        %v5306 = vadd.f32 %v5193, %v5305
        %v5307 = vpop.f32.mrb[0].mxu0
        %v5308 = vadd.f32 %v5195, %v5307
        %v5309 = vpop.f32.mrb[0].mxu0
        %v5310 = vadd.f32 %v5197, %v5309
        %5311 = vmatprep.mubr.bf16.mxu0 %v1655
        %5312 = vmatmul.mubr.bf16.gmra.mrb[0].mxu0 %v1654
        %v5313 = vpop.f32.mrb[0].mxu0
        %v5314 = vadd.f32 %v5201, %v5313
        %v5315 = vpop.f32.mrb[0].mxu0
        %v5316 = vadd.f32 %v5203, %v5315
        %v5317 = vpop.f32.mrb[0].mxu0
        %v5318 = vadd.f32 %v5205, %v5317
        %v5319 = vpop.f32.mrb[0].mxu0
        %v5320 = vadd.f32 %v5207, %v5319
        %5321 = vmatprep.mubr.bf16.mxu0 %v1667
        %5322 = vmatmul.mubr.bf16.gmra.mrb[0].mxu0 %v1666
        %v5323 = vpop.f32.mrb[0].mxu0
        %v5324 = vadd.f32 %v5211, %v5323
        %v5325 = vpop.f32.mrb[0].mxu0
        %v5326 = vadd.f32 %v5213, %v5325
        %v5327 = vpop.f32.mrb[0].mxu0
        %v5328 = vadd.f32 %v5215, %v5327
        %v5329 = vpop.f32.mrb[0].mxu0
        %v5330 = vadd.f32 %v5217, %v5329
        %5331 = vmatprep.mubr.bf16.mxu0 %v1679
        %5332 = vmatmul.mubr.bf16.gmra.mrb[0].mxu0 %v1678
        %v5333 = vpop.f32.mrb[0].mxu0
        %v5334 = vadd.f32 %v5221, %v5333
        %v5335 = vpop.f32.mrb[0].mxu0
        %v5336 = vadd.f32 %v5223, %v5335
        %v5337 = vpop.f32.mrb[0].mxu0
        %v5338 = vadd.f32 %v5225, %v5337
        %v5339 = vpop.f32.mrb[0].mxu0
        %v5340 = vadd.f32 %v5227, %v5339
        %5341 = vmatprep.mubr.bf16.mxu0 %v1691
        %5342 = vmatmul.mubr.bf16.gmra.mrb[0].mxu0 %v1690
        %v5343 = vpop.f32.mrb[0].mxu0
        %v5344 = vadd.f32 %v5231, %v5343
        %v5345 = vpop.f32.mrb[0].mxu0
        %v5346 = vadd.f32 %v5233, %v5345
        %v5347 = vpop.f32.mrb[0].mxu0
        %v5348 = vadd.f32 %v5235, %v5347
        %v5349 = vpop.f32.mrb[0].mxu0
        %v5350 = vadd.f32 %v5237, %v5349
        %5351 = vmatprep.mubr.bf16.mxu0 %v1703
        %5352 = vmatmul.mubr.bf16.gmra.mrb[0].mxu0 %v1702
        %v5353 = vpop.f32.mrb[0].mxu0
        %v5354 = vadd.f32 %v5241, %v5353
        %v5355 = vpop.f32.mrb[0].mxu0
        %v5356 = vadd.f32 %v5243, %v5355
        %v5357 = vpop.f32.mrb[0].mxu0
        %v5358 = vadd.f32 %v5245, %v5357
        %v5359 = vpop.f32.mrb[0].mxu0
        %v5360 = vadd.f32 %v5247, %v5359
        %5361 = vmatprep.mubr.bf16.mxu0 %v1715
        %5362 = vmatmul.mubr.bf16.gmra.mrb[0].mxu0 %v1714
        %v5363 = vpop.f32.mrb[0].mxu0
        %v5364 = vadd.f32 %v5251, %v5363
        %v5365 = vpop.f32.mrb[0].mxu0
        %v5366 = vadd.f32 %v5253, %v5365
        %v5367 = vpop.f32.mrb[0].mxu0
        %v5368 = vadd.f32 %v5255, %v5367
        %v5369 = vpop.f32.mrb[0].mxu0
        %v5370 = vadd.f32 %v5257, %v5369
        %5371 = vmatprep.mubr.bf16.mxu0 %v1727
        %5372 = vmatmul.mubr.bf16.gmra.mrb[0].mxu0 %v1726
        %v5373 = vpop.f32.mrb[0].mxu0
        %v5374 = vadd.f32 %v5261, %v5373
        %v5375 = vpop.f32.mrb[0].mxu0
        %v5376 = vadd.f32 %v5263, %v5375
        %v5377 = vpop.f32.mrb[0].mxu0
        %v5378 = vadd.f32 %v5265, %v5377
        %v5379 = vpop.f32.mrb[0].mxu0
        %v5380 = vadd.f32 %v5267, %v5379
        %5381 = vdwg.mxu0
        %5382 = vmatprep.subr.bf16.mxu0 %v3555
        %5383 = vmatpush1.bf16.msra.mxu0 %v3554
        %5384 = vmatprep.subr.bf16.mxu0 %v3561
        %5385 = vmatpush1.bf16.msra.mxu0 %v3560
        %5386 = vmatprep.subr.bf16.mxu0 %v3567
        %5387 = vmatpush1.bf16.msra.mxu0 %v3566
        %5388 = vmatprep.subr.bf16.mxu0 %v3573
        %5389 = vmatpush1.bf16.msra.mxu0 %v3572
        %5390 = vmatprep.subr.bf16.mxu0 %v3579
        %5391 = vmatpush1.bf16.msra.mxu0 %v3578
        %5392 = vmatprep.subr.bf16.mxu0 %v3585
        %5393 = vmatpush1.bf16.msra.mxu0 %v3584
        %5394 = vmatprep.subr.bf16.mxu0 %v3591
        %5395 = vmatpush1.bf16.msra.mxu0 %v3590
        %5396 = vmatprep.subr.bf16.mxu0 %v3597
        %5397 = vmatpush1.bf16.msra.mxu0 %v3596
        %5398 = vmatprep.subr.bf16.mxu0 %v3603
        %5399 = vmatpush1.bf16.msra.mxu0 %v3602
        %5400 = vmatprep.subr.bf16.mxu0 %v3609
        %5401 = vmatpush1.bf16.msra.mxu0 %v3608
        %5402 = vmatprep.subr.bf16.mxu0 %v3615
        %5403 = vmatpush1.bf16.msra.mxu0 %v3614
        %5404 = vmatprep.subr.bf16.mxu0 %v3621
        %5405 = vmatpush1.bf16.msra.mxu0 %v3620
        %5406 = vmatprep.subr.bf16.mxu0 %v3627
        %5407 = vmatpush1.bf16.msra.mxu0 %v3626
        %5408 = vmatprep.subr.bf16.mxu0 %v3633
        %5409 = vmatpush1.bf16.msra.mxu0 %v3632
        %5410 = vmatprep.subr.bf16.mxu0 %v3639
        %5411 = vmatpush1.bf16.msra.mxu0 %v3638
        %5412 = vmatprep.subr.bf16.mxu0 %v3645
        %5413 = vmatpush1.bf16.msra.mxu0 %v3644
        %5414 = vmatprep.mubr.bf16.mxu0 %v1633
        %5415 = vmatmul.mubr.bf16.gmra.mrb[0].mxu0 %v1632
        %v5416 = vpop.f32.mrb[0].mxu0
        %v5417 = vadd.f32 0.0, %v5416
        %v5418 = vpop.f32.mrb[0].mxu0
        %v5419 = vadd.f32 0.0, %v5418
        %v5420 = vpop.f32.mrb[0].mxu0
        %v5421 = vadd.f32 0.0, %v5420
        %v5422 = vpop.f32.mrb[0].mxu0
        %v5423 = vadd.f32 0.0, %v5422
        %5424 = vmatprep.mubr.bf16.mxu0 %v1645
        %5425 = vmatmul.mubr.bf16.gmra.mrb[0].mxu0 %v1644
        %v5426 = vpop.f32.mrb[0].mxu0
        %v5427 = vadd.f32 0.0, %v5426
        %v5428 = vpop.f32.mrb[0].mxu0
        %v5429 = vadd.f32 0.0, %v5428
        %v5430 = vpop.f32.mrb[0].mxu0
        %v5431 = vadd.f32 0.0, %v5430
        %v5432 = vpop.f32.mrb[0].mxu0
        %v5433 = vadd.f32 0.0, %v5432
        %5434 = vmatprep.mubr.bf16.mxu0 %v1657
        %5435 = vmatmul.mubr.bf16.gmra.mrb[0].mxu0 %v1656
        %v5436 = vpop.f32.mrb[0].mxu0
        %v5437 = vadd.f32 0.0, %v5436
        %v5438 = vpop.f32.mrb[0].mxu0
        %v5439 = vadd.f32 0.0, %v5438
        %v5440 = vpop.f32.mrb[0].mxu0
        %v5441 = vadd.f32 0.0, %v5440
        %v5442 = vpop.f32.mrb[0].mxu0
        %v5443 = vadd.f32 0.0, %v5442
        %5444 = vmatprep.mubr.bf16.mxu0 %v1669
        %5445 = vmatmul.mubr.bf16.gmra.mrb[0].mxu0 %v1668
        %v5446 = vpop.f32.mrb[0].mxu0
        %v5447 = vadd.f32 0.0, %v5446
        %v5448 = vpop.f32.mrb[0].mxu0
        %v5449 = vadd.f32 0.0, %v5448
        %v5450 = vpop.f32.mrb[0].mxu0
        %v5451 = vadd.f32 0.0, %v5450
        %v5452 = vpop.f32.mrb[0].mxu0
        %v5453 = vadd.f32 0.0, %v5452
        %5454 = vmatprep.mubr.bf16.mxu0 %v1681
        %5455 = vmatmul.mubr.bf16.gmra.mrb[0].mxu0 %v1680
        %v5456 = vpop.f32.mrb[0].mxu0
        %v5457 = vadd.f32 0.0, %v5456
        %v5458 = vpop.f32.mrb[0].mxu0
        %v5459 = vadd.f32 0.0, %v5458
        %v5460 = vpop.f32.mrb[0].mxu0
        %v5461 = vadd.f32 0.0, %v5460
        %v5462 = vpop.f32.mrb[0].mxu0
        %v5463 = vadd.f32 0.0, %v5462
        %5464 = vmatprep.mubr.bf16.mxu0 %v1693
        %5465 = vmatmul.mubr.bf16.gmra.mrb[0].mxu0 %v1692
        %v5466 = vpop.f32.mrb[0].mxu0
        %v5467 = vadd.f32 0.0, %v5466
        %v5468 = vpop.f32.mrb[0].mxu0
        %v5469 = vadd.f32 0.0, %v5468
        %v5470 = vpop.f32.mrb[0].mxu0
        %v5471 = vadd.f32 0.0, %v5470
        %v5472 = vpop.f32.mrb[0].mxu0
        %v5473 = vadd.f32 0.0, %v5472
        %5474 = vmatprep.mubr.bf16.mxu0 %v1705
        %5475 = vmatmul.mubr.bf16.gmra.mrb[0].mxu0 %v1704
        %v5476 = vpop.f32.mrb[0].mxu0
        %v5477 = vadd.f32 0.0, %v5476
        %v5478 = vpop.f32.mrb[0].mxu0
        %v5479 = vadd.f32 0.0, %v5478
        %v5480 = vpop.f32.mrb[0].mxu0
        %v5481 = vadd.f32 0.0, %v5480
        %v5482 = vpop.f32.mrb[0].mxu0
        %v5483 = vadd.f32 0.0, %v5482
        %5484 = vmatprep.mubr.bf16.mxu0 %v1717
        %5485 = vmatmul.mubr.bf16.gmra.mrb[0].mxu0 %v1716
        %v5486 = vpop.f32.mrb[0].mxu0
        %v5487 = vadd.f32 0.0, %v5486
        %v5488 = vpop.f32.mrb[0].mxu0
        %v5489 = vadd.f32 0.0, %v5488
        %v5490 = vpop.f32.mrb[0].mxu0
        %v5491 = vadd.f32 0.0, %v5490
        %v5492 = vpop.f32.mrb[0].mxu0
        %v5493 = vadd.f32 0.0, %v5492
        %5494 = vdwg.mxu0
        %5495 = vmatprep.subr.bf16.mxu0 %v3651
        %5496 = vmatpush1.bf16.msra.mxu0 %v3650
        %5497 = vmatprep.subr.bf16.mxu0 %v3657
        %5498 = vmatpush1.bf16.msra.mxu0 %v3656
        %5499 = vmatprep.subr.bf16.mxu0 %v3663
        %5500 = vmatpush1.bf16.msra.mxu0 %v3662
        %5501 = vmatprep.subr.bf16.mxu0 %v3669
        %5502 = vmatpush1.bf16.msra.mxu0 %v3668
        %5503 = vmatprep.subr.bf16.mxu0 %v3675
        %5504 = vmatpush1.bf16.msra.mxu0 %v3674
        %5505 = vmatprep.subr.bf16.mxu0 %v3681
        %5506 = vmatpush1.bf16.msra.mxu0 %v3680
        %5507 = vmatprep.subr.bf16.mxu0 %v3687
        %5508 = vmatpush1.bf16.msra.mxu0 %v3686
        %5509 = vmatprep.subr.bf16.mxu0 %v3693
        %5510 = vmatpush1.bf16.msra.mxu0 %v3692
        %5511 = vmatprep.subr.bf16.mxu0 %v3699
        %5512 = vmatpush1.bf16.msra.mxu0 %v3698
        %5513 = vmatprep.subr.bf16.mxu0 %v3705
        %5514 = vmatpush1.bf16.msra.mxu0 %v3704
        %5515 = vmatprep.subr.bf16.mxu0 %v3711
        %5516 = vmatpush1.bf16.msra.mxu0 %v3710
        %5517 = vmatprep.subr.bf16.mxu0 %v3717
        %5518 = vmatpush1.bf16.msra.mxu0 %v3716
        %5519 = vmatprep.subr.bf16.mxu0 %v3723
        %5520 = vmatpush1.bf16.msra.mxu0 %v3722
        %5521 = vmatprep.subr.bf16.mxu0 %v3729
        %5522 = vmatpush1.bf16.msra.mxu0 %v3728
        %5523 = vmatprep.subr.bf16.mxu0 %v3735
        %5524 = vmatpush1.bf16.msra.mxu0 %v3734
        %5525 = vmatprep.subr.bf16.mxu0 %v3741
        %5526 = vmatpush1.bf16.msra.mxu0 %v3740
        %5527 = vmatprep.mubr.bf16.mxu0 %v1635
        %5528 = vmatmul.mubr.bf16.gmra.mrb[0].mxu0 %v1634
        %v5529 = vpop.f32.mrb[0].mxu0
        %v5530 = vadd.f32 %v5417, %v5529
        %v5531 = vpop.f32.mrb[0].mxu0
        %v5532 = vadd.f32 %v5419, %v5531
        %v5533 = vpop.f32.mrb[0].mxu0
        %v5534 = vadd.f32 %v5421, %v5533
        %v5535 = vpop.f32.mrb[0].mxu0
        %v5536 = vadd.f32 %v5423, %v5535
        %5537 = vmatprep.mubr.bf16.mxu0 %v1647
        %5538 = vmatmul.mubr.bf16.gmra.mrb[0].mxu0 %v1646
        %v5539 = vpop.f32.mrb[0].mxu0
        %v5540 = vadd.f32 %v5427, %v5539
        %v5541 = vpop.f32.mrb[0].mxu0
        %v5542 = vadd.f32 %v5429, %v5541
        %v5543 = vpop.f32.mrb[0].mxu0
        %v5544 = vadd.f32 %v5431, %v5543
        %v5545 = vpop.f32.mrb[0].mxu0
        %v5546 = vadd.f32 %v5433, %v5545
        %5547 = vmatprep.mubr.bf16.mxu0 %v1659
        %5548 = vmatmul.mubr.bf16.gmra.mrb[0].mxu0 %v1658
        %v5549 = vpop.f32.mrb[0].mxu0
        %v5550 = vadd.f32 %v5437, %v5549
        %v5551 = vpop.f32.mrb[0].mxu0
        %v5552 = vadd.f32 %v5439, %v5551
        %v5553 = vpop.f32.mrb[0].mxu0
        %v5554 = vadd.f32 %v5441, %v5553
        %v5555 = vpop.f32.mrb[0].mxu0
        %v5556 = vadd.f32 %v5443, %v5555
        %5557 = vmatprep.mubr.bf16.mxu0 %v1671
        %5558 = vmatmul.mubr.bf16.gmra.mrb[0].mxu0 %v1670
        %v5559 = vpop.f32.mrb[0].mxu0
        %v5560 = vadd.f32 %v5447, %v5559
        %v5561 = vpop.f32.mrb[0].mxu0
        %v5562 = vadd.f32 %v5449, %v5561
        %v5563 = vpop.f32.mrb[0].mxu0
        %v5564 = vadd.f32 %v5451, %v5563
        %v5565 = vpop.f32.mrb[0].mxu0
        %v5566 = vadd.f32 %v5453, %v5565
        %5567 = vmatprep.mubr.bf16.mxu0 %v1683
        %5568 = vmatmul.mubr.bf16.gmra.mrb[0].mxu0 %v1682
        %v5569 = vpop.f32.mrb[0].mxu0
        %v5570 = vadd.f32 %v5457, %v5569
        %v5571 = vpop.f32.mrb[0].mxu0
        %v5572 = vadd.f32 %v5459, %v5571
        %v5573 = vpop.f32.mrb[0].mxu0
        %v5574 = vadd.f32 %v5461, %v5573
        %v5575 = vpop.f32.mrb[0].mxu0
        %v5576 = vadd.f32 %v5463, %v5575
        %5577 = vmatprep.mubr.bf16.mxu0 %v1695
        %5578 = vmatmul.mubr.bf16.gmra.mrb[0].mxu0 %v1694
        %v5579 = vpop.f32.mrb[0].mxu0
        %v5580 = vadd.f32 %v5467, %v5579
        %v5581 = vpop.f32.mrb[0].mxu0
        %v5582 = vadd.f32 %v5469, %v5581
        %v5583 = vpop.f32.mrb[0].mxu0
        %v5584 = vadd.f32 %v5471, %v5583
        %v5585 = vpop.f32.mrb[0].mxu0
        %v5586 = vadd.f32 %v5473, %v5585
        %5587 = vmatprep.mubr.bf16.mxu0 %v1707
        %5588 = vmatmul.mubr.bf16.gmra.mrb[0].mxu0 %v1706
        %v5589 = vpop.f32.mrb[0].mxu0
        %v5590 = vadd.f32 %v5477, %v5589
        %v5591 = vpop.f32.mrb[0].mxu0
        %v5592 = vadd.f32 %v5479, %v5591
        %v5593 = vpop.f32.mrb[0].mxu0
        %v5594 = vadd.f32 %v5481, %v5593
        %v5595 = vpop.f32.mrb[0].mxu0
        %v5596 = vadd.f32 %v5483, %v5595
        %5597 = vmatprep.mubr.bf16.mxu0 %v1719
        %5598 = vmatmul.mubr.bf16.gmra.mrb[0].mxu0 %v1718
        %v5599 = vpop.f32.mrb[0].mxu0
        %v5600 = vadd.f32 %v5487, %v5599
        %v5601 = vpop.f32.mrb[0].mxu0
        %v5602 = vadd.f32 %v5489, %v5601
        %v5603 = vpop.f32.mrb[0].mxu0
        %v5604 = vadd.f32 %v5491, %v5603
        %v5605 = vpop.f32.mrb[0].mxu0
        %v5606 = vadd.f32 %v5493, %v5605
        %5607 = vdwg.mxu0
        %5608 = vmatprep.subr.bf16.mxu0 %v3747
        %5609 = vmatpush1.bf16.msra.mxu0 %v3746
        %5610 = vmatprep.subr.bf16.mxu0 %v3753
        %5611 = vmatpush1.bf16.msra.mxu0 %v3752
        %5612 = vmatprep.subr.bf16.mxu0 %v3759
        %5613 = vmatpush1.bf16.msra.mxu0 %v3758
        %5614 = vmatprep.subr.bf16.mxu0 %v3765
        %5615 = vmatpush1.bf16.msra.mxu0 %v3764
        %5616 = vmatprep.subr.bf16.mxu0 %v3771
        %5617 = vmatpush1.bf16.msra.mxu0 %v3770
        %5618 = vmatprep.subr.bf16.mxu0 %v3777
        %5619 = vmatpush1.bf16.msra.mxu0 %v3776
        %5620 = vmatprep.subr.bf16.mxu0 %v3783
        %5621 = vmatpush1.bf16.msra.mxu0 %v3782
        %5622 = vmatprep.subr.bf16.mxu0 %v3789
        %5623 = vmatpush1.bf16.msra.mxu0 %v3788
        %5624 = vmatprep.subr.bf16.mxu0 %v3795
        %5625 = vmatpush1.bf16.msra.mxu0 %v3794
        %5626 = vmatprep.subr.bf16.mxu0 %v3801
        %5627 = vmatpush1.bf16.msra.mxu0 %v3800
        %5628 = vmatprep.subr.bf16.mxu0 %v3807
        %5629 = vmatpush1.bf16.msra.mxu0 %v3806
        %5630 = vmatprep.subr.bf16.mxu0 %v3813
        %5631 = vmatpush1.bf16.msra.mxu0 %v3812
        %5632 = vmatprep.subr.bf16.mxu0 %v3819
        %5633 = vmatpush1.bf16.msra.mxu0 %v3818
        %5634 = vmatprep.subr.bf16.mxu0 %v3825
        %5635 = vmatpush1.bf16.msra.mxu0 %v3824
        %5636 = vmatprep.subr.bf16.mxu0 %v3831
        %5637 = vmatpush1.bf16.msra.mxu0 %v3830
        %5638 = vmatprep.subr.bf16.mxu0 %v3837
        %5639 = vmatpush1.bf16.msra.mxu0 %v3836
        %5640 = vmatprep.mubr.bf16.mxu0 %v1637
        %5641 = vmatmul.mubr.bf16.gmra.mrb[0].mxu0 %v1636
        %v5642 = vpop.f32.mrb[0].mxu0
        %v5643 = vadd.f32 %v5530, %v5642
        %v5644 = vpop.f32.mrb[0].mxu0
        %v5645 = vadd.f32 %v5532, %v5644
        %v5646 = vpop.f32.mrb[0].mxu0
        %v5647 = vadd.f32 %v5534, %v5646
        %v5648 = vpop.f32.mrb[0].mxu0
        %v5649 = vadd.f32 %v5536, %v5648
        %5650 = vmatprep.mubr.bf16.mxu0 %v1649
        %5651 = vmatmul.mubr.bf16.gmra.mrb[0].mxu0 %v1648
        %v5652 = vpop.f32.mrb[0].mxu0
        %v5653 = vadd.f32 %v5540, %v5652
        %v5654 = vpop.f32.mrb[0].mxu0
        %v5655 = vadd.f32 %v5542, %v5654
        %v5656 = vpop.f32.mrb[0].mxu0
        %v5657 = vadd.f32 %v5544, %v5656
        %v5658 = vpop.f32.mrb[0].mxu0
        %v5659 = vadd.f32 %v5546, %v5658
        %5660 = vmatprep.mubr.bf16.mxu0 %v1661
        %5661 = vmatmul.mubr.bf16.gmra.mrb[0].mxu0 %v1660
        %v5662 = vpop.f32.mrb[0].mxu0
        %v5663 = vadd.f32 %v5550, %v5662
        %v5664 = vpop.f32.mrb[0].mxu0
        %v5665 = vadd.f32 %v5552, %v5664
        %v5666 = vpop.f32.mrb[0].mxu0
        %v5667 = vadd.f32 %v5554, %v5666
        %v5668 = vpop.f32.mrb[0].mxu0
        %v5669 = vadd.f32 %v5556, %v5668
        %5670 = vmatprep.mubr.bf16.mxu0 %v1673
        %5671 = vmatmul.mubr.bf16.gmra.mrb[0].mxu0 %v1672
        %v5672 = vpop.f32.mrb[0].mxu0
        %v5673 = vadd.f32 %v5560, %v5672
        %v5674 = vpop.f32.mrb[0].mxu0
        %v5675 = vadd.f32 %v5562, %v5674
        %v5676 = vpop.f32.mrb[0].mxu0
        %v5677 = vadd.f32 %v5564, %v5676
        %v5678 = vpop.f32.mrb[0].mxu0
        %v5679 = vadd.f32 %v5566, %v5678
        %5680 = vmatprep.mubr.bf16.mxu0 %v1685
        %5681 = vmatmul.mubr.bf16.gmra.mrb[0].mxu0 %v1684
        %v5682 = vpop.f32.mrb[0].mxu0
        %v5683 = vadd.f32 %v5570, %v5682
        %v5684 = vpop.f32.mrb[0].mxu0
        %v5685 = vadd.f32 %v5572, %v5684
        %v5686 = vpop.f32.mrb[0].mxu0
        %v5687 = vadd.f32 %v5574, %v5686
        %v5688 = vpop.f32.mrb[0].mxu0
        %v5689 = vadd.f32 %v5576, %v5688
        %5690 = vmatprep.mubr.bf16.mxu0 %v1697
        %5691 = vmatmul.mubr.bf16.gmra.mrb[0].mxu0 %v1696
        %v5692 = vpop.f32.mrb[0].mxu0
        %v5693 = vadd.f32 %v5580, %v5692
        %v5694 = vpop.f32.mrb[0].mxu0
        %v5695 = vadd.f32 %v5582, %v5694
        %v5696 = vpop.f32.mrb[0].mxu0
        %v5697 = vadd.f32 %v5584, %v5696
        %v5698 = vpop.f32.mrb[0].mxu0
        %v5699 = vadd.f32 %v5586, %v5698
        %5700 = vmatprep.mubr.bf16.mxu0 %v1709
        %5701 = vmatmul.mubr.bf16.gmra.mrb[0].mxu0 %v1708
        %v5702 = vpop.f32.mrb[0].mxu0
        %v5703 = vadd.f32 %v5590, %v5702
        %v5704 = vpop.f32.mrb[0].mxu0
        %v5705 = vadd.f32 %v5592, %v5704
        %v5706 = vpop.f32.mrb[0].mxu0
        %v5707 = vadd.f32 %v5594, %v5706
        %v5708 = vpop.f32.mrb[0].mxu0
        %v5709 = vadd.f32 %v5596, %v5708
        %5710 = vmatprep.mubr.bf16.mxu0 %v1721
        %5711 = vmatmul.mubr.bf16.gmra.mrb[0].mxu0 %v1720
        %v5712 = vpop.f32.mrb[0].mxu0
        %v5713 = vadd.f32 %v5600, %v5712
        %v5714 = vpop.f32.mrb[0].mxu0
        %v5715 = vadd.f32 %v5602, %v5714
        %v5716 = vpop.f32.mrb[0].mxu0
        %v5717 = vadd.f32 %v5604, %v5716
        %v5718 = vpop.f32.mrb[0].mxu0
        %v5719 = vadd.f32 %v5606, %v5718
        %5720 = vdwg.mxu0
        %5721 = vmatprep.subr.bf16.mxu0 %v3843
        %5722 = vmatpush1.bf16.msra.mxu0 %v3842
        %5723 = vmatprep.subr.bf16.mxu0 %v3849
        %5724 = vmatpush1.bf16.msra.mxu0 %v3848
        %5725 = vmatprep.subr.bf16.mxu0 %v3855
        %5726 = vmatpush1.bf16.msra.mxu0 %v3854
        %5727 = vmatprep.subr.bf16.mxu0 %v3861
        %5728 = vmatpush1.bf16.msra.mxu0 %v3860
        %5729 = vmatprep.subr.bf16.mxu0 %v3867
        %5730 = vmatpush1.bf16.msra.mxu0 %v3866
        %5731 = vmatprep.subr.bf16.mxu0 %v3873
        %5732 = vmatpush1.bf16.msra.mxu0 %v3872
        %5733 = vmatprep.subr.bf16.mxu0 %v3879
        %5734 = vmatpush1.bf16.msra.mxu0 %v3878
        %5735 = vmatprep.subr.bf16.mxu0 %v3885
        %5736 = vmatpush1.bf16.msra.mxu0 %v3884
        %5737 = vmatprep.subr.bf16.mxu0 %v3891
        %5738 = vmatpush1.bf16.msra.mxu0 %v3890
        %5739 = vmatprep.subr.bf16.mxu0 %v3897
        %5740 = vmatpush1.bf16.msra.mxu0 %v3896
        %5741 = vmatprep.subr.bf16.mxu0 %v3903
        %5742 = vmatpush1.bf16.msra.mxu0 %v3902
        %5743 = vmatprep.subr.bf16.mxu0 %v3909
        %5744 = vmatpush1.bf16.msra.mxu0 %v3908
        %5745 = vmatprep.subr.bf16.mxu0 %v3915
        %5746 = vmatpush1.bf16.msra.mxu0 %v3914
        %5747 = vmatprep.subr.bf16.mxu0 %v3921
        %5748 = vmatpush1.bf16.msra.mxu0 %v3920
        %5749 = vmatprep.subr.bf16.mxu0 %v3927
        %5750 = vmatpush1.bf16.msra.mxu0 %v3926
        %5751 = vmatprep.subr.bf16.mxu0 %v3933
        %5752 = vmatpush1.bf16.msra.mxu0 %v3932
        %5753 = vmatprep.mubr.bf16.mxu0 %v1639
        %5754 = vmatmul.mubr.bf16.gmra.mrb[0].mxu0 %v1638
        %v5755 = vpop.f32.mrb[0].mxu0
        %v5756 = vadd.f32 %v5643, %v5755
        %v5757 = vpop.f32.mrb[0].mxu0
        %v5758 = vadd.f32 %v5645, %v5757
        %v5759 = vpop.f32.mrb[0].mxu0
        %v5760 = vadd.f32 %v5647, %v5759
        %v5761 = vpop.f32.mrb[0].mxu0
        %v5762 = vadd.f32 %v5649, %v5761
        %5763 = vmatprep.mubr.bf16.mxu0 %v1651
        %5764 = vmatmul.mubr.bf16.gmra.mrb[0].mxu0 %v1650
        %v5765 = vpop.f32.mrb[0].mxu0
        %v5766 = vadd.f32 %v5653, %v5765
        %v5767 = vpop.f32.mrb[0].mxu0
        %v5768 = vadd.f32 %v5655, %v5767
        %v5769 = vpop.f32.mrb[0].mxu0
        %v5770 = vadd.f32 %v5657, %v5769
        %v5771 = vpop.f32.mrb[0].mxu0
        %v5772 = vadd.f32 %v5659, %v5771
        %5773 = vmatprep.mubr.bf16.mxu0 %v1663
        %5774 = vmatmul.mubr.bf16.gmra.mrb[0].mxu0 %v1662
        %v5775 = vpop.f32.mrb[0].mxu0
        %v5776 = vadd.f32 %v5663, %v5775
        %v5777 = vpop.f32.mrb[0].mxu0
        %v5778 = vadd.f32 %v5665, %v5777
        %v5779 = vpop.f32.mrb[0].mxu0
        %v5780 = vadd.f32 %v5667, %v5779
        %v5781 = vpop.f32.mrb[0].mxu0
        %v5782 = vadd.f32 %v5669, %v5781
        %5783 = vmatprep.mubr.bf16.mxu0 %v1675
        %5784 = vmatmul.mubr.bf16.gmra.mrb[0].mxu0 %v1674
        %v5785 = vpop.f32.mrb[0].mxu0
        %v5786 = vadd.f32 %v5673, %v5785
        %v5787 = vpop.f32.mrb[0].mxu0
        %v5788 = vadd.f32 %v5675, %v5787
        %v5789 = vpop.f32.mrb[0].mxu0
        %v5790 = vadd.f32 %v5677, %v5789
        %v5791 = vpop.f32.mrb[0].mxu0
        %v5792 = vadd.f32 %v5679, %v5791
        %5793 = vmatprep.mubr.bf16.mxu0 %v1687
        %5794 = vmatmul.mubr.bf16.gmra.mrb[0].mxu0 %v1686
        %v5795 = vpop.f32.mrb[0].mxu0
        %v5796 = vadd.f32 %v5683, %v5795
        %v5797 = vpop.f32.mrb[0].mxu0
        %v5798 = vadd.f32 %v5685, %v5797
        %v5799 = vpop.f32.mrb[0].mxu0
        %v5800 = vadd.f32 %v5687, %v5799
        %v5801 = vpop.f32.mrb[0].mxu0
        %v5802 = vadd.f32 %v5689, %v5801
        %5803 = vmatprep.mubr.bf16.mxu0 %v1699
        %5804 = vmatmul.mubr.bf16.gmra.mrb[0].mxu0 %v1698
        %v5805 = vpop.f32.mrb[0].mxu0
        %v5806 = vadd.f32 %v5693, %v5805
        %v5807 = vpop.f32.mrb[0].mxu0
        %v5808 = vadd.f32 %v5695, %v5807
        %v5809 = vpop.f32.mrb[0].mxu0
        %v5810 = vadd.f32 %v5697, %v5809
        %v5811 = vpop.f32.mrb[0].mxu0
        %v5812 = vadd.f32 %v5699, %v5811
        %5813 = vmatprep.mubr.bf16.mxu0 %v1711
        %5814 = vmatmul.mubr.bf16.gmra.mrb[0].mxu0 %v1710
        %v5815 = vpop.f32.mrb[0].mxu0
        %v5816 = vadd.f32 %v5703, %v5815
        %v5817 = vpop.f32.mrb[0].mxu0
        %v5818 = vadd.f32 %v5705, %v5817
        %v5819 = vpop.f32.mrb[0].mxu0
        %v5820 = vadd.f32 %v5707, %v5819
        %v5821 = vpop.f32.mrb[0].mxu0
        %v5822 = vadd.f32 %v5709, %v5821
        %5823 = vmatprep.mubr.bf16.mxu0 %v1723
        %5824 = vmatmul.mubr.bf16.gmra.mrb[0].mxu0 %v1722
        %v5825 = vpop.f32.mrb[0].mxu0
        %v5826 = vadd.f32 %v5713, %v5825
        %v5827 = vpop.f32.mrb[0].mxu0
        %v5828 = vadd.f32 %v5715, %v5827
        %v5829 = vpop.f32.mrb[0].mxu0
        %v5830 = vadd.f32 %v5717, %v5829
        %v5831 = vpop.f32.mrb[0].mxu0
        %v5832 = vadd.f32 %v5719, %v5831
        %5833 = vdwg.mxu0
        %5834 = vmatprep.subr.bf16.mxu0 %v3939
        %5835 = vmatpush1.bf16.msra.mxu0 %v3938
        %5836 = vmatprep.subr.bf16.mxu0 %v3945
        %5837 = vmatpush1.bf16.msra.mxu0 %v3944
        %5838 = vmatprep.subr.bf16.mxu0 %v3951
        %5839 = vmatpush1.bf16.msra.mxu0 %v3950
        %5840 = vmatprep.subr.bf16.mxu0 %v3957
        %5841 = vmatpush1.bf16.msra.mxu0 %v3956
        %5842 = vmatprep.subr.bf16.mxu0 %v3963
        %5843 = vmatpush1.bf16.msra.mxu0 %v3962
        %5844 = vmatprep.subr.bf16.mxu0 %v3969
        %5845 = vmatpush1.bf16.msra.mxu0 %v3968
        %5846 = vmatprep.subr.bf16.mxu0 %v3975
        %5847 = vmatpush1.bf16.msra.mxu0 %v3974
        %5848 = vmatprep.subr.bf16.mxu0 %v3981
        %5849 = vmatpush1.bf16.msra.mxu0 %v3980
        %5850 = vmatprep.subr.bf16.mxu0 %v3987
        %5851 = vmatpush1.bf16.msra.mxu0 %v3986
        %5852 = vmatprep.subr.bf16.mxu0 %v3993
        %5853 = vmatpush1.bf16.msra.mxu0 %v3992
        %5854 = vmatprep.subr.bf16.mxu0 %v3999
        %5855 = vmatpush1.bf16.msra.mxu0 %v3998
        %5856 = vmatprep.subr.bf16.mxu0 %v4005
        %5857 = vmatpush1.bf16.msra.mxu0 %v4004
        %5858 = vmatprep.subr.bf16.mxu0 %v4011
        %5859 = vmatpush1.bf16.msra.mxu0 %v4010
        %5860 = vmatprep.subr.bf16.mxu0 %v4017
        %5861 = vmatpush1.bf16.msra.mxu0 %v4016
        %5862 = vmatprep.subr.bf16.mxu0 %v4023
        %5863 = vmatpush1.bf16.msra.mxu0 %v4022
        %5864 = vmatprep.subr.bf16.mxu0 %v4029
        %5865 = vmatpush1.bf16.msra.mxu0 %v4028
        %5866 = vmatprep.mubr.bf16.mxu0 %v1641
        %5867 = vmatmul.mubr.bf16.gmra.mrb[0].mxu0 %v1640
        %v5868 = vpop.f32.mrb[0].mxu0
        %v5869 = vadd.f32 %v5756, %v5868
        %v5870 = vpop.f32.mrb[0].mxu0
        %v5871 = vadd.f32 %v5758, %v5870
        %v5872 = vpop.f32.mrb[0].mxu0
        %v5873 = vadd.f32 %v5760, %v5872
        %v5874 = vpop.f32.mrb[0].mxu0
        %v5875 = vadd.f32 %v5762, %v5874
        %5876 = vmatprep.mubr.bf16.mxu0 %v1653
        %5877 = vmatmul.mubr.bf16.gmra.mrb[0].mxu0 %v1652
        %v5878 = vpop.f32.mrb[0].mxu0
        %v5879 = vadd.f32 %v5766, %v5878
        %v5880 = vpop.f32.mrb[0].mxu0
        %v5881 = vadd.f32 %v5768, %v5880
        %v5882 = vpop.f32.mrb[0].mxu0
        %v5883 = vadd.f32 %v5770, %v5882
        %v5884 = vpop.f32.mrb[0].mxu0
        %v5885 = vadd.f32 %v5772, %v5884
        %5886 = vmatprep.mubr.bf16.mxu0 %v1665
        %5887 = vmatmul.mubr.bf16.gmra.mrb[0].mxu0 %v1664
        %v5888 = vpop.f32.mrb[0].mxu0
        %v5889 = vadd.f32 %v5776, %v5888
        %v5890 = vpop.f32.mrb[0].mxu0
        %v5891 = vadd.f32 %v5778, %v5890
        %v5892 = vpop.f32.mrb[0].mxu0
        %v5893 = vadd.f32 %v5780, %v5892
        %v5894 = vpop.f32.mrb[0].mxu0
        %v5895 = vadd.f32 %v5782, %v5894
        %5896 = vmatprep.mubr.bf16.mxu0 %v1677
        %5897 = vmatmul.mubr.bf16.gmra.mrb[0].mxu0 %v1676
        %v5898 = vpop.f32.mrb[0].mxu0
        %v5899 = vadd.f32 %v5786, %v5898
        %v5900 = vpop.f32.mrb[0].mxu0
        %v5901 = vadd.f32 %v5788, %v5900
        %v5902 = vpop.f32.mrb[0].mxu0
        %v5903 = vadd.f32 %v5790, %v5902
        %v5904 = vpop.f32.mrb[0].mxu0
        %v5905 = vadd.f32 %v5792, %v5904
        %5906 = vmatprep.mubr.bf16.mxu0 %v1689
        %5907 = vmatmul.mubr.bf16.gmra.mrb[0].mxu0 %v1688
        %v5908 = vpop.f32.mrb[0].mxu0
        %v5909 = vadd.f32 %v5796, %v5908
        %v5910 = vpop.f32.mrb[0].mxu0
        %v5911 = vadd.f32 %v5798, %v5910
        %v5912 = vpop.f32.mrb[0].mxu0
        %v5913 = vadd.f32 %v5800, %v5912
        %v5914 = vpop.f32.mrb[0].mxu0
        %v5915 = vadd.f32 %v5802, %v5914
        %5916 = vmatprep.mubr.bf16.mxu0 %v1701
        %5917 = vmatmul.mubr.bf16.gmra.mrb[0].mxu0 %v1700
        %v5918 = vpop.f32.mrb[0].mxu0
        %v5919 = vadd.f32 %v5806, %v5918
        %v5920 = vpop.f32.mrb[0].mxu0
        %v5921 = vadd.f32 %v5808, %v5920
        %v5922 = vpop.f32.mrb[0].mxu0
        %v5923 = vadd.f32 %v5810, %v5922
        %v5924 = vpop.f32.mrb[0].mxu0
        %v5925 = vadd.f32 %v5812, %v5924
        %5926 = vmatprep.mubr.bf16.mxu0 %v1713
        %5927 = vmatmul.mubr.bf16.gmra.mrb[0].mxu0 %v1712
        %v5928 = vpop.f32.mrb[0].mxu0
        %v5929 = vadd.f32 %v5816, %v5928
        %v5930 = vpop.f32.mrb[0].mxu0
        %v5931 = vadd.f32 %v5818, %v5930
        %v5932 = vpop.f32.mrb[0].mxu0
        %v5933 = vadd.f32 %v5820, %v5932
        %v5934 = vpop.f32.mrb[0].mxu0
        %v5935 = vadd.f32 %v5822, %v5934
        %5936 = vmatprep.mubr.bf16.mxu0 %v1725
        %5937 = vmatmul.mubr.bf16.gmra.mrb[0].mxu0 %v1724
        %v5938 = vpop.f32.mrb[0].mxu0
        %v5939 = vadd.f32 %v5826, %v5938
        %v5940 = vpop.f32.mrb[0].mxu0
        %v5941 = vadd.f32 %v5828, %v5940
        %v5942 = vpop.f32.mrb[0].mxu0
        %v5943 = vadd.f32 %v5830, %v5942
        %v5944 = vpop.f32.mrb[0].mxu0
        %v5945 = vadd.f32 %v5832, %v5944
        %5946 = vdwg.mxu0
        %5947 = vmatprep.subr.bf16.mxu0 %v4035
        %5948 = vmatpush1.bf16.msra.mxu0 %v4034
        %5949 = vmatprep.subr.bf16.mxu0 %v4041
        %5950 = vmatpush1.bf16.msra.mxu0 %v4040
        %5951 = vmatprep.subr.bf16.mxu0 %v4047
        %5952 = vmatpush1.bf16.msra.mxu0 %v4046
        %5953 = vmatprep.subr.bf16.mxu0 %v4053
        %5954 = vmatpush1.bf16.msra.mxu0 %v4052
        %5955 = vmatprep.subr.bf16.mxu0 %v4059
        %5956 = vmatpush1.bf16.msra.mxu0 %v4058
        %5957 = vmatprep.subr.bf16.mxu0 %v4065
        %5958 = vmatpush1.bf16.msra.mxu0 %v4064
        %5959 = vmatprep.subr.bf16.mxu0 %v4071
        %5960 = vmatpush1.bf16.msra.mxu0 %v4070
        %5961 = vmatprep.subr.bf16.mxu0 %v4077
        %5962 = vmatpush1.bf16.msra.mxu0 %v4076
        %5963 = vmatprep.subr.bf16.mxu0 %v4083
        %5964 = vmatpush1.bf16.msra.mxu0 %v4082
        %5965 = vmatprep.subr.bf16.mxu0 %v4089
        %5966 = vmatpush1.bf16.msra.mxu0 %v4088
        %5967 = vmatprep.subr.bf16.mxu0 %v4095
        %5968 = vmatpush1.bf16.msra.mxu0 %v4094
        %5969 = vmatprep.subr.bf16.mxu0 %v4101
        %5970 = vmatpush1.bf16.msra.mxu0 %v4100
        %5971 = vmatprep.subr.bf16.mxu0 %v4107
        %5972 = vmatpush1.bf16.msra.mxu0 %v4106
        %5973 = vmatprep.subr.bf16.mxu0 %v4113
        %5974 = vmatpush1.bf16.msra.mxu0 %v4112
        %5975 = vmatprep.subr.bf16.mxu0 %v4119
        %5976 = vmatpush1.bf16.msra.mxu0 %v4118
        %5977 = vmatprep.subr.bf16.mxu0 %v4125
        %5978 = vmatpush1.bf16.msra.mxu0 %v4124
        %5979 = vmatprep.mubr.bf16.mxu0 %v1643
        %5980 = vmatmul.mubr.bf16.gmra.mrb[0].mxu0 %v1642
        %v5981 = vpop.f32.mrb[0].mxu0
        %v5982 = vadd.f32 %v5869, %v5981
        %v5983 = vpop.f32.mrb[0].mxu0
        %v5984 = vadd.f32 %v5871, %v5983
        %v5985 = vpop.f32.mrb[0].mxu0
        %v5986 = vadd.f32 %v5873, %v5985
        %v5987 = vpop.f32.mrb[0].mxu0
        %v5988 = vadd.f32 %v5875, %v5987
        %5989 = vmatprep.mubr.bf16.mxu0 %v1655
        %5990 = vmatmul.mubr.bf16.gmra.mrb[0].mxu0 %v1654
        %v5991 = vpop.f32.mrb[0].mxu0
        %v5992 = vadd.f32 %v5879, %v5991
        %v5993 = vpop.f32.mrb[0].mxu0
        %v5994 = vadd.f32 %v5881, %v5993
        %v5995 = vpop.f32.mrb[0].mxu0
        %v5996 = vadd.f32 %v5883, %v5995
        %v5997 = vpop.f32.mrb[0].mxu0
        %v5998 = vadd.f32 %v5885, %v5997
        %5999 = vmatprep.mubr.bf16.mxu0 %v1667
        %6000 = vmatmul.mubr.bf16.gmra.mrb[0].mxu0 %v1666
        %v6001 = vpop.f32.mrb[0].mxu0
        %v6002 = vadd.f32 %v5889, %v6001
        %v6003 = vpop.f32.mrb[0].mxu0
        %v6004 = vadd.f32 %v5891, %v6003
        %v6005 = vpop.f32.mrb[0].mxu0
        %v6006 = vadd.f32 %v5893, %v6005
        %v6007 = vpop.f32.mrb[0].mxu0
        %v6008 = vadd.f32 %v5895, %v6007
        %6009 = vmatprep.mubr.bf16.mxu0 %v1679
        %6010 = vmatmul.mubr.bf16.gmra.mrb[0].mxu0 %v1678
        %v6011 = vpop.f32.mrb[0].mxu0
        %v6012 = vadd.f32 %v5899, %v6011
        %v6013 = vpop.f32.mrb[0].mxu0
        %v6014 = vadd.f32 %v5901, %v6013
        %v6015 = vpop.f32.mrb[0].mxu0
        %v6016 = vadd.f32 %v5903, %v6015
        %v6017 = vpop.f32.mrb[0].mxu0
        %v6018 = vadd.f32 %v5905, %v6017
        %6019 = vmatprep.mubr.bf16.mxu0 %v1691
        %6020 = vmatmul.mubr.bf16.gmra.mrb[0].mxu0 %v1690
        %v6021 = vpop.f32.mrb[0].mxu0
        %v6022 = vadd.f32 %v5909, %v6021
        %v6023 = vpop.f32.mrb[0].mxu0
        %v6024 = vadd.f32 %v5911, %v6023
        %v6025 = vpop.f32.mrb[0].mxu0
        %v6026 = vadd.f32 %v5913, %v6025
        %v6027 = vpop.f32.mrb[0].mxu0
        %v6028 = vadd.f32 %v5915, %v6027
        %6029 = vmatprep.mubr.bf16.mxu0 %v1703
        %6030 = vmatmul.mubr.bf16.gmra.mrb[0].mxu0 %v1702
        %v6031 = vpop.f32.mrb[0].mxu0
        %v6032 = vadd.f32 %v5919, %v6031
        %v6033 = vpop.f32.mrb[0].mxu0
        %v6034 = vadd.f32 %v5921, %v6033
        %v6035 = vpop.f32.mrb[0].mxu0
        %v6036 = vadd.f32 %v5923, %v6035
        %v6037 = vpop.f32.mrb[0].mxu0
        %v6038 = vadd.f32 %v5925, %v6037
        %6039 = vmatprep.mubr.bf16.mxu0 %v1715
        %6040 = vmatmul.mubr.bf16.gmra.mrb[0].mxu0 %v1714
        %v6041 = vpop.f32.mrb[0].mxu0
        %v6042 = vadd.f32 %v5929, %v6041
        %v6043 = vpop.f32.mrb[0].mxu0
        %v6044 = vadd.f32 %v5931, %v6043
        %v6045 = vpop.f32.mrb[0].mxu0
        %v6046 = vadd.f32 %v5933, %v6045
        %v6047 = vpop.f32.mrb[0].mxu0
        %v6048 = vadd.f32 %v5935, %v6047
        %6049 = vmatprep.mubr.bf16.mxu0 %v1727
        %6050 = vmatmul.mubr.bf16.gmra.mrb[0].mxu0 %v1726
        %v6051 = vpop.f32.mrb[0].mxu0
        %v6052 = vadd.f32 %v5939, %v6051
        %v6053 = vpop.f32.mrb[0].mxu0
        %v6054 = vadd.f32 %v5941, %v6053
        %v6055 = vpop.f32.mrb[0].mxu0
        %v6056 = vadd.f32 %v5943, %v6055
        %v6057 = vpop.f32.mrb[0].mxu0
        %v6058 = vadd.f32 %v5945, %v6057
        %6059 = vdwg.mxu0
        %6060 = vmatprep.subr.bf16.mxu0 %v3557
        %6061 = vmatpush1.bf16.msra.mxu0 %v3556
        %6062 = vmatprep.subr.bf16.mxu0 %v3563
        %6063 = vmatpush1.bf16.msra.mxu0 %v3562
        %6064 = vmatprep.subr.bf16.mxu0 %v3569
        %6065 = vmatpush1.bf16.msra.mxu0 %v3568
        %6066 = vmatprep.subr.bf16.mxu0 %v3575
        %6067 = vmatpush1.bf16.msra.mxu0 %v3574
        %6068 = vmatprep.subr.bf16.mxu0 %v3581
        %6069 = vmatpush1.bf16.msra.mxu0 %v3580
        %6070 = vmatprep.subr.bf16.mxu0 %v3587
        %6071 = vmatpush1.bf16.msra.mxu0 %v3586
        %6072 = vmatprep.subr.bf16.mxu0 %v3593
        %6073 = vmatpush1.bf16.msra.mxu0 %v3592
        %6074 = vmatprep.subr.bf16.mxu0 %v3599
        %6075 = vmatpush1.bf16.msra.mxu0 %v3598
        %6076 = vmatprep.subr.bf16.mxu0 %v3605
        %6077 = vmatpush1.bf16.msra.mxu0 %v3604
        %6078 = vmatprep.subr.bf16.mxu0 %v3611
        %6079 = vmatpush1.bf16.msra.mxu0 %v3610
        %6080 = vmatprep.subr.bf16.mxu0 %v3617
        %6081 = vmatpush1.bf16.msra.mxu0 %v3616
        %6082 = vmatprep.subr.bf16.mxu0 %v3623
        %6083 = vmatpush1.bf16.msra.mxu0 %v3622
        %6084 = vmatprep.subr.bf16.mxu0 %v3629
        %6085 = vmatpush1.bf16.msra.mxu0 %v3628
        %6086 = vmatprep.subr.bf16.mxu0 %v3635
        %6087 = vmatpush1.bf16.msra.mxu0 %v3634
        %6088 = vmatprep.subr.bf16.mxu0 %v3641
        %6089 = vmatpush1.bf16.msra.mxu0 %v3640
        %6090 = vmatprep.subr.bf16.mxu0 %v3647
        %6091 = vmatpush1.bf16.msra.mxu0 %v3646
        %6092 = vmatprep.mubr.bf16.mxu0 %v1633
        %6093 = vmatmul.mubr.bf16.gmra.mrb[0].mxu0 %v1632
        %v6094 = vpop.f32.mrb[0].mxu0
        %v6095 = vadd.f32 0.0, %v6094
        %v6096 = vpop.f32.mrb[0].mxu0
        %v6097 = vadd.f32 0.0, %v6096
        %v6098 = vpop.f32.mrb[0].mxu0
        %v6099 = vadd.f32 0.0, %v6098
        %v6100 = vpop.f32.mrb[0].mxu0
        %v6101 = vadd.f32 0.0, %v6100
        %6102 = vmatprep.mubr.bf16.mxu0 %v1645
        %6103 = vmatmul.mubr.bf16.gmra.mrb[0].mxu0 %v1644
        %v6104 = vpop.f32.mrb[0].mxu0
        %v6105 = vadd.f32 0.0, %v6104
        %v6106 = vpop.f32.mrb[0].mxu0
        %v6107 = vadd.f32 0.0, %v6106
        %v6108 = vpop.f32.mrb[0].mxu0
        %v6109 = vadd.f32 0.0, %v6108
        %v6110 = vpop.f32.mrb[0].mxu0
        %v6111 = vadd.f32 0.0, %v6110
        %6112 = vmatprep.mubr.bf16.mxu0 %v1657
        %6113 = vmatmul.mubr.bf16.gmra.mrb[0].mxu0 %v1656
        %v6114 = vpop.f32.mrb[0].mxu0
        %v6115 = vadd.f32 0.0, %v6114
        %v6116 = vpop.f32.mrb[0].mxu0
        %v6117 = vadd.f32 0.0, %v6116
        %v6118 = vpop.f32.mrb[0].mxu0
        %v6119 = vadd.f32 0.0, %v6118
        %v6120 = vpop.f32.mrb[0].mxu0
        %v6121 = vadd.f32 0.0, %v6120
        %6122 = vmatprep.mubr.bf16.mxu0 %v1669
        %6123 = vmatmul.mubr.bf16.gmra.mrb[0].mxu0 %v1668
        %v6124 = vpop.f32.mrb[0].mxu0
        %v6125 = vadd.f32 0.0, %v6124
        %v6126 = vpop.f32.mrb[0].mxu0
        %v6127 = vadd.f32 0.0, %v6126
        %v6128 = vpop.f32.mrb[0].mxu0
        %v6129 = vadd.f32 0.0, %v6128
        %v6130 = vpop.f32.mrb[0].mxu0
        %v6131 = vadd.f32 0.0, %v6130
        %6132 = vmatprep.mubr.bf16.mxu0 %v1681
        %6133 = vmatmul.mubr.bf16.gmra.mrb[0].mxu0 %v1680
        %v6134 = vpop.f32.mrb[0].mxu0
        %v6135 = vadd.f32 0.0, %v6134
        %v6136 = vpop.f32.mrb[0].mxu0
        %v6137 = vadd.f32 0.0, %v6136
        %v6138 = vpop.f32.mrb[0].mxu0
        %v6139 = vadd.f32 0.0, %v6138
        %v6140 = vpop.f32.mrb[0].mxu0
        %v6141 = vadd.f32 0.0, %v6140
        %6142 = vmatprep.mubr.bf16.mxu0 %v1693
        %6143 = vmatmul.mubr.bf16.gmra.mrb[0].mxu0 %v1692
        %v6144 = vpop.f32.mrb[0].mxu0
        %v6145 = vadd.f32 0.0, %v6144
        %v6146 = vpop.f32.mrb[0].mxu0
        %v6147 = vadd.f32 0.0, %v6146
        %v6148 = vpop.f32.mrb[0].mxu0
        %v6149 = vadd.f32 0.0, %v6148
        %v6150 = vpop.f32.mrb[0].mxu0
        %v6151 = vadd.f32 0.0, %v6150
        %6152 = vmatprep.mubr.bf16.mxu0 %v1705
        %6153 = vmatmul.mubr.bf16.gmra.mrb[0].mxu0 %v1704
        %v6154 = vpop.f32.mrb[0].mxu0
        %v6155 = vadd.f32 0.0, %v6154
        %v6156 = vpop.f32.mrb[0].mxu0
        %v6157 = vadd.f32 0.0, %v6156
        %v6158 = vpop.f32.mrb[0].mxu0
        %v6159 = vadd.f32 0.0, %v6158
        %v6160 = vpop.f32.mrb[0].mxu0
        %v6161 = vadd.f32 0.0, %v6160
        %6162 = vmatprep.mubr.bf16.mxu0 %v1717
        %6163 = vmatmul.mubr.bf16.gmra.mrb[0].mxu0 %v1716
        %v6164 = vpop.f32.mrb[0].mxu0
        %v6165 = vadd.f32 0.0, %v6164
        %v6166 = vpop.f32.mrb[0].mxu0
        %v6167 = vadd.f32 0.0, %v6166
        %v6168 = vpop.f32.mrb[0].mxu0
        %v6169 = vadd.f32 0.0, %v6168
        %v6170 = vpop.f32.mrb[0].mxu0
        %v6171 = vadd.f32 0.0, %v6170
        %6172 = vdwg.mxu0
        %6173 = vmatprep.subr.bf16.mxu0 %v3653
        %6174 = vmatpush1.bf16.msra.mxu0 %v3652
        %6175 = vmatprep.subr.bf16.mxu0 %v3659
        %6176 = vmatpush1.bf16.msra.mxu0 %v3658
        %6177 = vmatprep.subr.bf16.mxu0 %v3665
        %6178 = vmatpush1.bf16.msra.mxu0 %v3664
        %6179 = vmatprep.subr.bf16.mxu0 %v3671
        %6180 = vmatpush1.bf16.msra.mxu0 %v3670
        %6181 = vmatprep.subr.bf16.mxu0 %v3677
        %6182 = vmatpush1.bf16.msra.mxu0 %v3676
        %6183 = vmatprep.subr.bf16.mxu0 %v3683
        %6184 = vmatpush1.bf16.msra.mxu0 %v3682
        %6185 = vmatprep.subr.bf16.mxu0 %v3689
        %6186 = vmatpush1.bf16.msra.mxu0 %v3688
        %6187 = vmatprep.subr.bf16.mxu0 %v3695
        %6188 = vmatpush1.bf16.msra.mxu0 %v3694
        %6189 = vmatprep.subr.bf16.mxu0 %v3701
        %6190 = vmatpush1.bf16.msra.mxu0 %v3700
        %6191 = vmatprep.subr.bf16.mxu0 %v3707
        %6192 = vmatpush1.bf16.msra.mxu0 %v3706
        %6193 = vmatprep.subr.bf16.mxu0 %v3713
        %6194 = vmatpush1.bf16.msra.mxu0 %v3712
        %6195 = vmatprep.subr.bf16.mxu0 %v3719
        %6196 = vmatpush1.bf16.msra.mxu0 %v3718
        %6197 = vmatprep.subr.bf16.mxu0 %v3725
        %6198 = vmatpush1.bf16.msra.mxu0 %v3724
        %6199 = vmatprep.subr.bf16.mxu0 %v3731
        %6200 = vmatpush1.bf16.msra.mxu0 %v3730
        %6201 = vmatprep.subr.bf16.mxu0 %v3737
        %6202 = vmatpush1.bf16.msra.mxu0 %v3736
        %6203 = vmatprep.subr.bf16.mxu0 %v3743
        %6204 = vmatpush1.bf16.msra.mxu0 %v3742
        %6205 = vmatprep.mubr.bf16.mxu0 %v1635
        %6206 = vmatmul.mubr.bf16.gmra.mrb[0].mxu0 %v1634
        %v6207 = vpop.f32.mrb[0].mxu0
        %v6208 = vadd.f32 %v6095, %v6207
        %v6209 = vpop.f32.mrb[0].mxu0
        %v6210 = vadd.f32 %v6097, %v6209
        %v6211 = vpop.f32.mrb[0].mxu0
        %v6212 = vadd.f32 %v6099, %v6211
        %v6213 = vpop.f32.mrb[0].mxu0
        %v6214 = vadd.f32 %v6101, %v6213
        %6215 = vmatprep.mubr.bf16.mxu0 %v1647
        %6216 = vmatmul.mubr.bf16.gmra.mrb[0].mxu0 %v1646
        %v6217 = vpop.f32.mrb[0].mxu0
        %v6218 = vadd.f32 %v6105, %v6217
        %v6219 = vpop.f32.mrb[0].mxu0
        %v6220 = vadd.f32 %v6107, %v6219
        %v6221 = vpop.f32.mrb[0].mxu0
        %v6222 = vadd.f32 %v6109, %v6221
        %v6223 = vpop.f32.mrb[0].mxu0
        %v6224 = vadd.f32 %v6111, %v6223
        %6225 = vmatprep.mubr.bf16.mxu0 %v1659
        %6226 = vmatmul.mubr.bf16.gmra.mrb[0].mxu0 %v1658
        %v6227 = vpop.f32.mrb[0].mxu0
        %v6228 = vadd.f32 %v6115, %v6227
        %v6229 = vpop.f32.mrb[0].mxu0
        %v6230 = vadd.f32 %v6117, %v6229
        %v6231 = vpop.f32.mrb[0].mxu0
        %v6232 = vadd.f32 %v6119, %v6231
        %v6233 = vpop.f32.mrb[0].mxu0
        %v6234 = vadd.f32 %v6121, %v6233
        %6235 = vmatprep.mubr.bf16.mxu0 %v1671
        %6236 = vmatmul.mubr.bf16.gmra.mrb[0].mxu0 %v1670
        %v6237 = vpop.f32.mrb[0].mxu0
        %v6238 = vadd.f32 %v6125, %v6237
        %v6239 = vpop.f32.mrb[0].mxu0
        %v6240 = vadd.f32 %v6127, %v6239
        %v6241 = vpop.f32.mrb[0].mxu0
        %v6242 = vadd.f32 %v6129, %v6241
        %v6243 = vpop.f32.mrb[0].mxu0
        %v6244 = vadd.f32 %v6131, %v6243
        %6245 = vmatprep.mubr.bf16.mxu0 %v1683
        %6246 = vmatmul.mubr.bf16.gmra.mrb[0].mxu0 %v1682
        %v6247 = vpop.f32.mrb[0].mxu0
        %v6248 = vadd.f32 %v6135, %v6247
        %v6249 = vpop.f32.mrb[0].mxu0
        %v6250 = vadd.f32 %v6137, %v6249
        %v6251 = vpop.f32.mrb[0].mxu0
        %v6252 = vadd.f32 %v6139, %v6251
        %v6253 = vpop.f32.mrb[0].mxu0
        %v6254 = vadd.f32 %v6141, %v6253
        %6255 = vmatprep.mubr.bf16.mxu0 %v1695
        %6256 = vmatmul.mubr.bf16.gmra.mrb[0].mxu0 %v1694
        %v6257 = vpop.f32.mrb[0].mxu0
        %v6258 = vadd.f32 %v6145, %v6257
        %v6259 = vpop.f32.mrb[0].mxu0
        %v6260 = vadd.f32 %v6147, %v6259
        %v6261 = vpop.f32.mrb[0].mxu0
        %v6262 = vadd.f32 %v6149, %v6261
        %v6263 = vpop.f32.mrb[0].mxu0
        %v6264 = vadd.f32 %v6151, %v6263
        %6265 = vmatprep.mubr.bf16.mxu0 %v1707
        %6266 = vmatmul.mubr.bf16.gmra.mrb[0].mxu0 %v1706
        %v6267 = vpop.f32.mrb[0].mxu0
        %v6268 = vadd.f32 %v6155, %v6267
        %v6269 = vpop.f32.mrb[0].mxu0
        %v6270 = vadd.f32 %v6157, %v6269
        %v6271 = vpop.f32.mrb[0].mxu0
        %v6272 = vadd.f32 %v6159, %v6271
        %v6273 = vpop.f32.mrb[0].mxu0
        %v6274 = vadd.f32 %v6161, %v6273
        %6275 = vmatprep.mubr.bf16.mxu0 %v1719
        %6276 = vmatmul.mubr.bf16.gmra.mrb[0].mxu0 %v1718
        %v6277 = vpop.f32.mrb[0].mxu0
        %v6278 = vadd.f32 %v6165, %v6277
        %v6279 = vpop.f32.mrb[0].mxu0
        %v6280 = vadd.f32 %v6167, %v6279
        %v6281 = vpop.f32.mrb[0].mxu0
        %v6282 = vadd.f32 %v6169, %v6281
        %v6283 = vpop.f32.mrb[0].mxu0
        %v6284 = vadd.f32 %v6171, %v6283
        %6285 = vdwg.mxu0
        %6286 = vmatprep.subr.bf16.mxu0 %v3749
        %6287 = vmatpush1.bf16.msra.mxu0 %v3748
        %6288 = vmatprep.subr.bf16.mxu0 %v3755
        %6289 = vmatpush1.bf16.msra.mxu0 %v3754
        %6290 = vmatprep.subr.bf16.mxu0 %v3761
        %6291 = vmatpush1.bf16.msra.mxu0 %v3760
        %6292 = vmatprep.subr.bf16.mxu0 %v3767
        %6293 = vmatpush1.bf16.msra.mxu0 %v3766
        %6294 = vmatprep.subr.bf16.mxu0 %v3773
        %6295 = vmatpush1.bf16.msra.mxu0 %v3772
        %6296 = vmatprep.subr.bf16.mxu0 %v3779
        %6297 = vmatpush1.bf16.msra.mxu0 %v3778
        %6298 = vmatprep.subr.bf16.mxu0 %v3785
        %6299 = vmatpush1.bf16.msra.mxu0 %v3784
        %6300 = vmatprep.subr.bf16.mxu0 %v3791
        %6301 = vmatpush1.bf16.msra.mxu0 %v3790
        %6302 = vmatprep.subr.bf16.mxu0 %v3797
        %6303 = vmatpush1.bf16.msra.mxu0 %v3796
        %6304 = vmatprep.subr.bf16.mxu0 %v3803
        %6305 = vmatpush1.bf16.msra.mxu0 %v3802
        %6306 = vmatprep.subr.bf16.mxu0 %v3809
        %6307 = vmatpush1.bf16.msra.mxu0 %v3808
        %6308 = vmatprep.subr.bf16.mxu0 %v3815
        %6309 = vmatpush1.bf16.msra.mxu0 %v3814
        %6310 = vmatprep.subr.bf16.mxu0 %v3821
        %6311 = vmatpush1.bf16.msra.mxu0 %v3820
        %6312 = vmatprep.subr.bf16.mxu0 %v3827
        %6313 = vmatpush1.bf16.msra.mxu0 %v3826
        %6314 = vmatprep.subr.bf16.mxu0 %v3833
        %6315 = vmatpush1.bf16.msra.mxu0 %v3832
        %6316 = vmatprep.subr.bf16.mxu0 %v3839
        %6317 = vmatpush1.bf16.msra.mxu0 %v3838
        %6318 = vmatprep.mubr.bf16.mxu0 %v1637
        %6319 = vmatmul.mubr.bf16.gmra.mrb[0].mxu0 %v1636
        %v6320 = vpop.f32.mrb[0].mxu0
        %v6321 = vadd.f32 %v6208, %v6320
        %v6322 = vpop.f32.mrb[0].mxu0
        %v6323 = vadd.f32 %v6210, %v6322
        %v6324 = vpop.f32.mrb[0].mxu0
        %v6325 = vadd.f32 %v6212, %v6324
        %v6326 = vpop.f32.mrb[0].mxu0
        %v6327 = vadd.f32 %v6214, %v6326
        %6328 = vmatprep.mubr.bf16.mxu0 %v1649
        %6329 = vmatmul.mubr.bf16.gmra.mrb[0].mxu0 %v1648
        %v6330 = vpop.f32.mrb[0].mxu0
        %v6331 = vadd.f32 %v6218, %v6330
        %v6332 = vpop.f32.mrb[0].mxu0
        %v6333 = vadd.f32 %v6220, %v6332
        %v6334 = vpop.f32.mrb[0].mxu0
        %v6335 = vadd.f32 %v6222, %v6334
        %v6336 = vpop.f32.mrb[0].mxu0
        %v6337 = vadd.f32 %v6224, %v6336
        %6338 = vmatprep.mubr.bf16.mxu0 %v1661
        %6339 = vmatmul.mubr.bf16.gmra.mrb[0].mxu0 %v1660
        %v6340 = vpop.f32.mrb[0].mxu0
        %v6341 = vadd.f32 %v6228, %v6340
        %v6342 = vpop.f32.mrb[0].mxu0
        %v6343 = vadd.f32 %v6230, %v6342
        %v6344 = vpop.f32.mrb[0].mxu0
        %v6345 = vadd.f32 %v6232, %v6344
        %v6346 = vpop.f32.mrb[0].mxu0
        %v6347 = vadd.f32 %v6234, %v6346
        %6348 = vmatprep.mubr.bf16.mxu0 %v1673
        %6349 = vmatmul.mubr.bf16.gmra.mrb[0].mxu0 %v1672
        %v6350 = vpop.f32.mrb[0].mxu0
        %v6351 = vadd.f32 %v6238, %v6350
        %v6352 = vpop.f32.mrb[0].mxu0
        %v6353 = vadd.f32 %v6240, %v6352
        %v6354 = vpop.f32.mrb[0].mxu0
        %v6355 = vadd.f32 %v6242, %v6354
        %v6356 = vpop.f32.mrb[0].mxu0
        %v6357 = vadd.f32 %v6244, %v6356
        %6358 = vmatprep.mubr.bf16.mxu0 %v1685
        %6359 = vmatmul.mubr.bf16.gmra.mrb[0].mxu0 %v1684
        %v6360 = vpop.f32.mrb[0].mxu0
        %v6361 = vadd.f32 %v6248, %v6360
        %v6362 = vpop.f32.mrb[0].mxu0
        %v6363 = vadd.f32 %v6250, %v6362
        %v6364 = vpop.f32.mrb[0].mxu0
        %v6365 = vadd.f32 %v6252, %v6364
        %v6366 = vpop.f32.mrb[0].mxu0
        %v6367 = vadd.f32 %v6254, %v6366
        %6368 = vmatprep.mubr.bf16.mxu0 %v1697
        %6369 = vmatmul.mubr.bf16.gmra.mrb[0].mxu0 %v1696
        %v6370 = vpop.f32.mrb[0].mxu0
        %v6371 = vadd.f32 %v6258, %v6370
        %v6372 = vpop.f32.mrb[0].mxu0
        %v6373 = vadd.f32 %v6260, %v6372
        %v6374 = vpop.f32.mrb[0].mxu0
        %v6375 = vadd.f32 %v6262, %v6374
        %v6376 = vpop.f32.mrb[0].mxu0
        %v6377 = vadd.f32 %v6264, %v6376
        %6378 = vmatprep.mubr.bf16.mxu0 %v1709
        %6379 = vmatmul.mubr.bf16.gmra.mrb[0].mxu0 %v1708
        %v6380 = vpop.f32.mrb[0].mxu0
        %v6381 = vadd.f32 %v6268, %v6380
        %v6382 = vpop.f32.mrb[0].mxu0
        %v6383 = vadd.f32 %v6270, %v6382
        %v6384 = vpop.f32.mrb[0].mxu0
        %v6385 = vadd.f32 %v6272, %v6384
        %v6386 = vpop.f32.mrb[0].mxu0
        %v6387 = vadd.f32 %v6274, %v6386
        %6388 = vmatprep.mubr.bf16.mxu0 %v1721
        %6389 = vmatmul.mubr.bf16.gmra.mrb[0].mxu0 %v1720
        %v6390 = vpop.f32.mrb[0].mxu0
        %v6391 = vadd.f32 %v6278, %v6390
        %v6392 = vpop.f32.mrb[0].mxu0
        %v6393 = vadd.f32 %v6280, %v6392
        %v6394 = vpop.f32.mrb[0].mxu0
        %v6395 = vadd.f32 %v6282, %v6394
        %v6396 = vpop.f32.mrb[0].mxu0
        %v6397 = vadd.f32 %v6284, %v6396
        %6398 = vdwg.mxu0
        %6399 = vmatprep.subr.bf16.mxu0 %v3845
        %6400 = vmatpush1.bf16.msra.mxu0 %v3844
        %6401 = vmatprep.subr.bf16.mxu0 %v3851
        %6402 = vmatpush1.bf16.msra.mxu0 %v3850
        %6403 = vmatprep.subr.bf16.mxu0 %v3857
        %6404 = vmatpush1.bf16.msra.mxu0 %v3856
        %6405 = vmatprep.subr.bf16.mxu0 %v3863
        %6406 = vmatpush1.bf16.msra.mxu0 %v3862
        %6407 = vmatprep.subr.bf16.mxu0 %v3869
        %6408 = vmatpush1.bf16.msra.mxu0 %v3868
        %6409 = vmatprep.subr.bf16.mxu0 %v3875
        %6410 = vmatpush1.bf16.msra.mxu0 %v3874
        %6411 = vmatprep.subr.bf16.mxu0 %v3881
        %6412 = vmatpush1.bf16.msra.mxu0 %v3880
        %6413 = vmatprep.subr.bf16.mxu0 %v3887
        %6414 = vmatpush1.bf16.msra.mxu0 %v3886
        %6415 = vmatprep.subr.bf16.mxu0 %v3893
        %6416 = vmatpush1.bf16.msra.mxu0 %v3892
        %6417 = vmatprep.subr.bf16.mxu0 %v3899
        %6418 = vmatpush1.bf16.msra.mxu0 %v3898
        %6419 = vmatprep.subr.bf16.mxu0 %v3905
        %6420 = vmatpush1.bf16.msra.mxu0 %v3904
        %6421 = vmatprep.subr.bf16.mxu0 %v3911
        %6422 = vmatpush1.bf16.msra.mxu0 %v3910
        %6423 = vmatprep.subr.bf16.mxu0 %v3917
        %6424 = vmatpush1.bf16.msra.mxu0 %v3916
        %6425 = vmatprep.subr.bf16.mxu0 %v3923
        %6426 = vmatpush1.bf16.msra.mxu0 %v3922
        %6427 = vmatprep.subr.bf16.mxu0 %v3929
        %6428 = vmatpush1.bf16.msra.mxu0 %v3928
        %6429 = vmatprep.subr.bf16.mxu0 %v3935
        %6430 = vmatpush1.bf16.msra.mxu0 %v3934
        %6431 = vmatprep.mubr.bf16.mxu0 %v1639
        %6432 = vmatmul.mubr.bf16.gmra.mrb[0].mxu0 %v1638
        %v6433 = vpop.f32.mrb[0].mxu0
        %v6434 = vadd.f32 %v6321, %v6433
        %v6435 = vpop.f32.mrb[0].mxu0
        %v6436 = vadd.f32 %v6323, %v6435
        %v6437 = vpop.f32.mrb[0].mxu0
        %v6438 = vadd.f32 %v6325, %v6437
        %v6439 = vpop.f32.mrb[0].mxu0
        %v6440 = vadd.f32 %v6327, %v6439
        %6441 = vmatprep.mubr.bf16.mxu0 %v1651
        %6442 = vmatmul.mubr.bf16.gmra.mrb[0].mxu0 %v1650
        %v6443 = vpop.f32.mrb[0].mxu0
        %v6444 = vadd.f32 %v6331, %v6443
        %v6445 = vpop.f32.mrb[0].mxu0
        %v6446 = vadd.f32 %v6333, %v6445
        %v6447 = vpop.f32.mrb[0].mxu0
        %v6448 = vadd.f32 %v6335, %v6447
        %v6449 = vpop.f32.mrb[0].mxu0
        %v6450 = vadd.f32 %v6337, %v6449
        %6451 = vmatprep.mubr.bf16.mxu0 %v1663
        %6452 = vmatmul.mubr.bf16.gmra.mrb[0].mxu0 %v1662
        %v6453 = vpop.f32.mrb[0].mxu0
        %v6454 = vadd.f32 %v6341, %v6453
        %v6455 = vpop.f32.mrb[0].mxu0
        %v6456 = vadd.f32 %v6343, %v6455
        %v6457 = vpop.f32.mrb[0].mxu0
        %v6458 = vadd.f32 %v6345, %v6457
        %v6459 = vpop.f32.mrb[0].mxu0
        %v6460 = vadd.f32 %v6347, %v6459
        %6461 = vmatprep.mubr.bf16.mxu0 %v1675
        %6462 = vmatmul.mubr.bf16.gmra.mrb[0].mxu0 %v1674
        %v6463 = vpop.f32.mrb[0].mxu0
        %v6464 = vadd.f32 %v6351, %v6463
        %v6465 = vpop.f32.mrb[0].mxu0
        %v6466 = vadd.f32 %v6353, %v6465
        %v6467 = vpop.f32.mrb[0].mxu0
        %v6468 = vadd.f32 %v6355, %v6467
        %v6469 = vpop.f32.mrb[0].mxu0
        %v6470 = vadd.f32 %v6357, %v6469
        %6471 = vmatprep.mubr.bf16.mxu0 %v1687
        %6472 = vmatmul.mubr.bf16.gmra.mrb[0].mxu0 %v1686
        %v6473 = vpop.f32.mrb[0].mxu0
        %v6474 = vadd.f32 %v6361, %v6473
        %v6475 = vpop.f32.mrb[0].mxu0
        %v6476 = vadd.f32 %v6363, %v6475
        %v6477 = vpop.f32.mrb[0].mxu0
        %v6478 = vadd.f32 %v6365, %v6477
        %v6479 = vpop.f32.mrb[0].mxu0
        %v6480 = vadd.f32 %v6367, %v6479
        %6481 = vmatprep.mubr.bf16.mxu0 %v1699
        %6482 = vmatmul.mubr.bf16.gmra.mrb[0].mxu0 %v1698
        %v6483 = vpop.f32.mrb[0].mxu0
        %v6484 = vadd.f32 %v6371, %v6483
        %v6485 = vpop.f32.mrb[0].mxu0
        %v6486 = vadd.f32 %v6373, %v6485
        %v6487 = vpop.f32.mrb[0].mxu0
        %v6488 = vadd.f32 %v6375, %v6487
        %v6489 = vpop.f32.mrb[0].mxu0
        %v6490 = vadd.f32 %v6377, %v6489
        %6491 = vmatprep.mubr.bf16.mxu0 %v1711
        %6492 = vmatmul.mubr.bf16.gmra.mrb[0].mxu0 %v1710
        %v6493 = vpop.f32.mrb[0].mxu0
        %v6494 = vadd.f32 %v6381, %v6493
        %v6495 = vpop.f32.mrb[0].mxu0
        %v6496 = vadd.f32 %v6383, %v6495
        %v6497 = vpop.f32.mrb[0].mxu0
        %v6498 = vadd.f32 %v6385, %v6497
        %v6499 = vpop.f32.mrb[0].mxu0
        %v6500 = vadd.f32 %v6387, %v6499
        %6501 = vmatprep.mubr.bf16.mxu0 %v1723
        %6502 = vmatmul.mubr.bf16.gmra.mrb[0].mxu0 %v1722
        %v6503 = vpop.f32.mrb[0].mxu0
        %v6504 = vadd.f32 %v6391, %v6503
        %v6505 = vpop.f32.mrb[0].mxu0
        %v6506 = vadd.f32 %v6393, %v6505
        %v6507 = vpop.f32.mrb[0].mxu0
        %v6508 = vadd.f32 %v6395, %v6507
        %v6509 = vpop.f32.mrb[0].mxu0
        %v6510 = vadd.f32 %v6397, %v6509
        %6511 = vdwg.mxu0
        %6512 = vmatprep.subr.bf16.mxu0 %v3941
        %6513 = vmatpush1.bf16.msra.mxu0 %v3940
        %6514 = vmatprep.subr.bf16.mxu0 %v3947
        %6515 = vmatpush1.bf16.msra.mxu0 %v3946
        %6516 = vmatprep.subr.bf16.mxu0 %v3953
        %6517 = vmatpush1.bf16.msra.mxu0 %v3952
        %6518 = vmatprep.subr.bf16.mxu0 %v3959
        %6519 = vmatpush1.bf16.msra.mxu0 %v3958
        %6520 = vmatprep.subr.bf16.mxu0 %v3965
        %6521 = vmatpush1.bf16.msra.mxu0 %v3964
        %6522 = vmatprep.subr.bf16.mxu0 %v3971
        %6523 = vmatpush1.bf16.msra.mxu0 %v3970
        %6524 = vmatprep.subr.bf16.mxu0 %v3977
        %6525 = vmatpush1.bf16.msra.mxu0 %v3976
        %6526 = vmatprep.subr.bf16.mxu0 %v3983
        %6527 = vmatpush1.bf16.msra.mxu0 %v3982
        %6528 = vmatprep.subr.bf16.mxu0 %v3989
        %6529 = vmatpush1.bf16.msra.mxu0 %v3988
        %6530 = vmatprep.subr.bf16.mxu0 %v3995
        %6531 = vmatpush1.bf16.msra.mxu0 %v3994
        %6532 = vmatprep.subr.bf16.mxu0 %v4001
        %6533 = vmatpush1.bf16.msra.mxu0 %v4000
        %6534 = vmatprep.subr.bf16.mxu0 %v4007
        %6535 = vmatpush1.bf16.msra.mxu0 %v4006
        %6536 = vmatprep.subr.bf16.mxu0 %v4013
        %6537 = vmatpush1.bf16.msra.mxu0 %v4012
        %6538 = vmatprep.subr.bf16.mxu0 %v4019
        %6539 = vmatpush1.bf16.msra.mxu0 %v4018
        %6540 = vmatprep.subr.bf16.mxu0 %v4025
        %6541 = vmatpush1.bf16.msra.mxu0 %v4024
        %6542 = vmatprep.subr.bf16.mxu0 %v4031
        %6543 = vmatpush1.bf16.msra.mxu0 %v4030
        %6544 = vmatprep.mubr.bf16.mxu0 %v1641
        %6545 = vmatmul.mubr.bf16.gmra.mrb[0].mxu0 %v1640
        %v6546 = vpop.f32.mrb[0].mxu0
        %v6547 = vadd.f32 %v6434, %v6546
        %v6548 = vpop.f32.mrb[0].mxu0
        %v6549 = vadd.f32 %v6436, %v6548
        %v6550 = vpop.f32.mrb[0].mxu0
        %v6551 = vadd.f32 %v6438, %v6550
        %v6552 = vpop.f32.mrb[0].mxu0
        %v6553 = vadd.f32 %v6440, %v6552
        %6554 = vmatprep.mubr.bf16.mxu0 %v1653
        %6555 = vmatmul.mubr.bf16.gmra.mrb[0].mxu0 %v1652
        %v6556 = vpop.f32.mrb[0].mxu0
        %v6557 = vadd.f32 %v6444, %v6556
        %v6558 = vpop.f32.mrb[0].mxu0
        %v6559 = vadd.f32 %v6446, %v6558
        %v6560 = vpop.f32.mrb[0].mxu0
        %v6561 = vadd.f32 %v6448, %v6560
        %v6562 = vpop.f32.mrb[0].mxu0
        %v6563 = vadd.f32 %v6450, %v6562
        %6564 = vmatprep.mubr.bf16.mxu0 %v1665
        %6565 = vmatmul.mubr.bf16.gmra.mrb[0].mxu0 %v1664
        %v6566 = vpop.f32.mrb[0].mxu0
        %v6567 = vadd.f32 %v6454, %v6566
        %v6568 = vpop.f32.mrb[0].mxu0
        %v6569 = vadd.f32 %v6456, %v6568
        %v6570 = vpop.f32.mrb[0].mxu0
        %v6571 = vadd.f32 %v6458, %v6570
        %v6572 = vpop.f32.mrb[0].mxu0
        %v6573 = vadd.f32 %v6460, %v6572
        %6574 = vmatprep.mubr.bf16.mxu0 %v1677
        %6575 = vmatmul.mubr.bf16.gmra.mrb[0].mxu0 %v1676
        %v6576 = vpop.f32.mrb[0].mxu0
        %v6577 = vadd.f32 %v6464, %v6576
        %v6578 = vpop.f32.mrb[0].mxu0
        %v6579 = vadd.f32 %v6466, %v6578
        %v6580 = vpop.f32.mrb[0].mxu0
        %v6581 = vadd.f32 %v6468, %v6580
        %v6582 = vpop.f32.mrb[0].mxu0
        %v6583 = vadd.f32 %v6470, %v6582
        %6584 = vmatprep.mubr.bf16.mxu0 %v1689
        %6585 = vmatmul.mubr.bf16.gmra.mrb[0].mxu0 %v1688
        %v6586 = vpop.f32.mrb[0].mxu0
        %v6587 = vadd.f32 %v6474, %v6586
        %v6588 = vpop.f32.mrb[0].mxu0
        %v6589 = vadd.f32 %v6476, %v6588
        %v6590 = vpop.f32.mrb[0].mxu0
        %v6591 = vadd.f32 %v6478, %v6590
        %v6592 = vpop.f32.mrb[0].mxu0
        %v6593 = vadd.f32 %v6480, %v6592
        %6594 = vmatprep.mubr.bf16.mxu0 %v1701
        %6595 = vmatmul.mubr.bf16.gmra.mrb[0].mxu0 %v1700
        %v6596 = vpop.f32.mrb[0].mxu0
        %v6597 = vadd.f32 %v6484, %v6596
        %v6598 = vpop.f32.mrb[0].mxu0
        %v6599 = vadd.f32 %v6486, %v6598
        %v6600 = vpop.f32.mrb[0].mxu0
        %v6601 = vadd.f32 %v6488, %v6600
        %v6602 = vpop.f32.mrb[0].mxu0
        %v6603 = vadd.f32 %v6490, %v6602
        %6604 = vmatprep.mubr.bf16.mxu0 %v1713
        %6605 = vmatmul.mubr.bf16.gmra.mrb[0].mxu0 %v1712
        %v6606 = vpop.f32.mrb[0].mxu0
        %v6607 = vadd.f32 %v6494, %v6606
        %v6608 = vpop.f32.mrb[0].mxu0
        %v6609 = vadd.f32 %v6496, %v6608
        %v6610 = vpop.f32.mrb[0].mxu0
        %v6611 = vadd.f32 %v6498, %v6610
        %v6612 = vpop.f32.mrb[0].mxu0
        %v6613 = vadd.f32 %v6500, %v6612
        %6614 = vmatprep.mubr.bf16.mxu0 %v1725
        %6615 = vmatmul.mubr.bf16.gmra.mrb[0].mxu0 %v1724
        %v6616 = vpop.f32.mrb[0].mxu0
        %v6617 = vadd.f32 %v6504, %v6616
        %v6618 = vpop.f32.mrb[0].mxu0
        %v6619 = vadd.f32 %v6506, %v6618
        %v6620 = vpop.f32.mrb[0].mxu0
        %v6621 = vadd.f32 %v6508, %v6620
        %v6622 = vpop.f32.mrb[0].mxu0
        %v6623 = vadd.f32 %v6510, %v6622
        %6624 = vdwg.mxu0
        %6625 = vmatprep.subr.bf16.mxu0 %v4037
        %6626 = vmatpush1.bf16.msra.mxu0 %v4036
        %6627 = vmatprep.subr.bf16.mxu0 %v4043
        %6628 = vmatpush1.bf16.msra.mxu0 %v4042
        %6629 = vmatprep.subr.bf16.mxu0 %v4049
        %6630 = vmatpush1.bf16.msra.mxu0 %v4048
        %6631 = vmatprep.subr.bf16.mxu0 %v4055
        %6632 = vmatpush1.bf16.msra.mxu0 %v4054
        %6633 = vmatprep.subr.bf16.mxu0 %v4061
        %6634 = vmatpush1.bf16.msra.mxu0 %v4060
        %6635 = vmatprep.subr.bf16.mxu0 %v4067
        %6636 = vmatpush1.bf16.msra.mxu0 %v4066
        %6637 = vmatprep.subr.bf16.mxu0 %v4073
        %6638 = vmatpush1.bf16.msra.mxu0 %v4072
        %6639 = vmatprep.subr.bf16.mxu0 %v4079
        %6640 = vmatpush1.bf16.msra.mxu0 %v4078
        %6641 = vmatprep.subr.bf16.mxu0 %v4085
        %6642 = vmatpush1.bf16.msra.mxu0 %v4084
        %6643 = vmatprep.subr.bf16.mxu0 %v4091
        %6644 = vmatpush1.bf16.msra.mxu0 %v4090
        %6645 = vmatprep.subr.bf16.mxu0 %v4097
        %6646 = vmatpush1.bf16.msra.mxu0 %v4096
        %6647 = vmatprep.subr.bf16.mxu0 %v4103
        %6648 = vmatpush1.bf16.msra.mxu0 %v4102
        %6649 = vmatprep.subr.bf16.mxu0 %v4109
        %6650 = vmatpush1.bf16.msra.mxu0 %v4108
        %6651 = vmatprep.subr.bf16.mxu0 %v4115
        %6652 = vmatpush1.bf16.msra.mxu0 %v4114
        %6653 = vmatprep.subr.bf16.mxu0 %v4121
        %6654 = vmatpush1.bf16.msra.mxu0 %v4120
        %6655 = vmatprep.subr.bf16.mxu0 %v4127
        %6656 = vmatpush1.bf16.msra.mxu0 %v4126
        %6657 = vmatprep.mubr.bf16.mxu0 %v1643
        %6658 = vmatmul.mubr.bf16.gmra.mrb[0].mxu0 %v1642
        %v6659 = vpop.f32.mrb[0].mxu0
        %v6660 = vadd.f32 %v6547, %v6659
        %v6661 = vpop.f32.mrb[0].mxu0
        %v6662 = vadd.f32 %v6549, %v6661
        %v6663 = vpop.f32.mrb[0].mxu0
        %v6664 = vadd.f32 %v6551, %v6663
        %v6665 = vpop.f32.mrb[0].mxu0
        %v6666 = vadd.f32 %v6553, %v6665
        %6667 = vmatprep.mubr.bf16.mxu0 %v1655
        %6668 = vmatmul.mubr.bf16.gmra.mrb[0].mxu0 %v1654
        %v6669 = vpop.f32.mrb[0].mxu0
        %v6670 = vadd.f32 %v6557, %v6669
        %v6671 = vpop.f32.mrb[0].mxu0
        %v6672 = vadd.f32 %v6559, %v6671
        %v6673 = vpop.f32.mrb[0].mxu0
        %v6674 = vadd.f32 %v6561, %v6673
        %v6675 = vpop.f32.mrb[0].mxu0
        %v6676 = vadd.f32 %v6563, %v6675
        %6677 = vmatprep.mubr.bf16.mxu0 %v1667
        %6678 = vmatmul.mubr.bf16.gmra.mrb[0].mxu0 %v1666
        %v6679 = vpop.f32.mrb[0].mxu0
        %v6680 = vadd.f32 %v6567, %v6679
        %v6681 = vpop.f32.mrb[0].mxu0
        %v6682 = vadd.f32 %v6569, %v6681
        %v6683 = vpop.f32.mrb[0].mxu0
        %v6684 = vadd.f32 %v6571, %v6683
        %v6685 = vpop.f32.mrb[0].mxu0
        %v6686 = vadd.f32 %v6573, %v6685
        %6687 = vmatprep.mubr.bf16.mxu0 %v1679
        %6688 = vmatmul.mubr.bf16.gmra.mrb[0].mxu0 %v1678
        %v6689 = vpop.f32.mrb[0].mxu0
        %v6690 = vadd.f32 %v6577, %v6689
        %v6691 = vpop.f32.mrb[0].mxu0
        %v6692 = vadd.f32 %v6579, %v6691
        %v6693 = vpop.f32.mrb[0].mxu0
        %v6694 = vadd.f32 %v6581, %v6693
        %v6695 = vpop.f32.mrb[0].mxu0
        %v6696 = vadd.f32 %v6583, %v6695
        %6697 = vmatprep.mubr.bf16.mxu0 %v1691
        %6698 = vmatmul.mubr.bf16.gmra.mrb[0].mxu0 %v1690
        %v6699 = vpop.f32.mrb[0].mxu0
        %v6700 = vadd.f32 %v6587, %v6699
        %v6701 = vpop.f32.mrb[0].mxu0
        %v6702 = vadd.f32 %v6589, %v6701
        %v6703 = vpop.f32.mrb[0].mxu0
        %v6704 = vadd.f32 %v6591, %v6703
        %v6705 = vpop.f32.mrb[0].mxu0
        %v6706 = vadd.f32 %v6593, %v6705
        %6707 = vmatprep.mubr.bf16.mxu0 %v1703
        %6708 = vmatmul.mubr.bf16.gmra.mrb[0].mxu0 %v1702
        %v6709 = vpop.f32.mrb[0].mxu0
        %v6710 = vadd.f32 %v6597, %v6709
        %v6711 = vpop.f32.mrb[0].mxu0
        %v6712 = vadd.f32 %v6599, %v6711
        %v6713 = vpop.f32.mrb[0].mxu0
        %v6714 = vadd.f32 %v6601, %v6713
        %v6715 = vpop.f32.mrb[0].mxu0
        %v6716 = vadd.f32 %v6603, %v6715
        %6717 = vmatprep.mubr.bf16.mxu0 %v1715
        %6718 = vmatmul.mubr.bf16.gmra.mrb[0].mxu0 %v1714
        %v6719 = vpop.f32.mrb[0].mxu0
        %v6720 = vadd.f32 %v6607, %v6719
        %v6721 = vpop.f32.mrb[0].mxu0
        %v6722 = vadd.f32 %v6609, %v6721
        %v6723 = vpop.f32.mrb[0].mxu0
        %v6724 = vadd.f32 %v6611, %v6723
        %v6725 = vpop.f32.mrb[0].mxu0
        %v6726 = vadd.f32 %v6613, %v6725
        %6727 = vmatprep.mubr.bf16.mxu0 %v1727
        %6728 = vmatmul.mubr.bf16.gmra.mrb[0].mxu0 %v1726
        %v6729 = vpop.f32.mrb[0].mxu0
        %v6730 = vadd.f32 %v6617, %v6729
        %v6731 = vpop.f32.mrb[0].mxu0
        %v6732 = vadd.f32 %v6619, %v6731
        %v6733 = vpop.f32.mrb[0].mxu0
        %v6734 = vadd.f32 %v6621, %v6733
        %v6735 = vpop.f32.mrb[0].mxu0
        %v6736 = vadd.f32 %v6623, %v6735
        %6737 = vdwg.mxu0
        %v6738 = vadd.f32 %v576, %v5304
        %v6739 = vadd.f32 %v577, %v5306
        %v6740 = vadd.f32 %v578, %v5982
        %v6741 = vadd.f32 %v579, %v5984
        %v6742 = vadd.f32 %v580, %v6660
        %v6743 = vadd.f32 %v581, %v6662
        %v6744 = vadd.f32 %v582, %v5308
        %v6745 = vadd.f32 %v583, %v5310
        %v6746 = vadd.f32 %v584, %v5986
        %v6747 = vadd.f32 %v585, %v5988
        %v6748 = vadd.f32 %v586, %v6664
        %v6749 = vadd.f32 %v587, %v6666
        %v6750 = vadd.f32 %v588, %v5314
        %v6751 = vadd.f32 %v589, %v5316
        %v6752 = vadd.f32 %v590, %v5992
        %v6753 = vadd.f32 %v591, %v5994
        %v6754 = vadd.f32 %v592, %v6670
        %v6755 = vadd.f32 %v593, %v6672
        %v6756 = vadd.f32 %v594, %v5318
        %v6757 = vadd.f32 %v595, %v5320
        %v6758 = vadd.f32 %v596, %v5996
        %v6759 = vadd.f32 %v597, %v5998
        %v6760 = vadd.f32 %v598, %v6674
        %v6761 = vadd.f32 %v599, %v6676
        %v6762 = vadd.f32 %v600, %v5324
        %v6763 = vadd.f32 %v601, %v5326
        %v6764 = vadd.f32 %v602, %v6002
        %v6765 = vadd.f32 %v603, %v6004
        %v6766 = vadd.f32 %v604, %v6680
        %v6767 = vadd.f32 %v605, %v6682
        %v6768 = vadd.f32 %v606, %v5328
        %v6769 = vadd.f32 %v607, %v5330
        %v6770 = vadd.f32 %v608, %v6006
        %v6771 = vadd.f32 %v609, %v6008
        %v6772 = vadd.f32 %v610, %v6684
        %v6773 = vadd.f32 %v611, %v6686
        %v6774 = vadd.f32 %v612, %v5334
        %v6775 = vadd.f32 %v613, %v5336
        %v6776 = vadd.f32 %v614, %v6012
        %v6777 = vadd.f32 %v615, %v6014
        %v6778 = vadd.f32 %v616, %v6690
        %v6779 = vadd.f32 %v617, %v6692
        %v6780 = vadd.f32 %v618, %v5338
        %v6781 = vadd.f32 %v619, %v5340
        %v6782 = vadd.f32 %v620, %v6016
        %v6783 = vadd.f32 %v621, %v6018
        %v6784 = vadd.f32 %v622, %v6694
        %v6785 = vadd.f32 %v623, %v6696
        %v6786 = vadd.f32 %v624, %v5344
        %v6787 = vadd.f32 %v625, %v5346
        %v6788 = vadd.f32 %v626, %v6022
        %v6789 = vadd.f32 %v627, %v6024
        %v6790 = vadd.f32 %v628, %v6700
        %v6791 = vadd.f32 %v629, %v6702
        %v6792 = vadd.f32 %v630, %v5348
        %v6793 = vadd.f32 %v631, %v5350
        %v6794 = vadd.f32 %v632, %v6026
        %v6795 = vadd.f32 %v633, %v6028
        %v6796 = vadd.f32 %v634, %v6704
        %v6797 = vadd.f32 %v635, %v6706
        %v6798 = vadd.f32 %v636, %v5354
        %v6799 = vadd.f32 %v637, %v5356
        %v6800 = vadd.f32 %v638, %v6032
        %v6801 = vadd.f32 %v639, %v6034
        %v6802 = vadd.f32 %v640, %v6710
        %v6803 = vadd.f32 %v641, %v6712
        %v6804 = vadd.f32 %v642, %v5358
        %v6805 = vadd.f32 %v643, %v5360
        %v6806 = vadd.f32 %v644, %v6036
        %v6807 = vadd.f32 %v645, %v6038
        %v6808 = vadd.f32 %v646, %v6714
        %v6809 = vadd.f32 %v647, %v6716
        %v6810 = vadd.f32 %v648, %v5364
        %v6811 = vadd.f32 %v649, %v5366
        %v6812 = vadd.f32 %v650, %v6042
        %v6813 = vadd.f32 %v651, %v6044
        %v6814 = vadd.f32 %v652, %v6720
        %v6815 = vadd.f32 %v653, %v6722
        %v6816 = vadd.f32 %v654, %v5368
        %v6817 = vadd.f32 %v655, %v5370
        %v6818 = vadd.f32 %v656, %v6046
        %v6819 = vadd.f32 %v657, %v6048
        %v6820 = vadd.f32 %v658, %v6724
        %v6821 = vadd.f32 %v659, %v6726
        %v6822 = vadd.f32 %v660, %v5374
        %v6823 = vadd.f32 %v661, %v5376
        %v6824 = vadd.f32 %v662, %v6052
        %v6825 = vadd.f32 %v663, %v6054
        %v6826 = vadd.f32 %v664, %v6730
        %v6827 = vadd.f32 %v665, %v6732
        %v6828 = vadd.f32 %v666, %v5378
        %v6829 = vadd.f32 %v667, %v5380
        %v6830 = vadd.f32 %v668, %v6056
        %v6831 = vadd.f32 %v669, %v6058
        %v6832 = vadd.f32 %v670, %v6734
        %v6833 = vadd.f32 %v671, %v6736
        %6834 = vst [vmem:[%s458] sm:$0xff] %v6738
        %6835 = vst [vmem:[%s458 + $0x8] sm:$0xff] %v6739
        %6836 = vst [vmem:[%s458 + $0x10] sm:$0xff] %v6740
        %6837 = vst [vmem:[%s458 + $0x18] sm:$0xff] %v6741
        %6838 = vst [vmem:[%s458 + $0x20] sm:$0xff] %v6742
        %6839 = vst [vmem:[%s458 + $0x28] sm:$0xff] %v6743
        %6840 = vst [vmem:[%s458 + $0x30] sm:$0xff] %v6744
        %6841 = vst [vmem:[%s458 + $0x38] sm:$0xff] %v6745
        %6842 = vst [vmem:[%s458 + $0x40] sm:$0xff] %v6746
        %6843 = vst [vmem:[%s458 + $0x48] sm:$0xff] %v6747
        %6844 = vst [vmem:[%s458 + $0x50] sm:$0xff] %v6748
        %6845 = vst [vmem:[%s458 + $0x58] sm:$0xff] %v6749
        %6846 = vst [vmem:[%s458 + $0x60] sm:$0xff] %v6750
        %6847 = vst [vmem:[%s458 + $0x68] sm:$0xff] %v6751
        %6848 = vst [vmem:[%s458 + $0x70] sm:$0xff] %v6752
        %6849 = vst [vmem:[%s458 + $0x78] sm:$0xff] %v6753
        %6850 = vst [vmem:[%s458 + $0x80] sm:$0xff] %v6754
        %6851 = vst [vmem:[%s458 + $0x88] sm:$0xff] %v6755
        %6852 = vst [vmem:[%s458 + $0x90] sm:$0xff] %v6756
        %6853 = vst [vmem:[%s458 + $0x98] sm:$0xff] %v6757
        %6854 = vst [vmem:[%s458 + $0xa0] sm:$0xff] %v6758
        %6855 = vst [vmem:[%s458 + $0xa8] sm:$0xff] %v6759
        %6856 = vst [vmem:[%s458 + $0xb0] sm:$0xff] %v6760
        %6857 = vst [vmem:[%s458 + $0xb8] sm:$0xff] %v6761
        %6858 = vst [vmem:[%s458 + $0xc0] sm:$0xff] %v6762
        %6859 = vst [vmem:[%s458 + $0xc8] sm:$0xff] %v6763
        %6860 = vst [vmem:[%s458 + $0xd0] sm:$0xff] %v6764
        %6861 = vst [vmem:[%s458 + $0xd8] sm:$0xff] %v6765
        %6862 = vst [vmem:[%s458 + $0xe0] sm:$0xff] %v6766
        %6863 = vst [vmem:[%s458 + $0xe8] sm:$0xff] %v6767
        %6864 = vst [vmem:[%s458 + $0xf0] sm:$0xff] %v6768
        %6865 = vst [vmem:[%s458 + $0xf8] sm:$0xff] %v6769
        %6866 = vst [vmem:[%s458 + $0x100] sm:$0xff] %v6770
        %6867 = vst [vmem:[%s458 + $0x108] sm:$0xff] %v6771
        %6868 = vst [vmem:[%s458 + $0x110] sm:$0xff] %v6772
        %6869 = vst [vmem:[%s458 + $0x118] sm:$0xff] %v6773
        %6870 = vst [vmem:[%s458 + $0x120] sm:$0xff] %v6774
        %6871 = vst [vmem:[%s458 + $0x128] sm:$0xff] %v6775
        %6872 = vst [vmem:[%s458 + $0x130] sm:$0xff] %v6776
        %6873 = vst [vmem:[%s458 + $0x138] sm:$0xff] %v6777
        %6874 = vst [vmem:[%s458 + $0x140] sm:$0xff] %v6778
        %6875 = vst [vmem:[%s458 + $0x148] sm:$0xff] %v6779
        %6876 = vst [vmem:[%s458 + $0x150] sm:$0xff] %v6780
        %6877 = vst [vmem:[%s458 + $0x158] sm:$0xff] %v6781
        %6878 = vst [vmem:[%s458 + $0x160] sm:$0xff] %v6782
        %6879 = vst [vmem:[%s458 + $0x168] sm:$0xff] %v6783
        %6880 = vst [vmem:[%s458 + $0x170] sm:$0xff] %v6784
        %6881 = vst [vmem:[%s458 + $0x178] sm:$0xff] %v6785
        %6882 = vst [vmem:[%s458 + $0x180] sm:$0xff] %v6786
        %6883 = vst [vmem:[%s458 + $0x188] sm:$0xff] %v6787
        %6884 = vst [vmem:[%s458 + $0x190] sm:$0xff] %v6788
        %6885 = vst [vmem:[%s458 + $0x198] sm:$0xff] %v6789
        %6886 = vst [vmem:[%s458 + $0x1a0] sm:$0xff] %v6790
        %6887 = vst [vmem:[%s458 + $0x1a8] sm:$0xff] %v6791
        %6888 = vst [vmem:[%s458 + $0x1b0] sm:$0xff] %v6792
        %6889 = vst [vmem:[%s458 + $0x1b8] sm:$0xff] %v6793
        %6890 = vst [vmem:[%s458 + $0x1c0] sm:$0xff] %v6794
        %6891 = vst [vmem:[%s458 + $0x1c8] sm:$0xff] %v6795
        %6892 = vst [vmem:[%s458 + $0x1d0] sm:$0xff] %v6796
        %6893 = vst [vmem:[%s458 + $0x1d8] sm:$0xff] %v6797
        %6894 = vst [vmem:[%s458 + $0x1e0] sm:$0xff] %v6798
        %6895 = vst [vmem:[%s458 + $0x1e8] sm:$0xff] %v6799
        %6896 = vst [vmem:[%s458 + $0x1f0] sm:$0xff] %v6800
        %6897 = vst [vmem:[%s458 + $0x1f8] sm:$0xff] %v6801
        %6898 = vst [vmem:[%s458 + $0x200] sm:$0xff] %v6802
        %6899 = vst [vmem:[%s458 + $0x208] sm:$0xff] %v6803
        %6900 = vst [vmem:[%s458 + $0x210] sm:$0xff] %v6804
        %6901 = vst [vmem:[%s458 + $0x218] sm:$0xff] %v6805
        %6902 = vst [vmem:[%s458 + $0x220] sm:$0xff] %v6806
        %6903 = vst [vmem:[%s458 + $0x228] sm:$0xff] %v6807
        %6904 = vst [vmem:[%s458 + $0x230] sm:$0xff] %v6808
        %6905 = vst [vmem:[%s458 + $0x238] sm:$0xff] %v6809
        %6906 = vst [vmem:[%s458 + $0x240] sm:$0xff] %v6810
        %6907 = vst [vmem:[%s458 + $0x248] sm:$0xff] %v6811
        %6908 = vst [vmem:[%s458 + $0x250] sm:$0xff] %v6812
        %6909 = vst [vmem:[%s458 + $0x258] sm:$0xff] %v6813
        %6910 = vst [vmem:[%s458 + $0x260] sm:$0xff] %v6814
        %6911 = vst [vmem:[%s458 + $0x268] sm:$0xff] %v6815
        %6912 = vst [vmem:[%s458 + $0x270] sm:$0xff] %v6816
        %6913 = vst [vmem:[%s458 + $0x278] sm:$0xff] %v6817
        %6914 = vst [vmem:[%s458 + $0x280] sm:$0xff] %v6818
        %6915 = vst [vmem:[%s458 + $0x288] sm:$0xff] %v6819
        %6916 = vst [vmem:[%s458 + $0x290] sm:$0xff] %v6820
        %6917 = vst [vmem:[%s458 + $0x298] sm:$0xff] %v6821
        %6918 = vst [vmem:[%s458 + $0x2a0] sm:$0xff] %v6822
        %6919 = vst [vmem:[%s458 + $0x2a8] sm:$0xff] %v6823
        %6920 = vst [vmem:[%s458 + $0x2b0] sm:$0xff] %v6824
        %6921 = vst [vmem:[%s458 + $0x2b8] sm:$0xff] %v6825
        %6922 = vst [vmem:[%s458 + $0x2c0] sm:$0xff] %v6826
        %6923 = vst [vmem:[%s458 + $0x2c8] sm:$0xff] %v6827
        %6924 = vst [vmem:[%s458 + $0x2d0] sm:$0xff] %v6828
        %6925 = vst [vmem:[%s458 + $0x2d8] sm:$0xff] %v6829
        %6926 = vst [vmem:[%s458 + $0x2e0] sm:$0xff] %v6830
        %6927 = vst [vmem:[%s458 + $0x2e8] sm:$0xff] %v6831
        %6928 = vst [vmem:[%s458 + $0x2f0] sm:$0xff] %v6832
        %6929 = vst [vmem:[%s458 + $0x2f8] sm:$0xff] %v6833
        %p6930 = scmp.eq.s32.totalorder %s23, 1
        // Predicated region
        $region64: #{model_forward.1} parent=54 // pred_check
          %p6931 = pneg %p6930
        $region65: #{model_forward.1} parent=54 // pred_check_branch
          %6933 = sbr.rel (%p6931) target = $region67
        $region66: #{model_forward.1} parent=54 // pred_region
          %v6934 = vld [vmem:[%s458] sm:$0xff]
          %v6935 = vld [vmem:[%s458 + $0x8] sm:$0xff]
          %v6936 = vld [vmem:[%s458 + $0x10] sm:$0xff]
          %v6937 = vld [vmem:[%s458 + $0x18] sm:$0xff]
          %v6938 = vld [vmem:[%s458 + $0x20] sm:$0xff]
          %v6939 = vld [vmem:[%s458 + $0x28] sm:$0xff]
          %v6940 = vld [vmem:[%s458 + $0x30] sm:$0xff]
          %v6941 = vld [vmem:[%s458 + $0x38] sm:$0xff]
          %v6942 = vld [vmem:[%s458 + $0x40] sm:$0xff]
          %v6943 = vld [vmem:[%s458 + $0x48] sm:$0xff]
          %v6944 = vld [vmem:[%s458 + $0x50] sm:$0xff]
          %v6945 = vld [vmem:[%s458 + $0x58] sm:$0xff]
          %v6946 = vld [vmem:[%s458 + $0x60] sm:$0xff]
          %v6947 = vld [vmem:[%s458 + $0x68] sm:$0xff]
          %v6948 = vld [vmem:[%s458 + $0x70] sm:$0xff]
          %v6949 = vld [vmem:[%s458 + $0x78] sm:$0xff]
          %v6950 = vld [vmem:[%s458 + $0x80] sm:$0xff]
          %v6951 = vld [vmem:[%s458 + $0x88] sm:$0xff]
          %v6952 = vld [vmem:[%s458 + $0x90] sm:$0xff]
          %v6953 = vld [vmem:[%s458 + $0x98] sm:$0xff]
          %v6954 = vld [vmem:[%s458 + $0xa0] sm:$0xff]
          %v6955 = vld [vmem:[%s458 + $0xa8] sm:$0xff]
          %v6956 = vld [vmem:[%s458 + $0xb0] sm:$0xff]
          %v6957 = vld [vmem:[%s458 + $0xb8] sm:$0xff]
          %v6958 = vld [vmem:[%s458 + $0xc0] sm:$0xff]
          %v6959 = vld [vmem:[%s458 + $0xc8] sm:$0xff]
          %v6960 = vld [vmem:[%s458 + $0xd0] sm:$0xff]
          %v6961 = vld [vmem:[%s458 + $0xd8] sm:$0xff]
          %v6962 = vld [vmem:[%s458 + $0xe0] sm:$0xff]
          %v6963 = vld [vmem:[%s458 + $0xe8] sm:$0xff]
          %v6964 = vld [vmem:[%s458 + $0xf0] sm:$0xff]
          %v6965 = vld [vmem:[%s458 + $0xf8] sm:$0xff]
          %v6966 = vld [vmem:[%s458 + $0x100] sm:$0xff]
          %v6967 = vld [vmem:[%s458 + $0x108] sm:$0xff]
          %v6968 = vld [vmem:[%s458 + $0x110] sm:$0xff]
          %v6969 = vld [vmem:[%s458 + $0x118] sm:$0xff]
          %v6970 = vld [vmem:[%s458 + $0x120] sm:$0xff]
          %v6971 = vld [vmem:[%s458 + $0x128] sm:$0xff]
          %v6972 = vld [vmem:[%s458 + $0x130] sm:$0xff]
          %v6973 = vld [vmem:[%s458 + $0x138] sm:$0xff]
          %v6974 = vld [vmem:[%s458 + $0x140] sm:$0xff]
          %v6975 = vld [vmem:[%s458 + $0x148] sm:$0xff]
          %v6976 = vld [vmem:[%s458 + $0x150] sm:$0xff]
          %v6977 = vld [vmem:[%s458 + $0x158] sm:$0xff]
          %v6978 = vld [vmem:[%s458 + $0x160] sm:$0xff]
          %v6979 = vld [vmem:[%s458 + $0x168] sm:$0xff]
          %v6980 = vld [vmem:[%s458 + $0x170] sm:$0xff]
          %v6981 = vld [vmem:[%s458 + $0x178] sm:$0xff]
          %v6982 = vld [vmem:[%s458 + $0x180] sm:$0xff]
          %v6983 = vld [vmem:[%s458 + $0x188] sm:$0xff]
          %v6984 = vld [vmem:[%s458 + $0x190] sm:$0xff]
          %v6985 = vld [vmem:[%s458 + $0x198] sm:$0xff]
          %v6986 = vld [vmem:[%s458 + $0x1a0] sm:$0xff]
          %v6987 = vld [vmem:[%s458 + $0x1a8] sm:$0xff]
          %v6988 = vld [vmem:[%s458 + $0x1b0] sm:$0xff]
          %v6989 = vld [vmem:[%s458 + $0x1b8] sm:$0xff]
          %v6990 = vld [vmem:[%s458 + $0x1c0] sm:$0xff]
          %v6991 = vld [vmem:[%s458 + $0x1c8] sm:$0xff]
          %v6992 = vld [vmem:[%s458 + $0x1d0] sm:$0xff]
          %v6993 = vld [vmem:[%s458 + $0x1d8] sm:$0xff]
          %v6994 = vld [vmem:[%s458 + $0x1e0] sm:$0xff]
          %v6995 = vld [vmem:[%s458 + $0x1e8] sm:$0xff]
          %v6996 = vld [vmem:[%s458 + $0x1f0] sm:$0xff]
          %v6997 = vld [vmem:[%s458 + $0x1f8] sm:$0xff]
          %v6998 = vld [vmem:[%s458 + $0x200] sm:$0xff]
          %v6999 = vld [vmem:[%s458 + $0x208] sm:$0xff]
          %v7000 = vld [vmem:[%s458 + $0x210] sm:$0xff]
          %v7001 = vld [vmem:[%s458 + $0x218] sm:$0xff]
          %v7002 = vld [vmem:[%s458 + $0x220] sm:$0xff]
          %v7003 = vld [vmem:[%s458 + $0x228] sm:$0xff]
          %v7004 = vld [vmem:[%s458 + $0x230] sm:$0xff]
          %v7005 = vld [vmem:[%s458 + $0x238] sm:$0xff]
          %v7006 = vld [vmem:[%s458 + $0x240] sm:$0xff]
          %v7007 = vld [vmem:[%s458 + $0x248] sm:$0xff]
          %v7008 = vld [vmem:[%s458 + $0x250] sm:$0xff]
          %v7009 = vld [vmem:[%s458 + $0x258] sm:$0xff]
          %v7010 = vld [vmem:[%s458 + $0x260] sm:$0xff]
          %v7011 = vld [vmem:[%s458 + $0x268] sm:$0xff]
          %v7012 = vld [vmem:[%s458 + $0x270] sm:$0xff]
          %v7013 = vld [vmem:[%s458 + $0x278] sm:$0xff]
          %v7014 = vld [vmem:[%s458 + $0x280] sm:$0xff]
          %v7015 = vld [vmem:[%s458 + $0x288] sm:$0xff]
          %v7016 = vld [vmem:[%s458 + $0x290] sm:$0xff]
          %v7017 = vld [vmem:[%s458 + $0x298] sm:$0xff]
          %v7018 = vld [vmem:[%s458 + $0x2a0] sm:$0xff]
          %v7019 = vld [vmem:[%s458 + $0x2a8] sm:$0xff]
          %v7020 = vld [vmem:[%s458 + $0x2b0] sm:$0xff]
          %v7021 = vld [vmem:[%s458 + $0x2b8] sm:$0xff]
          %v7022 = vld [vmem:[%s458 + $0x2c0] sm:$0xff]
          %v7023 = vld [vmem:[%s458 + $0x2c8] sm:$0xff]
          %v7024 = vld [vmem:[%s458 + $0x2d0] sm:$0xff]
          %v7025 = vld [vmem:[%s458 + $0x2d8] sm:$0xff]
          %v7026 = vld [vmem:[%s458 + $0x2e0] sm:$0xff]
          %v7027 = vld [vmem:[%s458 + $0x2e8] sm:$0xff]
          %v7028 = vld [vmem:[%s458 + $0x2f0] sm:$0xff]
          %v7029 = vld [vmem:[%s458 + $0x2f8] sm:$0xff]
          %v7030 = vld [vmem:[%s2] sm:$0x3f]
          %v7032 = vlaneseq
          %v7033 = vshrl.u32 %v7032, 7
          %v7034 = vsub.s32 0, %v7033
          %v7035 = vrot.slane %v7030, %v7034
          %v7036 = vlaneseq
          %v7037 = vshrl.u32 %v7036, 7
          %v7038 = vsub.s32 1, %v7037
          %v7039 = vrot.slane %v7030, %v7038
          %v7040 = vlaneseq
          %v7041 = vshrl.u32 %v7040, 7
          %v7042 = vsub.s32 2, %v7041
          %v7043 = vrot.slane %v7030, %v7042
          %v7044 = vlaneseq
          %v7045 = vshrl.u32 %v7044, 7
          %v7046 = vsub.s32 3, %v7045
          %v7047 = vrot.slane %v7030, %v7046
          %v7048 = vlaneseq
          %v7049 = vshrl.u32 %v7048, 7
          %v7050 = vsub.s32 4, %v7049
          %v7051 = vrot.slane %v7030, %v7050
          %v7052 = vlaneseq
          %v7053 = vshrl.u32 %v7052, 7
          %v7054 = vsub.s32 5, %v7053
          %v7055 = vrot.slane %v7030, %v7054
          %v7062 = vadd.f32 %v6934, %v7035
          %v7063 = vadd.f32 %v6935, %v7039
          %v7064 = vadd.f32 %v6936, %v7043
          %v7065 = vadd.f32 %v6937, %v7047
          %v7066 = vadd.f32 %v6938, %v7051
          %v7067 = vadd.f32 %v6939, %v7055
          %v7068 = vadd.f32 %v6940, %v7035
          %v7069 = vadd.f32 %v6941, %v7039
          %v7070 = vadd.f32 %v6942, %v7043
          %v7071 = vadd.f32 %v6943, %v7047
          %v7072 = vadd.f32 %v6944, %v7051
          %v7073 = vadd.f32 %v6945, %v7055
          %v7074 = vadd.f32 %v6946, %v7035
          %v7075 = vadd.f32 %v6947, %v7039
          %v7076 = vadd.f32 %v6948, %v7043
          %v7077 = vadd.f32 %v6949, %v7047
          %v7078 = vadd.f32 %v6950, %v7051
          %v7079 = vadd.f32 %v6951, %v7055
          %v7080 = vadd.f32 %v6952, %v7035
          %v7081 = vadd.f32 %v6953, %v7039
          %v7082 = vadd.f32 %v6954, %v7043
          %v7083 = vadd.f32 %v6955, %v7047
          %v7084 = vadd.f32 %v6956, %v7051
          %v7085 = vadd.f32 %v6957, %v7055
          %v7086 = vadd.f32 %v6958, %v7035
          %v7087 = vadd.f32 %v6959, %v7039
          %v7088 = vadd.f32 %v6960, %v7043
          %v7089 = vadd.f32 %v6961, %v7047
          %v7090 = vadd.f32 %v6962, %v7051
          %v7091 = vadd.f32 %v6963, %v7055
          %v7092 = vadd.f32 %v6964, %v7035
          %v7093 = vadd.f32 %v6965, %v7039
          %v7094 = vadd.f32 %v6966, %v7043
          %v7095 = vadd.f32 %v6967, %v7047
          %v7096 = vadd.f32 %v6968, %v7051
          %v7097 = vadd.f32 %v6969, %v7055
          %v7098 = vadd.f32 %v6970, %v7035
          %v7099 = vadd.f32 %v6971, %v7039
          %v7100 = vadd.f32 %v6972, %v7043
          %v7101 = vadd.f32 %v6973, %v7047
          %v7102 = vadd.f32 %v6974, %v7051
          %v7103 = vadd.f32 %v6975, %v7055
          %v7104 = vadd.f32 %v6976, %v7035
          %v7105 = vadd.f32 %v6977, %v7039
          %v7106 = vadd.f32 %v6978, %v7043
          %v7107 = vadd.f32 %v6979, %v7047
          %v7108 = vadd.f32 %v6980, %v7051
          %v7109 = vadd.f32 %v6981, %v7055
          %v7110 = vadd.f32 %v6982, %v7035
          %v7111 = vadd.f32 %v6983, %v7039
          %v7112 = vadd.f32 %v6984, %v7043
          %v7113 = vadd.f32 %v6985, %v7047
          %v7114 = vadd.f32 %v6986, %v7051
          %v7115 = vadd.f32 %v6987, %v7055
          %v7116 = vadd.f32 %v6988, %v7035
          %v7117 = vadd.f32 %v6989, %v7039
          %v7118 = vadd.f32 %v6990, %v7043
          %v7119 = vadd.f32 %v6991, %v7047
          %v7120 = vadd.f32 %v6992, %v7051
          %v7121 = vadd.f32 %v6993, %v7055
          %v7122 = vadd.f32 %v6994, %v7035
          %v7123 = vadd.f32 %v6995, %v7039
          %v7124 = vadd.f32 %v6996, %v7043
          %v7125 = vadd.f32 %v6997, %v7047
          %v7126 = vadd.f32 %v6998, %v7051
          %v7127 = vadd.f32 %v6999, %v7055
          %v7128 = vadd.f32 %v7000, %v7035
          %v7129 = vadd.f32 %v7001, %v7039
          %v7130 = vadd.f32 %v7002, %v7043
          %v7131 = vadd.f32 %v7003, %v7047
          %v7132 = vadd.f32 %v7004, %v7051
          %v7133 = vadd.f32 %v7005, %v7055
          %v7134 = vadd.f32 %v7006, %v7035
          %v7135 = vadd.f32 %v7007, %v7039
          %v7136 = vadd.f32 %v7008, %v7043
          %v7137 = vadd.f32 %v7009, %v7047
          %v7138 = vadd.f32 %v7010, %v7051
          %v7139 = vadd.f32 %v7011, %v7055
          %v7140 = vadd.f32 %v7012, %v7035
          %v7141 = vadd.f32 %v7013, %v7039
          %v7142 = vadd.f32 %v7014, %v7043
          %v7143 = vadd.f32 %v7015, %v7047
          %v7144 = vadd.f32 %v7016, %v7051
          %v7145 = vadd.f32 %v7017, %v7055
          %v7146 = vadd.f32 %v7018, %v7035
          %v7147 = vadd.f32 %v7019, %v7039
          %v7148 = vadd.f32 %v7020, %v7043
          %v7149 = vadd.f32 %v7021, %v7047
          %v7150 = vadd.f32 %v7022, %v7051
          %v7151 = vadd.f32 %v7023, %v7055
          %v7152 = vadd.f32 %v7024, %v7035
          %v7153 = vadd.f32 %v7025, %v7039
          %v7154 = vadd.f32 %v7026, %v7043
          %v7155 = vadd.f32 %v7027, %v7047
          %v7156 = vadd.f32 %v7028, %v7051
          %v7157 = vadd.f32 %v7029, %v7055
          %v7158 = vld [vmem:[%s473] sm:$0xff]
          %v7159 = vld [vmem:[%s473 + $0x8] sm:$0xff]
          %v7160 = vld [vmem:[%s473 + $0x10] sm:$0xff]
          %v7161 = vld [vmem:[%s473 + $0x18] sm:$0xff]
          %v7162 = vld [vmem:[%s473 + $0x20] sm:$0xff]
          %v7163 = vld [vmem:[%s473 + $0x28] sm:$0xff]
          %v7164 = vld [vmem:[%s473 + $0x30] sm:$0xff]
          %v7165 = vld [vmem:[%s473 + $0x38] sm:$0xff]
          %v7166 = vld [vmem:[%s473 + $0x40] sm:$0xff]
          %v7167 = vld [vmem:[%s473 + $0x48] sm:$0xff]
          %v7168 = vld [vmem:[%s473 + $0x50] sm:$0xff]
          %v7169 = vld [vmem:[%s473 + $0x58] sm:$0xff]
          %v7170 = vld [vmem:[%s473 + $0x60] sm:$0xff]
          %v7171 = vld [vmem:[%s473 + $0x68] sm:$0xff]
          %v7172 = vld [vmem:[%s473 + $0x70] sm:$0xff]
          %v7173 = vld [vmem:[%s473 + $0x78] sm:$0xff]
          %v7174 = vld [vmem:[%s473 + $0x80] sm:$0xff]
          %v7175 = vld [vmem:[%s473 + $0x88] sm:$0xff]
          %v7176 = vld [vmem:[%s473 + $0x90] sm:$0xff]
          %v7177 = vld [vmem:[%s473 + $0x98] sm:$0xff]
          %v7178 = vld [vmem:[%s473 + $0xa0] sm:$0xff]
          %v7179 = vld [vmem:[%s473 + $0xa8] sm:$0xff]
          %v7180 = vld [vmem:[%s473 + $0xb0] sm:$0xff]
          %v7181 = vld [vmem:[%s473 + $0xb8] sm:$0xff]
          %v7182 = vld [vmem:[%s473 + $0xc0] sm:$0xff]
          %v7183 = vld [vmem:[%s473 + $0xc8] sm:$0xff]
          %v7184 = vld [vmem:[%s473 + $0xd0] sm:$0xff]
          %v7185 = vld [vmem:[%s473 + $0xd8] sm:$0xff]
          %v7186 = vld [vmem:[%s473 + $0xe0] sm:$0xff]
          %v7187 = vld [vmem:[%s473 + $0xe8] sm:$0xff]
          %v7188 = vld [vmem:[%s473 + $0xf0] sm:$0xff]
          %v7189 = vld [vmem:[%s473 + $0xf8] sm:$0xff]
          %v7190 = vld [vmem:[%s473 + $0x100] sm:$0xff]
          %v7191 = vld [vmem:[%s473 + $0x108] sm:$0xff]
          %v7192 = vld [vmem:[%s473 + $0x110] sm:$0xff]
          %v7193 = vld [vmem:[%s473 + $0x118] sm:$0xff]
          %v7194 = vld [vmem:[%s473 + $0x120] sm:$0xff]
          %v7195 = vld [vmem:[%s473 + $0x128] sm:$0xff]
          %v7196 = vld [vmem:[%s473 + $0x130] sm:$0xff]
          %v7197 = vld [vmem:[%s473 + $0x138] sm:$0xff]
          %v7198 = vld [vmem:[%s473 + $0x140] sm:$0xff]
          %v7199 = vld [vmem:[%s473 + $0x148] sm:$0xff]
          %v7200 = vld [vmem:[%s473 + $0x150] sm:$0xff]
          %v7201 = vld [vmem:[%s473 + $0x158] sm:$0xff]
          %v7202 = vld [vmem:[%s473 + $0x160] sm:$0xff]
          %v7203 = vld [vmem:[%s473 + $0x168] sm:$0xff]
          %v7204 = vld [vmem:[%s473 + $0x170] sm:$0xff]
          %v7205 = vld [vmem:[%s473 + $0x178] sm:$0xff]
          %v7206 = vld [vmem:[%s473 + $0x180] sm:$0xff]
          %v7207 = vld [vmem:[%s473 + $0x188] sm:$0xff]
          %v7208 = vld [vmem:[%s473 + $0x190] sm:$0xff]
          %v7209 = vld [vmem:[%s473 + $0x198] sm:$0xff]
          %v7210 = vld [vmem:[%s473 + $0x1a0] sm:$0xff]
          %v7211 = vld [vmem:[%s473 + $0x1a8] sm:$0xff]
          %v7212 = vld [vmem:[%s473 + $0x1b0] sm:$0xff]
          %v7213 = vld [vmem:[%s473 + $0x1b8] sm:$0xff]
          %v7214 = vld [vmem:[%s473 + $0x1c0] sm:$0xff]
          %v7215 = vld [vmem:[%s473 + $0x1c8] sm:$0xff]
          %v7216 = vld [vmem:[%s473 + $0x1d0] sm:$0xff]
          %v7217 = vld [vmem:[%s473 + $0x1d8] sm:$0xff]
          %v7218 = vld [vmem:[%s473 + $0x1e0] sm:$0xff]
          %v7219 = vld [vmem:[%s473 + $0x1e8] sm:$0xff]
          %v7220 = vld [vmem:[%s473 + $0x1f0] sm:$0xff]
          %v7221 = vld [vmem:[%s473 + $0x1f8] sm:$0xff]
          %v7222 = vld [vmem:[%s473 + $0x200] sm:$0xff]
          %v7223 = vld [vmem:[%s473 + $0x208] sm:$0xff]
          %v7224 = vld [vmem:[%s473 + $0x210] sm:$0xff]
          %v7225 = vld [vmem:[%s473 + $0x218] sm:$0xff]
          %v7226 = vld [vmem:[%s473 + $0x220] sm:$0xff]
          %v7227 = vld [vmem:[%s473 + $0x228] sm:$0xff]
          %v7228 = vld [vmem:[%s473 + $0x230] sm:$0xff]
          %v7229 = vld [vmem:[%s473 + $0x238] sm:$0xff]
          %v7230 = vld [vmem:[%s473 + $0x240] sm:$0xff]
          %v7231 = vld [vmem:[%s473 + $0x248] sm:$0xff]
          %v7232 = vld [vmem:[%s473 + $0x250] sm:$0xff]
          %v7233 = vld [vmem:[%s473 + $0x258] sm:$0xff]
          %v7234 = vld [vmem:[%s473 + $0x260] sm:$0xff]
          %v7235 = vld [vmem:[%s473 + $0x268] sm:$0xff]
          %v7236 = vld [vmem:[%s473 + $0x270] sm:$0xff]
          %v7237 = vld [vmem:[%s473 + $0x278] sm:$0xff]
          %v7238 = vld [vmem:[%s473 + $0x280] sm:$0xff]
          %v7239 = vld [vmem:[%s473 + $0x288] sm:$0xff]
          %v7240 = vld [vmem:[%s473 + $0x290] sm:$0xff]
          %v7241 = vld [vmem:[%s473 + $0x298] sm:$0xff]
          %v7242 = vld [vmem:[%s473 + $0x2a0] sm:$0xff]
          %v7243 = vld [vmem:[%s473 + $0x2a8] sm:$0xff]
          %v7244 = vld [vmem:[%s473 + $0x2b0] sm:$0xff]
          %v7245 = vld [vmem:[%s473 + $0x2b8] sm:$0xff]
          %v7246 = vld [vmem:[%s473 + $0x2c0] sm:$0xff]
          %v7247 = vld [vmem:[%s473 + $0x2c8] sm:$0xff]
          %v7248 = vld [vmem:[%s473 + $0x2d0] sm:$0xff]
          %v7249 = vld [vmem:[%s473 + $0x2d8] sm:$0xff]
          %v7250 = vld [vmem:[%s473 + $0x2e0] sm:$0xff]
          %v7251 = vld [vmem:[%s473 + $0x2e8] sm:$0xff]
          %v7252 = vld [vmem:[%s473 + $0x2f0] sm:$0xff]
          %v7253 = vld [vmem:[%s473 + $0x2f8] sm:$0xff]
          %v7254 = vmul.f32 %v7062, %v7158
          %v7255 = vmul.f32 %v7063, %v7159
          %v7256 = vmul.f32 %v7064, %v7160
          %v7257 = vmul.f32 %v7065, %v7161
          %v7258 = vmul.f32 %v7066, %v7162
          %v7259 = vmul.f32 %v7067, %v7163
          %v7260 = vmul.f32 %v7068, %v7164
          %v7261 = vmul.f32 %v7069, %v7165
          %v7262 = vmul.f32 %v7070, %v7166
          %v7263 = vmul.f32 %v7071, %v7167
          %v7264 = vmul.f32 %v7072, %v7168
          %v7265 = vmul.f32 %v7073, %v7169
          %v7266 = vmul.f32 %v7074, %v7170
          %v7267 = vmul.f32 %v7075, %v7171
          %v7268 = vmul.f32 %v7076, %v7172
          %v7269 = vmul.f32 %v7077, %v7173
          %v7270 = vmul.f32 %v7078, %v7174
          %v7271 = vmul.f32 %v7079, %v7175
          %v7272 = vmul.f32 %v7080, %v7176
          %v7273 = vmul.f32 %v7081, %v7177
          %v7274 = vmul.f32 %v7082, %v7178
          %v7275 = vmul.f32 %v7083, %v7179
          %v7276 = vmul.f32 %v7084, %v7180
          %v7277 = vmul.f32 %v7085, %v7181
          %v7278 = vmul.f32 %v7086, %v7182
          %v7279 = vmul.f32 %v7087, %v7183
          %v7280 = vmul.f32 %v7088, %v7184
          %v7281 = vmul.f32 %v7089, %v7185
          %v7282 = vmul.f32 %v7090, %v7186
          %v7283 = vmul.f32 %v7091, %v7187
          %v7284 = vmul.f32 %v7092, %v7188
          %v7285 = vmul.f32 %v7093, %v7189
          %v7286 = vmul.f32 %v7094, %v7190
          %v7287 = vmul.f32 %v7095, %v7191
          %v7288 = vmul.f32 %v7096, %v7192
          %v7289 = vmul.f32 %v7097, %v7193
          %v7290 = vmul.f32 %v7098, %v7194
          %v7291 = vmul.f32 %v7099, %v7195
          %v7292 = vmul.f32 %v7100, %v7196
          %v7293 = vmul.f32 %v7101, %v7197
          %v7294 = vmul.f32 %v7102, %v7198
          %v7295 = vmul.f32 %v7103, %v7199
          %v7296 = vmul.f32 %v7104, %v7200
          %v7297 = vmul.f32 %v7105, %v7201
          %v7298 = vmul.f32 %v7106, %v7202
          %v7299 = vmul.f32 %v7107, %v7203
          %v7300 = vmul.f32 %v7108, %v7204
          %v7301 = vmul.f32 %v7109, %v7205
          %v7302 = vmul.f32 %v7110, %v7206
          %v7303 = vmul.f32 %v7111, %v7207
          %v7304 = vmul.f32 %v7112, %v7208
          %v7305 = vmul.f32 %v7113, %v7209
          %v7306 = vmul.f32 %v7114, %v7210
          %v7307 = vmul.f32 %v7115, %v7211
          %v7308 = vmul.f32 %v7116, %v7212
          %v7309 = vmul.f32 %v7117, %v7213
          %v7310 = vmul.f32 %v7118, %v7214
          %v7311 = vmul.f32 %v7119, %v7215
          %v7312 = vmul.f32 %v7120, %v7216
          %v7313 = vmul.f32 %v7121, %v7217
          %v7314 = vmul.f32 %v7122, %v7218
          %v7315 = vmul.f32 %v7123, %v7219
          %v7316 = vmul.f32 %v7124, %v7220
          %v7317 = vmul.f32 %v7125, %v7221
          %v7318 = vmul.f32 %v7126, %v7222
          %v7319 = vmul.f32 %v7127, %v7223
          %v7320 = vmul.f32 %v7128, %v7224
          %v7321 = vmul.f32 %v7129, %v7225
          %v7322 = vmul.f32 %v7130, %v7226
          %v7323 = vmul.f32 %v7131, %v7227
          %v7324 = vmul.f32 %v7132, %v7228
          %v7325 = vmul.f32 %v7133, %v7229
          %v7326 = vmul.f32 %v7134, %v7230
          %v7327 = vmul.f32 %v7135, %v7231
          %v7328 = vmul.f32 %v7136, %v7232
          %v7329 = vmul.f32 %v7137, %v7233
          %v7330 = vmul.f32 %v7138, %v7234
          %v7331 = vmul.f32 %v7139, %v7235
          %v7332 = vmul.f32 %v7140, %v7236
          %v7333 = vmul.f32 %v7141, %v7237
          %v7334 = vmul.f32 %v7142, %v7238
          %v7335 = vmul.f32 %v7143, %v7239
          %v7336 = vmul.f32 %v7144, %v7240
          %v7337 = vmul.f32 %v7145, %v7241
          %v7338 = vmul.f32 %v7146, %v7242
          %v7339 = vmul.f32 %v7147, %v7243
          %v7340 = vmul.f32 %v7148, %v7244
          %v7341 = vmul.f32 %v7149, %v7245
          %v7342 = vmul.f32 %v7150, %v7246
          %v7343 = vmul.f32 %v7151, %v7247
          %v7344 = vmul.f32 %v7152, %v7248
          %v7345 = vmul.f32 %v7153, %v7249
          %v7346 = vmul.f32 %v7154, %v7250
          %v7347 = vmul.f32 %v7155, %v7251
          %v7348 = vmul.f32 %v7156, %v7252
          %v7349 = vmul.f32 %v7157, %v7253
          %7350 = vst [vmem:[%s458] sm:$0xff] %v7254
          %7351 = vst [vmem:[%s458 + $0x8] sm:$0xff] %v7255
          %7352 = vst [vmem:[%s458 + $0x10] sm:$0xff] %v7256
          %7353 = vst [vmem:[%s458 + $0x18] sm:$0xff] %v7257
          %7354 = vst [vmem:[%s458 + $0x20] sm:$0xff] %v7258
          %7355 = vst [vmem:[%s458 + $0x28] sm:$0xff] %v7259
          %7356 = vst [vmem:[%s458 + $0x30] sm:$0xff] %v7260
          %7357 = vst [vmem:[%s458 + $0x38] sm:$0xff] %v7261
          %7358 = vst [vmem:[%s458 + $0x40] sm:$0xff] %v7262
          %7359 = vst [vmem:[%s458 + $0x48] sm:$0xff] %v7263
          %7360 = vst [vmem:[%s458 + $0x50] sm:$0xff] %v7264
          %7361 = vst [vmem:[%s458 + $0x58] sm:$0xff] %v7265
          %7362 = vst [vmem:[%s458 + $0x60] sm:$0xff] %v7266
          %7363 = vst [vmem:[%s458 + $0x68] sm:$0xff] %v7267
          %7364 = vst [vmem:[%s458 + $0x70] sm:$0xff] %v7268
          %7365 = vst [vmem:[%s458 + $0x78] sm:$0xff] %v7269
          %7366 = vst [vmem:[%s458 + $0x80] sm:$0xff] %v7270
          %7367 = vst [vmem:[%s458 + $0x88] sm:$0xff] %v7271
          %7368 = vst [vmem:[%s458 + $0x90] sm:$0xff] %v7272
          %7369 = vst [vmem:[%s458 + $0x98] sm:$0xff] %v7273
          %7370 = vst [vmem:[%s458 + $0xa0] sm:$0xff] %v7274
          %7371 = vst [vmem:[%s458 + $0xa8] sm:$0xff] %v7275
          %7372 = vst [vmem:[%s458 + $0xb0] sm:$0xff] %v7276
          %7373 = vst [vmem:[%s458 + $0xb8] sm:$0xff] %v7277
          %7374 = vst [vmem:[%s458 + $0xc0] sm:$0xff] %v7278
          %7375 = vst [vmem:[%s458 + $0xc8] sm:$0xff] %v7279
          %7376 = vst [vmem:[%s458 + $0xd0] sm:$0xff] %v7280
          %7377 = vst [vmem:[%s458 + $0xd8] sm:$0xff] %v7281
          %7378 = vst [vmem:[%s458 + $0xe0] sm:$0xff] %v7282
          %7379 = vst [vmem:[%s458 + $0xe8] sm:$0xff] %v7283
          %7380 = vst [vmem:[%s458 + $0xf0] sm:$0xff] %v7284
          %7381 = vst [vmem:[%s458 + $0xf8] sm:$0xff] %v7285
          %7382 = vst [vmem:[%s458 + $0x100] sm:$0xff] %v7286
          %7383 = vst [vmem:[%s458 + $0x108] sm:$0xff] %v7287
          %7384 = vst [vmem:[%s458 + $0x110] sm:$0xff] %v7288
          %7385 = vst [vmem:[%s458 + $0x118] sm:$0xff] %v7289
          %7386 = vst [vmem:[%s458 + $0x120] sm:$0xff] %v7290
          %7387 = vst [vmem:[%s458 + $0x128] sm:$0xff] %v7291
          %7388 = vst [vmem:[%s458 + $0x130] sm:$0xff] %v7292
          %7389 = vst [vmem:[%s458 + $0x138] sm:$0xff] %v7293
          %7390 = vst [vmem:[%s458 + $0x140] sm:$0xff] %v7294
          %7391 = vst [vmem:[%s458 + $0x148] sm:$0xff] %v7295
          %7392 = vst [vmem:[%s458 + $0x150] sm:$0xff] %v7296
          %7393 = vst [vmem:[%s458 + $0x158] sm:$0xff] %v7297
          %7394 = vst [vmem:[%s458 + $0x160] sm:$0xff] %v7298
          %7395 = vst [vmem:[%s458 + $0x168] sm:$0xff] %v7299
          %7396 = vst [vmem:[%s458 + $0x170] sm:$0xff] %v7300
          %7397 = vst [vmem:[%s458 + $0x178] sm:$0xff] %v7301
          %7398 = vst [vmem:[%s458 + $0x180] sm:$0xff] %v7302
          %7399 = vst [vmem:[%s458 + $0x188] sm:$0xff] %v7303
          %7400 = vst [vmem:[%s458 + $0x190] sm:$0xff] %v7304
          %7401 = vst [vmem:[%s458 + $0x198] sm:$0xff] %v7305
          %7402 = vst [vmem:[%s458 + $0x1a0] sm:$0xff] %v7306
          %7403 = vst [vmem:[%s458 + $0x1a8] sm:$0xff] %v7307
          %7404 = vst [vmem:[%s458 + $0x1b0] sm:$0xff] %v7308
          %7405 = vst [vmem:[%s458 + $0x1b8] sm:$0xff] %v7309
          %7406 = vst [vmem:[%s458 + $0x1c0] sm:$0xff] %v7310
          %7407 = vst [vmem:[%s458 + $0x1c8] sm:$0xff] %v7311
          %7408 = vst [vmem:[%s458 + $0x1d0] sm:$0xff] %v7312
          %7409 = vst [vmem:[%s458 + $0x1d8] sm:$0xff] %v7313
          %7410 = vst [vmem:[%s458 + $0x1e0] sm:$0xff] %v7314
          %7411 = vst [vmem:[%s458 + $0x1e8] sm:$0xff] %v7315
          %7412 = vst [vmem:[%s458 + $0x1f0] sm:$0xff] %v7316
          %7413 = vst [vmem:[%s458 + $0x1f8] sm:$0xff] %v7317
          %7414 = vst [vmem:[%s458 + $0x200] sm:$0xff] %v7318
          %7415 = vst [vmem:[%s458 + $0x208] sm:$0xff] %v7319
          %7416 = vst [vmem:[%s458 + $0x210] sm:$0xff] %v7320
          %7417 = vst [vmem:[%s458 + $0x218] sm:$0xff] %v7321
          %7418 = vst [vmem:[%s458 + $0x220] sm:$0xff] %v7322
          %7419 = vst [vmem:[%s458 + $0x228] sm:$0xff] %v7323
          %7420 = vst [vmem:[%s458 + $0x230] sm:$0xff] %v7324
          %7421 = vst [vmem:[%s458 + $0x238] sm:$0xff] %v7325
          %7422 = vst [vmem:[%s458 + $0x240] sm:$0xff] %v7326
          %7423 = vst [vmem:[%s458 + $0x248] sm:$0xff] %v7327
          %7424 = vst [vmem:[%s458 + $0x250] sm:$0xff] %v7328
          %7425 = vst [vmem:[%s458 + $0x258] sm:$0xff] %v7329
          %7426 = vst [vmem:[%s458 + $0x260] sm:$0xff] %v7330
          %7427 = vst [vmem:[%s458 + $0x268] sm:$0xff] %v7331
          %7428 = vst [vmem:[%s458 + $0x270] sm:$0xff] %v7332
          %7429 = vst [vmem:[%s458 + $0x278] sm:$0xff] %v7333
          %7430 = vst [vmem:[%s458 + $0x280] sm:$0xff] %v7334
          %7431 = vst [vmem:[%s458 + $0x288] sm:$0xff] %v7335
          %7432 = vst [vmem:[%s458 + $0x290] sm:$0xff] %v7336
          %7433 = vst [vmem:[%s458 + $0x298] sm:$0xff] %v7337
          %7434 = vst [vmem:[%s458 + $0x2a0] sm:$0xff] %v7338
          %7435 = vst [vmem:[%s458 + $0x2a8] sm:$0xff] %v7339
          %7436 = vst [vmem:[%s458 + $0x2b0] sm:$0xff] %v7340
          %7437 = vst [vmem:[%s458 + $0x2b8] sm:$0xff] %v7341
          %7438 = vst [vmem:[%s458 + $0x2c0] sm:$0xff] %v7342
          %7439 = vst [vmem:[%s458 + $0x2c8] sm:$0xff] %v7343
          %7440 = vst [vmem:[%s458 + $0x2d0] sm:$0xff] %v7344
          %7441 = vst [vmem:[%s458 + $0x2d8] sm:$0xff] %v7345
          %7442 = vst [vmem:[%s458 + $0x2e0] sm:$0xff] %v7346
          %7443 = vst [vmem:[%s458 + $0x2e8] sm:$0xff] %v7347
          %7444 = vst [vmem:[%s458 + $0x2f0] sm:$0xff] %v7348
          %7445 = vst [vmem:[%s458 + $0x2f8] sm:$0xff] %v7349
        $region67: #{model_forward.1} parent=54 // pred_fallthru
          _
        %s7446 = sand.u32 %s139, 1
        %s7447 = scalar_lea.sflag [#allocation4], %s7446
        %s7448 = sand.u32 %s139, 1
        %s7449 = smul.addr %s7448, 768
        %s7450 = scalar_lea.vmem [#allocation3], %s7449
        // Predicated region
        $region68: #{model_forward.1} parent=54 // pred_check
          %p7451 = pneg %p149
        $region69: #{model_forward.1} parent=54 // pred_check_branch
          %7453 = sbr.rel (%p7451) target = $region71
        $region70: #{model_forward.1} parent=54 // pred_region
          %s7454 = smul.u32 16, %s22
          %s7456 = ssub.s32 12288, 12288
          %7457 = vsyncadd %s7447, %s7456
          %s7458 = smul.addr %s7454, 6
          %s7459 = smul.addr %s7458, 128
          %s7460 = scalar_lea.hbm %s4, %s7459
          %s7461 = sshll.u32 %s7450, 4
          %s7462 = int_to_ptr.vmem [resolvable:$true] %s7461
          %7467 = dma.vmem_to_hbm [thread:$0]  %s7462, 12288, %s7460, %s7447, 768, 768, 48
        $region71: #{model_forward.1} parent=54 // pred_fallthru
          _
      $region55: #{model_forward.1} parent=5 // pred_fallthru
        _
      %p7468 = scmp.le.s32.totalorder 2, %s13
      // Predicated region
      $region72: #{model_forward.1} parent=5 // pred_check
        %p7469 = pneg %p7468
      $region73: #{model_forward.1} parent=5 // pred_check_branch
        %7471 = sbr.rel (%p7469) target = $region75
      $region74: #{model_forward.1} parent=5 // pred_region
        %s7472 = ssub.s32 %s13, 2
        // Predicated region
        $region76: #{model_forward.1} parent=74 // pred_check
          %p7473 = pneg %p155
        $region77: #{model_forward.1} parent=74 // pred_check_branch
          %7475 = sbr.rel (%p7473) target = $region79
        $region78: #{model_forward.1} parent=74 // pred_region
          %s7476 = sand.u32 %s140, 1
          %s7477 = scalar_lea.sflag [#allocation4], %s7476
          %s7478 = sand.u32 %s140, 1
          %s7479 = smul.addr %s7478, 768
          %s7480 = scalar_lea.vmem [#allocation3], %s7479
          %7481 = dma.done %s7477, 12288
        $region79: #{model_forward.1} parent=74 // pred_fallthru
          _
      $region75: #{model_forward.1} parent=5 // pred_fallthru
        _
    $region6: #{model_forward.1} parent=1 // loop_footer
      %s17 = sadd.s32 1, %s13
    $region7: #{model_forward.1} parent=1 // loop_footer_branch
      %12 = sbr.rel target = $region3
    $region8: #{model_forward.1} parent=1 // loop_exit
      _
    %7482 = vsyncpa [#allocation4], 1
    %s7483 = scalar_lea.sflag [#allocation4], 1
    %7484 = vsyncpa %s7483, 1

</llo_original>
